<compile_context>
chip_gen: v7x
topology: tpu7x:2x2x1
jax: 0.10.0
libtpu: 0.0.40
codegen_flags: <defaults>
</compile_context>

<pallas_src>
import functools

import numpy as np
import jax
import jax.numpy as jnp
from jax.experimental import pallas as pl
from jax.experimental.pallas import tpu as pltpu


# ---------------------------------------------------------------------------
# Pallas kernels
# ---------------------------------------------------------------------------
def _mm_affine_kernel(a_ref, b_ref, scale_ref, shift_ref, o_ref, *, relu):
    """out = act((A @ B) * scale + shift); A/B bf16, f32 accumulation + epilogue."""
    acc = jnp.dot(a_ref[...], b_ref[...], preferred_element_type=jnp.float32)
    acc = acc * scale_ref[...] + shift_ref[...]
    if relu:
        acc = jnp.maximum(acc, 0.0)
    o_ref[...] = acc.astype(o_ref.dtype)


def _max_taps_kernel(x_ref, o_ref):
    """Single-step max reduction over the leading tap axis (whole slab in VMEM)."""
    o_ref[...] = jnp.max(x_ref[...], axis=0)


# ---------------------------------------------------------------------------
# Pallas wrappers
# ---------------------------------------------------------------------------
def _round_up(x, m):
    return ((x + m - 1) // m) * m


def _choose_tm(m):
    """Row-tile size: single block for small M, 2 'parallel' steps (v7x megacore)
    for mid-size M, 512 cap for big M."""
    m16 = _round_up(max(m, 16), 16)
    if m16 <= 256:
        return m16
    if m16 <= 1024:
        return _round_up((m16 + 1) // 2, 16)
    return 512


def matmul_affine(a, b, scale, shift, *, relu):
    """Pallas: act((a @ b) * scale + shift).

    a:(M,K) f32, b:(K,N) f32, scale/shift:(N,).
    K and N are zero-padded to multiples of 128 (padded output columns are exactly 0).
    Returns (M, N_padded) f32 — caller slices columns if it needs the exact N.
    """
    M, K = a.shape
    K2, Nc = b.shape
    assert K == K2
    Kp = _round_up(K, 128)
    Np = _round_up(Nc, 128)
    tm = _choose_tm(M)
    Mp = _round_up(M, tm)

    a_p = jnp.pad(a, ((0, Mp - M), (0, Kp - K))).astype(jnp.bfloat16)
    b_p = jnp.pad(b, ((0, Kp - K), (0, Np - Nc))).astype(jnp.bfloat16)
    scale_p = jnp.pad(scale.reshape(1, Nc).astype(jnp.float32), ((0, 0), (0, Np - Nc)))
    shift_p = jnp.pad(shift.reshape(1, Nc).astype(jnp.float32), ((0, 0), (0, Np - Nc)))

    out = pl.pallas_call(
        functools.partial(_mm_affine_kernel, relu=relu),
        out_shape=jax.ShapeDtypeStruct((Mp, Np), jnp.float32),
        grid=(Mp // tm,),
        in_specs=[
            pl.BlockSpec((tm, Kp), lambda i: (i, 0)),
            pl.BlockSpec((Kp, Np), lambda i: (0, 0)),
            pl.BlockSpec((1, Np), lambda i: (0, 0)),
            pl.BlockSpec((1, Np), lambda i: (0, 0)),
        ],
        out_specs=pl.BlockSpec((tm, Np), lambda i: (i, 0)),
        compiler_params=pltpu.CompilerParams(dimension_semantics=("parallel",)),
    )(a_p, b_p, scale_p, shift_p)

    if Mp != M:
        out = out[:M]
    return out  # columns kept lane-dense (padded to Np)


def conv1d_bn_relu(x_nlc, w, gamma, beta, mean, var, *, stride, padding, eps=1e-5):
    """Conv1d (no bias) + BatchNorm1d (inference) + ReLU in (N, L, C) layout.

    x_nlc: (N, L, Cin_x).  w: (Cout, Cin_w, k).  If the input carries zero-padded
    channels (Cin_x > Cin_w), the weight is zero-padded to match.  Returns
    (N, Lout, Cout_padded) with Cout padded to a multiple of 128 (padded channels == 0).
    """
    N, L, Cin_x = x_nlc.shape
    Cout, Cin_w, k = w.shape
    if Cin_x > Cin_w:
        w = jnp.pad(w, ((0, 0), (0, Cin_x - Cin_w), (0, 0)))
    Lout = (L + 2 * padding - k) // stride + 1

    x_pad = jnp.pad(x_nlc, ((0, 0), (padding, padding), (0, 0)))
    if stride == 1 and k <= 16:
        # k shifted views, cheap and fuses well.
        patches = jnp.stack([x_pad[:, t:t + Lout, :] for t in range(k)], axis=2)
    else:
        # One constant-index gather (avoids k separate slice HLOs for k=50/400).
        idx = np.arange(Lout)[:, None] * stride + np.arange(k)[None, :]
        patches = jnp.take(x_pad, jnp.asarray(idx, dtype=jnp.int32), axis=1)
    # patches: (N, Lout, k, Cin_x) — flatten K with tap-outer / channel-inner order.
    patches2d = patches.reshape(N * Lout, k * Cin_x)
    # weight to matching (k*Cin, Cout) order.
    wmat = jnp.transpose(w, (2, 1, 0)).reshape(k * Cin_x, Cout)

    scale = gamma / jnp.sqrt(var + eps)
    shift = beta - mean * scale

    out2d = matmul_affine(patches2d, wmat, scale, shift, relu=True)  # (N*Lout, Cout_pad)
    return out2d.reshape(N, Lout, out2d.shape[1])


def maxpool1d(x_nlc, kernel, stride, padding):
    """MaxPool1d (floor mode, -inf padding) over the L axis of (N, L, C).

    Single Pallas step: the whole (kernel, N*Lout, C) tap slab is VMEM-resident and
    reduced with one jnp.max; channels stay on the 128-lane axis (lane-dense stores).
    """
    N, L, C = x_nlc.shape
    Lout = (L + 2 * padding - kernel) // stride + 1
    x_pad = jnp.pad(x_nlc, ((0, 0), (padding, padding), (0, 0)),
                    constant_values=-jnp.inf)
    taps = jnp.stack(
        [x_pad[:, t: t + (Lout - 1) * stride + 1: stride, :] for t in range(kernel)],
        axis=0,
    ).reshape(kernel, N * Lout, C)

    out = pl.pallas_call(
        _max_taps_kernel,
        out_shape=jax.ShapeDtypeStruct((N * Lout, C), x_nlc.dtype),
    )(taps)
    return out.reshape(N, Lout, C)


def adaptive_avg_pool1d_ncl(x_ncl, out_size):
    """AdaptiveAvgPool1d over the last axis of (N, C, L).

    Fast path: identity when L == out_size (this config).  Otherwise a Pallas
    averaging-matrix matmul.
    """
    N, C, L = x_ncl.shape
    if L == out_size:
        return x_ncl
    P = np.zeros((L, out_size), dtype=np.float32)
    for i in range(out_size):
        s = (i * L) // out_size
        e = ((i + 1) * L + out_size - 1) // out_size
        P[s:e, i] = 1.0 / (e - s)
    ones = jnp.ones((out_size,), jnp.float32)
    zeros = jnp.zeros((out_size,), jnp.float32)
    out2d = matmul_affine(x_ncl.reshape(N * C, L), jnp.asarray(P), ones, zeros,
                          relu=False)[:, :out_size]
    return out2d.reshape(N, C, out_size)


# ---------------------------------------------------------------------------
# Model config / params / forward
# ---------------------------------------------------------------------------
class Configs:
    input_channels = 2
    small_kernel_size = 50
    small_stride_size = 6
    wide_kernel_size = 400
    wide_stride_size = 50
    dropout = 0.5
    reduced_cnn_size = 128   # must equal 128 so features1/features2 concat on dim=2
    num_classes = 5


MODEL_OUTPUT_DIM = 80


def init_params(key, cfg):
    ks = jax.random.split(key, 16)

    def conv_w(k, shape):
        return (0.02 * jax.random.normal(k, shape)).astype(jnp.float32)

    def bn(k, c):
        k1, k2, k3, k4 = jax.random.split(k, 4)
        gamma = 1.0 + 0.1 * jax.random.normal(k1, (c,))
        beta = 0.1 * jax.random.normal(k2, (c,))
        mean = 0.05 * jax.random.normal(k3, (c,))
        var = 1.0 + 0.1 * jnp.abs(jax.random.normal(k4, (c,)))
        return (gamma.astype(jnp.float32), beta.astype(jnp.float32),
                mean.astype(jnp.float32), var.astype(jnp.float32))

    rc = cfg.reduced_cnn_size
    params = {
        "f1_conv1_w": conv_w(ks[0], (64, cfg.input_channels, cfg.small_kernel_size)),
        "f1_bn1": bn(ks[1], 64),
        "f1_conv2_w": conv_w(ks[2], (128, 64, 8)),
        "f1_bn2": bn(ks[3], 128),
        "f1_conv3_w": conv_w(ks[4], (128, 128, 8)),
        "f1_bn3": bn(ks[5], 128),
        "f2_conv1_w": conv_w(ks[6], (64, cfg.input_channels, cfg.wide_kernel_size)),
        "f2_bn1": bn(ks[7], 64),
        "f2_conv2_w": conv_w(ks[8], (128, 64, 7)),
        "f2_bn2": bn(ks[9], 128),
        "f2_conv3_w": conv_w(ks[10], (rc, 128, 7)),
        "f2_bn3": bn(ks[11], rc),
        "logits_w": conv_w(ks[12], (cfg.num_classes, MODEL_OUTPUT_DIM * rc)),
        "logits_b": (0.01 * jax.random.normal(ks[13], (cfg.num_classes,))).astype(jnp.float32),
    }
    return params


def forward(params, x, cfg):
    # Single relayout at the input: (N, Cin, L) -> (N, L, Cin) so channels ride lanes.
    x_nlc = jnp.transpose(x, (0, 2, 1))

    # features1  (64-channel conv output is carried zero-padded to 128 lanes)
    h = conv1d_bn_relu(x_nlc, params["f1_conv1_w"], *params["f1_bn1"],
                       stride=cfg.small_stride_size, padding=24)
    h = maxpool1d(h, 8, 2, 4)
    # Dropout -> identity (eval)
    h = conv1d_bn_relu(h, params["f1_conv2_w"], *params["f1_bn2"], stride=1, padding=4)
    h = conv1d_bn_relu(h, params["f1_conv3_w"], *params["f1_bn3"], stride=1, padding=4)
    x1 = maxpool1d(h, 4, 4, 2)                       # (N, 64, 128)

    # features2
    h = conv1d_bn_relu(x_nlc, params["f2_conv1_w"], *params["f2_bn1"],
                       stride=cfg.wide_stride_size, padding=200)
    h = maxpool1d(h, 4, 2, 2)
    # Dropout -> identity (eval)
    h = conv1d_bn_relu(h, params["f2_conv2_w"], *params["f2_bn2"], stride=1, padding=3)
    h = conv1d_bn_relu(h, params["f2_conv3_w"], *params["f2_bn3"], stride=1, padding=3)
    x2 = maxpool1d(h, 2, 2, 1)                       # (N, 16, 128)

    # concat along length (axis=1 in NLC), dropout -> identity
    x_concat = jnp.concatenate((x1, x2), axis=1)     # (N, 80, 128)

    # back to PyTorch NCL for the output feature map / flatten order
    full_ncl = jnp.transpose(x_concat, (0, 2, 1))    # (N, 128, 80)
    full_features = adaptive_avg_pool1d_ncl(full_ncl, MODEL_OUTPUT_DIM)  # identity here

    # supervised branch: flatten (C outer, L inner) then Linear
    vec_features = full_features.reshape(full_features.shape[0], -1)
    ones = jnp.ones((cfg.num_classes,), jnp.float32)
    logits = matmul_affine(vec_features, params["logits_w"].T, ones,
                           params["logits_b"], relu=False)[:, :cfg.num_classes]
    return logits, (vec_features, full_features)


if __name__ == "__main__":
    cfg = Configs()
    key = jax.random.PRNGKey(0)
    pkey, xkey = jax.random.split(key)

    params = init_params(pkey, cfg)
    # x: (batch=2, input_channels=2, seq_len=3000) — EEG epoch, NCL layout
    x = jax.random.normal(xkey, (2, cfg.input_channels, 3000), dtype=jnp.float32)

    fwd = jax.jit(functools.partial(forward, cfg=cfg))
    logits, (vec_features, full_features) = fwd(params, x)
    jax.block_until_ready((logits, vec_features, full_features))

    assert logits.shape == (2, cfg.num_classes)
    assert full_features.shape == (2, cfg.reduced_cnn_size, MODEL_OUTPUT_DIM)
    assert vec_features.shape == (2, cfg.reduced_cnn_size * MODEL_OUTPUT_DIM)
    assert bool(jnp.all(jnp.isfinite(logits)))
    print("KERNEL_OK")
</pallas_src>

<mosaic_0001>
module attributes {stable_mosaic.version = 11 : i64} {
  func.func @_mm_affine_kernel(%arg0: i32, %arg1: memref<128x896xbf16, #tpu.memory_space<vmem>>, %arg2: memref<896x128xbf16, #tpu.memory_space<vmem>>, %arg3: memref<1x128xf32, #tpu.memory_space<vmem>>, %arg4: memref<1x128xf32, #tpu.memory_space<vmem>>, %arg5: memref<128x128xf32, #tpu.memory_space<vmem>>) attributes {dimension_semantics = [#tpu.dimension_semantics<parallel>], iteration_bounds = array<i64: 1>, scalar_prefetch = 0 : i64, scratch_operands = 0 : i64, tpu.core_type = #tpu.core_type<tc>, window_params = [{transform_indices = @transform_0, window_bounds = array<i64: 128, 896>}, {pipeline_mode = #tpu.pipeline_mode<synchronous>, transform_indices = @transform_1, window_bounds = array<i64: 896, 128>}, {pipeline_mode = #tpu.pipeline_mode<synchronous>, transform_indices = @transform_2, window_bounds = array<i64: 1, 128>}, {pipeline_mode = #tpu.pipeline_mode<synchronous>, transform_indices = @transform_3, window_bounds = array<i64: 1, 128>}, {transform_indices = @transform_4, window_bounds = array<i64: 128, 128>}]} {
    %c0 = arith.constant 0 : index
    %c0_0 = arith.constant 0 : index
    %0 = vector.load %arg1[%c0, %c0_0] : memref<128x896xbf16, #tpu.memory_space<vmem>>, vector<128x896xbf16>
    %c0_1 = arith.constant 0 : index
    %c0_2 = arith.constant 0 : index
    %1 = vector.load %arg2[%c0_1, %c0_2] : memref<896x128xbf16, #tpu.memory_space<vmem>>, vector<896x128xbf16>
    %cst = arith.constant dense<0.000000e+00> : vector<128x128xf32>
    %2 = tpu.matmul %0, %1, %cst {dimension_numbers = #tpu.dot_dimension_numbers<[1], [0], [0], [1], [0, 0, 1, 1], [], []>} : vector<128x896xbf16>, vector<896x128xbf16>, vector<128x128xf32> -> vector<128x128xf32>
    %c0_3 = arith.constant 0 : index
    %c0_4 = arith.constant 0 : index
    %3 = vector.load %arg3[%c0_3, %c0_4] : memref<1x128xf32, #tpu.memory_space<vmem>>, vector<1x128xf32>
    %4 = vector.broadcast %3 : vector<1x128xf32> to vector<128x128xf32>
    %5 = arith.mulf %2, %4 : vector<128x128xf32>
    %c0_5 = arith.constant 0 : index
    %c0_6 = arith.constant 0 : index
    %6 = vector.load %arg4[%c0_5, %c0_6] : memref<1x128xf32, #tpu.memory_space<vmem>>, vector<1x128xf32>
    %7 = vector.broadcast %6 : vector<1x128xf32> to vector<128x128xf32>
    %8 = arith.addf %5, %7 : vector<128x128xf32>
    %cst_7 = arith.constant 0.000000e+00 : f32
    %9 = vector.broadcast %cst_7 : f32 to vector<128x128xf32>
    %10 = arith.maximumf %8, %9 : vector<128x128xf32>
    %c0_8 = arith.constant 0 : index
    %c0_9 = arith.constant 0 : index
    %11 = vector.load %arg5[%c0_8, %c0_9] : memref<128x128xf32, #tpu.memory_space<vmem>>, vector<128x128xf32>
    tpu.vector_store %arg5[%c0_8, %c0_9], %10 {strides = array<i32>} : memref<128x128xf32, #tpu.memory_space<vmem>>, vector<128x128xf32>,
    return
  }
  func.func @transform_0(%arg0: i32) -> (i32, i32) {
    %c0_i32 = arith.constant 0 : i32
    %c0_i32_0 = arith.constant 0 : i32
    return %arg0, %c0_i32 : i32, i32
  }
  func.func @transform_1(%arg0: i32) -> (i32, i32) {
    %c0_i32 = arith.constant 0 : i32
    %c0_i32_0 = arith.constant 0 : i32
    %c0_i32_1 = arith.constant 0 : i32
    return %c0_i32, %c0_i32_0 : i32, i32
  }
  func.func @transform_2(%arg0: i32) -> (i32, i32) {
    %c0_i32 = arith.constant 0 : i32
    %c0_i32_0 = arith.constant 0 : i32
    %c0_i32_1 = arith.constant 0 : i32
    return %c0_i32, %c0_i32_0 : i32, i32
  }
  func.func @transform_3(%arg0: i32) -> (i32, i32) {
    %c0_i32 = arith.constant 0 : i32
    %c0_i32_0 = arith.constant 0 : i32
    %c0_i32_1 = arith.constant 0 : i32
    return %c0_i32, %c0_i32_0 : i32, i32
  }
  func.func @transform_4(%arg0: i32) -> (i32, i32) {
    %c0_i32 = arith.constant 0 : i32
    %c0_i32_0 = arith.constant 0 : i32
    return %arg0, %c0_i32 : i32, i32
  }
}

module attributes {stable_mosaic.version = 11 : i64} {
  func.func @_max_taps_kernel(%arg0: memref<4x62x128xf32, #tpu.memory_space<vmem>>, %arg1: memref<62x128xf32, #tpu.memory_space<vmem>>) attributes {dimension_semantics = [], scalar_prefetch = 0 : i64, scratch_operands = 0 : i64, tpu.core_type = #tpu.core_type<tc>} {
    %c0 = arith.constant 0 : index
    %c0_0 = arith.constant 0 : index
    %c0_1 = arith.constant 0 : index
    %0 = vector.load %arg0[%c0, %c0_0, %c0_1] : memref<4x62x128xf32, #tpu.memory_space<vmem>>, vector<4x62x128xf32>
    %cst = arith.constant dense<0xFF800000> : vector<62x128xf32>
    %1 = vector.multi_reduction <maximumf>, %0, %cst [0] : vector<4x62x128xf32> to vector<62x128xf32>
    %c0_2 = arith.constant 0 : index
    %c0_3 = arith.constant 0 : index
    %2 = vector.load %arg1[%c0_2, %c0_3] : memref<62x128xf32, #tpu.memory_space<vmem>>, vector<62x128xf32>
    tpu.vector_store %arg1[%c0_2, %c0_3], %1 {strides = array<i32>} : memref<62x128xf32, #tpu.memory_space<vmem>>, vector<62x128xf32>,
    return
  }
}

module attributes {stable_mosaic.version = 11 : i64} {
  func.func @_mm_affine_kernel(%arg0: i32, %arg1: memref<64x896xbf16, #tpu.memory_space<vmem>>, %arg2: memref<896x128xbf16, #tpu.memory_space<vmem>>, %arg3: memref<1x128xf32, #tpu.memory_space<vmem>>, %arg4: memref<1x128xf32, #tpu.memory_space<vmem>>, %arg5: memref<64x128xf32, #tpu.memory_space<vmem>>) attributes {dimension_semantics = [#tpu.dimension_semantics<parallel>], iteration_bounds = array<i64: 1>, scalar_prefetch = 0 : i64, scratch_operands = 0 : i64, tpu.core_type = #tpu.core_type<tc>, window_params = [{transform_indices = @transform_0, window_bounds = array<i64: 64, 896>}, {pipeline_mode = #tpu.pipeline_mode<synchronous>, transform_indices = @transform_1, window_bounds = array<i64: 896, 128>}, {pipeline_mode = #tpu.pipeline_mode<synchronous>, transform_indices = @transform_2, window_bounds = array<i64: 1, 128>}, {pipeline_mode = #tpu.pipeline_mode<synchronous>, transform_indices = @transform_3, window_bounds = array<i64: 1, 128>}, {transform_indices = @transform_4, window_bounds = array<i64: 64, 128>}]} {
    %c0 = arith.constant 0 : index
    %c0_0 = arith.constant 0 : index
    %0 = vector.load %arg1[%c0, %c0_0] : memref<64x896xbf16, #tpu.memory_space<vmem>>, vector<64x896xbf16>
    %c0_1 = arith.constant 0 : index
    %c0_2 = arith.constant 0 : index
    %1 = vector.load %arg2[%c0_1, %c0_2] : memref<896x128xbf16, #tpu.memory_space<vmem>>, vector<896x128xbf16>
    %cst = arith.constant dense<0.000000e+00> : vector<64x128xf32>
    %2 = tpu.matmul %0, %1, %cst {dimension_numbers = #tpu.dot_dimension_numbers<[1], [0], [0], [1], [0, 0, 1, 1], [], []>} : vector<64x896xbf16>, vector<896x128xbf16>, vector<64x128xf32> -> vector<64x128xf32>
    %c0_3 = arith.constant 0 : index
    %c0_4 = arith.constant 0 : index
    %3 = vector.load %arg3[%c0_3, %c0_4] : memref<1x128xf32, #tpu.memory_space<vmem>>, vector<1x128xf32>
    %4 = vector.broadcast %3 : vector<1x128xf32> to vector<64x128xf32>
    %5 = arith.mulf %2, %4 : vector<64x128xf32>
    %c0_5 = arith.constant 0 : index
    %c0_6 = arith.constant 0 : index
    %6 = vector.load %arg4[%c0_5, %c0_6] : memref<1x128xf32, #tpu.memory_space<vmem>>, vector<1x128xf32>
    %7 = vector.broadcast %6 : vector<1x128xf32> to vector<64x128xf32>
    %8 = arith.addf %5, %7 : vector<64x128xf32>
    %cst_7 = arith.constant 0.000000e+00 : f32
    %9 = vector.broadcast %cst_7 : f32 to vector<64x128xf32>
    %10 = arith.maximumf %8, %9 : vector<64x128xf32>
    %c0_8 = arith.constant 0 : index
    %c0_9 = arith.constant 0 : index
    %11 = vector.load %arg5[%c0_8, %c0_9] : memref<64x128xf32, #tpu.memory_space<vmem>>, vector<64x128xf32>
    tpu.vector_store %arg5[%c0_8, %c0_9], %10 {strides = array<i32>} : memref<64x128xf32, #tpu.memory_space<vmem>>, vector<64x128xf32>,
    return
  }
  func.func @transform_0(%arg0: i32) -> (i32, i32) {
    %c0_i32 = arith.constant 0 : i32
    %c0_i32_0 = arith.constant 0 : i32
    return %arg0, %c0_i32 : i32, i32
  }
  func.func @transform_1(%arg0: i32) -> (i32, i32) {
    %c0_i32 = arith.constant 0 : i32
    %c0_i32_0 = arith.constant 0 : i32
    %c0_i32_1 = arith.constant 0 : i32
    return %c0_i32, %c0_i32_0 : i32, i32
  }
  func.func @transform_2(%arg0: i32) -> (i32, i32) {
    %c0_i32 = arith.constant 0 : i32
    %c0_i32_0 = arith.constant 0 : i32
    %c0_i32_1 = arith.constant 0 : i32
    return %c0_i32, %c0_i32_0 : i32, i32
  }
  func.func @transform_3(%arg0: i32) -> (i32, i32) {
    %c0_i32 = arith.constant 0 : i32
    %c0_i32_0 = arith.constant 0 : i32
    %c0_i32_1 = arith.constant 0 : i32
    return %c0_i32, %c0_i32_0 : i32, i32
  }
  func.func @transform_4(%arg0: i32) -> (i32, i32) {
    %c0_i32 = arith.constant 0 : i32
    %c0_i32_0 = arith.constant 0 : i32
    return %arg0, %c0_i32 : i32, i32
  }
}

module attributes {stable_mosaic.version = 11 : i64} {
  func.func @_max_taps_kernel(%arg0: memref<2x32x128xf32, #tpu.memory_space<vmem>>, %arg1: memref<32x128xf32, #tpu.memory_space<vmem>>) attributes {dimension_semantics = [], scalar_prefetch = 0 : i64, scratch_operands = 0 : i64, tpu.core_type = #tpu.core_type<tc>} {
    %c0 = arith.constant 0 : index
    %c0_0 = arith.constant 0 : index
    %c0_1 = arith.constant 0 : index
    %0 = vector.load %arg0[%c0, %c0_0, %c0_1] : memref<2x32x128xf32, #tpu.memory_space<vmem>>, vector<2x32x128xf32>
    %cst = arith.constant dense<0xFF800000> : vector<32x128xf32>
    %1 = vector.multi_reduction <maximumf>, %0, %cst [0] : vector<2x32x128xf32> to vector<32x128xf32>
    %c0_2 = arith.constant 0 : index
    %c0_3 = arith.constant 0 : index
    %2 = vector.load %arg1[%c0_2, %c0_3] : memref<32x128xf32, #tpu.memory_space<vmem>>, vector<32x128xf32>
    tpu.vector_store %arg1[%c0_2, %c0_3], %1 {strides = array<i32>} : memref<32x128xf32, #tpu.memory_space<vmem>>, vector<32x128xf32>,
    return
  }
}

module attributes {stable_mosaic.version = 11 : i64} {
  func.func @_mm_affine_kernel(%arg0: i32, %arg1: memref<512x128xbf16, #tpu.memory_space<vmem>>, %arg2: memref<128x128xbf16, #tpu.memory_space<vmem>>, %arg3: memref<1x128xf32, #tpu.memory_space<vmem>>, %arg4: memref<1x128xf32, #tpu.memory_space<vmem>>, %arg5: memref<512x128xf32, #tpu.memory_space<vmem>>) attributes {dimension_semantics = [#tpu.dimension_semantics<parallel>], iteration_bounds = array<i64: 2>, scalar_prefetch = 0 : i64, scratch_operands = 0 : i64, tpu.core_type = #tpu.core_type<tc>, window_params = [{transform_indices = @transform_0, window_bounds = array<i64: 512, 128>}, {pipeline_mode = #tpu.pipeline_mode<synchronous>, transform_indices = @transform_1, window_bounds = array<i64: 128, 128>}, {pipeline_mode = #tpu.pipeline_mode<synchronous>, transform_indices = @transform_2, window_bounds = array<i64: 1, 128>}, {pipeline_mode = #tpu.pipeline_mode<synchronous>, transform_indices = @transform_3, window_bounds = array<i64: 1, 128>}, {transform_indices = @transform_4, window_bounds = array<i64: 512, 128>}]} {
    %c0 = arith.constant 0 : index
    %c0_0 = arith.constant 0 : index
    %0 = vector.load %arg1[%c0, %c0_0] : memref<512x128xbf16, #tpu.memory_space<vmem>>, vector<512x128xbf16>
    %c0_1 = arith.constant 0 : index
    %c0_2 = arith.constant 0 : index
    %1 = vector.load %arg2[%c0_1, %c0_2] : memref<128x128xbf16, #tpu.memory_space<vmem>>, vector<128x128xbf16>
    %cst = arith.constant dense<0.000000e+00> : vector<512x128xf32>
    %2 = tpu.matmul %0, %1, %cst {dimension_numbers = #tpu.dot_dimension_numbers<[1], [0], [0], [1], [0, 0, 1, 1], [], []>} : vector<512x128xbf16>, vector<128x128xbf16>, vector<512x128xf32> -> vector<512x128xf32>
    %c0_3 = arith.constant 0 : index
    %c0_4 = arith.constant 0 : index
    %3 = vector.load %arg3[%c0_3, %c0_4] : memref<1x128xf32, #tpu.memory_space<vmem>>, vector<1x128xf32>
    %4 = vector.broadcast %3 : vector<1x128xf32> to vector<512x128xf32>
    %5 = arith.mulf %2, %4 : vector<512x128xf32>
    %c0_5 = arith.constant 0 : index
    %c0_6 = arith.constant 0 : index
    %6 = vector.load %arg4[%c0_5, %c0_6] : memref<1x128xf32, #tpu.memory_space<vmem>>, vector<1x128xf32>
    %7 = vector.broadcast %6 : vector<1x128xf32> to vector<512x128xf32>
    %8 = arith.addf %5, %7 : vector<512x128xf32>
    %cst_7 = arith.constant 0.000000e+00 : f32
    %9 = vector.broadcast %cst_7 : f32 to vector<512x128xf32>
    %10 = arith.maximumf %8, %9 : vector<512x128xf32>
    %c0_8 = arith.constant 0 : index
    %c0_9 = arith.constant 0 : index
    %11 = vector.load %arg5[%c0_8, %c0_9] : memref<512x128xf32, #tpu.memory_space<vmem>>, vector<512x128xf32>
    tpu.vector_store %arg5[%c0_8, %c0_9], %10 {strides = array<i32>} : memref<512x128xf32, #tpu.memory_space<vmem>>, vector<512x128xf32>,
    return
  }
  func.func @transform_0(%arg0: i32) -> (i32, i32) {
    %c0_i32 = arith.constant 0 : i32
    %c0_i32_0 = arith.constant 0 : i32
    return %arg0, %c0_i32 : i32, i32
  }
  func.func @transform_1(%arg0: i32) -> (i32, i32) {
    %c0_i32 = arith.constant 0 : i32
    %c0_i32_0 = arith.constant 0 : i32
    %c0_i32_1 = arith.constant 0 : i32
    return %c0_i32, %c0_i32_0 : i32, i32
  }
  func.func @transform_2(%arg0: i32) -> (i32, i32) {
    %c0_i32 = arith.constant 0 : i32
    %c0_i32_0 = arith.constant 0 : i32
    %c0_i32_1 = arith.constant 0 : i32
    return %c0_i32, %c0_i32_0 : i32, i32
  }
  func.func @transform_3(%arg0: i32) -> (i32, i32) {
    %c0_i32 = arith.constant 0 : i32
    %c0_i32_0 = arith.constant 0 : i32
    %c0_i32_1 = arith.constant 0 : i32
    return %c0_i32, %c0_i32_0 : i32, i32
  }
  func.func @transform_4(%arg0: i32) -> (i32, i32) {
    %c0_i32 = arith.constant 0 : i32
    %c0_i32_0 = arith.constant 0 : i32
    return %arg0, %c0_i32 : i32, i32
  }
}

module attributes {stable_mosaic.version = 11 : i64} {
  func.func @_max_taps_kernel(%arg0: memref<8x502x128xf32, #tpu.memory_space<vmem>>, %arg1: memref<502x128xf32, #tpu.memory_space<vmem>>) attributes {dimension_semantics = [], scalar_prefetch = 0 : i64, scratch_operands = 0 : i64, tpu.core_type = #tpu.core_type<tc>} {
    %c0 = arith.constant 0 : index
    %c0_0 = arith.constant 0 : index
    %c0_1 = arith.constant 0 : index
    %0 = vector.load %arg0[%c0, %c0_0, %c0_1] : memref<8x502x128xf32, #tpu.memory_space<vmem>>, vector<8x502x128xf32>
    %cst = arith.constant dense<0xFF800000> : vector<502x128xf32>
    %1 = vector.multi_reduction <maximumf>, %0, %cst [0] : vector<8x502x128xf32> to vector<502x128xf32>
    %c0_2 = arith.constant 0 : index
    %c0_3 = arith.constant 0 : index
    %2 = vector.load %arg1[%c0_2, %c0_3] : memref<502x128xf32, #tpu.memory_space<vmem>>, vector<502x128xf32>
    tpu.vector_store %arg1[%c0_2, %c0_3], %1 {strides = array<i32>} : memref<502x128xf32, #tpu.memory_space<vmem>>, vector<502x128xf32>,
    return
  }
}

module attributes {stable_mosaic.version = 11 : i64} {
  func.func @_mm_affine_kernel(%arg0: i32, %arg1: memref<256x1024xbf16, #tpu.memory_space<vmem>>, %arg2: memref<1024x128xbf16, #tpu.memory_space<vmem>>, %arg3: memref<1x128xf32, #tpu.memory_space<vmem>>, %arg4: memref<1x128xf32, #tpu.memory_space<vmem>>, %arg5: memref<256x128xf32, #tpu.memory_space<vmem>>) attributes {dimension_semantics = [#tpu.dimension_semantics<parallel>], iteration_bounds = array<i64: 2>, scalar_prefetch = 0 : i64, scratch_operands = 0 : i64, tpu.core_type = #tpu.core_type<tc>, window_params = [{transform_indices = @transform_0, window_bounds = array<i64: 256, 1024>}, {pipeline_mode = #tpu.pipeline_mode<synchronous>, transform_indices = @transform_1, window_bounds = array<i64: 1024, 128>}, {pipeline_mode = #tpu.pipeline_mode<synchronous>, transform_indices = @transform_2, window_bounds = array<i64: 1, 128>}, {pipeline_mode = #tpu.pipeline_mode<synchronous>, transform_indices = @transform_3, window_bounds = array<i64: 1, 128>}, {transform_indices = @transform_4, window_bounds = array<i64: 256, 128>}]} {
    %c0 = arith.constant 0 : index
    %c0_0 = arith.constant 0 : index
    %0 = vector.load %arg1[%c0, %c0_0] : memref<256x1024xbf16, #tpu.memory_space<vmem>>, vector<256x1024xbf16>
    %c0_1 = arith.constant 0 : index
    %c0_2 = arith.constant 0 : index
    %1 = vector.load %arg2[%c0_1, %c0_2] : memref<1024x128xbf16, #tpu.memory_space<vmem>>, vector<1024x128xbf16>
    %cst = arith.constant dense<0.000000e+00> : vector<256x128xf32>
    %2 = tpu.matmul %0, %1, %cst {dimension_numbers = #tpu.dot_dimension_numbers<[1], [0], [0], [1], [0, 0, 1, 1], [], []>} : vector<256x1024xbf16>, vector<1024x128xbf16>, vector<256x128xf32> -> vector<256x128xf32>
    %c0_3 = arith.constant 0 : index
    %c0_4 = arith.constant 0 : index
    %3 = vector.load %arg3[%c0_3, %c0_4] : memref<1x128xf32, #tpu.memory_space<vmem>>, vector<1x128xf32>
    %4 = vector.broadcast %3 : vector<1x128xf32> to vector<256x128xf32>
    %5 = arith.mulf %2, %4 : vector<256x128xf32>
    %c0_5 = arith.constant 0 : index
    %c0_6 = arith.constant 0 : index
    %6 = vector.load %arg4[%c0_5, %c0_6] : memref<1x128xf32, #tpu.memory_space<vmem>>, vector<1x128xf32>
    %7 = vector.broadcast %6 : vector<1x128xf32> to vector<256x128xf32>
    %8 = arith.addf %5, %7 : vector<256x128xf32>
    %cst_7 = arith.constant 0.000000e+00 : f32
    %9 = vector.broadcast %cst_7 : f32 to vector<256x128xf32>
    %10 = arith.maximumf %8, %9 : vector<256x128xf32>
    %c0_8 = arith.constant 0 : index
    %c0_9 = arith.constant 0 : index
    %11 = vector.load %arg5[%c0_8, %c0_9] : memref<256x128xf32, #tpu.memory_space<vmem>>, vector<256x128xf32>
    tpu.vector_store %arg5[%c0_8, %c0_9], %10 {strides = array<i32>} : memref<256x128xf32, #tpu.memory_space<vmem>>, vector<256x128xf32>,
    return
  }
  func.func @transform_0(%arg0: i32) -> (i32, i32) {
    %c0_i32 = arith.constant 0 : i32
    %c0_i32_0 = arith.constant 0 : i32
    return %arg0, %c0_i32 : i32, i32
  }
  func.func @transform_1(%arg0: i32) -> (i32, i32) {
    %c0_i32 = arith.constant 0 : i32
    %c0_i32_0 = arith.constant 0 : i32
    %c0_i32_1 = arith.constant 0 : i32
    return %c0_i32, %c0_i32_0 : i32, i32
  }
  func.func @transform_2(%arg0: i32) -> (i32, i32) {
    %c0_i32 = arith.constant 0 : i32
    %c0_i32_0 = arith.constant 0 : i32
    %c0_i32_1 = arith.constant 0 : i32
    return %c0_i32, %c0_i32_0 : i32, i32
  }
  func.func @transform_3(%arg0: i32) -> (i32, i32) {
    %c0_i32 = arith.constant 0 : i32
    %c0_i32_0 = arith.constant 0 : i32
    %c0_i32_1 = arith.constant 0 : i32
    return %c0_i32, %c0_i32_0 : i32, i32
  }
  func.func @transform_4(%arg0: i32) -> (i32, i32) {
    %c0_i32 = arith.constant 0 : i32
    %c0_i32_0 = arith.constant 0 : i32
    return %arg0, %c0_i32 : i32, i32
  }
}

module attributes {stable_mosaic.version = 11 : i64} {
  func.func @_max_taps_kernel(%arg0: memref<4x128x128xf32, #tpu.memory_space<vmem>>, %arg1: memref<128x128xf32, #tpu.memory_space<vmem>>) attributes {dimension_semantics = [], scalar_prefetch = 0 : i64, scratch_operands = 0 : i64, tpu.core_type = #tpu.core_type<tc>} {
    %c0 = arith.constant 0 : index
    %c0_0 = arith.constant 0 : index
    %c0_1 = arith.constant 0 : index
    %0 = vector.load %arg0[%c0, %c0_0, %c0_1] : memref<4x128x128xf32, #tpu.memory_space<vmem>>, vector<4x128x128xf32>
    %cst = arith.constant dense<0xFF800000> : vector<128x128xf32>
    %1 = vector.multi_reduction <maximumf>, %0, %cst [0] : vector<4x128x128xf32> to vector<128x128xf32>
    %c0_2 = arith.constant 0 : index
    %c0_3 = arith.constant 0 : index
    %2 = vector.load %arg1[%c0_2, %c0_3] : memref<128x128xf32, #tpu.memory_space<vmem>>, vector<128x128xf32>
    tpu.vector_store %arg1[%c0_2, %c0_3], %1 {strides = array<i32>} : memref<128x128xf32, #tpu.memory_space<vmem>>, vector<128x128xf32>,
    return
  }
}

module attributes {stable_mosaic.version = 11 : i64} {
  func.func @_mm_affine_kernel(%arg0: i32, %arg1: memref<16x10240xbf16, #tpu.memory_space<vmem>>, %arg2: memref<10240x128xbf16, #tpu.memory_space<vmem>>, %arg3: memref<1x128xf32, #tpu.memory_space<vmem>>, %arg4: memref<1x128xf32, #tpu.memory_space<vmem>>, %arg5: memref<16x128xf32, #tpu.memory_space<vmem>>) attributes {dimension_semantics = [#tpu.dimension_semantics<parallel>], iteration_bounds = array<i64: 1>, scalar_prefetch = 0 : i64, scratch_operands = 0 : i64, tpu.core_type = #tpu.core_type<tc>, window_params = [{transform_indices = @transform_0, window_bounds = array<i64: 16, 10240>}, {pipeline_mode = #tpu.pipeline_mode<synchronous>, transform_indices = @transform_1, window_bounds = array<i64: 10240, 128>}, {pipeline_mode = #tpu.pipeline_mode<synchronous>, transform_indices = @transform_2, window_bounds = array<i64: 1, 128>}, {pipeline_mode = #tpu.pipeline_mode<synchronous>, transform_indices = @transform_3, window_bounds = array<i64: 1, 128>}, {transform_indices = @transform_4, window_bounds = array<i64: 16, 128>}]} {
    %c0 = arith.constant 0 : index
    %c0_0 = arith.constant 0 : index
    %0 = vector.load %arg1[%c0, %c0_0] : memref<16x10240xbf16, #tpu.memory_space<vmem>>, vector<16x10240xbf16>
    %c0_1 = arith.constant 0 : index
    %c0_2 = arith.constant 0 : index
    %1 = vector.load %arg2[%c0_1, %c0_2] : memref<10240x128xbf16, #tpu.memory_space<vmem>>, vector<10240x128xbf16>
    %cst = arith.constant dense<0.000000e+00> : vector<16x128xf32>
    %2 = tpu.matmul %0, %1, %cst {dimension_numbers = #tpu.dot_dimension_numbers<[1], [0], [0], [1], [0, 0, 1, 1], [], []>} : vector<16x10240xbf16>, vector<10240x128xbf16>, vector<16x128xf32> -> vector<16x128xf32>
    %c0_3 = arith.constant 0 : index
    %c0_4 = arith.constant 0 : index
    %3 = vector.load %arg3[%c0_3, %c0_4] : memref<1x128xf32, #tpu.memory_space<vmem>>, vector<1x128xf32>
    %4 = vector.broadcast %3 : vector<1x128xf32> to vector<16x128xf32>
    %5 = arith.mulf %2, %4 : vector<16x128xf32>
    %c0_5 = arith.constant 0 : index
    %c0_6 = arith.constant 0 : index
    %6 = vector.load %arg4[%c0_5, %c0_6] : memref<1x128xf32, #tpu.memory_space<vmem>>, vector<1x128xf32>
    %7 = vector.broadcast %6 : vector<1x128xf32> to vector<16x128xf32>
    %8 = arith.addf %5, %7 : vector<16x128xf32>
    %c0_7 = arith.constant 0 : index
    %c0_8 = arith.constant 0 : index
    %9 = vector.load %arg5[%c0_7, %c0_8] : memref<16x128xf32, #tpu.memory_space<vmem>>, vector<16x128xf32>
    tpu.vector_store %arg5[%c0_7, %c0_8], %8 {strides = array<i32>} : memref<16x128xf32, #tpu.memory_space<vmem>>, vector<16x128xf32>,
    return
  }
  func.func @transform_0(%arg0: i32) -> (i32, i32) {
    %c0_i32 = arith.constant 0 : i32
    %c0_i32_0 = arith.constant 0 : i32
    return %arg0, %c0_i32 : i32, i32
  }
  func.func @transform_1(%arg0: i32) -> (i32, i32) {
    %c0_i32 = arith.constant 0 : i32
    %c0_i32_0 = arith.constant 0 : i32
    %c0_i32_1 = arith.constant 0 : i32
    return %c0_i32, %c0_i32_0 : i32, i32
  }
  func.func @transform_2(%arg0: i32) -> (i32, i32) {
    %c0_i32 = arith.constant 0 : i32
    %c0_i32_0 = arith.constant 0 : i32
    %c0_i32_1 = arith.constant 0 : i32
    return %c0_i32, %c0_i32_0 : i32, i32
  }
  func.func @transform_3(%arg0: i32) -> (i32, i32) {
    %c0_i32 = arith.constant 0 : i32
    %c0_i32_0 = arith.constant 0 : i32
    %c0_i32_1 = arith.constant 0 : i32
    return %c0_i32, %c0_i32_0 : i32, i32
  }
  func.func @transform_4(%arg0: i32) -> (i32, i32) {
    %c0_i32 = arith.constant 0 : i32
    %c0_i32_0 = arith.constant 0 : i32
    return %arg0, %c0_i32 : i32, i32
  }
}

</mosaic_0001>

<llo_original>
// kernel: forward.17
$region0: #{forward.17}
  #allocation0 [shape = 'u32[]', space=smem, size = 0x4, offset = 0x4, fixed_abs, tag = 'smem constant byte address 0x4 - core index']
  #allocation1 [shape = 'u32[144,128]{1,0:T(1,128)}', space=vmem, size = 0x12000, scoped, tag = 'internal scratch']
  %s0 = inlined_call_operand.vmem [shape: f32[4,62,128], index: 0, kind: input, shape index: {}]
  %s1 = inlined_call_operand.vmem [shape: f32[62,128], index: 1, kind: output, shape index: {}]
  %s2 = sld [smem:[#allocation0]]
  $region14: #{forward.17} parent=0
    _
  %s4 = ssub.s32 1, %s2
  %s5 = scalar_select 0, %s4, %s2
  // Predicated region
  $region2: #{forward.17} parent=0 // pred_check
    _
  $region3: #{forward.17} parent=0 // pred_check_branch
    %7 = sbr.rel (0) target = $region5
  $region4: #{forward.17} parent=0 // pred_region
    _
  $region5: #{forward.17} parent=0 // pred_fallthru
    _
  %v8 = vld [vmem:[%s0] sm:$0xff]
  %v9 = vld [vmem:[%s0 + $0x8] sm:$0xff]
  %v10 = vld [vmem:[%s0 + $0x10] sm:$0xff]
  %v11 = vld [vmem:[%s0 + $0x18] sm:$0xff]
  %v12 = vld [vmem:[%s0 + $0x20] sm:$0xff]
  %v13 = vld [vmem:[%s0 + $0x28] sm:$0xff]
  %v14 = vld [vmem:[%s0 + $0x30] sm:$0xff]
  %v15 = vld [vmem:[%s0 + $0x38] sm:$0x3f]
  %v16 = vld [vmem:[%s0 + $0x40] sm:$0xff]
  %v17 = vld [vmem:[%s0 + $0x48] sm:$0xff]
  %v18 = vld [vmem:[%s0 + $0x50] sm:$0xff]
  %v19 = vld [vmem:[%s0 + $0x58] sm:$0xff]
  %v20 = vld [vmem:[%s0 + $0x60] sm:$0xff]
  %v21 = vld [vmem:[%s0 + $0x68] sm:$0xff]
  %v22 = vld [vmem:[%s0 + $0x70] sm:$0xff]
  %v23 = vld [vmem:[%s0 + $0x78] sm:$0x3f]
  %v24 = vld [vmem:[%s0 + $0x80] sm:$0xff]
  %v25 = vld [vmem:[%s0 + $0x88] sm:$0xff]
  %v26 = vld [vmem:[%s0 + $0x90] sm:$0xff]
  %v27 = vld [vmem:[%s0 + $0x98] sm:$0xff]
  %v28 = vld [vmem:[%s0 + $0xa0] sm:$0xff]
  %v29 = vld [vmem:[%s0 + $0xa8] sm:$0xff]
  %v30 = vld [vmem:[%s0 + $0xb0] sm:$0xff]
  %v31 = vld [vmem:[%s0 + $0xb8] sm:$0x3f]
  %v32 = vld [vmem:[%s0 + $0xc0] sm:$0xff]
  %v33 = vld [vmem:[%s0 + $0xc8] sm:$0xff]
  %v34 = vld [vmem:[%s0 + $0xd0] sm:$0xff]
  %v35 = vld [vmem:[%s0 + $0xd8] sm:$0xff]
  %v36 = vld [vmem:[%s0 + $0xe0] sm:$0xff]
  %v37 = vld [vmem:[%s0 + $0xe8] sm:$0xff]
  %v38 = vld [vmem:[%s0 + $0xf0] sm:$0xff]
  %v39 = vld [vmem:[%s0 + $0xf8] sm:$0x3f]
  %v40 = vmax.f32 %v8, %v16
  %v41 = vmax.f32 %v40, %v24
  %v42 = vmax.f32 %v41, %v32
  %v43 = vmax.f32 %v9, %v17
  %v44 = vmax.f32 %v43, %v25
  %v45 = vmax.f32 %v44, %v33
  %v46 = vmax.f32 %v10, %v18
  %v47 = vmax.f32 %v46, %v26
  %v48 = vmax.f32 %v47, %v34
  %v49 = vmax.f32 %v11, %v19
  %v50 = vmax.f32 %v49, %v27
  %v51 = vmax.f32 %v50, %v35
  %v52 = vmax.f32 %v12, %v20
  %v53 = vmax.f32 %v52, %v28
  %v54 = vmax.f32 %v53, %v36
  %v55 = vmax.f32 %v13, %v21
  %v56 = vmax.f32 %v55, %v29
  %v57 = vmax.f32 %v56, %v37
  %v58 = vmax.f32 %v14, %v22
  %v59 = vmax.f32 %v58, %v30
  %v60 = vmax.f32 %v59, %v38
  %vm61 = vcmask 1045504
  %v62 = vsel %vm61, %v15, -inf
  %v63 = vsel %vm61, %v23, -inf
  %v64 = vmax.f32 %v62, %v63
  %v65 = vsel %vm61, %v31, -inf
  %v66 = vmax.f32 %v64, %v65
  %v67 = vsel %vm61, %v39, -inf
  %v68 = vmax.f32 %v66, %v67
  %69 = vst [vmem:[%s1] sm:$0xff] %v42
  %70 = vst [vmem:[%s1 + $0x8] sm:$0xff] %v45
  %71 = vst [vmem:[%s1 + $0x10] sm:$0xff] %v48
  %72 = vst [vmem:[%s1 + $0x18] sm:$0xff] %v51
  %73 = vst [vmem:[%s1 + $0x20] sm:$0xff] %v54
  %74 = vst [vmem:[%s1 + $0x28] sm:$0xff] %v57
  %75 = vst [vmem:[%s1 + $0x30] sm:$0xff] %v60
  %76 = vst [vmem:[%s1 + $0x38] sm:$0x3f] %v68
  // Predicated region
  $region6: #{forward.17} parent=0 // pred_check
    _
  $region7: #{forward.17} parent=0 // pred_check_branch
    %78 = sbr.rel (0) target = $region9
  $region8: #{forward.17} parent=0 // pred_region
    _
  $region9: #{forward.17} parent=0 // pred_fallthru
    _
  // Predicated region
  $region10: #{forward.17} parent=0 // pred_check
    _
  $region11: #{forward.17} parent=0 // pred_check_branch
    %80 = sbr.rel (0) target = $region13
  $region12: #{forward.17} parent=0 // pred_region
    _
  $region13: #{forward.17} parent=0 // pred_fallthru
    _

// kernel: forward.16
$region0: #{forward.16}
  #allocation0 [shape = 'u32[]', space=smem, size = 0x4, offset = 0x4, fixed_abs, tag = 'smem constant byte address 0x4 - core index']
  #allocation1 [shape = 'u32[144,128]{1,0:T(1,128)}', space=vmem, size = 0x12000, scoped, tag = 'internal scratch']
  %s0 = inlined_call_operand.vmem [shape: bf16[128,896], index: 0, kind: input, shape index: {}]
  %s1 = inlined_call_operand.vmem [shape: bf16[896,128], index: 1, kind: input, shape index: {}]
  %s2 = inlined_call_operand.vmem [shape: f32[1,128], index: 2, kind: input, shape index: {}]
  %s3 = inlined_call_operand.vmem [shape: f32[1,128], index: 3, kind: input, shape index: {}]
  %s4 = inlined_call_operand.vmem [shape: f32[128,128], index: 4, kind: output, shape index: {}]
  %s5 = sld [smem:[#allocation0]]
  $region26: #{forward.16} parent=0
    _
  %s7 = ssub.s32 1, %s5
  %s8 = scalar_select 0, %s7, %s5
  // Predicated region
  $region2: #{forward.16} parent=0 // pred_check
    _
  $region3: #{forward.16} parent=0 // pred_check_branch
    %10 = sbr.rel (0) target = $region5
  $region4: #{forward.16} parent=0 // pred_region
    _
  $region5: #{forward.16} parent=0 // pred_fallthru
    _
  // Predicated region
  $region6: #{forward.16} parent=0 // pred_check
    _
  $region7: #{forward.16} parent=0 // pred_check_branch
    %12 = sbr.rel (0) target = $region9
  $region8: #{forward.16} parent=0 // pred_region
    _
  $region9: #{forward.16} parent=0 // pred_fallthru
    _
  // Predicated region
  $region10: #{forward.16} parent=0 // pred_check
    _
  $region11: #{forward.16} parent=0 // pred_check_branch
    %14 = sbr.rel (0) target = $region13
  $region12: #{forward.16} parent=0 // pred_region
    _
  $region13: #{forward.16} parent=0 // pred_fallthru
    _
  // Predicated region
  $region14: #{forward.16} parent=0 // pred_check
    _
  $region15: #{forward.16} parent=0 // pred_check_branch
    %16 = sbr.rel (0) target = $region17
  $region16: #{forward.16} parent=0 // pred_region
    _
  $region17: #{forward.16} parent=0 // pred_fallthru
    _
  %v18 = vld [vmem:[%s0] sm:$0xff]
  %v19 = vld [vmem:[%s0 + $0x8] sm:$0xff]
  %v20 = vld [vmem:[%s0 + $0x10] sm:$0xff]
  %v21 = vld [vmem:[%s0 + $0x18] sm:$0xf]
  %v22 = vld [vmem:[%s0 + $0x1c] sm:$0xff]
  %v23 = vld [vmem:[%s0 + $0x24] sm:$0xff]
  %v24 = vld [vmem:[%s0 + $0x2c] sm:$0xff]
  %v25 = vld [vmem:[%s0 + $0x34] sm:$0xf]
  %v26 = vld [vmem:[%s0 + $0x38] sm:$0xff]
  %v27 = vld [vmem:[%s0 + $0x40] sm:$0xff]
  %v28 = vld [vmem:[%s0 + $0x48] sm:$0xff]
  %v29 = vld [vmem:[%s0 + $0x50] sm:$0xf]
  %v30 = vld [vmem:[%s0 + $0x54] sm:$0xff]
  %v31 = vld [vmem:[%s0 + $0x5c] sm:$0xff]
  %v32 = vld [vmem:[%s0 + $0x64] sm:$0xff]
  %v33 = vld [vmem:[%s0 + $0x6c] sm:$0xf]
  %v34 = vld [vmem:[%s0 + $0x70] sm:$0xff]
  %v35 = vld [vmem:[%s0 + $0x78] sm:$0xff]
  %v36 = vld [vmem:[%s0 + $0x80] sm:$0xff]
  %v37 = vld [vmem:[%s0 + $0x88] sm:$0xf]
  %v38 = vld [vmem:[%s0 + $0x8c] sm:$0xff]
  %v39 = vld [vmem:[%s0 + $0x94] sm:$0xff]
  %v40 = vld [vmem:[%s0 + $0x9c] sm:$0xff]
  %v41 = vld [vmem:[%s0 + $0xa4] sm:$0xf]
  %v42 = vld [vmem:[%s0 + $0xa8] sm:$0xff]
  %v43 = vld [vmem:[%s0 + $0xb0] sm:$0xff]
  %v44 = vld [vmem:[%s0 + $0xb8] sm:$0xff]
  %v45 = vld [vmem:[%s0 + $0xc0] sm:$0xf]
  %v46 = vld [vmem:[%s0 + $0xc4] sm:$0xff]
  %v47 = vld [vmem:[%s0 + $0xcc] sm:$0xff]
  %v48 = vld [vmem:[%s0 + $0xd4] sm:$0xff]
  %v49 = vld [vmem:[%s0 + $0xdc] sm:$0xf]
  %v50 = vld [vmem:[%s0 + $0xe0] sm:$0xff]
  %v51 = vld [vmem:[%s0 + $0xe8] sm:$0xff]
  %v52 = vld [vmem:[%s0 + $0xf0] sm:$0xff]
  %v53 = vld [vmem:[%s0 + $0xf8] sm:$0xf]
  %v54 = vld [vmem:[%s0 + $0xfc] sm:$0xff]
  %v55 = vld [vmem:[%s0 + $0x104] sm:$0xff]
  %v56 = vld [vmem:[%s0 + $0x10c] sm:$0xff]
  %v57 = vld [vmem:[%s0 + $0x114] sm:$0xf]
  %v58 = vld [vmem:[%s0 + $0x118] sm:$0xff]
  %v59 = vld [vmem:[%s0 + $0x120] sm:$0xff]
  %v60 = vld [vmem:[%s0 + $0x128] sm:$0xff]
  %v61 = vld [vmem:[%s0 + $0x130] sm:$0xf]
  %v62 = vld [vmem:[%s0 + $0x134] sm:$0xff]
  %v63 = vld [vmem:[%s0 + $0x13c] sm:$0xff]
  %v64 = vld [vmem:[%s0 + $0x144] sm:$0xff]
  %v65 = vld [vmem:[%s0 + $0x14c] sm:$0xf]
  %v66 = vld [vmem:[%s0 + $0x150] sm:$0xff]
  %v67 = vld [vmem:[%s0 + $0x158] sm:$0xff]
  %v68 = vld [vmem:[%s0 + $0x160] sm:$0xff]
  %v69 = vld [vmem:[%s0 + $0x168] sm:$0xf]
  %v70 = vld [vmem:[%s0 + $0x16c] sm:$0xff]
  %v71 = vld [vmem:[%s0 + $0x174] sm:$0xff]
  %v72 = vld [vmem:[%s0 + $0x17c] sm:$0xff]
  %v73 = vld [vmem:[%s0 + $0x184] sm:$0xf]
  %v74 = vld [vmem:[%s0 + $0x188] sm:$0xff]
  %v75 = vld [vmem:[%s0 + $0x190] sm:$0xff]
  %v76 = vld [vmem:[%s0 + $0x198] sm:$0xff]
  %v77 = vld [vmem:[%s0 + $0x1a0] sm:$0xf]
  %v78 = vld [vmem:[%s0 + $0x1a4] sm:$0xff]
  %v79 = vld [vmem:[%s0 + $0x1ac] sm:$0xff]
  %v80 = vld [vmem:[%s0 + $0x1b4] sm:$0xff]
  %v81 = vld [vmem:[%s0 + $0x1bc] sm:$0xf]
  %v82 = vld [vmem:[%s1] sm:$0xf]
  %v83 = vld [vmem:[%s1 + $0x4] sm:$0xf]
  %v84 = vld [vmem:[%s1 + $0x8] sm:$0xf]
  %v85 = vld [vmem:[%s1 + $0xc] sm:$0xf]
  %v86 = vld [vmem:[%s1 + $0x10] sm:$0xf]
  %v87 = vld [vmem:[%s1 + $0x14] sm:$0xf]
  %v88 = vld [vmem:[%s1 + $0x18] sm:$0xf]
  %v89 = vld [vmem:[%s1 + $0x1c] sm:$0xf]
  %v90 = vld [vmem:[%s1 + $0x20] sm:$0xf]
  %v91 = vld [vmem:[%s1 + $0x24] sm:$0xf]
  %v92 = vld [vmem:[%s1 + $0x28] sm:$0xf]
  %v93 = vld [vmem:[%s1 + $0x2c] sm:$0xf]
  %v94 = vld [vmem:[%s1 + $0x30] sm:$0xf]
  %v95 = vld [vmem:[%s1 + $0x34] sm:$0xf]
  %v96 = vld [vmem:[%s1 + $0x38] sm:$0xf]
  %v97 = vld [vmem:[%s1 + $0x3c] sm:$0xf]
  %v98 = vld [vmem:[%s1 + $0x40] sm:$0xf]
  %v99 = vld [vmem:[%s1 + $0x44] sm:$0xf]
  %v100 = vld [vmem:[%s1 + $0x48] sm:$0xf]
  %v101 = vld [vmem:[%s1 + $0x4c] sm:$0xf]
  %v102 = vld [vmem:[%s1 + $0x50] sm:$0xf]
  %v103 = vld [vmem:[%s1 + $0x54] sm:$0xf]
  %v104 = vld [vmem:[%s1 + $0x58] sm:$0xf]
  %v105 = vld [vmem:[%s1 + $0x5c] sm:$0xf]
  %v106 = vld [vmem:[%s1 + $0x60] sm:$0xf]
  %v107 = vld [vmem:[%s1 + $0x64] sm:$0xf]
  %v108 = vld [vmem:[%s1 + $0x68] sm:$0xf]
  %v109 = vld [vmem:[%s1 + $0x6c] sm:$0xf]
  %v110 = vld [vmem:[%s1 + $0x70] sm:$0xf]
  %v111 = vld [vmem:[%s1 + $0x74] sm:$0xf]
  %v112 = vld [vmem:[%s1 + $0x78] sm:$0xf]
  %v113 = vld [vmem:[%s1 + $0x7c] sm:$0xf]
  %v114 = vld [vmem:[%s1 + $0x80] sm:$0xf]
  %v115 = vld [vmem:[%s1 + $0x84] sm:$0xf]
  %v116 = vld [vmem:[%s1 + $0x88] sm:$0xf]
  %v117 = vld [vmem:[%s1 + $0x8c] sm:$0xf]
  %v118 = vld [vmem:[%s1 + $0x90] sm:$0xf]
  %v119 = vld [vmem:[%s1 + $0x94] sm:$0xf]
  %v120 = vld [vmem:[%s1 + $0x98] sm:$0xf]
  %v121 = vld [vmem:[%s1 + $0x9c] sm:$0xf]
  %v122 = vld [vmem:[%s1 + $0xa0] sm:$0xf]
  %v123 = vld [vmem:[%s1 + $0xa4] sm:$0xf]
  %v124 = vld [vmem:[%s1 + $0xa8] sm:$0xf]
  %v125 = vld [vmem:[%s1 + $0xac] sm:$0xf]
  %v126 = vld [vmem:[%s1 + $0xb0] sm:$0xf]
  %v127 = vld [vmem:[%s1 + $0xb4] sm:$0xf]
  %v128 = vld [vmem:[%s1 + $0xb8] sm:$0xf]
  %v129 = vld [vmem:[%s1 + $0xbc] sm:$0xf]
  %v130 = vld [vmem:[%s1 + $0xc0] sm:$0xf]
  %v131 = vld [vmem:[%s1 + $0xc4] sm:$0xf]
  %v132 = vld [vmem:[%s1 + $0xc8] sm:$0xf]
  %v133 = vld [vmem:[%s1 + $0xcc] sm:$0xf]
  %v134 = vld [vmem:[%s1 + $0xd0] sm:$0xf]
  %v135 = vld [vmem:[%s1 + $0xd4] sm:$0xf]
  %v136 = vld [vmem:[%s1 + $0xd8] sm:$0xf]
  %v137 = vld [vmem:[%s1 + $0xdc] sm:$0xf]
  %v138 = vld [vmem:[%s1 + $0xe0] sm:$0xf]
  %v139 = vld [vmem:[%s1 + $0xe4] sm:$0xf]
  %v140 = vld [vmem:[%s1 + $0xe8] sm:$0xf]
  %v141 = vld [vmem:[%s1 + $0xec] sm:$0xf]
  %v142 = vld [vmem:[%s1 + $0xf0] sm:$0xf]
  %v143 = vld [vmem:[%s1 + $0xf4] sm:$0xf]
  %v144 = vld [vmem:[%s1 + $0xf8] sm:$0xf]
  %v145 = vld [vmem:[%s1 + $0xfc] sm:$0xf]
  %v146 = vld [vmem:[%s1 + $0x100] sm:$0xf]
  %v147 = vld [vmem:[%s1 + $0x104] sm:$0xf]
  %v148 = vld [vmem:[%s1 + $0x108] sm:$0xf]
  %v149 = vld [vmem:[%s1 + $0x10c] sm:$0xf]
  %v150 = vld [vmem:[%s1 + $0x110] sm:$0xf]
  %v151 = vld [vmem:[%s1 + $0x114] sm:$0xf]
  %v152 = vld [vmem:[%s1 + $0x118] sm:$0xf]
  %v153 = vld [vmem:[%s1 + $0x11c] sm:$0xf]
  %v154 = vld [vmem:[%s1 + $0x120] sm:$0xf]
  %v155 = vld [vmem:[%s1 + $0x124] sm:$0xf]
  %v156 = vld [vmem:[%s1 + $0x128] sm:$0xf]
  %v157 = vld [vmem:[%s1 + $0x12c] sm:$0xf]
  %v158 = vld [vmem:[%s1 + $0x130] sm:$0xf]
  %v159 = vld [vmem:[%s1 + $0x134] sm:$0xf]
  %v160 = vld [vmem:[%s1 + $0x138] sm:$0xf]
  %v161 = vld [vmem:[%s1 + $0x13c] sm:$0xf]
  %v162 = vld [vmem:[%s1 + $0x140] sm:$0xf]
  %v163 = vld [vmem:[%s1 + $0x144] sm:$0xf]
  %v164 = vld [vmem:[%s1 + $0x148] sm:$0xf]
  %v165 = vld [vmem:[%s1 + $0x14c] sm:$0xf]
  %v166 = vld [vmem:[%s1 + $0x150] sm:$0xf]
  %v167 = vld [vmem:[%s1 + $0x154] sm:$0xf]
  %v168 = vld [vmem:[%s1 + $0x158] sm:$0xf]
  %v169 = vld [vmem:[%s1 + $0x15c] sm:$0xf]
  %v170 = vld [vmem:[%s1 + $0x160] sm:$0xf]
  %v171 = vld [vmem:[%s1 + $0x164] sm:$0xf]
  %v172 = vld [vmem:[%s1 + $0x168] sm:$0xf]
  %v173 = vld [vmem:[%s1 + $0x16c] sm:$0xf]
  %v174 = vld [vmem:[%s1 + $0x170] sm:$0xf]
  %v175 = vld [vmem:[%s1 + $0x174] sm:$0xf]
  %v176 = vld [vmem:[%s1 + $0x178] sm:$0xf]
  %v177 = vld [vmem:[%s1 + $0x17c] sm:$0xf]
  %v178 = vld [vmem:[%s1 + $0x180] sm:$0xf]
  %v179 = vld [vmem:[%s1 + $0x184] sm:$0xf]
  %v180 = vld [vmem:[%s1 + $0x188] sm:$0xf]
  %v181 = vld [vmem:[%s1 + $0x18c] sm:$0xf]
  %v182 = vld [vmem:[%s1 + $0x190] sm:$0xf]
  %v183 = vld [vmem:[%s1 + $0x194] sm:$0xf]
  %v184 = vld [vmem:[%s1 + $0x198] sm:$0xf]
  %v185 = vld [vmem:[%s1 + $0x19c] sm:$0xf]
  %v186 = vld [vmem:[%s1 + $0x1a0] sm:$0xf]
  %v187 = vld [vmem:[%s1 + $0x1a4] sm:$0xf]
  %v188 = vld [vmem:[%s1 + $0x1a8] sm:$0xf]
  %v189 = vld [vmem:[%s1 + $0x1ac] sm:$0xf]
  %v190 = vld [vmem:[%s1 + $0x1b0] sm:$0xf]
  %v191 = vld [vmem:[%s1 + $0x1b4] sm:$0xf]
  %v192 = vld [vmem:[%s1 + $0x1b8] sm:$0xf]
  %v193 = vld [vmem:[%s1 + $0x1bc] sm:$0xf]
  %v258 = vunpack.c.l.b16 %v18
  %v259 = vunpack.c.h.b16 %v18
  %v260 = vunpack.c.l.b16 %v19
  %v261 = vunpack.c.h.b16 %v19
  %v262 = vunpack.c.l.b16 %v20
  %v263 = vunpack.c.h.b16 %v20
  %v264 = vunpack.c.l.b16 %v21
  %v265 = vunpack.c.l.b16 %v22
  %v266 = vunpack.c.h.b16 %v22
  %v267 = vunpack.c.l.b16 %v23
  %v268 = vunpack.c.h.b16 %v23
  %v269 = vunpack.c.l.b16 %v24
  %v270 = vunpack.c.h.b16 %v24
  %v271 = vunpack.c.l.b16 %v25
  %v272 = vunpack.c.l.b16 %v26
  %v273 = vunpack.c.h.b16 %v26
  %v274 = vunpack.c.l.b16 %v27
  %v275 = vunpack.c.h.b16 %v27
  %v276 = vunpack.c.l.b16 %v28
  %v277 = vunpack.c.h.b16 %v28
  %v278 = vunpack.c.l.b16 %v29
  %v279 = vunpack.c.l.b16 %v30
  %v280 = vunpack.c.h.b16 %v30
  %v281 = vunpack.c.l.b16 %v31
  %v282 = vunpack.c.h.b16 %v31
  %v283 = vunpack.c.l.b16 %v32
  %v284 = vunpack.c.h.b16 %v32
  %v285 = vunpack.c.l.b16 %v33
  %v286 = vunpack.c.l.b16 %v34
  %v287 = vunpack.c.h.b16 %v34
  %v288 = vunpack.c.l.b16 %v35
  %v289 = vunpack.c.h.b16 %v35
  %v290 = vunpack.c.l.b16 %v36
  %v291 = vunpack.c.h.b16 %v36
  %v292 = vunpack.c.l.b16 %v37
  %v293 = vunpack.c.l.b16 %v38
  %v294 = vunpack.c.h.b16 %v38
  %v295 = vunpack.c.l.b16 %v39
  %v296 = vunpack.c.h.b16 %v39
  %v297 = vunpack.c.l.b16 %v40
  %v298 = vunpack.c.h.b16 %v40
  %v299 = vunpack.c.l.b16 %v41
  %v300 = vunpack.c.l.b16 %v42
  %v301 = vunpack.c.h.b16 %v42
  %v302 = vunpack.c.l.b16 %v43
  %v303 = vunpack.c.h.b16 %v43
  %v304 = vunpack.c.l.b16 %v44
  %v305 = vunpack.c.h.b16 %v44
  %v306 = vunpack.c.l.b16 %v45
  %v307 = vunpack.c.l.b16 %v46
  %v308 = vunpack.c.h.b16 %v46
  %v309 = vunpack.c.l.b16 %v47
  %v310 = vunpack.c.h.b16 %v47
  %v311 = vunpack.c.l.b16 %v48
  %v312 = vunpack.c.h.b16 %v48
  %v313 = vunpack.c.l.b16 %v49
  %v314 = vunpack.c.l.b16 %v50
  %v315 = vunpack.c.h.b16 %v50
  %v316 = vunpack.c.l.b16 %v51
  %v317 = vunpack.c.h.b16 %v51
  %v318 = vunpack.c.l.b16 %v52
  %v319 = vunpack.c.h.b16 %v52
  %v320 = vunpack.c.l.b16 %v53
  %v321 = vunpack.c.l.b16 %v54
  %v322 = vunpack.c.h.b16 %v54
  %v323 = vunpack.c.l.b16 %v55
  %v324 = vunpack.c.h.b16 %v55
  %v325 = vunpack.c.l.b16 %v56
  %v326 = vunpack.c.h.b16 %v56
  %v327 = vunpack.c.l.b16 %v57
  %v328 = vunpack.c.l.b16 %v58
  %v329 = vunpack.c.h.b16 %v58
  %v330 = vunpack.c.l.b16 %v59
  %v331 = vunpack.c.h.b16 %v59
  %v332 = vunpack.c.l.b16 %v60
  %v333 = vunpack.c.h.b16 %v60
  %v334 = vunpack.c.l.b16 %v61
  %v335 = vunpack.c.l.b16 %v62
  %v336 = vunpack.c.h.b16 %v62
  %v337 = vunpack.c.l.b16 %v63
  %v338 = vunpack.c.h.b16 %v63
  %v339 = vunpack.c.l.b16 %v64
  %v340 = vunpack.c.h.b16 %v64
  %v341 = vunpack.c.l.b16 %v65
  %v342 = vunpack.c.l.b16 %v66
  %v343 = vunpack.c.h.b16 %v66
  %v344 = vunpack.c.l.b16 %v67
  %v345 = vunpack.c.h.b16 %v67
  %v346 = vunpack.c.l.b16 %v68
  %v347 = vunpack.c.h.b16 %v68
  %v348 = vunpack.c.l.b16 %v69
  %v349 = vunpack.c.l.b16 %v70
  %v350 = vunpack.c.h.b16 %v70
  %v351 = vunpack.c.l.b16 %v71
  %v352 = vunpack.c.h.b16 %v71
  %v353 = vunpack.c.l.b16 %v72
  %v354 = vunpack.c.h.b16 %v72
  %v355 = vunpack.c.l.b16 %v73
  %v356 = vunpack.c.l.b16 %v74
  %v357 = vunpack.c.h.b16 %v74
  %v358 = vunpack.c.l.b16 %v75
  %v359 = vunpack.c.h.b16 %v75
  %v360 = vunpack.c.l.b16 %v76
  %v361 = vunpack.c.h.b16 %v76
  %v362 = vunpack.c.l.b16 %v77
  %v363 = vunpack.c.l.b16 %v78
  %v364 = vunpack.c.h.b16 %v78
  %v365 = vunpack.c.l.b16 %v79
  %v366 = vunpack.c.h.b16 %v79
  %v367 = vunpack.c.l.b16 %v80
  %v368 = vunpack.c.h.b16 %v80
  %v369 = vunpack.c.l.b16 %v81
  %v370 = vpack.c.b16 %v265, %v258
  %v371 = vpack.c.b16 %v266, %v259
  %v372 = vpack.c.b16 %v267, %v260
  %v373 = vpack.c.b16 %v268, %v261
  %v374 = vpack.c.b16 %v269, %v262
  %v375 = vpack.c.b16 %v270, %v263
  %v376 = vpack.c.b16 %v271, %v264
  %v377 = vpack.c.b16 %v279, %v272
  %v378 = vpack.c.b16 %v280, %v273
  %v379 = vpack.c.b16 %v281, %v274
  %v380 = vpack.c.b16 %v282, %v275
  %v381 = vpack.c.b16 %v283, %v276
  %v382 = vpack.c.b16 %v284, %v277
  %v383 = vpack.c.b16 %v285, %v278
  %v384 = vpack.c.b16 %v293, %v286
  %v385 = vpack.c.b16 %v294, %v287
  %v386 = vpack.c.b16 %v295, %v288
  %v387 = vpack.c.b16 %v296, %v289
  %v388 = vpack.c.b16 %v297, %v290
  %v389 = vpack.c.b16 %v298, %v291
  %v390 = vpack.c.b16 %v299, %v292
  %v391 = vpack.c.b16 %v307, %v300
  %v392 = vpack.c.b16 %v308, %v301
  %v393 = vpack.c.b16 %v309, %v302
  %v394 = vpack.c.b16 %v310, %v303
  %v395 = vpack.c.b16 %v311, %v304
  %v396 = vpack.c.b16 %v312, %v305
  %v397 = vpack.c.b16 %v313, %v306
  %v398 = vpack.c.b16 %v321, %v314
  %v399 = vpack.c.b16 %v322, %v315
  %v400 = vpack.c.b16 %v323, %v316
  %v401 = vpack.c.b16 %v324, %v317
  %v402 = vpack.c.b16 %v325, %v318
  %v403 = vpack.c.b16 %v326, %v319
  %v404 = vpack.c.b16 %v327, %v320
  %v405 = vpack.c.b16 %v335, %v328
  %v406 = vpack.c.b16 %v336, %v329
  %v407 = vpack.c.b16 %v337, %v330
  %v408 = vpack.c.b16 %v338, %v331
  %v409 = vpack.c.b16 %v339, %v332
  %v410 = vpack.c.b16 %v340, %v333
  %v411 = vpack.c.b16 %v341, %v334
  %v412 = vpack.c.b16 %v349, %v342
  %v413 = vpack.c.b16 %v350, %v343
  %v414 = vpack.c.b16 %v351, %v344
  %v415 = vpack.c.b16 %v352, %v345
  %v416 = vpack.c.b16 %v353, %v346
  %v417 = vpack.c.b16 %v354, %v347
  %v418 = vpack.c.b16 %v355, %v348
  %v419 = vpack.c.b16 %v363, %v356
  %v420 = vpack.c.b16 %v364, %v357
  %v421 = vpack.c.b16 %v365, %v358
  %v422 = vpack.c.b16 %v366, %v359
  %v423 = vpack.c.b16 %v367, %v360
  %v424 = vpack.c.b16 %v368, %v361
  %v425 = vpack.c.b16 %v369, %v362
  %v594 = vunpack.c.l.b16 %v82
  %v595 = vunpack.c.l.b16 %v83
  %v596 = vunpack.c.l.b16 %v84
  %v597 = vunpack.c.l.b16 %v85
  %v598 = vunpack.c.l.b16 %v86
  %v599 = vunpack.c.l.b16 %v87
  %v600 = vunpack.c.l.b16 %v88
  %v601 = vunpack.c.l.b16 %v89
  %v602 = vunpack.c.l.b16 %v90
  %v603 = vunpack.c.l.b16 %v91
  %v604 = vunpack.c.l.b16 %v92
  %v605 = vunpack.c.l.b16 %v93
  %v606 = vunpack.c.l.b16 %v94
  %v607 = vunpack.c.l.b16 %v95
  %v608 = vunpack.c.l.b16 %v96
  %v609 = vunpack.c.l.b16 %v97
  %v610 = vunpack.c.l.b16 %v98
  %v611 = vunpack.c.l.b16 %v99
  %v612 = vunpack.c.l.b16 %v100
  %v613 = vunpack.c.l.b16 %v101
  %v614 = vunpack.c.l.b16 %v102
  %v615 = vunpack.c.l.b16 %v103
  %v616 = vunpack.c.l.b16 %v104
  %v617 = vunpack.c.l.b16 %v105
  %v618 = vunpack.c.l.b16 %v106
  %v619 = vunpack.c.l.b16 %v107
  %v620 = vunpack.c.l.b16 %v108
  %v621 = vunpack.c.l.b16 %v109
  %v622 = vunpack.c.l.b16 %v110
  %v623 = vunpack.c.l.b16 %v111
  %v624 = vunpack.c.l.b16 %v112
  %v625 = vunpack.c.l.b16 %v113
  %v626 = vunpack.c.l.b16 %v114
  %v627 = vunpack.c.l.b16 %v115
  %v628 = vunpack.c.l.b16 %v116
  %v629 = vunpack.c.l.b16 %v117
  %v630 = vunpack.c.l.b16 %v118
  %v631 = vunpack.c.l.b16 %v119
  %v632 = vunpack.c.l.b16 %v120
  %v633 = vunpack.c.l.b16 %v121
  %v634 = vunpack.c.l.b16 %v122
  %v635 = vunpack.c.l.b16 %v123
  %v636 = vunpack.c.l.b16 %v124
  %v637 = vunpack.c.l.b16 %v125
  %v638 = vunpack.c.l.b16 %v126
  %v639 = vunpack.c.l.b16 %v127
  %v640 = vunpack.c.l.b16 %v128
  %v641 = vunpack.c.l.b16 %v129
  %v642 = vunpack.c.l.b16 %v130
  %v643 = vunpack.c.l.b16 %v131
  %v644 = vunpack.c.l.b16 %v132
  %v645 = vunpack.c.l.b16 %v133
  %v646 = vunpack.c.l.b16 %v134
  %v647 = vunpack.c.l.b16 %v135
  %v648 = vunpack.c.l.b16 %v136
  %v649 = vunpack.c.l.b16 %v137
  %v650 = vunpack.c.l.b16 %v138
  %v651 = vunpack.c.l.b16 %v139
  %v652 = vunpack.c.l.b16 %v140
  %v653 = vunpack.c.l.b16 %v141
  %v654 = vunpack.c.l.b16 %v142
  %v655 = vunpack.c.l.b16 %v143
  %v656 = vunpack.c.l.b16 %v144
  %v657 = vunpack.c.l.b16 %v145
  %v658 = vunpack.c.l.b16 %v146
  %v659 = vunpack.c.l.b16 %v147
  %v660 = vunpack.c.l.b16 %v148
  %v661 = vunpack.c.l.b16 %v149
  %v662 = vunpack.c.l.b16 %v150
  %v663 = vunpack.c.l.b16 %v151
  %v664 = vunpack.c.l.b16 %v152
  %v665 = vunpack.c.l.b16 %v153
  %v666 = vunpack.c.l.b16 %v154
  %v667 = vunpack.c.l.b16 %v155
  %v668 = vunpack.c.l.b16 %v156
  %v669 = vunpack.c.l.b16 %v157
  %v670 = vunpack.c.l.b16 %v158
  %v671 = vunpack.c.l.b16 %v159
  %v672 = vunpack.c.l.b16 %v160
  %v673 = vunpack.c.l.b16 %v161
  %v674 = vunpack.c.l.b16 %v162
  %v675 = vunpack.c.l.b16 %v163
  %v676 = vunpack.c.l.b16 %v164
  %v677 = vunpack.c.l.b16 %v165
  %v678 = vunpack.c.l.b16 %v166
  %v679 = vunpack.c.l.b16 %v167
  %v680 = vunpack.c.l.b16 %v168
  %v681 = vunpack.c.l.b16 %v169
  %v682 = vunpack.c.l.b16 %v170
  %v683 = vunpack.c.l.b16 %v171
  %v684 = vunpack.c.l.b16 %v172
  %v685 = vunpack.c.l.b16 %v173
  %v686 = vunpack.c.l.b16 %v174
  %v687 = vunpack.c.l.b16 %v175
  %v688 = vunpack.c.l.b16 %v176
  %v689 = vunpack.c.l.b16 %v177
  %v690 = vunpack.c.l.b16 %v178
  %v691 = vunpack.c.l.b16 %v179
  %v692 = vunpack.c.l.b16 %v180
  %v693 = vunpack.c.l.b16 %v181
  %v694 = vunpack.c.l.b16 %v182
  %v695 = vunpack.c.l.b16 %v183
  %v696 = vunpack.c.l.b16 %v184
  %v697 = vunpack.c.l.b16 %v185
  %v698 = vunpack.c.l.b16 %v186
  %v699 = vunpack.c.l.b16 %v187
  %v700 = vunpack.c.l.b16 %v188
  %v701 = vunpack.c.l.b16 %v189
  %v702 = vunpack.c.l.b16 %v190
  %v703 = vunpack.c.l.b16 %v191
  %v704 = vunpack.c.l.b16 %v192
  %v705 = vunpack.c.l.b16 %v193
  %v706 = vpack.c.b16 %v595, %v594
  %v707 = vpack.c.b16 %v597, %v596
  %v708 = vpack.c.b16 %v599, %v598
  %v709 = vpack.c.b16 %v601, %v600
  %v710 = vpack.c.b16 %v603, %v602
  %v711 = vpack.c.b16 %v605, %v604
  %v712 = vpack.c.b16 %v607, %v606
  %v713 = vpack.c.b16 %v609, %v608
  %v714 = vpack.c.b16 %v611, %v610
  %v715 = vpack.c.b16 %v613, %v612
  %v716 = vpack.c.b16 %v615, %v614
  %v717 = vpack.c.b16 %v617, %v616
  %v718 = vpack.c.b16 %v619, %v618
  %v719 = vpack.c.b16 %v621, %v620
  %v720 = vpack.c.b16 %v623, %v622
  %v721 = vpack.c.b16 %v625, %v624
  %v722 = vpack.c.b16 %v627, %v626
  %v723 = vpack.c.b16 %v629, %v628
  %v724 = vpack.c.b16 %v631, %v630
  %v725 = vpack.c.b16 %v633, %v632
  %v726 = vpack.c.b16 %v635, %v634
  %v727 = vpack.c.b16 %v637, %v636
  %v728 = vpack.c.b16 %v639, %v638
  %v729 = vpack.c.b16 %v641, %v640
  %v730 = vpack.c.b16 %v643, %v642
  %v731 = vpack.c.b16 %v645, %v644
  %v732 = vpack.c.b16 %v647, %v646
  %v733 = vpack.c.b16 %v649, %v648
  %v734 = vpack.c.b16 %v651, %v650
  %v735 = vpack.c.b16 %v653, %v652
  %v736 = vpack.c.b16 %v655, %v654
  %v737 = vpack.c.b16 %v657, %v656
  %v738 = vpack.c.b16 %v659, %v658
  %v739 = vpack.c.b16 %v661, %v660
  %v740 = vpack.c.b16 %v663, %v662
  %v741 = vpack.c.b16 %v665, %v664
  %v742 = vpack.c.b16 %v667, %v666
  %v743 = vpack.c.b16 %v669, %v668
  %v744 = vpack.c.b16 %v671, %v670
  %v745 = vpack.c.b16 %v673, %v672
  %v746 = vpack.c.b16 %v675, %v674
  %v747 = vpack.c.b16 %v677, %v676
  %v748 = vpack.c.b16 %v679, %v678
  %v749 = vpack.c.b16 %v681, %v680
  %v750 = vpack.c.b16 %v683, %v682
  %v751 = vpack.c.b16 %v685, %v684
  %v752 = vpack.c.b16 %v687, %v686
  %v753 = vpack.c.b16 %v689, %v688
  %v754 = vpack.c.b16 %v691, %v690
  %v755 = vpack.c.b16 %v693, %v692
  %v756 = vpack.c.b16 %v695, %v694
  %v757 = vpack.c.b16 %v697, %v696
  %v758 = vpack.c.b16 %v699, %v698
  %v759 = vpack.c.b16 %v701, %v700
  %v760 = vpack.c.b16 %v703, %v702
  %v761 = vpack.c.b16 %v705, %v704
  %818 = vmatprep.subr.bf16.mxu0 0
  %819 = vmatpush1.bf16.msra.mxu0 %v706
  %820 = vmatprep.subr.bf16.mxu0 0
  %821 = vmatpush1.bf16.msra.mxu0 %v707
  %822 = vmatprep.subr.bf16.mxu0 0
  %823 = vmatpush1.bf16.msra.mxu0 %v708
  %824 = vmatprep.subr.bf16.mxu0 0
  %825 = vmatpush1.bf16.msra.mxu0 %v709
  %826 = vmatprep.subr.bf16.mxu0 0
  %827 = vmatpush1.bf16.msra.mxu0 %v710
  %828 = vmatprep.subr.bf16.mxu0 0
  %829 = vmatpush1.bf16.msra.mxu0 %v711
  %830 = vmatprep.subr.bf16.mxu0 0
  %831 = vmatpush1.bf16.msra.mxu0 %v712
  %832 = vmatprep.subr.bf16.mxu0 0
  %833 = vmatpush1.bf16.msra.mxu0 %v713
  %834 = vmatprep.subr.bf16.mxu0 0
  %835 = vmatpush1.bf16.msra.mxu0 %v714
  %836 = vmatprep.subr.bf16.mxu0 0
  %837 = vmatpush1.bf16.msra.mxu0 %v715
  %838 = vmatprep.subr.bf16.mxu0 0
  %839 = vmatpush1.bf16.msra.mxu0 %v716
  %840 = vmatprep.subr.bf16.mxu0 0
  %841 = vmatpush1.bf16.msra.mxu0 %v717
  %842 = vmatprep.subr.bf16.mxu0 0
  %843 = vmatpush1.bf16.msra.mxu0 %v718
  %844 = vmatprep.subr.bf16.mxu0 0
  %845 = vmatpush1.bf16.msra.mxu0 %v719
  %846 = vmatprep.subr.bf16.mxu0 0
  %847 = vmatpush1.bf16.msra.mxu0 %v720
  %848 = vmatprep.subr.bf16.mxu0 0
  %849 = vmatpush1.bf16.msra.mxu0 %v721
  %850 = vmatprep.mubr.bf16.mxu0 %v371
  %851 = vmatmul.mubr.bf16.gmra.mrb[0].mxu0 %v370
  %v852 = vpop.f32.mrb[0].mxu0
  %v853 = vadd.f32 0.0, %v852
  %v854 = vpop.f32.mrb[0].mxu0
  %v855 = vpop.f32.mrb[0].mxu0
  %v856 = vadd.f32 0.0, %v855
  %v857 = vpop.f32.mrb[0].mxu0
  %858 = vmatprep.mubr.bf16.mxu0 %v378
  %859 = vmatmul.mubr.bf16.gmra.mrb[0].mxu0 %v377
  %v860 = vpop.f32.mrb[0].mxu0
  %v861 = vadd.f32 0.0, %v860
  %v862 = vpop.f32.mrb[0].mxu0
  %v863 = vpop.f32.mrb[0].mxu0
  %v864 = vadd.f32 0.0, %v863
  %v865 = vpop.f32.mrb[0].mxu0
  %866 = vmatprep.mubr.bf16.mxu0 %v385
  %867 = vmatmul.mubr.bf16.gmra.mrb[0].mxu0 %v384
  %v868 = vpop.f32.mrb[0].mxu0
  %v869 = vadd.f32 0.0, %v868
  %v870 = vpop.f32.mrb[0].mxu0
  %v871 = vpop.f32.mrb[0].mxu0
  %v872 = vadd.f32 0.0, %v871
  %v873 = vpop.f32.mrb[0].mxu0
  %874 = vmatprep.mubr.bf16.mxu0 %v392
  %875 = vmatmul.mubr.bf16.gmra.mrb[0].mxu0 %v391
  %v876 = vpop.f32.mrb[0].mxu0
  %v877 = vadd.f32 0.0, %v876
  %v878 = vpop.f32.mrb[0].mxu0
  %v879 = vpop.f32.mrb[0].mxu0
  %v880 = vadd.f32 0.0, %v879
  %v881 = vpop.f32.mrb[0].mxu0
  %882 = vmatprep.mubr.bf16.mxu0 %v399
  %883 = vmatmul.mubr.bf16.gmra.mrb[0].mxu0 %v398
  %v884 = vpop.f32.mrb[0].mxu0
  %v885 = vadd.f32 0.0, %v884
  %v886 = vpop.f32.mrb[0].mxu0
  %v887 = vpop.f32.mrb[0].mxu0
  %v888 = vadd.f32 0.0, %v887
  %v889 = vpop.f32.mrb[0].mxu0
  %890 = vmatprep.mubr.bf16.mxu0 %v406
  %891 = vmatmul.mubr.bf16.gmra.mrb[0].mxu0 %v405
  %v892 = vpop.f32.mrb[0].mxu0
  %v893 = vadd.f32 0.0, %v892
  %v894 = vpop.f32.mrb[0].mxu0
  %v895 = vpop.f32.mrb[0].mxu0
  %v896 = vadd.f32 0.0, %v895
  %v897 = vpop.f32.mrb[0].mxu0
  %898 = vmatprep.mubr.bf16.mxu0 %v413
  %899 = vmatmul.mubr.bf16.gmra.mrb[0].mxu0 %v412
  %v900 = vpop.f32.mrb[0].mxu0
  %v901 = vadd.f32 0.0, %v900
  %v902 = vpop.f32.mrb[0].mxu0
  %v903 = vpop.f32.mrb[0].mxu0
  %v904 = vadd.f32 0.0, %v903
  %v905 = vpop.f32.mrb[0].mxu0
  %906 = vmatprep.mubr.bf16.mxu0 %v420
  %907 = vmatmul.mubr.bf16.gmra.mrb[0].mxu0 %v419
  %v908 = vpop.f32.mrb[0].mxu0
  %v909 = vadd.f32 0.0, %v908
  %v910 = vpop.f32.mrb[0].mxu0
  %v911 = vpop.f32.mrb[0].mxu0
  %v912 = vadd.f32 0.0, %v911
  %v913 = vpop.f32.mrb[0].mxu0
  %914 = vdwg.mxu0
  %915 = vmatprep.subr.bf16.mxu0 0
  %916 = vmatpush1.bf16.msra.mxu0 %v722
  %917 = vmatprep.subr.bf16.mxu0 0
  %918 = vmatpush1.bf16.msra.mxu0 %v723
  %919 = vmatprep.subr.bf16.mxu0 0
  %920 = vmatpush1.bf16.msra.mxu0 %v724
  %921 = vmatprep.subr.bf16.mxu0 0
  %922 = vmatpush1.bf16.msra.mxu0 %v725
  %923 = vmatprep.subr.bf16.mxu0 0
  %924 = vmatpush1.bf16.msra.mxu0 %v726
  %925 = vmatprep.subr.bf16.mxu0 0
  %926 = vmatpush1.bf16.msra.mxu0 %v727
  %927 = vmatprep.subr.bf16.mxu0 0
  %928 = vmatpush1.bf16.msra.mxu0 %v728
  %929 = vmatprep.subr.bf16.mxu0 0
  %930 = vmatpush1.bf16.msra.mxu0 %v729
  %931 = vmatprep.subr.bf16.mxu0 0
  %932 = vmatpush1.bf16.msra.mxu0 %v730
  %933 = vmatprep.subr.bf16.mxu0 0
  %934 = vmatpush1.bf16.msra.mxu0 %v731
  %935 = vmatprep.subr.bf16.mxu0 0
  %936 = vmatpush1.bf16.msra.mxu0 %v732
  %937 = vmatprep.subr.bf16.mxu0 0
  %938 = vmatpush1.bf16.msra.mxu0 %v733
  %939 = vmatprep.subr.bf16.mxu0 0
  %940 = vmatpush1.bf16.msra.mxu0 %v734
  %941 = vmatprep.subr.bf16.mxu0 0
  %942 = vmatpush1.bf16.msra.mxu0 %v735
  %943 = vmatprep.subr.bf16.mxu0 0
  %944 = vmatpush1.bf16.msra.mxu0 %v736
  %945 = vmatprep.subr.bf16.mxu0 0
  %946 = vmatpush1.bf16.msra.mxu0 %v737
  %947 = vmatprep.mubr.bf16.mxu0 %v373
  %948 = vmatmul.mubr.bf16.gmra.mrb[0].mxu0 %v372
  %v949 = vpop.f32.mrb[0].mxu0
  %v950 = vadd.f32 %v853, %v949
  %v951 = vpop.f32.mrb[0].mxu0
  %v952 = vpop.f32.mrb[0].mxu0
  %v953 = vadd.f32 %v856, %v952
  %v954 = vpop.f32.mrb[0].mxu0
  %955 = vmatprep.mubr.bf16.mxu0 %v380
  %956 = vmatmul.mubr.bf16.gmra.mrb[0].mxu0 %v379
  %v957 = vpop.f32.mrb[0].mxu0
  %v958 = vadd.f32 %v861, %v957
  %v959 = vpop.f32.mrb[0].mxu0
  %v960 = vpop.f32.mrb[0].mxu0
  %v961 = vadd.f32 %v864, %v960
  %v962 = vpop.f32.mrb[0].mxu0
  %963 = vmatprep.mubr.bf16.mxu0 %v387
  %964 = vmatmul.mubr.bf16.gmra.mrb[0].mxu0 %v386
  %v965 = vpop.f32.mrb[0].mxu0
  %v966 = vadd.f32 %v869, %v965
  %v967 = vpop.f32.mrb[0].mxu0
  %v968 = vpop.f32.mrb[0].mxu0
  %v969 = vadd.f32 %v872, %v968
  %v970 = vpop.f32.mrb[0].mxu0
  %971 = vmatprep.mubr.bf16.mxu0 %v394
  %972 = vmatmul.mubr.bf16.gmra.mrb[0].mxu0 %v393
  %v973 = vpop.f32.mrb[0].mxu0
  %v974 = vadd.f32 %v877, %v973
  %v975 = vpop.f32.mrb[0].mxu0
  %v976 = vpop.f32.mrb[0].mxu0
  %v977 = vadd.f32 %v880, %v976
  %v978 = vpop.f32.mrb[0].mxu0
  %979 = vmatprep.mubr.bf16.mxu0 %v401
  %980 = vmatmul.mubr.bf16.gmra.mrb[0].mxu0 %v400
  %v981 = vpop.f32.mrb[0].mxu0
  %v982 = vadd.f32 %v885, %v981
  %v983 = vpop.f32.mrb[0].mxu0
  %v984 = vpop.f32.mrb[0].mxu0
  %v985 = vadd.f32 %v888, %v984
  %v986 = vpop.f32.mrb[0].mxu0
  %987 = vmatprep.mubr.bf16.mxu0 %v408
  %988 = vmatmul.mubr.bf16.gmra.mrb[0].mxu0 %v407
  %v989 = vpop.f32.mrb[0].mxu0
  %v990 = vadd.f32 %v893, %v989
  %v991 = vpop.f32.mrb[0].mxu0
  %v992 = vpop.f32.mrb[0].mxu0
  %v993 = vadd.f32 %v896, %v992
  %v994 = vpop.f32.mrb[0].mxu0
  %995 = vmatprep.mubr.bf16.mxu0 %v415
  %996 = vmatmul.mubr.bf16.gmra.mrb[0].mxu0 %v414
  %v997 = vpop.f32.mrb[0].mxu0
  %v998 = vadd.f32 %v901, %v997
  %v999 = vpop.f32.mrb[0].mxu0
  %v1000 = vpop.f32.mrb[0].mxu0
  %v1001 = vadd.f32 %v904, %v1000
  %v1002 = vpop.f32.mrb[0].mxu0
  %1003 = vmatprep.mubr.bf16.mxu0 %v422
  %1004 = vmatmul.mubr.bf16.gmra.mrb[0].mxu0 %v421
  %v1005 = vpop.f32.mrb[0].mxu0
  %v1006 = vadd.f32 %v909, %v1005
  %v1007 = vpop.f32.mrb[0].mxu0
  %v1008 = vpop.f32.mrb[0].mxu0
  %v1009 = vadd.f32 %v912, %v1008
  %v1010 = vpop.f32.mrb[0].mxu0
  %1011 = vdwg.mxu0
  %1012 = vmatprep.subr.bf16.mxu0 0
  %1013 = vmatpush1.bf16.msra.mxu0 %v738
  %1014 = vmatprep.subr.bf16.mxu0 0
  %1015 = vmatpush1.bf16.msra.mxu0 %v739
  %1016 = vmatprep.subr.bf16.mxu0 0
  %1017 = vmatpush1.bf16.msra.mxu0 %v740
  %1018 = vmatprep.subr.bf16.mxu0 0
  %1019 = vmatpush1.bf16.msra.mxu0 %v741
  %1020 = vmatprep.subr.bf16.mxu0 0
  %1021 = vmatpush1.bf16.msra.mxu0 %v742
  %1022 = vmatprep.subr.bf16.mxu0 0
  %1023 = vmatpush1.bf16.msra.mxu0 %v743
  %1024 = vmatprep.subr.bf16.mxu0 0
  %1025 = vmatpush1.bf16.msra.mxu0 %v744
  %1026 = vmatprep.subr.bf16.mxu0 0
  %1027 = vmatpush1.bf16.msra.mxu0 %v745
  %1028 = vmatprep.subr.bf16.mxu0 0
  %1029 = vmatpush1.bf16.msra.mxu0 %v746
  %1030 = vmatprep.subr.bf16.mxu0 0
  %1031 = vmatpush1.bf16.msra.mxu0 %v747
  %1032 = vmatprep.subr.bf16.mxu0 0
  %1033 = vmatpush1.bf16.msra.mxu0 %v748
  %1034 = vmatprep.subr.bf16.mxu0 0
  %1035 = vmatpush1.bf16.msra.mxu0 %v749
  %1036 = vmatprep.subr.bf16.mxu0 0
  %1037 = vmatpush1.bf16.msra.mxu0 %v750
  %1038 = vmatprep.subr.bf16.mxu0 0
  %1039 = vmatpush1.bf16.msra.mxu0 %v751
  %1040 = vmatprep.subr.bf16.mxu0 0
  %1041 = vmatpush1.bf16.msra.mxu0 %v752
  %1042 = vmatprep.subr.bf16.mxu0 0
  %1043 = vmatpush1.bf16.msra.mxu0 %v753
  %1044 = vmatprep.mubr.bf16.mxu0 %v375
  %1045 = vmatmul.mubr.bf16.gmra.mrb[0].mxu0 %v374
  %v1046 = vpop.f32.mrb[0].mxu0
  %v1047 = vadd.f32 %v950, %v1046
  %v1048 = vpop.f32.mrb[0].mxu0
  %v1049 = vpop.f32.mrb[0].mxu0
  %v1050 = vadd.f32 %v953, %v1049
  %v1051 = vpop.f32.mrb[0].mxu0
  %1052 = vmatprep.mubr.bf16.mxu0 %v382
  %1053 = vmatmul.mubr.bf16.gmra.mrb[0].mxu0 %v381
  %v1054 = vpop.f32.mrb[0].mxu0
  %v1055 = vadd.f32 %v958, %v1054
  %v1056 = vpop.f32.mrb[0].mxu0
  %v1057 = vpop.f32.mrb[0].mxu0
  %v1058 = vadd.f32 %v961, %v1057
  %v1059 = vpop.f32.mrb[0].mxu0
  %1060 = vmatprep.mubr.bf16.mxu0 %v389
  %1061 = vmatmul.mubr.bf16.gmra.mrb[0].mxu0 %v388
  %v1062 = vpop.f32.mrb[0].mxu0
  %v1063 = vadd.f32 %v966, %v1062
  %v1064 = vpop.f32.mrb[0].mxu0
  %v1065 = vpop.f32.mrb[0].mxu0
  %v1066 = vadd.f32 %v969, %v1065
  %v1067 = vpop.f32.mrb[0].mxu0
  %1068 = vmatprep.mubr.bf16.mxu0 %v396
  %1069 = vmatmul.mubr.bf16.gmra.mrb[0].mxu0 %v395
  %v1070 = vpop.f32.mrb[0].mxu0
  %v1071 = vadd.f32 %v974, %v1070
  %v1072 = vpop.f32.mrb[0].mxu0
  %v1073 = vpop.f32.mrb[0].mxu0
  %v1074 = vadd.f32 %v977, %v1073
  %v1075 = vpop.f32.mrb[0].mxu0
  %1076 = vmatprep.mubr.bf16.mxu0 %v403
  %1077 = vmatmul.mubr.bf16.gmra.mrb[0].mxu0 %v402
  %v1078 = vpop.f32.mrb[0].mxu0
  %v1079 = vadd.f32 %v982, %v1078
  %v1080 = vpop.f32.mrb[0].mxu0
  %v1081 = vpop.f32.mrb[0].mxu0
  %v1082 = vadd.f32 %v985, %v1081
  %v1083 = vpop.f32.mrb[0].mxu0
  %1084 = vmatprep.mubr.bf16.mxu0 %v410
  %1085 = vmatmul.mubr.bf16.gmra.mrb[0].mxu0 %v409
  %v1086 = vpop.f32.mrb[0].mxu0
  %v1087 = vadd.f32 %v990, %v1086
  %v1088 = vpop.f32.mrb[0].mxu0
  %v1089 = vpop.f32.mrb[0].mxu0
  %v1090 = vadd.f32 %v993, %v1089
  %v1091 = vpop.f32.mrb[0].mxu0
  %1092 = vmatprep.mubr.bf16.mxu0 %v417
  %1093 = vmatmul.mubr.bf16.gmra.mrb[0].mxu0 %v416
  %v1094 = vpop.f32.mrb[0].mxu0
  %v1095 = vadd.f32 %v998, %v1094
  %v1096 = vpop.f32.mrb[0].mxu0
  %v1097 = vpop.f32.mrb[0].mxu0
  %v1098 = vadd.f32 %v1001, %v1097
  %v1099 = vpop.f32.mrb[0].mxu0
  %1100 = vmatprep.mubr.bf16.mxu0 %v424
  %1101 = vmatmul.mubr.bf16.gmra.mrb[0].mxu0 %v423
  %v1102 = vpop.f32.mrb[0].mxu0
  %v1103 = vadd.f32 %v1006, %v1102
  %v1104 = vpop.f32.mrb[0].mxu0
  %v1105 = vpop.f32.mrb[0].mxu0
  %v1106 = vadd.f32 %v1009, %v1105
  %v1107 = vpop.f32.mrb[0].mxu0
  %1108 = vdwg.mxu0
  %1109 = vmatprep.subr.bf16.mxu0 0
  %1110 = vmatpush1.bf16.msra.mxu0 %v754
  %1111 = vmatprep.subr.bf16.mxu0 0
  %1112 = vmatpush1.bf16.msra.mxu0 %v755
  %1113 = vmatprep.subr.bf16.mxu0 0
  %1114 = vmatpush1.bf16.msra.mxu0 %v756
  %1115 = vmatprep.subr.bf16.mxu0 0
  %1116 = vmatpush1.bf16.msra.mxu0 %v757
  %1117 = vmatprep.subr.bf16.mxu0 0
  %1118 = vmatpush1.bf16.msra.mxu0 %v758
  %1119 = vmatprep.subr.bf16.mxu0 0
  %1120 = vmatpush1.bf16.msra.mxu0 %v759
  %1121 = vmatprep.subr.bf16.mxu0 0
  %1122 = vmatpush1.bf16.msra.mxu0 %v760
  %1123 = vmatprep.subr.bf16.mxu0 0
  %1124 = vmatpush1.bf16.msra.mxu0 %v761
  %1125 = vmatprep.subr.bf16.mxu0 0
  %1126 = vmatpush1.bf16.msra.mxu0 0
  %1127 = vmatprep.subr.bf16.mxu0 0
  %1128 = vmatpush1.bf16.msra.mxu0 0
  %1129 = vmatprep.subr.bf16.mxu0 0
  %1130 = vmatpush1.bf16.msra.mxu0 0
  %1131 = vmatprep.subr.bf16.mxu0 0
  %1132 = vmatpush1.bf16.msra.mxu0 0
  %1133 = vmatprep.subr.bf16.mxu0 0
  %1134 = vmatpush1.bf16.msra.mxu0 0
  %1135 = vmatprep.subr.bf16.mxu0 0
  %1136 = vmatpush1.bf16.msra.mxu0 0
  %1137 = vmatprep.subr.bf16.mxu0 0
  %1138 = vmatpush1.bf16.msra.mxu0 0
  %1139 = vmatprep.subr.bf16.mxu0 0
  %1140 = vmatpush1.bf16.msra.mxu0 0
  %1141 = vmatprep.mubr.bf16.mxu0 0
  %1142 = vmatmul.mubr.bf16.gmra.mrb[0].mxu0 %v376
  %v1143 = vpop.f32.mrb[0].mxu0
  %v1144 = vadd.f32 %v1047, %v1143
  %v1145 = vpop.f32.mrb[0].mxu0
  %v1146 = vpop.f32.mrb[0].mxu0
  %v1147 = vadd.f32 %v1050, %v1146
  %v1148 = vpop.f32.mrb[0].mxu0
  %1149 = vmatprep.mubr.bf16.mxu0 0
  %1150 = vmatmul.mubr.bf16.gmra.mrb[0].mxu0 %v383
  %v1151 = vpop.f32.mrb[0].mxu0
  %v1152 = vadd.f32 %v1055, %v1151
  %v1153 = vpop.f32.mrb[0].mxu0
  %v1154 = vpop.f32.mrb[0].mxu0
  %v1155 = vadd.f32 %v1058, %v1154
  %v1156 = vpop.f32.mrb[0].mxu0
  %1157 = vmatprep.mubr.bf16.mxu0 0
  %1158 = vmatmul.mubr.bf16.gmra.mrb[0].mxu0 %v390
  %v1159 = vpop.f32.mrb[0].mxu0
  %v1160 = vadd.f32 %v1063, %v1159
  %v1161 = vpop.f32.mrb[0].mxu0
  %v1162 = vpop.f32.mrb[0].mxu0
  %v1163 = vadd.f32 %v1066, %v1162
  %v1164 = vpop.f32.mrb[0].mxu0
  %1165 = vmatprep.mubr.bf16.mxu0 0
  %1166 = vmatmul.mubr.bf16.gmra.mrb[0].mxu0 %v397
  %v1167 = vpop.f32.mrb[0].mxu0
  %v1168 = vadd.f32 %v1071, %v1167
  %v1169 = vpop.f32.mrb[0].mxu0
  %v1170 = vpop.f32.mrb[0].mxu0
  %v1171 = vadd.f32 %v1074, %v1170
  %v1172 = vpop.f32.mrb[0].mxu0
  %1173 = vmatprep.mubr.bf16.mxu0 0
  %1174 = vmatmul.mubr.bf16.gmra.mrb[0].mxu0 %v404
  %v1175 = vpop.f32.mrb[0].mxu0
  %v1176 = vadd.f32 %v1079, %v1175
  %v1177 = vpop.f32.mrb[0].mxu0
  %v1178 = vpop.f32.mrb[0].mxu0
  %v1179 = vadd.f32 %v1082, %v1178
  %v1180 = vpop.f32.mrb[0].mxu0
  %1181 = vmatprep.mubr.bf16.mxu0 0
  %1182 = vmatmul.mubr.bf16.gmra.mrb[0].mxu0 %v411
  %v1183 = vpop.f32.mrb[0].mxu0
  %v1184 = vadd.f32 %v1087, %v1183
  %v1185 = vpop.f32.mrb[0].mxu0
  %v1186 = vpop.f32.mrb[0].mxu0
  %v1187 = vadd.f32 %v1090, %v1186
  %v1188 = vpop.f32.mrb[0].mxu0
  %1189 = vmatprep.mubr.bf16.mxu0 0
  %1190 = vmatmul.mubr.bf16.gmra.mrb[0].mxu0 %v418
  %v1191 = vpop.f32.mrb[0].mxu0
  %v1192 = vadd.f32 %v1095, %v1191
  %v1193 = vpop.f32.mrb[0].mxu0
  %v1194 = vpop.f32.mrb[0].mxu0
  %v1195 = vadd.f32 %v1098, %v1194
  %v1196 = vpop.f32.mrb[0].mxu0
  %1197 = vmatprep.mubr.bf16.mxu0 0
  %1198 = vmatmul.mubr.bf16.gmra.mrb[0].mxu0 %v425
  %v1199 = vpop.f32.mrb[0].mxu0
  %v1200 = vadd.f32 %v1103, %v1199
  %v1201 = vpop.f32.mrb[0].mxu0
  %v1202 = vpop.f32.mrb[0].mxu0
  %v1203 = vadd.f32 %v1106, %v1202
  %v1204 = vpop.f32.mrb[0].mxu0
  %1205 = vdwg.mxu0
  %v1206 = vld [vmem:[%s2] sm:$0x1]
  %v1208 = vlaneseq
  %v1209 = vshrl.u32 %v1208, 7
  %v1210 = vsub.s32 0, %v1209
  %v1211 = vrot.slane %v1206, %v1210
  %v1213 = vmul.f32 %v1144, %v1211
  %v1214 = vmul.f32 %v1147, %v1211
  %v1215 = vmul.f32 %v1152, %v1211
  %v1216 = vmul.f32 %v1155, %v1211
  %v1217 = vmul.f32 %v1160, %v1211
  %v1218 = vmul.f32 %v1163, %v1211
  %v1219 = vmul.f32 %v1168, %v1211
  %v1220 = vmul.f32 %v1171, %v1211
  %v1221 = vmul.f32 %v1176, %v1211
  %v1222 = vmul.f32 %v1179, %v1211
  %v1223 = vmul.f32 %v1184, %v1211
  %v1224 = vmul.f32 %v1187, %v1211
  %v1225 = vmul.f32 %v1192, %v1211
  %v1226 = vmul.f32 %v1195, %v1211
  %v1227 = vmul.f32 %v1200, %v1211
  %v1228 = vmul.f32 %v1203, %v1211
  %v1229 = vld [vmem:[%s3] sm:$0x1]
  %v1231 = vlaneseq
  %v1232 = vshrl.u32 %v1231, 7
  %v1233 = vsub.s32 0, %v1232
  %v1234 = vrot.slane %v1229, %v1233
  %v1236 = vadd.f32 %v1213, %v1234
  %v1237 = vadd.f32 %v1214, %v1234
  %v1238 = vadd.f32 %v1215, %v1234
  %v1239 = vadd.f32 %v1216, %v1234
  %v1240 = vadd.f32 %v1217, %v1234
  %v1241 = vadd.f32 %v1218, %v1234
  %v1242 = vadd.f32 %v1219, %v1234
  %v1243 = vadd.f32 %v1220, %v1234
  %v1244 = vadd.f32 %v1221, %v1234
  %v1245 = vadd.f32 %v1222, %v1234
  %v1246 = vadd.f32 %v1223, %v1234
  %v1247 = vadd.f32 %v1224, %v1234
  %v1248 = vadd.f32 %v1225, %v1234
  %v1249 = vadd.f32 %v1226, %v1234
  %v1250 = vadd.f32 %v1227, %v1234
  %v1251 = vadd.f32 %v1228, %v1234
  %v1252 = vmax.f32 %v1236, 0.0
  %v1253 = vmax.f32 %v1237, 0.0
  %v1254 = vmax.f32 %v1238, 0.0
  %v1255 = vmax.f32 %v1239, 0.0
  %v1256 = vmax.f32 %v1240, 0.0
  %v1257 = vmax.f32 %v1241, 0.0
  %v1258 = vmax.f32 %v1242, 0.0
  %v1259 = vmax.f32 %v1243, 0.0
  %v1260 = vmax.f32 %v1244, 0.0
  %v1261 = vmax.f32 %v1245, 0.0
  %v1262 = vmax.f32 %v1246, 0.0
  %v1263 = vmax.f32 %v1247, 0.0
  %v1264 = vmax.f32 %v1248, 0.0
  %v1265 = vmax.f32 %v1249, 0.0
  %v1266 = vmax.f32 %v1250, 0.0
  %v1267 = vmax.f32 %v1251, 0.0
  %1268 = vst [vmem:[%s4] sm:$0xff] %v1252
  %1269 = vst [vmem:[%s4 + $0x8] sm:$0xff] %v1253
  %1270 = vst [vmem:[%s4 + $0x10] sm:$0xff] %v1254
  %1271 = vst [vmem:[%s4 + $0x18] sm:$0xff] %v1255
  %1272 = vst [vmem:[%s4 + $0x20] sm:$0xff] %v1256
  %1273 = vst [vmem:[%s4 + $0x28] sm:$0xff] %v1257
  %1274 = vst [vmem:[%s4 + $0x30] sm:$0xff] %v1258
  %1275 = vst [vmem:[%s4 + $0x38] sm:$0xff] %v1259
  %1276 = vst [vmem:[%s4 + $0x40] sm:$0xff] %v1260
  %1277 = vst [vmem:[%s4 + $0x48] sm:$0xff] %v1261
  %1278 = vst [vmem:[%s4 + $0x50] sm:$0xff] %v1262
  %1279 = vst [vmem:[%s4 + $0x58] sm:$0xff] %v1263
  %1280 = vst [vmem:[%s4 + $0x60] sm:$0xff] %v1264
  %1281 = vst [vmem:[%s4 + $0x68] sm:$0xff] %v1265
  %1282 = vst [vmem:[%s4 + $0x70] sm:$0xff] %v1266
  %1283 = vst [vmem:[%s4 + $0x78] sm:$0xff] %v1267
  // Predicated region
  $region18: #{forward.16} parent=0 // pred_check
    _
  $region19: #{forward.16} parent=0 // pred_check_branch
    %1285 = sbr.rel (0) target = $region21
  $region20: #{forward.16} parent=0 // pred_region
    _
  $region21: #{forward.16} parent=0 // pred_fallthru
    _
  // Predicated region
  $region22: #{forward.16} parent=0 // pred_check
    _
  $region23: #{forward.16} parent=0 // pred_check_branch
    %1287 = sbr.rel (0) target = $region25
  $region24: #{forward.16} parent=0 // pred_region
    _
  $region25: #{forward.16} parent=0 // pred_fallthru
    _

// kernel: forward.20
$region0: #{forward.20}
  #allocation0 [shape = 'u32[]', space=smem, size = 0x4, offset = 0x4, fixed_abs, tag = 'smem constant byte address 0x4 - core index']
  #allocation1 [shape = 'u32[144,128]{1,0:T(1,128)}', space=vmem, size = 0x12000, scoped, tag = 'internal scratch']
  %s0 = inlined_call_operand.vmem [shape: f32[2,32,128], index: 0, kind: input, shape index: {}]
  %s1 = inlined_call_operand.vmem [shape: f32[32,128], index: 1, kind: output, shape index: {}]
  %s2 = sld [smem:[#allocation0]]
  $region14: #{forward.20} parent=0
    _
  %s4 = ssub.s32 1, %s2
  %s5 = scalar_select 0, %s4, %s2
  // Predicated region
  $region2: #{forward.20} parent=0 // pred_check
    _
  $region3: #{forward.20} parent=0 // pred_check_branch
    %7 = sbr.rel (0) target = $region5
  $region4: #{forward.20} parent=0 // pred_region
    _
  $region5: #{forward.20} parent=0 // pred_fallthru
    _
  %v8 = vld [vmem:[%s0] sm:$0xff]
  %v9 = vld [vmem:[%s0 + $0x8] sm:$0xff]
  %v10 = vld [vmem:[%s0 + $0x10] sm:$0xff]
  %v11 = vld [vmem:[%s0 + $0x18] sm:$0xff]
  %v12 = vld [vmem:[%s0 + $0x20] sm:$0xff]
  %v13 = vld [vmem:[%s0 + $0x28] sm:$0xff]
  %v14 = vld [vmem:[%s0 + $0x30] sm:$0xff]
  %v15 = vld [vmem:[%s0 + $0x38] sm:$0xff]
  %v16 = vmax.f32 %v8, %v12
  %v17 = vmax.f32 %v9, %v13
  %v18 = vmax.f32 %v10, %v14
  %v19 = vmax.f32 %v11, %v15
  %20 = vst [vmem:[%s1] sm:$0xff] %v16
  %21 = vst [vmem:[%s1 + $0x8] sm:$0xff] %v17
  %22 = vst [vmem:[%s1 + $0x10] sm:$0xff] %v18
  %23 = vst [vmem:[%s1 + $0x18] sm:$0xff] %v19
  // Predicated region
  $region6: #{forward.20} parent=0 // pred_check
    _
  $region7: #{forward.20} parent=0 // pred_check_branch
    %25 = sbr.rel (0) target = $region9
  $region8: #{forward.20} parent=0 // pred_region
    _
  $region9: #{forward.20} parent=0 // pred_fallthru
    _
  // Predicated region
  $region10: #{forward.20} parent=0 // pred_check
    _
  $region11: #{forward.20} parent=0 // pred_check_branch
    %27 = sbr.rel (0) target = $region13
  $region12: #{forward.20} parent=0 // pred_region
    _
  $region13: #{forward.20} parent=0 // pred_fallthru
    _

// kernel: forward.18
$region0: #{forward.18}
  #allocation0 [shape = 'u32[]', space=smem, size = 0x4, offset = 0x4, fixed_abs, tag = 'smem constant byte address 0x4 - core index']
  #allocation1 [shape = 'u32[144,128]{1,0:T(1,128)}', space=vmem, size = 0x12000, scoped, tag = 'internal scratch']
  %s0 = inlined_call_operand.vmem [shape: bf16[64,896], index: 0, kind: input, shape index: {}]
  %s1 = inlined_call_operand.vmem [shape: bf16[896,128], index: 1, kind: input, shape index: {}]
  %s2 = inlined_call_operand.vmem [shape: f32[1,128], index: 2, kind: input, shape index: {}]
  %s3 = inlined_call_operand.vmem [shape: f32[1,128], index: 3, kind: input, shape index: {}]
  %s4 = inlined_call_operand.vmem [shape: f32[64,128], index: 4, kind: output, shape index: {}]
  %s5 = sld [smem:[#allocation0]]
  $region26: #{forward.18} parent=0
    _
  %s7 = ssub.s32 1, %s5
  %s8 = scalar_select 0, %s7, %s5
  // Predicated region
  $region2: #{forward.18} parent=0 // pred_check
    _
  $region3: #{forward.18} parent=0 // pred_check_branch
    %10 = sbr.rel (0) target = $region5
  $region4: #{forward.18} parent=0 // pred_region
    _
  $region5: #{forward.18} parent=0 // pred_fallthru
    _
  // Predicated region
  $region6: #{forward.18} parent=0 // pred_check
    _
  $region7: #{forward.18} parent=0 // pred_check_branch
    %12 = sbr.rel (0) target = $region9
  $region8: #{forward.18} parent=0 // pred_region
    _
  $region9: #{forward.18} parent=0 // pred_fallthru
    _
  // Predicated region
  $region10: #{forward.18} parent=0 // pred_check
    _
  $region11: #{forward.18} parent=0 // pred_check_branch
    %14 = sbr.rel (0) target = $region13
  $region12: #{forward.18} parent=0 // pred_region
    _
  $region13: #{forward.18} parent=0 // pred_fallthru
    _
  // Predicated region
  $region14: #{forward.18} parent=0 // pred_check
    _
  $region15: #{forward.18} parent=0 // pred_check_branch
    %16 = sbr.rel (0) target = $region17
  $region16: #{forward.18} parent=0 // pred_region
    _
  $region17: #{forward.18} parent=0 // pred_fallthru
    _
  %v18 = vld [vmem:[%s0] sm:$0xff]
  %v19 = vld [vmem:[%s0 + $0x8] sm:$0xff]
  %v20 = vld [vmem:[%s0 + $0x10] sm:$0xff]
  %v21 = vld [vmem:[%s0 + $0x18] sm:$0xf]
  %v22 = vld [vmem:[%s0 + $0x1c] sm:$0xff]
  %v23 = vld [vmem:[%s0 + $0x24] sm:$0xff]
  %v24 = vld [vmem:[%s0 + $0x2c] sm:$0xff]
  %v25 = vld [vmem:[%s0 + $0x34] sm:$0xf]
  %v26 = vld [vmem:[%s0 + $0x38] sm:$0xff]
  %v27 = vld [vmem:[%s0 + $0x40] sm:$0xff]
  %v28 = vld [vmem:[%s0 + $0x48] sm:$0xff]
  %v29 = vld [vmem:[%s0 + $0x50] sm:$0xf]
  %v30 = vld [vmem:[%s0 + $0x54] sm:$0xff]
  %v31 = vld [vmem:[%s0 + $0x5c] sm:$0xff]
  %v32 = vld [vmem:[%s0 + $0x64] sm:$0xff]
  %v33 = vld [vmem:[%s0 + $0x6c] sm:$0xf]
  %v34 = vld [vmem:[%s0 + $0x70] sm:$0xff]
  %v35 = vld [vmem:[%s0 + $0x78] sm:$0xff]
  %v36 = vld [vmem:[%s0 + $0x80] sm:$0xff]
  %v37 = vld [vmem:[%s0 + $0x88] sm:$0xf]
  %v38 = vld [vmem:[%s0 + $0x8c] sm:$0xff]
  %v39 = vld [vmem:[%s0 + $0x94] sm:$0xff]
  %v40 = vld [vmem:[%s0 + $0x9c] sm:$0xff]
  %v41 = vld [vmem:[%s0 + $0xa4] sm:$0xf]
  %v42 = vld [vmem:[%s0 + $0xa8] sm:$0xff]
  %v43 = vld [vmem:[%s0 + $0xb0] sm:$0xff]
  %v44 = vld [vmem:[%s0 + $0xb8] sm:$0xff]
  %v45 = vld [vmem:[%s0 + $0xc0] sm:$0xf]
  %v46 = vld [vmem:[%s0 + $0xc4] sm:$0xff]
  %v47 = vld [vmem:[%s0 + $0xcc] sm:$0xff]
  %v48 = vld [vmem:[%s0 + $0xd4] sm:$0xff]
  %v49 = vld [vmem:[%s0 + $0xdc] sm:$0xf]
  %v50 = vld [vmem:[%s1] sm:$0xf]
  %v51 = vld [vmem:[%s1 + $0x4] sm:$0xf]
  %v52 = vld [vmem:[%s1 + $0x8] sm:$0xf]
  %v53 = vld [vmem:[%s1 + $0xc] sm:$0xf]
  %v54 = vld [vmem:[%s1 + $0x10] sm:$0xf]
  %v55 = vld [vmem:[%s1 + $0x14] sm:$0xf]
  %v56 = vld [vmem:[%s1 + $0x18] sm:$0xf]
  %v57 = vld [vmem:[%s1 + $0x1c] sm:$0xf]
  %v58 = vld [vmem:[%s1 + $0x20] sm:$0xf]
  %v59 = vld [vmem:[%s1 + $0x24] sm:$0xf]
  %v60 = vld [vmem:[%s1 + $0x28] sm:$0xf]
  %v61 = vld [vmem:[%s1 + $0x2c] sm:$0xf]
  %v62 = vld [vmem:[%s1 + $0x30] sm:$0xf]
  %v63 = vld [vmem:[%s1 + $0x34] sm:$0xf]
  %v64 = vld [vmem:[%s1 + $0x38] sm:$0xf]
  %v65 = vld [vmem:[%s1 + $0x3c] sm:$0xf]
  %v66 = vld [vmem:[%s1 + $0x40] sm:$0xf]
  %v67 = vld [vmem:[%s1 + $0x44] sm:$0xf]
  %v68 = vld [vmem:[%s1 + $0x48] sm:$0xf]
  %v69 = vld [vmem:[%s1 + $0x4c] sm:$0xf]
  %v70 = vld [vmem:[%s1 + $0x50] sm:$0xf]
  %v71 = vld [vmem:[%s1 + $0x54] sm:$0xf]
  %v72 = vld [vmem:[%s1 + $0x58] sm:$0xf]
  %v73 = vld [vmem:[%s1 + $0x5c] sm:$0xf]
  %v74 = vld [vmem:[%s1 + $0x60] sm:$0xf]
  %v75 = vld [vmem:[%s1 + $0x64] sm:$0xf]
  %v76 = vld [vmem:[%s1 + $0x68] sm:$0xf]
  %v77 = vld [vmem:[%s1 + $0x6c] sm:$0xf]
  %v78 = vld [vmem:[%s1 + $0x70] sm:$0xf]
  %v79 = vld [vmem:[%s1 + $0x74] sm:$0xf]
  %v80 = vld [vmem:[%s1 + $0x78] sm:$0xf]
  %v81 = vld [vmem:[%s1 + $0x7c] sm:$0xf]
  %v82 = vld [vmem:[%s1 + $0x80] sm:$0xf]
  %v83 = vld [vmem:[%s1 + $0x84] sm:$0xf]
  %v84 = vld [vmem:[%s1 + $0x88] sm:$0xf]
  %v85 = vld [vmem:[%s1 + $0x8c] sm:$0xf]
  %v86 = vld [vmem:[%s1 + $0x90] sm:$0xf]
  %v87 = vld [vmem:[%s1 + $0x94] sm:$0xf]
  %v88 = vld [vmem:[%s1 + $0x98] sm:$0xf]
  %v89 = vld [vmem:[%s1 + $0x9c] sm:$0xf]
  %v90 = vld [vmem:[%s1 + $0xa0] sm:$0xf]
  %v91 = vld [vmem:[%s1 + $0xa4] sm:$0xf]
  %v92 = vld [vmem:[%s1 + $0xa8] sm:$0xf]
  %v93 = vld [vmem:[%s1 + $0xac] sm:$0xf]
  %v94 = vld [vmem:[%s1 + $0xb0] sm:$0xf]
  %v95 = vld [vmem:[%s1 + $0xb4] sm:$0xf]
  %v96 = vld [vmem:[%s1 + $0xb8] sm:$0xf]
  %v97 = vld [vmem:[%s1 + $0xbc] sm:$0xf]
  %v98 = vld [vmem:[%s1 + $0xc0] sm:$0xf]
  %v99 = vld [vmem:[%s1 + $0xc4] sm:$0xf]
  %v100 = vld [vmem:[%s1 + $0xc8] sm:$0xf]
  %v101 = vld [vmem:[%s1 + $0xcc] sm:$0xf]
  %v102 = vld [vmem:[%s1 + $0xd0] sm:$0xf]
  %v103 = vld [vmem:[%s1 + $0xd4] sm:$0xf]
  %v104 = vld [vmem:[%s1 + $0xd8] sm:$0xf]
  %v105 = vld [vmem:[%s1 + $0xdc] sm:$0xf]
  %v106 = vld [vmem:[%s1 + $0xe0] sm:$0xf]
  %v107 = vld [vmem:[%s1 + $0xe4] sm:$0xf]
  %v108 = vld [vmem:[%s1 + $0xe8] sm:$0xf]
  %v109 = vld [vmem:[%s1 + $0xec] sm:$0xf]
  %v110 = vld [vmem:[%s1 + $0xf0] sm:$0xf]
  %v111 = vld [vmem:[%s1 + $0xf4] sm:$0xf]
  %v112 = vld [vmem:[%s1 + $0xf8] sm:$0xf]
  %v113 = vld [vmem:[%s1 + $0xfc] sm:$0xf]
  %v114 = vld [vmem:[%s1 + $0x100] sm:$0xf]
  %v115 = vld [vmem:[%s1 + $0x104] sm:$0xf]
  %v116 = vld [vmem:[%s1 + $0x108] sm:$0xf]
  %v117 = vld [vmem:[%s1 + $0x10c] sm:$0xf]
  %v118 = vld [vmem:[%s1 + $0x110] sm:$0xf]
  %v119 = vld [vmem:[%s1 + $0x114] sm:$0xf]
  %v120 = vld [vmem:[%s1 + $0x118] sm:$0xf]
  %v121 = vld [vmem:[%s1 + $0x11c] sm:$0xf]
  %v122 = vld [vmem:[%s1 + $0x120] sm:$0xf]
  %v123 = vld [vmem:[%s1 + $0x124] sm:$0xf]
  %v124 = vld [vmem:[%s1 + $0x128] sm:$0xf]
  %v125 = vld [vmem:[%s1 + $0x12c] sm:$0xf]
  %v126 = vld [vmem:[%s1 + $0x130] sm:$0xf]
  %v127 = vld [vmem:[%s1 + $0x134] sm:$0xf]
  %v128 = vld [vmem:[%s1 + $0x138] sm:$0xf]
  %v129 = vld [vmem:[%s1 + $0x13c] sm:$0xf]
  %v130 = vld [vmem:[%s1 + $0x140] sm:$0xf]
  %v131 = vld [vmem:[%s1 + $0x144] sm:$0xf]
  %v132 = vld [vmem:[%s1 + $0x148] sm:$0xf]
  %v133 = vld [vmem:[%s1 + $0x14c] sm:$0xf]
  %v134 = vld [vmem:[%s1 + $0x150] sm:$0xf]
  %v135 = vld [vmem:[%s1 + $0x154] sm:$0xf]
  %v136 = vld [vmem:[%s1 + $0x158] sm:$0xf]
  %v137 = vld [vmem:[%s1 + $0x15c] sm:$0xf]
  %v138 = vld [vmem:[%s1 + $0x160] sm:$0xf]
  %v139 = vld [vmem:[%s1 + $0x164] sm:$0xf]
  %v140 = vld [vmem:[%s1 + $0x168] sm:$0xf]
  %v141 = vld [vmem:[%s1 + $0x16c] sm:$0xf]
  %v142 = vld [vmem:[%s1 + $0x170] sm:$0xf]
  %v143 = vld [vmem:[%s1 + $0x174] sm:$0xf]
  %v144 = vld [vmem:[%s1 + $0x178] sm:$0xf]
  %v145 = vld [vmem:[%s1 + $0x17c] sm:$0xf]
  %v146 = vld [vmem:[%s1 + $0x180] sm:$0xf]
  %v147 = vld [vmem:[%s1 + $0x184] sm:$0xf]
  %v148 = vld [vmem:[%s1 + $0x188] sm:$0xf]
  %v149 = vld [vmem:[%s1 + $0x18c] sm:$0xf]
  %v150 = vld [vmem:[%s1 + $0x190] sm:$0xf]
  %v151 = vld [vmem:[%s1 + $0x194] sm:$0xf]
  %v152 = vld [vmem:[%s1 + $0x198] sm:$0xf]
  %v153 = vld [vmem:[%s1 + $0x19c] sm:$0xf]
  %v154 = vld [vmem:[%s1 + $0x1a0] sm:$0xf]
  %v155 = vld [vmem:[%s1 + $0x1a4] sm:$0xf]
  %v156 = vld [vmem:[%s1 + $0x1a8] sm:$0xf]
  %v157 = vld [vmem:[%s1 + $0x1ac] sm:$0xf]
  %v158 = vld [vmem:[%s1 + $0x1b0] sm:$0xf]
  %v159 = vld [vmem:[%s1 + $0x1b4] sm:$0xf]
  %v160 = vld [vmem:[%s1 + $0x1b8] sm:$0xf]
  %v161 = vld [vmem:[%s1 + $0x1bc] sm:$0xf]
  %v194 = vunpack.c.l.b16 %v18
  %v195 = vunpack.c.h.b16 %v18
  %v196 = vunpack.c.l.b16 %v19
  %v197 = vunpack.c.h.b16 %v19
  %v198 = vunpack.c.l.b16 %v20
  %v199 = vunpack.c.h.b16 %v20
  %v200 = vunpack.c.l.b16 %v21
  %v201 = vunpack.c.l.b16 %v22
  %v202 = vunpack.c.h.b16 %v22
  %v203 = vunpack.c.l.b16 %v23
  %v204 = vunpack.c.h.b16 %v23
  %v205 = vunpack.c.l.b16 %v24
  %v206 = vunpack.c.h.b16 %v24
  %v207 = vunpack.c.l.b16 %v25
  %v208 = vunpack.c.l.b16 %v26
  %v209 = vunpack.c.h.b16 %v26
  %v210 = vunpack.c.l.b16 %v27
  %v211 = vunpack.c.h.b16 %v27
  %v212 = vunpack.c.l.b16 %v28
  %v213 = vunpack.c.h.b16 %v28
  %v214 = vunpack.c.l.b16 %v29
  %v215 = vunpack.c.l.b16 %v30
  %v216 = vunpack.c.h.b16 %v30
  %v217 = vunpack.c.l.b16 %v31
  %v218 = vunpack.c.h.b16 %v31
  %v219 = vunpack.c.l.b16 %v32
  %v220 = vunpack.c.h.b16 %v32
  %v221 = vunpack.c.l.b16 %v33
  %v222 = vunpack.c.l.b16 %v34
  %v223 = vunpack.c.h.b16 %v34
  %v224 = vunpack.c.l.b16 %v35
  %v225 = vunpack.c.h.b16 %v35
  %v226 = vunpack.c.l.b16 %v36
  %v227 = vunpack.c.h.b16 %v36
  %v228 = vunpack.c.l.b16 %v37
  %v229 = vunpack.c.l.b16 %v38
  %v230 = vunpack.c.h.b16 %v38
  %v231 = vunpack.c.l.b16 %v39
  %v232 = vunpack.c.h.b16 %v39
  %v233 = vunpack.c.l.b16 %v40
  %v234 = vunpack.c.h.b16 %v40
  %v235 = vunpack.c.l.b16 %v41
  %v236 = vunpack.c.l.b16 %v42
  %v237 = vunpack.c.h.b16 %v42
  %v238 = vunpack.c.l.b16 %v43
  %v239 = vunpack.c.h.b16 %v43
  %v240 = vunpack.c.l.b16 %v44
  %v241 = vunpack.c.h.b16 %v44
  %v242 = vunpack.c.l.b16 %v45
  %v243 = vunpack.c.l.b16 %v46
  %v244 = vunpack.c.h.b16 %v46
  %v245 = vunpack.c.l.b16 %v47
  %v246 = vunpack.c.h.b16 %v47
  %v247 = vunpack.c.l.b16 %v48
  %v248 = vunpack.c.h.b16 %v48
  %v249 = vunpack.c.l.b16 %v49
  %v250 = vpack.c.b16 %v201, %v194
  %v251 = vpack.c.b16 %v202, %v195
  %v252 = vpack.c.b16 %v203, %v196
  %v253 = vpack.c.b16 %v204, %v197
  %v254 = vpack.c.b16 %v205, %v198
  %v255 = vpack.c.b16 %v206, %v199
  %v256 = vpack.c.b16 %v207, %v200
  %v257 = vpack.c.b16 %v215, %v208
  %v258 = vpack.c.b16 %v216, %v209
  %v259 = vpack.c.b16 %v217, %v210
  %v260 = vpack.c.b16 %v218, %v211
  %v261 = vpack.c.b16 %v219, %v212
  %v262 = vpack.c.b16 %v220, %v213
  %v263 = vpack.c.b16 %v221, %v214
  %v264 = vpack.c.b16 %v229, %v222
  %v265 = vpack.c.b16 %v230, %v223
  %v266 = vpack.c.b16 %v231, %v224
  %v267 = vpack.c.b16 %v232, %v225
  %v268 = vpack.c.b16 %v233, %v226
  %v269 = vpack.c.b16 %v234, %v227
  %v270 = vpack.c.b16 %v235, %v228
  %v271 = vpack.c.b16 %v243, %v236
  %v272 = vpack.c.b16 %v244, %v237
  %v273 = vpack.c.b16 %v245, %v238
  %v274 = vpack.c.b16 %v246, %v239
  %v275 = vpack.c.b16 %v247, %v240
  %v276 = vpack.c.b16 %v248, %v241
  %v277 = vpack.c.b16 %v249, %v242
  %v418 = vunpack.c.l.b16 %v50
  %v419 = vunpack.c.l.b16 %v51
  %v420 = vunpack.c.l.b16 %v52
  %v421 = vunpack.c.l.b16 %v53
  %v422 = vunpack.c.l.b16 %v54
  %v423 = vunpack.c.l.b16 %v55
  %v424 = vunpack.c.l.b16 %v56
  %v425 = vunpack.c.l.b16 %v57
  %v426 = vunpack.c.l.b16 %v58
  %v427 = vunpack.c.l.b16 %v59
  %v428 = vunpack.c.l.b16 %v60
  %v429 = vunpack.c.l.b16 %v61
  %v430 = vunpack.c.l.b16 %v62
  %v431 = vunpack.c.l.b16 %v63
  %v432 = vunpack.c.l.b16 %v64
  %v433 = vunpack.c.l.b16 %v65
  %v434 = vunpack.c.l.b16 %v66
  %v435 = vunpack.c.l.b16 %v67
  %v436 = vunpack.c.l.b16 %v68
  %v437 = vunpack.c.l.b16 %v69
  %v438 = vunpack.c.l.b16 %v70
  %v439 = vunpack.c.l.b16 %v71
  %v440 = vunpack.c.l.b16 %v72
  %v441 = vunpack.c.l.b16 %v73
  %v442 = vunpack.c.l.b16 %v74
  %v443 = vunpack.c.l.b16 %v75
  %v444 = vunpack.c.l.b16 %v76
  %v445 = vunpack.c.l.b16 %v77
  %v446 = vunpack.c.l.b16 %v78
  %v447 = vunpack.c.l.b16 %v79
  %v448 = vunpack.c.l.b16 %v80
  %v449 = vunpack.c.l.b16 %v81
  %v450 = vunpack.c.l.b16 %v82
  %v451 = vunpack.c.l.b16 %v83
  %v452 = vunpack.c.l.b16 %v84
  %v453 = vunpack.c.l.b16 %v85
  %v454 = vunpack.c.l.b16 %v86
  %v455 = vunpack.c.l.b16 %v87
  %v456 = vunpack.c.l.b16 %v88
  %v457 = vunpack.c.l.b16 %v89
  %v458 = vunpack.c.l.b16 %v90
  %v459 = vunpack.c.l.b16 %v91
  %v460 = vunpack.c.l.b16 %v92
  %v461 = vunpack.c.l.b16 %v93
  %v462 = vunpack.c.l.b16 %v94
  %v463 = vunpack.c.l.b16 %v95
  %v464 = vunpack.c.l.b16 %v96
  %v465 = vunpack.c.l.b16 %v97
  %v466 = vunpack.c.l.b16 %v98
  %v467 = vunpack.c.l.b16 %v99
  %v468 = vunpack.c.l.b16 %v100
  %v469 = vunpack.c.l.b16 %v101
  %v470 = vunpack.c.l.b16 %v102
  %v471 = vunpack.c.l.b16 %v103
  %v472 = vunpack.c.l.b16 %v104
  %v473 = vunpack.c.l.b16 %v105
  %v474 = vunpack.c.l.b16 %v106
  %v475 = vunpack.c.l.b16 %v107
  %v476 = vunpack.c.l.b16 %v108
  %v477 = vunpack.c.l.b16 %v109
  %v478 = vunpack.c.l.b16 %v110
  %v479 = vunpack.c.l.b16 %v111
  %v480 = vunpack.c.l.b16 %v112
  %v481 = vunpack.c.l.b16 %v113
  %v482 = vunpack.c.l.b16 %v114
  %v483 = vunpack.c.l.b16 %v115
  %v484 = vunpack.c.l.b16 %v116
  %v485 = vunpack.c.l.b16 %v117
  %v486 = vunpack.c.l.b16 %v118
  %v487 = vunpack.c.l.b16 %v119
  %v488 = vunpack.c.l.b16 %v120
  %v489 = vunpack.c.l.b16 %v121
  %v490 = vunpack.c.l.b16 %v122
  %v491 = vunpack.c.l.b16 %v123
  %v492 = vunpack.c.l.b16 %v124
  %v493 = vunpack.c.l.b16 %v125
  %v494 = vunpack.c.l.b16 %v126
  %v495 = vunpack.c.l.b16 %v127
  %v496 = vunpack.c.l.b16 %v128
  %v497 = vunpack.c.l.b16 %v129
  %v498 = vunpack.c.l.b16 %v130
  %v499 = vunpack.c.l.b16 %v131
  %v500 = vunpack.c.l.b16 %v132
  %v501 = vunpack.c.l.b16 %v133
  %v502 = vunpack.c.l.b16 %v134
  %v503 = vunpack.c.l.b16 %v135
  %v504 = vunpack.c.l.b16 %v136
  %v505 = vunpack.c.l.b16 %v137
  %v506 = vunpack.c.l.b16 %v138
  %v507 = vunpack.c.l.b16 %v139
  %v508 = vunpack.c.l.b16 %v140
  %v509 = vunpack.c.l.b16 %v141
  %v510 = vunpack.c.l.b16 %v142
  %v511 = vunpack.c.l.b16 %v143
  %v512 = vunpack.c.l.b16 %v144
  %v513 = vunpack.c.l.b16 %v145
  %v514 = vunpack.c.l.b16 %v146
  %v515 = vunpack.c.l.b16 %v147
  %v516 = vunpack.c.l.b16 %v148
  %v517 = vunpack.c.l.b16 %v149
  %v518 = vunpack.c.l.b16 %v150
  %v519 = vunpack.c.l.b16 %v151
  %v520 = vunpack.c.l.b16 %v152
  %v521 = vunpack.c.l.b16 %v153
  %v522 = vunpack.c.l.b16 %v154
  %v523 = vunpack.c.l.b16 %v155
  %v524 = vunpack.c.l.b16 %v156
  %v525 = vunpack.c.l.b16 %v157
  %v526 = vunpack.c.l.b16 %v158
  %v527 = vunpack.c.l.b16 %v159
  %v528 = vunpack.c.l.b16 %v160
  %v529 = vunpack.c.l.b16 %v161
  %v530 = vpack.c.b16 %v419, %v418
  %v531 = vpack.c.b16 %v421, %v420
  %v532 = vpack.c.b16 %v423, %v422
  %v533 = vpack.c.b16 %v425, %v424
  %v534 = vpack.c.b16 %v427, %v426
  %v535 = vpack.c.b16 %v429, %v428
  %v536 = vpack.c.b16 %v431, %v430
  %v537 = vpack.c.b16 %v433, %v432
  %v538 = vpack.c.b16 %v435, %v434
  %v539 = vpack.c.b16 %v437, %v436
  %v540 = vpack.c.b16 %v439, %v438
  %v541 = vpack.c.b16 %v441, %v440
  %v542 = vpack.c.b16 %v443, %v442
  %v543 = vpack.c.b16 %v445, %v444
  %v544 = vpack.c.b16 %v447, %v446
  %v545 = vpack.c.b16 %v449, %v448
  %v546 = vpack.c.b16 %v451, %v450
  %v547 = vpack.c.b16 %v453, %v452
  %v548 = vpack.c.b16 %v455, %v454
  %v549 = vpack.c.b16 %v457, %v456
  %v550 = vpack.c.b16 %v459, %v458
  %v551 = vpack.c.b16 %v461, %v460
  %v552 = vpack.c.b16 %v463, %v462
  %v553 = vpack.c.b16 %v465, %v464
  %v554 = vpack.c.b16 %v467, %v466
  %v555 = vpack.c.b16 %v469, %v468
  %v556 = vpack.c.b16 %v471, %v470
  %v557 = vpack.c.b16 %v473, %v472
  %v558 = vpack.c.b16 %v475, %v474
  %v559 = vpack.c.b16 %v477, %v476
  %v560 = vpack.c.b16 %v479, %v478
  %v561 = vpack.c.b16 %v481, %v480
  %v562 = vpack.c.b16 %v483, %v482
  %v563 = vpack.c.b16 %v485, %v484
  %v564 = vpack.c.b16 %v487, %v486
  %v565 = vpack.c.b16 %v489, %v488
  %v566 = vpack.c.b16 %v491, %v490
  %v567 = vpack.c.b16 %v493, %v492
  %v568 = vpack.c.b16 %v495, %v494
  %v569 = vpack.c.b16 %v497, %v496
  %v570 = vpack.c.b16 %v499, %v498
  %v571 = vpack.c.b16 %v501, %v500
  %v572 = vpack.c.b16 %v503, %v502
  %v573 = vpack.c.b16 %v505, %v504
  %v574 = vpack.c.b16 %v507, %v506
  %v575 = vpack.c.b16 %v509, %v508
  %v576 = vpack.c.b16 %v511, %v510
  %v577 = vpack.c.b16 %v513, %v512
  %v578 = vpack.c.b16 %v515, %v514
  %v579 = vpack.c.b16 %v517, %v516
  %v580 = vpack.c.b16 %v519, %v518
  %v581 = vpack.c.b16 %v521, %v520
  %v582 = vpack.c.b16 %v523, %v522
  %v583 = vpack.c.b16 %v525, %v524
  %v584 = vpack.c.b16 %v527, %v526
  %v585 = vpack.c.b16 %v529, %v528
  %642 = vmatprep.subr.bf16.mxu0 0
  %643 = vmatpush1.bf16.msra.mxu0 %v530
  %644 = vmatprep.subr.bf16.mxu0 0
  %645 = vmatpush1.bf16.msra.mxu0 %v531
  %646 = vmatprep.subr.bf16.mxu0 0
  %647 = vmatpush1.bf16.msra.mxu0 %v532
  %648 = vmatprep.subr.bf16.mxu0 0
  %649 = vmatpush1.bf16.msra.mxu0 %v533
  %650 = vmatprep.subr.bf16.mxu0 0
  %651 = vmatpush1.bf16.msra.mxu0 %v534
  %652 = vmatprep.subr.bf16.mxu0 0
  %653 = vmatpush1.bf16.msra.mxu0 %v535
  %654 = vmatprep.subr.bf16.mxu0 0
  %655 = vmatpush1.bf16.msra.mxu0 %v536
  %656 = vmatprep.subr.bf16.mxu0 0
  %657 = vmatpush1.bf16.msra.mxu0 %v537
  %658 = vmatprep.subr.bf16.mxu0 0
  %659 = vmatpush1.bf16.msra.mxu0 %v538
  %660 = vmatprep.subr.bf16.mxu0 0
  %661 = vmatpush1.bf16.msra.mxu0 %v539
  %662 = vmatprep.subr.bf16.mxu0 0
  %663 = vmatpush1.bf16.msra.mxu0 %v540
  %664 = vmatprep.subr.bf16.mxu0 0
  %665 = vmatpush1.bf16.msra.mxu0 %v541
  %666 = vmatprep.subr.bf16.mxu0 0
  %667 = vmatpush1.bf16.msra.mxu0 %v542
  %668 = vmatprep.subr.bf16.mxu0 0
  %669 = vmatpush1.bf16.msra.mxu0 %v543
  %670 = vmatprep.subr.bf16.mxu0 0
  %671 = vmatpush1.bf16.msra.mxu0 %v544
  %672 = vmatprep.subr.bf16.mxu0 0
  %673 = vmatpush1.bf16.msra.mxu0 %v545
  %674 = vmatprep.mubr.bf16.mxu0 %v251
  %675 = vmatmul.mubr.bf16.gmra.mrb[0].mxu0 %v250
  %v676 = vpop.f32.mrb[0].mxu0
  %v677 = vadd.f32 0.0, %v676
  %v678 = vpop.f32.mrb[0].mxu0
  %v679 = vpop.f32.mrb[0].mxu0
  %v680 = vadd.f32 0.0, %v679
  %v681 = vpop.f32.mrb[0].mxu0
  %682 = vmatprep.mubr.bf16.mxu0 %v258
  %683 = vmatmul.mubr.bf16.gmra.mrb[0].mxu0 %v257
  %v684 = vpop.f32.mrb[0].mxu0
  %v685 = vadd.f32 0.0, %v684
  %v686 = vpop.f32.mrb[0].mxu0
  %v687 = vpop.f32.mrb[0].mxu0
  %v688 = vadd.f32 0.0, %v687
  %v689 = vpop.f32.mrb[0].mxu0
  %690 = vmatprep.mubr.bf16.mxu0 %v265
  %691 = vmatmul.mubr.bf16.gmra.mrb[0].mxu0 %v264
  %v692 = vpop.f32.mrb[0].mxu0
  %v693 = vadd.f32 0.0, %v692
  %v694 = vpop.f32.mrb[0].mxu0
  %v695 = vpop.f32.mrb[0].mxu0
  %v696 = vadd.f32 0.0, %v695
  %v697 = vpop.f32.mrb[0].mxu0
  %698 = vmatprep.mubr.bf16.mxu0 %v272
  %699 = vmatmul.mubr.bf16.gmra.mrb[0].mxu0 %v271
  %v700 = vpop.f32.mrb[0].mxu0
  %v701 = vadd.f32 0.0, %v700
  %v702 = vpop.f32.mrb[0].mxu0
  %v703 = vpop.f32.mrb[0].mxu0
  %v704 = vadd.f32 0.0, %v703
  %v705 = vpop.f32.mrb[0].mxu0
  %706 = vdwg.mxu0
  %707 = vmatprep.subr.bf16.mxu0 0
  %708 = vmatpush1.bf16.msra.mxu0 %v546
  %709 = vmatprep.subr.bf16.mxu0 0
  %710 = vmatpush1.bf16.msra.mxu0 %v547
  %711 = vmatprep.subr.bf16.mxu0 0
  %712 = vmatpush1.bf16.msra.mxu0 %v548
  %713 = vmatprep.subr.bf16.mxu0 0
  %714 = vmatpush1.bf16.msra.mxu0 %v549
  %715 = vmatprep.subr.bf16.mxu0 0
  %716 = vmatpush1.bf16.msra.mxu0 %v550
  %717 = vmatprep.subr.bf16.mxu0 0
  %718 = vmatpush1.bf16.msra.mxu0 %v551
  %719 = vmatprep.subr.bf16.mxu0 0
  %720 = vmatpush1.bf16.msra.mxu0 %v552
  %721 = vmatprep.subr.bf16.mxu0 0
  %722 = vmatpush1.bf16.msra.mxu0 %v553
  %723 = vmatprep.subr.bf16.mxu0 0
  %724 = vmatpush1.bf16.msra.mxu0 %v554
  %725 = vmatprep.subr.bf16.mxu0 0
  %726 = vmatpush1.bf16.msra.mxu0 %v555
  %727 = vmatprep.subr.bf16.mxu0 0
  %728 = vmatpush1.bf16.msra.mxu0 %v556
  %729 = vmatprep.subr.bf16.mxu0 0
  %730 = vmatpush1.bf16.msra.mxu0 %v557
  %731 = vmatprep.subr.bf16.mxu0 0
  %732 = vmatpush1.bf16.msra.mxu0 %v558
  %733 = vmatprep.subr.bf16.mxu0 0
  %734 = vmatpush1.bf16.msra.mxu0 %v559
  %735 = vmatprep.subr.bf16.mxu0 0
  %736 = vmatpush1.bf16.msra.mxu0 %v560
  %737 = vmatprep.subr.bf16.mxu0 0
  %738 = vmatpush1.bf16.msra.mxu0 %v561
  %739 = vmatprep.mubr.bf16.mxu0 %v253
  %740 = vmatmul.mubr.bf16.gmra.mrb[0].mxu0 %v252
  %v741 = vpop.f32.mrb[0].mxu0
  %v742 = vadd.f32 %v677, %v741
  %v743 = vpop.f32.mrb[0].mxu0
  %v744 = vpop.f32.mrb[0].mxu0
  %v745 = vadd.f32 %v680, %v744
  %v746 = vpop.f32.mrb[0].mxu0
  %747 = vmatprep.mubr.bf16.mxu0 %v260
  %748 = vmatmul.mubr.bf16.gmra.mrb[0].mxu0 %v259
  %v749 = vpop.f32.mrb[0].mxu0
  %v750 = vadd.f32 %v685, %v749
  %v751 = vpop.f32.mrb[0].mxu0
  %v752 = vpop.f32.mrb[0].mxu0
  %v753 = vadd.f32 %v688, %v752
  %v754 = vpop.f32.mrb[0].mxu0
  %755 = vmatprep.mubr.bf16.mxu0 %v267
  %756 = vmatmul.mubr.bf16.gmra.mrb[0].mxu0 %v266
  %v757 = vpop.f32.mrb[0].mxu0
  %v758 = vadd.f32 %v693, %v757
  %v759 = vpop.f32.mrb[0].mxu0
  %v760 = vpop.f32.mrb[0].mxu0
  %v761 = vadd.f32 %v696, %v760
  %v762 = vpop.f32.mrb[0].mxu0
  %763 = vmatprep.mubr.bf16.mxu0 %v274
  %764 = vmatmul.mubr.bf16.gmra.mrb[0].mxu0 %v273
  %v765 = vpop.f32.mrb[0].mxu0
  %v766 = vadd.f32 %v701, %v765
  %v767 = vpop.f32.mrb[0].mxu0
  %v768 = vpop.f32.mrb[0].mxu0
  %v769 = vadd.f32 %v704, %v768
  %v770 = vpop.f32.mrb[0].mxu0
  %771 = vdwg.mxu0
  %772 = vmatprep.subr.bf16.mxu0 0
  %773 = vmatpush1.bf16.msra.mxu0 %v562
  %774 = vmatprep.subr.bf16.mxu0 0
  %775 = vmatpush1.bf16.msra.mxu0 %v563
  %776 = vmatprep.subr.bf16.mxu0 0
  %777 = vmatpush1.bf16.msra.mxu0 %v564
  %778 = vmatprep.subr.bf16.mxu0 0
  %779 = vmatpush1.bf16.msra.mxu0 %v565
  %780 = vmatprep.subr.bf16.mxu0 0
  %781 = vmatpush1.bf16.msra.mxu0 %v566
  %782 = vmatprep.subr.bf16.mxu0 0
  %783 = vmatpush1.bf16.msra.mxu0 %v567
  %784 = vmatprep.subr.bf16.mxu0 0
  %785 = vmatpush1.bf16.msra.mxu0 %v568
  %786 = vmatprep.subr.bf16.mxu0 0
  %787 = vmatpush1.bf16.msra.mxu0 %v569
  %788 = vmatprep.subr.bf16.mxu0 0
  %789 = vmatpush1.bf16.msra.mxu0 %v570
  %790 = vmatprep.subr.bf16.mxu0 0
  %791 = vmatpush1.bf16.msra.mxu0 %v571
  %792 = vmatprep.subr.bf16.mxu0 0
  %793 = vmatpush1.bf16.msra.mxu0 %v572
  %794 = vmatprep.subr.bf16.mxu0 0
  %795 = vmatpush1.bf16.msra.mxu0 %v573
  %796 = vmatprep.subr.bf16.mxu0 0
  %797 = vmatpush1.bf16.msra.mxu0 %v574
  %798 = vmatprep.subr.bf16.mxu0 0
  %799 = vmatpush1.bf16.msra.mxu0 %v575
  %800 = vmatprep.subr.bf16.mxu0 0
  %801 = vmatpush1.bf16.msra.mxu0 %v576
  %802 = vmatprep.subr.bf16.mxu0 0
  %803 = vmatpush1.bf16.msra.mxu0 %v577
  %804 = vmatprep.mubr.bf16.mxu0 %v255
  %805 = vmatmul.mubr.bf16.gmra.mrb[0].mxu0 %v254
  %v806 = vpop.f32.mrb[0].mxu0
  %v807 = vadd.f32 %v742, %v806
  %v808 = vpop.f32.mrb[0].mxu0
  %v809 = vpop.f32.mrb[0].mxu0
  %v810 = vadd.f32 %v745, %v809
  %v811 = vpop.f32.mrb[0].mxu0
  %812 = vmatprep.mubr.bf16.mxu0 %v262
  %813 = vmatmul.mubr.bf16.gmra.mrb[0].mxu0 %v261
  %v814 = vpop.f32.mrb[0].mxu0
  %v815 = vadd.f32 %v750, %v814
  %v816 = vpop.f32.mrb[0].mxu0
  %v817 = vpop.f32.mrb[0].mxu0
  %v818 = vadd.f32 %v753, %v817
  %v819 = vpop.f32.mrb[0].mxu0
  %820 = vmatprep.mubr.bf16.mxu0 %v269
  %821 = vmatmul.mubr.bf16.gmra.mrb[0].mxu0 %v268
  %v822 = vpop.f32.mrb[0].mxu0
  %v823 = vadd.f32 %v758, %v822
  %v824 = vpop.f32.mrb[0].mxu0
  %v825 = vpop.f32.mrb[0].mxu0
  %v826 = vadd.f32 %v761, %v825
  %v827 = vpop.f32.mrb[0].mxu0
  %828 = vmatprep.mubr.bf16.mxu0 %v276
  %829 = vmatmul.mubr.bf16.gmra.mrb[0].mxu0 %v275
  %v830 = vpop.f32.mrb[0].mxu0
  %v831 = vadd.f32 %v766, %v830
  %v832 = vpop.f32.mrb[0].mxu0
  %v833 = vpop.f32.mrb[0].mxu0
  %v834 = vadd.f32 %v769, %v833
  %v835 = vpop.f32.mrb[0].mxu0
  %836 = vdwg.mxu0
  %837 = vmatprep.subr.bf16.mxu0 0
  %838 = vmatpush1.bf16.msra.mxu0 %v578
  %839 = vmatprep.subr.bf16.mxu0 0
  %840 = vmatpush1.bf16.msra.mxu0 %v579
  %841 = vmatprep.subr.bf16.mxu0 0
  %842 = vmatpush1.bf16.msra.mxu0 %v580
  %843 = vmatprep.subr.bf16.mxu0 0
  %844 = vmatpush1.bf16.msra.mxu0 %v581
  %845 = vmatprep.subr.bf16.mxu0 0
  %846 = vmatpush1.bf16.msra.mxu0 %v582
  %847 = vmatprep.subr.bf16.mxu0 0
  %848 = vmatpush1.bf16.msra.mxu0 %v583
  %849 = vmatprep.subr.bf16.mxu0 0
  %850 = vmatpush1.bf16.msra.mxu0 %v584
  %851 = vmatprep.subr.bf16.mxu0 0
  %852 = vmatpush1.bf16.msra.mxu0 %v585
  %853 = vmatprep.subr.bf16.mxu0 0
  %854 = vmatpush1.bf16.msra.mxu0 0
  %855 = vmatprep.subr.bf16.mxu0 0
  %856 = vmatpush1.bf16.msra.mxu0 0
  %857 = vmatprep.subr.bf16.mxu0 0
  %858 = vmatpush1.bf16.msra.mxu0 0
  %859 = vmatprep.subr.bf16.mxu0 0
  %860 = vmatpush1.bf16.msra.mxu0 0
  %861 = vmatprep.subr.bf16.mxu0 0
  %862 = vmatpush1.bf16.msra.mxu0 0
  %863 = vmatprep.subr.bf16.mxu0 0
  %864 = vmatpush1.bf16.msra.mxu0 0
  %865 = vmatprep.subr.bf16.mxu0 0
  %866 = vmatpush1.bf16.msra.mxu0 0
  %867 = vmatprep.subr.bf16.mxu0 0
  %868 = vmatpush1.bf16.msra.mxu0 0
  %869 = vmatprep.mubr.bf16.mxu0 0
  %870 = vmatmul.mubr.bf16.gmra.mrb[0].mxu0 %v256
  %v871 = vpop.f32.mrb[0].mxu0
  %v872 = vadd.f32 %v807, %v871
  %v873 = vpop.f32.mrb[0].mxu0
  %v874 = vpop.f32.mrb[0].mxu0
  %v875 = vadd.f32 %v810, %v874
  %v876 = vpop.f32.mrb[0].mxu0
  %877 = vmatprep.mubr.bf16.mxu0 0
  %878 = vmatmul.mubr.bf16.gmra.mrb[0].mxu0 %v263
  %v879 = vpop.f32.mrb[0].mxu0
  %v880 = vadd.f32 %v815, %v879
  %v881 = vpop.f32.mrb[0].mxu0
  %v882 = vpop.f32.mrb[0].mxu0
  %v883 = vadd.f32 %v818, %v882
  %v884 = vpop.f32.mrb[0].mxu0
  %885 = vmatprep.mubr.bf16.mxu0 0
  %886 = vmatmul.mubr.bf16.gmra.mrb[0].mxu0 %v270
  %v887 = vpop.f32.mrb[0].mxu0
  %v888 = vadd.f32 %v823, %v887
  %v889 = vpop.f32.mrb[0].mxu0
  %v890 = vpop.f32.mrb[0].mxu0
  %v891 = vadd.f32 %v826, %v890
  %v892 = vpop.f32.mrb[0].mxu0
  %893 = vmatprep.mubr.bf16.mxu0 0
  %894 = vmatmul.mubr.bf16.gmra.mrb[0].mxu0 %v277
  %v895 = vpop.f32.mrb[0].mxu0
  %v896 = vadd.f32 %v831, %v895
  %v897 = vpop.f32.mrb[0].mxu0
  %v898 = vpop.f32.mrb[0].mxu0
  %v899 = vadd.f32 %v834, %v898
  %v900 = vpop.f32.mrb[0].mxu0
  %901 = vdwg.mxu0
  %v902 = vld [vmem:[%s2] sm:$0x1]
  %v904 = vlaneseq
  %v905 = vshrl.u32 %v904, 7
  %v906 = vsub.s32 0, %v905
  %v907 = vrot.slane %v902, %v906
  %v909 = vmul.f32 %v872, %v907
  %v910 = vmul.f32 %v875, %v907
  %v911 = vmul.f32 %v880, %v907
  %v912 = vmul.f32 %v883, %v907
  %v913 = vmul.f32 %v888, %v907
  %v914 = vmul.f32 %v891, %v907
  %v915 = vmul.f32 %v896, %v907
  %v916 = vmul.f32 %v899, %v907
  %v917 = vld [vmem:[%s3] sm:$0x1]
  %v919 = vlaneseq
  %v920 = vshrl.u32 %v919, 7
  %v921 = vsub.s32 0, %v920
  %v922 = vrot.slane %v917, %v921
  %v924 = vadd.f32 %v909, %v922
  %v925 = vadd.f32 %v910, %v922
  %v926 = vadd.f32 %v911, %v922
  %v927 = vadd.f32 %v912, %v922
  %v928 = vadd.f32 %v913, %v922
  %v929 = vadd.f32 %v914, %v922
  %v930 = vadd.f32 %v915, %v922
  %v931 = vadd.f32 %v916, %v922
  %v932 = vmax.f32 %v924, 0.0
  %v933 = vmax.f32 %v925, 0.0
  %v934 = vmax.f32 %v926, 0.0
  %v935 = vmax.f32 %v927, 0.0
  %v936 = vmax.f32 %v928, 0.0
  %v937 = vmax.f32 %v929, 0.0
  %v938 = vmax.f32 %v930, 0.0
  %v939 = vmax.f32 %v931, 0.0
  %940 = vst [vmem:[%s4] sm:$0xff] %v932
  %941 = vst [vmem:[%s4 + $0x8] sm:$0xff] %v933
  %942 = vst [vmem:[%s4 + $0x10] sm:$0xff] %v934
  %943 = vst [vmem:[%s4 + $0x18] sm:$0xff] %v935
  %944 = vst [vmem:[%s4 + $0x20] sm:$0xff] %v936
  %945 = vst [vmem:[%s4 + $0x28] sm:$0xff] %v937
  %946 = vst [vmem:[%s4 + $0x30] sm:$0xff] %v938
  %947 = vst [vmem:[%s4 + $0x38] sm:$0xff] %v939
  // Predicated region
  $region18: #{forward.18} parent=0 // pred_check
    _
  $region19: #{forward.18} parent=0 // pred_check_branch
    %949 = sbr.rel (0) target = $region21
  $region20: #{forward.18} parent=0 // pred_region
    _
  $region21: #{forward.18} parent=0 // pred_fallthru
    _
  // Predicated region
  $region22: #{forward.18} parent=0 // pred_check
    _
  $region23: #{forward.18} parent=0 // pred_check_branch
    %951 = sbr.rel (0) target = $region25
  $region24: #{forward.18} parent=0 // pred_region
    _
  $region25: #{forward.18} parent=0 // pred_fallthru
    _

// kernel: forward.11
$region0: #{forward.11}
  #allocation0 [shape = 'u32[]', space=smem, size = 0x4, offset = 0x4, fixed_abs, tag = 'smem constant byte address 0x4 - core index']
  #allocation1 [shape = 'u32[144,128]{1,0:T(1,128)}', space=vmem, size = 0x12000, scoped, tag = 'internal scratch']
  %s0 = inlined_call_operand.vmem [shape: bf16[1024,128], index: 0, kind: input, shape index: {}]
  %s1 = inlined_call_operand.vmem [shape: bf16[128,128], index: 1, kind: input, shape index: {}]
  %s2 = inlined_call_operand.vmem [shape: f32[1,128], index: 2, kind: input, shape index: {}]
  %s3 = inlined_call_operand.vmem [shape: f32[1,128], index: 3, kind: input, shape index: {}]
  %s4 = inlined_call_operand.vmem [shape: f32[1024,128], index: 4, kind: output, shape index: {}]
  %s5 = sld [smem:[#allocation0]]
  $region49: #{forward.11} parent=0
    _
  %s7 = ssub.s32 1, %s5
  %s8 = scalar_select 0, %s7, %s5
  loop: start=0, step=1, limit=4
  $region2: #{forward.11} parent=0 // loop_pre_header
    _
  $region3: #{forward.11} parent=0 // loop_header
    %s10 = sphi 0, %s14
    %p11 = scmp.ge.s32.totalorder %s10, 4
    %s20 = sphi 0, %s22
    %s23 = sphi 0, %s20
    %s24 = sphi 0, %s23
    %s40 = sphi 0, %s24
    %s44 = sphi 0, %s44
    %s46 = sphi 0, %s44
    %s47 = sphi 0, %s46
    %s61 = sphi 0, %s47
    %s65 = sphi 0, %s65
    %s67 = sphi 0, %s65
    %s68 = sphi 0, %s67
    %s82 = sphi 0, %s68
    %s86 = sphi 0, %s86
    %s88 = sphi 0, %s86
    %s89 = sphi 0, %s88
    %s103 = sphi 0, %s89
    %s109 = sphi 0, %s111
    %s112 = sphi 0, %s109
    %s113 = sphi 0, %s112
    %s129 = sphi 0, %s113
  $region4: #{forward.11} parent=0 // loop_header_branch
    %13 = sbr.rel (%p11) target = $region8
  $region5: #{forward.11} parent=0 // loop_body
    %s15 = ssub.s32 %s10, 1
    %s16 = ssub.s32 %s10, 2
    %s17 = sadd.s32 %s10, 1
    %s18 = ssub.s32 %s10, %s17
    %p19 = scmp.eq.s32.totalorder %s18, 0
    %s21 = sadd.s32 %s20, 1
    %s22 = scalar_select %p19, %s20, %s21
    %p25 = pneg %p19
    %p26 = scmp.eq.s32.totalorder %s10, 1
    %p27 = por %p25, %p26
    %p28 = scmp.ne.s32.totalorder %s20, %s23
    %p29 = scmp.eq.s32.totalorder %s10, 0
    %p30 = por %p28, %p29
    %p31 = scmp.ne.s32.totalorder %s20, %s23
    %p32 = scmp.eq.s32.totalorder %s15, 1
    %p33 = por %p31, %p32
    %p34 = scmp.ne.s32.totalorder %s23, %s24
    %p35 = scmp.eq.s32.totalorder %s15, 0
    %p36 = por %p34, %p35
    %p37 = scmp.ne.s32.totalorder %s23, %s24
    %p38 = scmp.eq.s32.totalorder %s16, 1
    %p39 = por %p37, %p38
    %p41 = scmp.ne.s32.totalorder %s24, %s40
    %p42 = scmp.eq.s32.totalorder %s16, 0
    %p43 = por %p41, %p42
    %s45 = sadd.s32 %s44, 1
    %p48 = scmp.eq.s32.totalorder %s10, 1
    %p49 = scmp.ne.s32.totalorder %s44, %s46
    %p50 = scmp.eq.s32.totalorder %s10, 0
    %p51 = por %p49, %p50
    %p52 = scmp.ne.s32.totalorder %s44, %s46
    %p53 = scmp.eq.s32.totalorder %s15, 1
    %p54 = por %p52, %p53
    %p55 = scmp.ne.s32.totalorder %s46, %s47
    %p56 = scmp.eq.s32.totalorder %s15, 0
    %p57 = por %p55, %p56
    %p58 = scmp.ne.s32.totalorder %s46, %s47
    %p59 = scmp.eq.s32.totalorder %s16, 1
    %p60 = por %p58, %p59
    %p62 = scmp.ne.s32.totalorder %s47, %s61
    %p63 = scmp.eq.s32.totalorder %s16, 0
    %p64 = por %p62, %p63
    %s66 = sadd.s32 %s65, 1
    %p69 = scmp.eq.s32.totalorder %s10, 1
    %p70 = scmp.ne.s32.totalorder %s65, %s67
    %p71 = scmp.eq.s32.totalorder %s10, 0
    %p72 = por %p70, %p71
    %p73 = scmp.ne.s32.totalorder %s65, %s67
    %p74 = scmp.eq.s32.totalorder %s15, 1
    %p75 = por %p73, %p74
    %p76 = scmp.ne.s32.totalorder %s67, %s68
    %p77 = scmp.eq.s32.totalorder %s15, 0
    %p78 = por %p76, %p77
    %p79 = scmp.ne.s32.totalorder %s67, %s68
    %p80 = scmp.eq.s32.totalorder %s16, 1
    %p81 = por %p79, %p80
    %p83 = scmp.ne.s32.totalorder %s68, %s82
    %p84 = scmp.eq.s32.totalorder %s16, 0
    %p85 = por %p83, %p84
    %s87 = sadd.s32 %s86, 1
    %p90 = scmp.eq.s32.totalorder %s10, 1
    %p91 = scmp.ne.s32.totalorder %s86, %s88
    %p92 = scmp.eq.s32.totalorder %s10, 0
    %p93 = por %p91, %p92
    %p94 = scmp.ne.s32.totalorder %s86, %s88
    %p95 = scmp.eq.s32.totalorder %s15, 1
    %p96 = por %p94, %p95
    %p97 = scmp.ne.s32.totalorder %s88, %s89
    %p98 = scmp.eq.s32.totalorder %s15, 0
    %p99 = por %p97, %p98
    %p100 = scmp.ne.s32.totalorder %s88, %s89
    %p101 = scmp.eq.s32.totalorder %s16, 1
    %p102 = por %p100, %p101
    %p104 = scmp.ne.s32.totalorder %s89, %s103
    %p105 = scmp.eq.s32.totalorder %s16, 0
    %p106 = por %p104, %p105
    %s107 = ssub.s32 %s10, %s17
    %p108 = scmp.eq.s32.totalorder %s107, 0
    %s110 = sadd.s32 %s109, 1
    %s111 = scalar_select %p108, %s109, %s110
    %p114 = pneg %p108
    %p115 = scmp.eq.s32.totalorder %s10, 1
    %p116 = por %p114, %p115
    %p117 = scmp.ne.s32.totalorder %s109, %s112
    %p118 = scmp.eq.s32.totalorder %s10, 0
    %p119 = por %p117, %p118
    %p120 = scmp.ne.s32.totalorder %s109, %s112
    %p121 = scmp.eq.s32.totalorder %s15, 1
    %p122 = por %p120, %p121
    %p123 = scmp.ne.s32.totalorder %s112, %s113
    %p124 = scmp.eq.s32.totalorder %s15, 0
    %p125 = por %p123, %p124
    %p126 = scmp.ne.s32.totalorder %s112, %s113
    %p127 = scmp.eq.s32.totalorder %s16, 1
    %p128 = por %p126, %p127
    %p130 = scmp.ne.s32.totalorder %s113, %s129
    %p131 = scmp.eq.s32.totalorder %s16, 0
    %p132 = por %p130, %p131
    %p133 = scmp.le.s32.totalorder 1, %s10
    %p134 = scmp.lt.s32.totalorder %s10, 3
    %p135 = pnand %p133, %p134
    %p136 = pneg %p135
    // Predicated region
    $region9: #{forward.11} parent=5 // pred_check
      _
    $region10: #{forward.11} parent=5 // pred_check_branch
      %138 = sbr.rel (%p135) target = $region12
    $region11: #{forward.11} parent=5 // pred_region
      %s139 = ssub.s32 %s10, 1
      // Predicated region
      $region13: #{forward.11} parent=11 // pred_check
        %p140 = pneg %p57
      $region14: #{forward.11} parent=11 // pred_check_branch
        %142 = sbr.rel (%p140) target = $region16
      $region15: #{forward.11} parent=11 // pred_region
        _
      $region16: #{forward.11} parent=11 // pred_fallthru
        _
      // Predicated region
      $region17: #{forward.11} parent=11 // pred_check
        %p143 = pneg %p78
      $region18: #{forward.11} parent=11 // pred_check_branch
        %145 = sbr.rel (%p143) target = $region20
      $region19: #{forward.11} parent=11 // pred_region
        _
      $region20: #{forward.11} parent=11 // pred_fallthru
        _
      // Predicated region
      $region21: #{forward.11} parent=11 // pred_check
        %p146 = pneg %p99
      $region22: #{forward.11} parent=11 // pred_check_branch
        %148 = sbr.rel (%p146) target = $region24
      $region23: #{forward.11} parent=11 // pred_region
        _
      $region24: #{forward.11} parent=11 // pred_fallthru
        _
    $region12: #{forward.11} parent=5 // pred_fallthru
      _
    %p149 = scmp.lt.s32.totalorder %s10, 2
    // Predicated region
    $region25: #{forward.11} parent=5 // pred_check
      %p150 = pneg %p149
    $region26: #{forward.11} parent=5 // pred_check_branch
      %152 = sbr.rel (%p150) target = $region28
    $region27: #{forward.11} parent=5 // pred_region
      // Predicated region
      $region29: #{forward.11} parent=27 // pred_check
        %p153 = pneg %p30
      $region30: #{forward.11} parent=27 // pred_check_branch
        %155 = sbr.rel (%p153) target = $region32
      $region31: #{forward.11} parent=27 // pred_region
        %s156 = smul.u32 64, %s10
        %p157 = scmp.lt.s32.totalorder %s156, 127
        %s158 = scalar_select %p157, %s156, 127
        %s159 = smul.addr %s158, 4
        %s160 = scalar_lea.vmem %s0, %s159
        %s161 = smul.u32 64, %s10
      $region32: #{forward.11} parent=27 // pred_fallthru
        _
    $region28: #{forward.11} parent=5 // pred_fallthru
      _
    %p162 = scmp.le.s32.totalorder 1, %s10
    %p163 = scmp.lt.s32.totalorder %s10, 3
    %p164 = pnand %p162, %p163
    %p165 = pneg %p164
    // Predicated region
    $region33: #{forward.11} parent=5 // pred_check
      _
    $region34: #{forward.11} parent=5 // pred_check_branch
      %167 = sbr.rel (%p164) target = $region36
    $region35: #{forward.11} parent=5 // pred_region
      %s168 = ssub.s32 %s10, 1
      %s169 = smul.u32 64, %s15
      %p170 = scmp.lt.s32.totalorder %s169, 127
      %s171 = scalar_select %p170, %s169, 127
      %s172 = smul.addr %s171, 4
      %s173 = scalar_lea.vmem %s0, %s172
      %p174 = pneg %p36
      %p175 = pneg %p33
      %p176 = pneg %p57
      %p177 = pneg %p54
      %p178 = pneg %p78
      %p179 = pneg %p75
      %p180 = pneg %p99
      %p181 = pneg %p96
      %p182 = pneg %p125
      %p183 = pneg %p122
      %s184 = smul.u32 64, %s15
      %p185 = scmp.lt.s32.totalorder %s184, 127
      %s186 = scalar_select %p185, %s184, 127
      %s187 = smul.addr %s186, 8
      %s188 = scalar_lea.vmem %s4, %s187
      %s189 = smul.u32 64, %s15
      %p190 = scmp.lt.s32.totalorder %s189, 127
      %s191 = scalar_select %p190, %s189, 127
      %s192 = smul.addr %s191, 4
      %s193 = scalar_lea.vmem %s0, %s192
      %s194 = smul.u32 64, %s15
      %s195 = smul.u32 64, %s15
      %p196 = scmp.lt.s32.totalorder %s195, 127
      %s197 = scalar_select %p196, %s195, 127
      %s198 = smul.addr %s197, 8
      %s199 = scalar_lea.vmem %s4, %s198
      %s200 = smul.u32 64, %s15
      %v202 = vld [vmem:[%s193] sm:$0xf]
      %v203 = vld [vmem:[%s193 + $0x4] sm:$0xf]
      %v204 = vld [vmem:[%s193 + $0x8] sm:$0xf]
      %v205 = vld [vmem:[%s193 + $0xc] sm:$0xf]
      %v206 = vld [vmem:[%s193 + $0x10] sm:$0xf]
      %v207 = vld [vmem:[%s193 + $0x14] sm:$0xf]
      %v208 = vld [vmem:[%s193 + $0x18] sm:$0xf]
      %v209 = vld [vmem:[%s193 + $0x1c] sm:$0xf]
      %v210 = vld [vmem:[%s193 + $0x20] sm:$0xf]
      %v211 = vld [vmem:[%s193 + $0x24] sm:$0xf]
      %v212 = vld [vmem:[%s193 + $0x28] sm:$0xf]
      %v213 = vld [vmem:[%s193 + $0x2c] sm:$0xf]
      %v214 = vld [vmem:[%s193 + $0x30] sm:$0xf]
      %v215 = vld [vmem:[%s193 + $0x34] sm:$0xf]
      %v216 = vld [vmem:[%s193 + $0x38] sm:$0xf]
      %v217 = vld [vmem:[%s193 + $0x3c] sm:$0xf]
      %v218 = vld [vmem:[%s193 + $0x40] sm:$0xf]
      %v219 = vld [vmem:[%s193 + $0x44] sm:$0xf]
      %v220 = vld [vmem:[%s193 + $0x48] sm:$0xf]
      %v221 = vld [vmem:[%s193 + $0x4c] sm:$0xf]
      %v222 = vld [vmem:[%s193 + $0x50] sm:$0xf]
      %v223 = vld [vmem:[%s193 + $0x54] sm:$0xf]
      %v224 = vld [vmem:[%s193 + $0x58] sm:$0xf]
      %v225 = vld [vmem:[%s193 + $0x5c] sm:$0xf]
      %v226 = vld [vmem:[%s193 + $0x60] sm:$0xf]
      %v227 = vld [vmem:[%s193 + $0x64] sm:$0xf]
      %v228 = vld [vmem:[%s193 + $0x68] sm:$0xf]
      %v229 = vld [vmem:[%s193 + $0x6c] sm:$0xf]
      %v230 = vld [vmem:[%s193 + $0x70] sm:$0xf]
      %v231 = vld [vmem:[%s193 + $0x74] sm:$0xf]
      %v232 = vld [vmem:[%s193 + $0x78] sm:$0xf]
      %v233 = vld [vmem:[%s193 + $0x7c] sm:$0xf]
      %v234 = vld [vmem:[%s193 + $0x80] sm:$0xf]
      %v235 = vld [vmem:[%s193 + $0x84] sm:$0xf]
      %v236 = vld [vmem:[%s193 + $0x88] sm:$0xf]
      %v237 = vld [vmem:[%s193 + $0x8c] sm:$0xf]
      %v238 = vld [vmem:[%s193 + $0x90] sm:$0xf]
      %v239 = vld [vmem:[%s193 + $0x94] sm:$0xf]
      %v240 = vld [vmem:[%s193 + $0x98] sm:$0xf]
      %v241 = vld [vmem:[%s193 + $0x9c] sm:$0xf]
      %v242 = vld [vmem:[%s193 + $0xa0] sm:$0xf]
      %v243 = vld [vmem:[%s193 + $0xa4] sm:$0xf]
      %v244 = vld [vmem:[%s193 + $0xa8] sm:$0xf]
      %v245 = vld [vmem:[%s193 + $0xac] sm:$0xf]
      %v246 = vld [vmem:[%s193 + $0xb0] sm:$0xf]
      %v247 = vld [vmem:[%s193 + $0xb4] sm:$0xf]
      %v248 = vld [vmem:[%s193 + $0xb8] sm:$0xf]
      %v249 = vld [vmem:[%s193 + $0xbc] sm:$0xf]
      %v250 = vld [vmem:[%s193 + $0xc0] sm:$0xf]
      %v251 = vld [vmem:[%s193 + $0xc4] sm:$0xf]
      %v252 = vld [vmem:[%s193 + $0xc8] sm:$0xf]
      %v253 = vld [vmem:[%s193 + $0xcc] sm:$0xf]
      %v254 = vld [vmem:[%s193 + $0xd0] sm:$0xf]
      %v255 = vld [vmem:[%s193 + $0xd4] sm:$0xf]
      %v256 = vld [vmem:[%s193 + $0xd8] sm:$0xf]
      %v257 = vld [vmem:[%s193 + $0xdc] sm:$0xf]
      %v258 = vld [vmem:[%s193 + $0xe0] sm:$0xf]
      %v259 = vld [vmem:[%s193 + $0xe4] sm:$0xf]
      %v260 = vld [vmem:[%s193 + $0xe8] sm:$0xf]
      %v261 = vld [vmem:[%s193 + $0xec] sm:$0xf]
      %v262 = vld [vmem:[%s193 + $0xf0] sm:$0xf]
      %v263 = vld [vmem:[%s193 + $0xf4] sm:$0xf]
      %v264 = vld [vmem:[%s193 + $0xf8] sm:$0xf]
      %v265 = vld [vmem:[%s193 + $0xfc] sm:$0xf]
      %v266 = vld [vmem:[%s1] sm:$0xf]
      %v267 = vld [vmem:[%s1 + $0x4] sm:$0xf]
      %v268 = vld [vmem:[%s1 + $0x8] sm:$0xf]
      %v269 = vld [vmem:[%s1 + $0xc] sm:$0xf]
      %v270 = vld [vmem:[%s1 + $0x10] sm:$0xf]
      %v271 = vld [vmem:[%s1 + $0x14] sm:$0xf]
      %v272 = vld [vmem:[%s1 + $0x18] sm:$0xf]
      %v273 = vld [vmem:[%s1 + $0x1c] sm:$0xf]
      %v274 = vld [vmem:[%s1 + $0x20] sm:$0xf]
      %v275 = vld [vmem:[%s1 + $0x24] sm:$0xf]
      %v276 = vld [vmem:[%s1 + $0x28] sm:$0xf]
      %v277 = vld [vmem:[%s1 + $0x2c] sm:$0xf]
      %v278 = vld [vmem:[%s1 + $0x30] sm:$0xf]
      %v279 = vld [vmem:[%s1 + $0x34] sm:$0xf]
      %v280 = vld [vmem:[%s1 + $0x38] sm:$0xf]
      %v281 = vld [vmem:[%s1 + $0x3c] sm:$0xf]
      %v346 = vunpack.c.l.b16 %v202
      %v347 = vunpack.c.l.b16 %v203
      %v348 = vunpack.c.l.b16 %v204
      %v349 = vunpack.c.l.b16 %v205
      %v350 = vunpack.c.l.b16 %v206
      %v351 = vunpack.c.l.b16 %v207
      %v352 = vunpack.c.l.b16 %v208
      %v353 = vunpack.c.l.b16 %v209
      %v354 = vunpack.c.l.b16 %v210
      %v355 = vunpack.c.l.b16 %v211
      %v356 = vunpack.c.l.b16 %v212
      %v357 = vunpack.c.l.b16 %v213
      %v358 = vunpack.c.l.b16 %v214
      %v359 = vunpack.c.l.b16 %v215
      %v360 = vunpack.c.l.b16 %v216
      %v361 = vunpack.c.l.b16 %v217
      %v362 = vunpack.c.l.b16 %v218
      %v363 = vunpack.c.l.b16 %v219
      %v364 = vunpack.c.l.b16 %v220
      %v365 = vunpack.c.l.b16 %v221
      %v366 = vunpack.c.l.b16 %v222
      %v367 = vunpack.c.l.b16 %v223
      %v368 = vunpack.c.l.b16 %v224
      %v369 = vunpack.c.l.b16 %v225
      %v370 = vunpack.c.l.b16 %v226
      %v371 = vunpack.c.l.b16 %v227
      %v372 = vunpack.c.l.b16 %v228
      %v373 = vunpack.c.l.b16 %v229
      %v374 = vunpack.c.l.b16 %v230
      %v375 = vunpack.c.l.b16 %v231
      %v376 = vunpack.c.l.b16 %v232
      %v377 = vunpack.c.l.b16 %v233
      %v378 = vunpack.c.l.b16 %v234
      %v379 = vunpack.c.l.b16 %v235
      %v380 = vunpack.c.l.b16 %v236
      %v381 = vunpack.c.l.b16 %v237
      %v382 = vunpack.c.l.b16 %v238
      %v383 = vunpack.c.l.b16 %v239
      %v384 = vunpack.c.l.b16 %v240
      %v385 = vunpack.c.l.b16 %v241
      %v386 = vunpack.c.l.b16 %v242
      %v387 = vunpack.c.l.b16 %v243
      %v388 = vunpack.c.l.b16 %v244
      %v389 = vunpack.c.l.b16 %v245
      %v390 = vunpack.c.l.b16 %v246
      %v391 = vunpack.c.l.b16 %v247
      %v392 = vunpack.c.l.b16 %v248
      %v393 = vunpack.c.l.b16 %v249
      %v394 = vunpack.c.l.b16 %v250
      %v395 = vunpack.c.l.b16 %v251
      %v396 = vunpack.c.l.b16 %v252
      %v397 = vunpack.c.l.b16 %v253
      %v398 = vunpack.c.l.b16 %v254
      %v399 = vunpack.c.l.b16 %v255
      %v400 = vunpack.c.l.b16 %v256
      %v401 = vunpack.c.l.b16 %v257
      %v402 = vunpack.c.l.b16 %v258
      %v403 = vunpack.c.l.b16 %v259
      %v404 = vunpack.c.l.b16 %v260
      %v405 = vunpack.c.l.b16 %v261
      %v406 = vunpack.c.l.b16 %v262
      %v407 = vunpack.c.l.b16 %v263
      %v408 = vunpack.c.l.b16 %v264
      %v409 = vunpack.c.l.b16 %v265
      %v410 = vpack.c.b16 %v347, %v346
      %v411 = vpack.c.b16 %v349, %v348
      %v412 = vpack.c.b16 %v351, %v350
      %v413 = vpack.c.b16 %v353, %v352
      %v414 = vpack.c.b16 %v355, %v354
      %v415 = vpack.c.b16 %v357, %v356
      %v416 = vpack.c.b16 %v359, %v358
      %v417 = vpack.c.b16 %v361, %v360
      %v418 = vpack.c.b16 %v363, %v362
      %v419 = vpack.c.b16 %v365, %v364
      %v420 = vpack.c.b16 %v367, %v366
      %v421 = vpack.c.b16 %v369, %v368
      %v422 = vpack.c.b16 %v371, %v370
      %v423 = vpack.c.b16 %v373, %v372
      %v424 = vpack.c.b16 %v375, %v374
      %v425 = vpack.c.b16 %v377, %v376
      %v426 = vpack.c.b16 %v379, %v378
      %v427 = vpack.c.b16 %v381, %v380
      %v428 = vpack.c.b16 %v383, %v382
      %v429 = vpack.c.b16 %v385, %v384
      %v430 = vpack.c.b16 %v387, %v386
      %v431 = vpack.c.b16 %v389, %v388
      %v432 = vpack.c.b16 %v391, %v390
      %v433 = vpack.c.b16 %v393, %v392
      %v434 = vpack.c.b16 %v395, %v394
      %v435 = vpack.c.b16 %v397, %v396
      %v436 = vpack.c.b16 %v399, %v398
      %v437 = vpack.c.b16 %v401, %v400
      %v438 = vpack.c.b16 %v403, %v402
      %v439 = vpack.c.b16 %v405, %v404
      %v440 = vpack.c.b16 %v407, %v406
      %v441 = vpack.c.b16 %v409, %v408
      %v490 = vunpack.c.l.b16 %v266
      %v491 = vunpack.c.l.b16 %v267
      %v492 = vunpack.c.l.b16 %v268
      %v493 = vunpack.c.l.b16 %v269
      %v494 = vunpack.c.l.b16 %v270
      %v495 = vunpack.c.l.b16 %v271
      %v496 = vunpack.c.l.b16 %v272
      %v497 = vunpack.c.l.b16 %v273
      %v498 = vunpack.c.l.b16 %v274
      %v499 = vunpack.c.l.b16 %v275
      %v500 = vunpack.c.l.b16 %v276
      %v501 = vunpack.c.l.b16 %v277
      %v502 = vunpack.c.l.b16 %v278
      %v503 = vunpack.c.l.b16 %v279
      %v504 = vunpack.c.l.b16 %v280
      %v505 = vunpack.c.l.b16 %v281
      %v506 = vpack.c.b16 %v491, %v490
      %v507 = vpack.c.b16 %v493, %v492
      %v508 = vpack.c.b16 %v495, %v494
      %v509 = vpack.c.b16 %v497, %v496
      %v510 = vpack.c.b16 %v499, %v498
      %v511 = vpack.c.b16 %v501, %v500
      %v512 = vpack.c.b16 %v503, %v502
      %v513 = vpack.c.b16 %v505, %v504
      %522 = vmatprep.subr.bf16.mxu0 0
      %523 = vmatpush1.bf16.msra.mxu0 %v506
      %524 = vmatprep.subr.bf16.mxu0 0
      %525 = vmatpush1.bf16.msra.mxu0 %v507
      %526 = vmatprep.subr.bf16.mxu0 0
      %527 = vmatpush1.bf16.msra.mxu0 %v508
      %528 = vmatprep.subr.bf16.mxu0 0
      %529 = vmatpush1.bf16.msra.mxu0 %v509
      %530 = vmatprep.subr.bf16.mxu0 0
      %531 = vmatpush1.bf16.msra.mxu0 %v510
      %532 = vmatprep.subr.bf16.mxu0 0
      %533 = vmatpush1.bf16.msra.mxu0 %v511
      %534 = vmatprep.subr.bf16.mxu0 0
      %535 = vmatpush1.bf16.msra.mxu0 %v512
      %536 = vmatprep.subr.bf16.mxu0 0
      %537 = vmatpush1.bf16.msra.mxu0 %v513
      %538 = vmatprep.subr.bf16.mxu0 0
      %539 = vmatpush1.bf16.msra.mxu0 0
      %540 = vmatprep.subr.bf16.mxu0 0
      %541 = vmatpush1.bf16.msra.mxu0 0
      %542 = vmatprep.subr.bf16.mxu0 0
      %543 = vmatpush1.bf16.msra.mxu0 0
      %544 = vmatprep.subr.bf16.mxu0 0
      %545 = vmatpush1.bf16.msra.mxu0 0
      %546 = vmatprep.subr.bf16.mxu0 0
      %547 = vmatpush1.bf16.msra.mxu0 0
      %548 = vmatprep.subr.bf16.mxu0 0
      %549 = vmatpush1.bf16.msra.mxu0 0
      %550 = vmatprep.subr.bf16.mxu0 0
      %551 = vmatpush1.bf16.msra.mxu0 0
      %552 = vmatprep.subr.bf16.mxu0 0
      %553 = vmatpush1.bf16.msra.mxu0 0
      %554 = vmatprep.mubr.bf16.mxu0 0
      %555 = vmatmul.mubr.bf16.gmra.mrb[0].mxu0 %v410
      %v556 = vpop.f32.mrb[0].mxu0
      %v557 = vadd.f32 0.0, %v556
      %v558 = vpop.f32.mrb[0].mxu0
      %v559 = vpop.f32.mrb[0].mxu0
      %v560 = vadd.f32 0.0, %v559
      %v561 = vpop.f32.mrb[0].mxu0
      %562 = vmatprep.mubr.bf16.mxu0 0
      %563 = vmatmul.mubr.bf16.gmra.mrb[0].mxu0 %v411
      %v564 = vpop.f32.mrb[0].mxu0
      %v565 = vadd.f32 0.0, %v564
      %v566 = vpop.f32.mrb[0].mxu0
      %v567 = vpop.f32.mrb[0].mxu0
      %v568 = vadd.f32 0.0, %v567
      %v569 = vpop.f32.mrb[0].mxu0
      %570 = vmatprep.mubr.bf16.mxu0 0
      %571 = vmatmul.mubr.bf16.gmra.mrb[0].mxu0 %v412
      %v572 = vpop.f32.mrb[0].mxu0
      %v573 = vadd.f32 0.0, %v572
      %v574 = vpop.f32.mrb[0].mxu0
      %v575 = vpop.f32.mrb[0].mxu0
      %v576 = vadd.f32 0.0, %v575
      %v577 = vpop.f32.mrb[0].mxu0
      %578 = vmatprep.mubr.bf16.mxu0 0
      %579 = vmatmul.mubr.bf16.gmra.mrb[0].mxu0 %v413
      %v580 = vpop.f32.mrb[0].mxu0
      %v581 = vadd.f32 0.0, %v580
      %v582 = vpop.f32.mrb[0].mxu0
      %v583 = vpop.f32.mrb[0].mxu0
      %v584 = vadd.f32 0.0, %v583
      %v585 = vpop.f32.mrb[0].mxu0
      %586 = vmatprep.mubr.bf16.mxu0 0
      %587 = vmatmul.mubr.bf16.gmra.mrb[0].mxu0 %v414
      %v588 = vpop.f32.mrb[0].mxu0
      %v589 = vadd.f32 0.0, %v588
      %v590 = vpop.f32.mrb[0].mxu0
      %v591 = vpop.f32.mrb[0].mxu0
      %v592 = vadd.f32 0.0, %v591
      %v593 = vpop.f32.mrb[0].mxu0
      %594 = vmatprep.mubr.bf16.mxu0 0
      %595 = vmatmul.mubr.bf16.gmra.mrb[0].mxu0 %v415
      %v596 = vpop.f32.mrb[0].mxu0
      %v597 = vadd.f32 0.0, %v596
      %v598 = vpop.f32.mrb[0].mxu0
      %v599 = vpop.f32.mrb[0].mxu0
      %v600 = vadd.f32 0.0, %v599
      %v601 = vpop.f32.mrb[0].mxu0
      %602 = vmatprep.mubr.bf16.mxu0 0
      %603 = vmatmul.mubr.bf16.gmra.mrb[0].mxu0 %v416
      %v604 = vpop.f32.mrb[0].mxu0
      %v605 = vadd.f32 0.0, %v604
      %v606 = vpop.f32.mrb[0].mxu0
      %v607 = vpop.f32.mrb[0].mxu0
      %v608 = vadd.f32 0.0, %v607
      %v609 = vpop.f32.mrb[0].mxu0
      %610 = vmatprep.mubr.bf16.mxu0 0
      %611 = vmatmul.mubr.bf16.gmra.mrb[0].mxu0 %v417
      %v612 = vpop.f32.mrb[0].mxu0
      %v613 = vadd.f32 0.0, %v612
      %v614 = vpop.f32.mrb[0].mxu0
      %v615 = vpop.f32.mrb[0].mxu0
      %v616 = vadd.f32 0.0, %v615
      %v617 = vpop.f32.mrb[0].mxu0
      %618 = vmatprep.mubr.bf16.mxu0 0
      %619 = vmatmul.mubr.bf16.gmra.mrb[0].mxu0 %v418
      %v620 = vpop.f32.mrb[0].mxu0
      %v621 = vadd.f32 0.0, %v620
      %v622 = vpop.f32.mrb[0].mxu0
      %v623 = vpop.f32.mrb[0].mxu0
      %v624 = vadd.f32 0.0, %v623
      %v625 = vpop.f32.mrb[0].mxu0
      %626 = vmatprep.mubr.bf16.mxu0 0
      %627 = vmatmul.mubr.bf16.gmra.mrb[0].mxu0 %v419
      %v628 = vpop.f32.mrb[0].mxu0
      %v629 = vadd.f32 0.0, %v628
      %v630 = vpop.f32.mrb[0].mxu0
      %v631 = vpop.f32.mrb[0].mxu0
      %v632 = vadd.f32 0.0, %v631
      %v633 = vpop.f32.mrb[0].mxu0
      %634 = vmatprep.mubr.bf16.mxu0 0
      %635 = vmatmul.mubr.bf16.gmra.mrb[0].mxu0 %v420
      %v636 = vpop.f32.mrb[0].mxu0
      %v637 = vadd.f32 0.0, %v636
      %v638 = vpop.f32.mrb[0].mxu0
      %v639 = vpop.f32.mrb[0].mxu0
      %v640 = vadd.f32 0.0, %v639
      %v641 = vpop.f32.mrb[0].mxu0
      %642 = vmatprep.mubr.bf16.mxu0 0
      %643 = vmatmul.mubr.bf16.gmra.mrb[0].mxu0 %v421
      %v644 = vpop.f32.mrb[0].mxu0
      %v645 = vadd.f32 0.0, %v644
      %v646 = vpop.f32.mrb[0].mxu0
      %v647 = vpop.f32.mrb[0].mxu0
      %v648 = vadd.f32 0.0, %v647
      %v649 = vpop.f32.mrb[0].mxu0
      %650 = vmatprep.mubr.bf16.mxu0 0
      %651 = vmatmul.mubr.bf16.gmra.mrb[0].mxu0 %v422
      %v652 = vpop.f32.mrb[0].mxu0
      %v653 = vadd.f32 0.0, %v652
      %v654 = vpop.f32.mrb[0].mxu0
      %v655 = vpop.f32.mrb[0].mxu0
      %v656 = vadd.f32 0.0, %v655
      %v657 = vpop.f32.mrb[0].mxu0
      %658 = vmatprep.mubr.bf16.mxu0 0
      %659 = vmatmul.mubr.bf16.gmra.mrb[0].mxu0 %v423
      %v660 = vpop.f32.mrb[0].mxu0
      %v661 = vadd.f32 0.0, %v660
      %v662 = vpop.f32.mrb[0].mxu0
      %v663 = vpop.f32.mrb[0].mxu0
      %v664 = vadd.f32 0.0, %v663
      %v665 = vpop.f32.mrb[0].mxu0
      %666 = vmatprep.mubr.bf16.mxu0 0
      %667 = vmatmul.mubr.bf16.gmra.mrb[0].mxu0 %v424
      %v668 = vpop.f32.mrb[0].mxu0
      %v669 = vadd.f32 0.0, %v668
      %v670 = vpop.f32.mrb[0].mxu0
      %v671 = vpop.f32.mrb[0].mxu0
      %v672 = vadd.f32 0.0, %v671
      %v673 = vpop.f32.mrb[0].mxu0
      %674 = vmatprep.mubr.bf16.mxu0 0
      %675 = vmatmul.mubr.bf16.gmra.mrb[0].mxu0 %v425
      %v676 = vpop.f32.mrb[0].mxu0
      %v677 = vadd.f32 0.0, %v676
      %v678 = vpop.f32.mrb[0].mxu0
      %v679 = vpop.f32.mrb[0].mxu0
      %v680 = vadd.f32 0.0, %v679
      %v681 = vpop.f32.mrb[0].mxu0
      %682 = vmatprep.mubr.bf16.mxu0 0
      %683 = vmatmul.mubr.bf16.gmra.mrb[0].mxu0 %v426
      %v684 = vpop.f32.mrb[0].mxu0
      %v685 = vadd.f32 0.0, %v684
      %v686 = vpop.f32.mrb[0].mxu0
      %v687 = vpop.f32.mrb[0].mxu0
      %v688 = vadd.f32 0.0, %v687
      %v689 = vpop.f32.mrb[0].mxu0
      %690 = vmatprep.mubr.bf16.mxu0 0
      %691 = vmatmul.mubr.bf16.gmra.mrb[0].mxu0 %v427
      %v692 = vpop.f32.mrb[0].mxu0
      %v693 = vadd.f32 0.0, %v692
      %v694 = vpop.f32.mrb[0].mxu0
      %v695 = vpop.f32.mrb[0].mxu0
      %v696 = vadd.f32 0.0, %v695
      %v697 = vpop.f32.mrb[0].mxu0
      %698 = vmatprep.mubr.bf16.mxu0 0
      %699 = vmatmul.mubr.bf16.gmra.mrb[0].mxu0 %v428
      %v700 = vpop.f32.mrb[0].mxu0
      %v701 = vadd.f32 0.0, %v700
      %v702 = vpop.f32.mrb[0].mxu0
      %v703 = vpop.f32.mrb[0].mxu0
      %v704 = vadd.f32 0.0, %v703
      %v705 = vpop.f32.mrb[0].mxu0
      %706 = vmatprep.mubr.bf16.mxu0 0
      %707 = vmatmul.mubr.bf16.gmra.mrb[0].mxu0 %v429
      %v708 = vpop.f32.mrb[0].mxu0
      %v709 = vadd.f32 0.0, %v708
      %v710 = vpop.f32.mrb[0].mxu0
      %v711 = vpop.f32.mrb[0].mxu0
      %v712 = vadd.f32 0.0, %v711
      %v713 = vpop.f32.mrb[0].mxu0
      %714 = vmatprep.mubr.bf16.mxu0 0
      %715 = vmatmul.mubr.bf16.gmra.mrb[0].mxu0 %v430
      %v716 = vpop.f32.mrb[0].mxu0
      %v717 = vadd.f32 0.0, %v716
      %v718 = vpop.f32.mrb[0].mxu0
      %v719 = vpop.f32.mrb[0].mxu0
      %v720 = vadd.f32 0.0, %v719
      %v721 = vpop.f32.mrb[0].mxu0
      %722 = vmatprep.mubr.bf16.mxu0 0
      %723 = vmatmul.mubr.bf16.gmra.mrb[0].mxu0 %v431
      %v724 = vpop.f32.mrb[0].mxu0
      %v725 = vadd.f32 0.0, %v724
      %v726 = vpop.f32.mrb[0].mxu0
      %v727 = vpop.f32.mrb[0].mxu0
      %v728 = vadd.f32 0.0, %v727
      %v729 = vpop.f32.mrb[0].mxu0
      %730 = vmatprep.mubr.bf16.mxu0 0
      %731 = vmatmul.mubr.bf16.gmra.mrb[0].mxu0 %v432
      %v732 = vpop.f32.mrb[0].mxu0
      %v733 = vadd.f32 0.0, %v732
      %v734 = vpop.f32.mrb[0].mxu0
      %v735 = vpop.f32.mrb[0].mxu0
      %v736 = vadd.f32 0.0, %v735
      %v737 = vpop.f32.mrb[0].mxu0
      %738 = vmatprep.mubr.bf16.mxu0 0
      %739 = vmatmul.mubr.bf16.gmra.mrb[0].mxu0 %v433
      %v740 = vpop.f32.mrb[0].mxu0
      %v741 = vadd.f32 0.0, %v740
      %v742 = vpop.f32.mrb[0].mxu0
      %v743 = vpop.f32.mrb[0].mxu0
      %v744 = vadd.f32 0.0, %v743
      %v745 = vpop.f32.mrb[0].mxu0
      %746 = vmatprep.mubr.bf16.mxu0 0
      %747 = vmatmul.mubr.bf16.gmra.mrb[0].mxu0 %v434
      %v748 = vpop.f32.mrb[0].mxu0
      %v749 = vadd.f32 0.0, %v748
      %v750 = vpop.f32.mrb[0].mxu0
      %v751 = vpop.f32.mrb[0].mxu0
      %v752 = vadd.f32 0.0, %v751
      %v753 = vpop.f32.mrb[0].mxu0
      %754 = vmatprep.mubr.bf16.mxu0 0
      %755 = vmatmul.mubr.bf16.gmra.mrb[0].mxu0 %v435
      %v756 = vpop.f32.mrb[0].mxu0
      %v757 = vadd.f32 0.0, %v756
      %v758 = vpop.f32.mrb[0].mxu0
      %v759 = vpop.f32.mrb[0].mxu0
      %v760 = vadd.f32 0.0, %v759
      %v761 = vpop.f32.mrb[0].mxu0
      %762 = vmatprep.mubr.bf16.mxu0 0
      %763 = vmatmul.mubr.bf16.gmra.mrb[0].mxu0 %v436
      %v764 = vpop.f32.mrb[0].mxu0
      %v765 = vadd.f32 0.0, %v764
      %v766 = vpop.f32.mrb[0].mxu0
      %v767 = vpop.f32.mrb[0].mxu0
      %v768 = vadd.f32 0.0, %v767
      %v769 = vpop.f32.mrb[0].mxu0
      %770 = vmatprep.mubr.bf16.mxu0 0
      %771 = vmatmul.mubr.bf16.gmra.mrb[0].mxu0 %v437
      %v772 = vpop.f32.mrb[0].mxu0
      %v773 = vadd.f32 0.0, %v772
      %v774 = vpop.f32.mrb[0].mxu0
      %v775 = vpop.f32.mrb[0].mxu0
      %v776 = vadd.f32 0.0, %v775
      %v777 = vpop.f32.mrb[0].mxu0
      %778 = vmatprep.mubr.bf16.mxu0 0
      %779 = vmatmul.mubr.bf16.gmra.mrb[0].mxu0 %v438
      %v780 = vpop.f32.mrb[0].mxu0
      %v781 = vadd.f32 0.0, %v780
      %v782 = vpop.f32.mrb[0].mxu0
      %v783 = vpop.f32.mrb[0].mxu0
      %v784 = vadd.f32 0.0, %v783
      %v785 = vpop.f32.mrb[0].mxu0
      %786 = vmatprep.mubr.bf16.mxu0 0
      %787 = vmatmul.mubr.bf16.gmra.mrb[0].mxu0 %v439
      %v788 = vpop.f32.mrb[0].mxu0
      %v789 = vadd.f32 0.0, %v788
      %v790 = vpop.f32.mrb[0].mxu0
      %v791 = vpop.f32.mrb[0].mxu0
      %v792 = vadd.f32 0.0, %v791
      %v793 = vpop.f32.mrb[0].mxu0
      %794 = vmatprep.mubr.bf16.mxu0 0
      %795 = vmatmul.mubr.bf16.gmra.mrb[0].mxu0 %v440
      %v796 = vpop.f32.mrb[0].mxu0
      %v797 = vadd.f32 0.0, %v796
      %v798 = vpop.f32.mrb[0].mxu0
      %v799 = vpop.f32.mrb[0].mxu0
      %v800 = vadd.f32 0.0, %v799
      %v801 = vpop.f32.mrb[0].mxu0
      %802 = vmatprep.mubr.bf16.mxu0 0
      %803 = vmatmul.mubr.bf16.gmra.mrb[0].mxu0 %v441
      %v804 = vpop.f32.mrb[0].mxu0
      %v805 = vadd.f32 0.0, %v804
      %v806 = vpop.f32.mrb[0].mxu0
      %v807 = vpop.f32.mrb[0].mxu0
      %v808 = vadd.f32 0.0, %v807
      %v809 = vpop.f32.mrb[0].mxu0
      %810 = vdwg.mxu0
      %v811 = vld [vmem:[%s2] sm:$0x1]
      %v813 = vlaneseq
      %v814 = vshrl.u32 %v813, 7
      %v815 = vsub.s32 0, %v814
      %v816 = vrot.slane %v811, %v815
      %v818 = vmul.f32 %v557, %v816
      %v819 = vmul.f32 %v560, %v816
      %v820 = vmul.f32 %v565, %v816
      %v821 = vmul.f32 %v568, %v816
      %v822 = vmul.f32 %v573, %v816
      %v823 = vmul.f32 %v576, %v816
      %v824 = vmul.f32 %v581, %v816
      %v825 = vmul.f32 %v584, %v816
      %v826 = vmul.f32 %v589, %v816
      %v827 = vmul.f32 %v592, %v816
      %v828 = vmul.f32 %v597, %v816
      %v829 = vmul.f32 %v600, %v816
      %v830 = vmul.f32 %v605, %v816
      %v831 = vmul.f32 %v608, %v816
      %v832 = vmul.f32 %v613, %v816
      %v833 = vmul.f32 %v616, %v816
      %v834 = vmul.f32 %v621, %v816
      %v835 = vmul.f32 %v624, %v816
      %v836 = vmul.f32 %v629, %v816
      %v837 = vmul.f32 %v632, %v816
      %v838 = vmul.f32 %v637, %v816
      %v839 = vmul.f32 %v640, %v816
      %v840 = vmul.f32 %v645, %v816
      %v841 = vmul.f32 %v648, %v816
      %v842 = vmul.f32 %v653, %v816
      %v843 = vmul.f32 %v656, %v816
      %v844 = vmul.f32 %v661, %v816
      %v845 = vmul.f32 %v664, %v816
      %v846 = vmul.f32 %v669, %v816
      %v847 = vmul.f32 %v672, %v816
      %v848 = vmul.f32 %v677, %v816
      %v849 = vmul.f32 %v680, %v816
      %v850 = vmul.f32 %v685, %v816
      %v851 = vmul.f32 %v688, %v816
      %v852 = vmul.f32 %v693, %v816
      %v853 = vmul.f32 %v696, %v816
      %v854 = vmul.f32 %v701, %v816
      %v855 = vmul.f32 %v704, %v816
      %v856 = vmul.f32 %v709, %v816
      %v857 = vmul.f32 %v712, %v816
      %v858 = vmul.f32 %v717, %v816
      %v859 = vmul.f32 %v720, %v816
      %v860 = vmul.f32 %v725, %v816
      %v861 = vmul.f32 %v728, %v816
      %v862 = vmul.f32 %v733, %v816
      %v863 = vmul.f32 %v736, %v816
      %v864 = vmul.f32 %v741, %v816
      %v865 = vmul.f32 %v744, %v816
      %v866 = vmul.f32 %v749, %v816
      %v867 = vmul.f32 %v752, %v816
      %v868 = vmul.f32 %v757, %v816
      %v869 = vmul.f32 %v760, %v816
      %v870 = vmul.f32 %v765, %v816
      %v871 = vmul.f32 %v768, %v816
      %v872 = vmul.f32 %v773, %v816
      %v873 = vmul.f32 %v776, %v816
      %v874 = vmul.f32 %v781, %v816
      %v875 = vmul.f32 %v784, %v816
      %v876 = vmul.f32 %v789, %v816
      %v877 = vmul.f32 %v792, %v816
      %v878 = vmul.f32 %v797, %v816
      %v879 = vmul.f32 %v800, %v816
      %v880 = vmul.f32 %v805, %v816
      %v881 = vmul.f32 %v808, %v816
      %v882 = vld [vmem:[%s3] sm:$0x1]
      %v884 = vlaneseq
      %v885 = vshrl.u32 %v884, 7
      %v886 = vsub.s32 0, %v885
      %v887 = vrot.slane %v882, %v886
      %v889 = vadd.f32 %v818, %v887
      %v890 = vadd.f32 %v819, %v887
      %v891 = vadd.f32 %v820, %v887
      %v892 = vadd.f32 %v821, %v887
      %v893 = vadd.f32 %v822, %v887
      %v894 = vadd.f32 %v823, %v887
      %v895 = vadd.f32 %v824, %v887
      %v896 = vadd.f32 %v825, %v887
      %v897 = vadd.f32 %v826, %v887
      %v898 = vadd.f32 %v827, %v887
      %v899 = vadd.f32 %v828, %v887
      %v900 = vadd.f32 %v829, %v887
      %v901 = vadd.f32 %v830, %v887
      %v902 = vadd.f32 %v831, %v887
      %v903 = vadd.f32 %v832, %v887
      %v904 = vadd.f32 %v833, %v887
      %v905 = vadd.f32 %v834, %v887
      %v906 = vadd.f32 %v835, %v887
      %v907 = vadd.f32 %v836, %v887
      %v908 = vadd.f32 %v837, %v887
      %v909 = vadd.f32 %v838, %v887
      %v910 = vadd.f32 %v839, %v887
      %v911 = vadd.f32 %v840, %v887
      %v912 = vadd.f32 %v841, %v887
      %v913 = vadd.f32 %v842, %v887
      %v914 = vadd.f32 %v843, %v887
      %v915 = vadd.f32 %v844, %v887
      %v916 = vadd.f32 %v845, %v887
      %v917 = vadd.f32 %v846, %v887
      %v918 = vadd.f32 %v847, %v887
      %v919 = vadd.f32 %v848, %v887
      %v920 = vadd.f32 %v849, %v887
      %v921 = vadd.f32 %v850, %v887
      %v922 = vadd.f32 %v851, %v887
      %v923 = vadd.f32 %v852, %v887
      %v924 = vadd.f32 %v853, %v887
      %v925 = vadd.f32 %v854, %v887
      %v926 = vadd.f32 %v855, %v887
      %v927 = vadd.f32 %v856, %v887
      %v928 = vadd.f32 %v857, %v887
      %v929 = vadd.f32 %v858, %v887
      %v930 = vadd.f32 %v859, %v887
      %v931 = vadd.f32 %v860, %v887
      %v932 = vadd.f32 %v861, %v887
      %v933 = vadd.f32 %v862, %v887
      %v934 = vadd.f32 %v863, %v887
      %v935 = vadd.f32 %v864, %v887
      %v936 = vadd.f32 %v865, %v887
      %v937 = vadd.f32 %v866, %v887
      %v938 = vadd.f32 %v867, %v887
      %v939 = vadd.f32 %v868, %v887
      %v940 = vadd.f32 %v869, %v887
      %v941 = vadd.f32 %v870, %v887
      %v942 = vadd.f32 %v871, %v887
      %v943 = vadd.f32 %v872, %v887
      %v944 = vadd.f32 %v873, %v887
      %v945 = vadd.f32 %v874, %v887
      %v946 = vadd.f32 %v875, %v887
      %v947 = vadd.f32 %v876, %v887
      %v948 = vadd.f32 %v877, %v887
      %v949 = vadd.f32 %v878, %v887
      %v950 = vadd.f32 %v879, %v887
      %v951 = vadd.f32 %v880, %v887
      %v952 = vadd.f32 %v881, %v887
      %v953 = vmax.f32 %v889, 0.0
      %v954 = vmax.f32 %v890, 0.0
      %v955 = vmax.f32 %v891, 0.0
      %v956 = vmax.f32 %v892, 0.0
      %v957 = vmax.f32 %v893, 0.0
      %v958 = vmax.f32 %v894, 0.0
      %v959 = vmax.f32 %v895, 0.0
      %v960 = vmax.f32 %v896, 0.0
      %v961 = vmax.f32 %v897, 0.0
      %v962 = vmax.f32 %v898, 0.0
      %v963 = vmax.f32 %v899, 0.0
      %v964 = vmax.f32 %v900, 0.0
      %v965 = vmax.f32 %v901, 0.0
      %v966 = vmax.f32 %v902, 0.0
      %v967 = vmax.f32 %v903, 0.0
      %v968 = vmax.f32 %v904, 0.0
      %v969 = vmax.f32 %v905, 0.0
      %v970 = vmax.f32 %v906, 0.0
      %v971 = vmax.f32 %v907, 0.0
      %v972 = vmax.f32 %v908, 0.0
      %v973 = vmax.f32 %v909, 0.0
      %v974 = vmax.f32 %v910, 0.0
      %v975 = vmax.f32 %v911, 0.0
      %v976 = vmax.f32 %v912, 0.0
      %v977 = vmax.f32 %v913, 0.0
      %v978 = vmax.f32 %v914, 0.0
      %v979 = vmax.f32 %v915, 0.0
      %v980 = vmax.f32 %v916, 0.0
      %v981 = vmax.f32 %v917, 0.0
      %v982 = vmax.f32 %v918, 0.0
      %v983 = vmax.f32 %v919, 0.0
      %v984 = vmax.f32 %v920, 0.0
      %v985 = vmax.f32 %v921, 0.0
      %v986 = vmax.f32 %v922, 0.0
      %v987 = vmax.f32 %v923, 0.0
      %v988 = vmax.f32 %v924, 0.0
      %v989 = vmax.f32 %v925, 0.0
      %v990 = vmax.f32 %v926, 0.0
      %v991 = vmax.f32 %v927, 0.0
      %v992 = vmax.f32 %v928, 0.0
      %v993 = vmax.f32 %v929, 0.0
      %v994 = vmax.f32 %v930, 0.0
      %v995 = vmax.f32 %v931, 0.0
      %v996 = vmax.f32 %v932, 0.0
      %v997 = vmax.f32 %v933, 0.0
      %v998 = vmax.f32 %v934, 0.0
      %v999 = vmax.f32 %v935, 0.0
      %v1000 = vmax.f32 %v936, 0.0
      %v1001 = vmax.f32 %v937, 0.0
      %v1002 = vmax.f32 %v938, 0.0
      %v1003 = vmax.f32 %v939, 0.0
      %v1004 = vmax.f32 %v940, 0.0
      %v1005 = vmax.f32 %v941, 0.0
      %v1006 = vmax.f32 %v942, 0.0
      %v1007 = vmax.f32 %v943, 0.0
      %v1008 = vmax.f32 %v944, 0.0
      %v1009 = vmax.f32 %v945, 0.0
      %v1010 = vmax.f32 %v946, 0.0
      %v1011 = vmax.f32 %v947, 0.0
      %v1012 = vmax.f32 %v948, 0.0
      %v1013 = vmax.f32 %v949, 0.0
      %v1014 = vmax.f32 %v950, 0.0
      %v1015 = vmax.f32 %v951, 0.0
      %v1016 = vmax.f32 %v952, 0.0
      %1017 = vst [vmem:[%s199] sm:$0xff] %v953
      %1018 = vst [vmem:[%s199 + $0x8] sm:$0xff] %v954
      %1019 = vst [vmem:[%s199 + $0x10] sm:$0xff] %v955
      %1020 = vst [vmem:[%s199 + $0x18] sm:$0xff] %v956
      %1021 = vst [vmem:[%s199 + $0x20] sm:$0xff] %v957
      %1022 = vst [vmem:[%s199 + $0x28] sm:$0xff] %v958
      %1023 = vst [vmem:[%s199 + $0x30] sm:$0xff] %v959
      %1024 = vst [vmem:[%s199 + $0x38] sm:$0xff] %v960
      %1025 = vst [vmem:[%s199 + $0x40] sm:$0xff] %v961
      %1026 = vst [vmem:[%s199 + $0x48] sm:$0xff] %v962
      %1027 = vst [vmem:[%s199 + $0x50] sm:$0xff] %v963
      %1028 = vst [vmem:[%s199 + $0x58] sm:$0xff] %v964
      %1029 = vst [vmem:[%s199 + $0x60] sm:$0xff] %v965
      %1030 = vst [vmem:[%s199 + $0x68] sm:$0xff] %v966
      %1031 = vst [vmem:[%s199 + $0x70] sm:$0xff] %v967
      %1032 = vst [vmem:[%s199 + $0x78] sm:$0xff] %v968
      %1033 = vst [vmem:[%s199 + $0x80] sm:$0xff] %v969
      %1034 = vst [vmem:[%s199 + $0x88] sm:$0xff] %v970
      %1035 = vst [vmem:[%s199 + $0x90] sm:$0xff] %v971
      %1036 = vst [vmem:[%s199 + $0x98] sm:$0xff] %v972
      %1037 = vst [vmem:[%s199 + $0xa0] sm:$0xff] %v973
      %1038 = vst [vmem:[%s199 + $0xa8] sm:$0xff] %v974
      %1039 = vst [vmem:[%s199 + $0xb0] sm:$0xff] %v975
      %1040 = vst [vmem:[%s199 + $0xb8] sm:$0xff] %v976
      %1041 = vst [vmem:[%s199 + $0xc0] sm:$0xff] %v977
      %1042 = vst [vmem:[%s199 + $0xc8] sm:$0xff] %v978
      %1043 = vst [vmem:[%s199 + $0xd0] sm:$0xff] %v979
      %1044 = vst [vmem:[%s199 + $0xd8] sm:$0xff] %v980
      %1045 = vst [vmem:[%s199 + $0xe0] sm:$0xff] %v981
      %1046 = vst [vmem:[%s199 + $0xe8] sm:$0xff] %v982
      %1047 = vst [vmem:[%s199 + $0xf0] sm:$0xff] %v983
      %1048 = vst [vmem:[%s199 + $0xf8] sm:$0xff] %v984
      %1049 = vst [vmem:[%s199 + $0x100] sm:$0xff] %v985
      %1050 = vst [vmem:[%s199 + $0x108] sm:$0xff] %v986
      %1051 = vst [vmem:[%s199 + $0x110] sm:$0xff] %v987
      %1052 = vst [vmem:[%s199 + $0x118] sm:$0xff] %v988
      %1053 = vst [vmem:[%s199 + $0x120] sm:$0xff] %v989
      %1054 = vst [vmem:[%s199 + $0x128] sm:$0xff] %v990
      %1055 = vst [vmem:[%s199 + $0x130] sm:$0xff] %v991
      %1056 = vst [vmem:[%s199 + $0x138] sm:$0xff] %v992
      %1057 = vst [vmem:[%s199 + $0x140] sm:$0xff] %v993
      %1058 = vst [vmem:[%s199 + $0x148] sm:$0xff] %v994
      %1059 = vst [vmem:[%s199 + $0x150] sm:$0xff] %v995
      %1060 = vst [vmem:[%s199 + $0x158] sm:$0xff] %v996
      %1061 = vst [vmem:[%s199 + $0x160] sm:$0xff] %v997
      %1062 = vst [vmem:[%s199 + $0x168] sm:$0xff] %v998
      %1063 = vst [vmem:[%s199 + $0x170] sm:$0xff] %v999
      %1064 = vst [vmem:[%s199 + $0x178] sm:$0xff] %v1000
      %1065 = vst [vmem:[%s199 + $0x180] sm:$0xff] %v1001
      %1066 = vst [vmem:[%s199 + $0x188] sm:$0xff] %v1002
      %1067 = vst [vmem:[%s199 + $0x190] sm:$0xff] %v1003
      %1068 = vst [vmem:[%s199 + $0x198] sm:$0xff] %v1004
      %1069 = vst [vmem:[%s199 + $0x1a0] sm:$0xff] %v1005
      %1070 = vst [vmem:[%s199 + $0x1a8] sm:$0xff] %v1006
      %1071 = vst [vmem:[%s199 + $0x1b0] sm:$0xff] %v1007
      %1072 = vst [vmem:[%s199 + $0x1b8] sm:$0xff] %v1008
      %1073 = vst [vmem:[%s199 + $0x1c0] sm:$0xff] %v1009
      %1074 = vst [vmem:[%s199 + $0x1c8] sm:$0xff] %v1010
      %1075 = vst [vmem:[%s199 + $0x1d0] sm:$0xff] %v1011
      %1076 = vst [vmem:[%s199 + $0x1d8] sm:$0xff] %v1012
      %1077 = vst [vmem:[%s199 + $0x1e0] sm:$0xff] %v1013
      %1078 = vst [vmem:[%s199 + $0x1e8] sm:$0xff] %v1014
      %1079 = vst [vmem:[%s199 + $0x1f0] sm:$0xff] %v1015
      %1080 = vst [vmem:[%s199 + $0x1f8] sm:$0xff] %v1016
      %s1081 = smul.u32 64, %s15
      %p1082 = scmp.lt.s32.totalorder %s1081, 127
      %s1083 = scalar_select %p1082, %s1081, 127
      %s1084 = smul.addr %s1083, 8
      %s1085 = scalar_lea.vmem %s4, %s1084
      // Predicated region
      $region37: #{forward.11} parent=35 // pred_check
        %p1086 = pneg %p122
      $region38: #{forward.11} parent=35 // pred_check_branch
        %1088 = sbr.rel (%p1086) target = $region40
      $region39: #{forward.11} parent=35 // pred_region
        %s1089 = smul.u32 64, %s15
      $region40: #{forward.11} parent=35 // pred_fallthru
        _
    $region36: #{forward.11} parent=5 // pred_fallthru
      _
    %p1090 = scmp.le.s32.totalorder 2, %s10
    // Predicated region
    $region41: #{forward.11} parent=5 // pred_check
      %p1091 = pneg %p1090
    $region42: #{forward.11} parent=5 // pred_check_branch
      %1093 = sbr.rel (%p1091) target = $region44
    $region43: #{forward.11} parent=5 // pred_region
      %s1094 = ssub.s32 %s10, 2
      // Predicated region
      $region45: #{forward.11} parent=43 // pred_check
        %p1095 = pneg %p128
      $region46: #{forward.11} parent=43 // pred_check_branch
        %1097 = sbr.rel (%p1095) target = $region48
      $region47: #{forward.11} parent=43 // pred_region
        %s1098 = smul.u32 64, %s16
        %p1099 = scmp.lt.s32.totalorder %s1098, 127
        %s1100 = scalar_select %p1099, %s1098, 127
        %s1101 = smul.addr %s1100, 8
        %s1102 = scalar_lea.vmem %s4, %s1101
      $region48: #{forward.11} parent=43 // pred_fallthru
        _
    $region44: #{forward.11} parent=5 // pred_fallthru
      _
  $region6: #{forward.11} parent=0 // loop_footer
    %s14 = sadd.s32 1, %s10
  $region7: #{forward.11} parent=0 // loop_footer_branch
    %9 = sbr.rel target = $region3
  $region8: #{forward.11} parent=0 // loop_exit
    _

// kernel: forward.12
$region0: #{forward.12}
  #allocation0 [shape = 'u32[]', space=smem, size = 0x4, offset = 0x4, fixed_abs, tag = 'smem constant byte address 0x4 - core index']
  #allocation1 [shape = 'u32[144,128]{1,0:T(1,128)}', space=vmem, size = 0x12000, scoped, tag = 'internal scratch']
  %s0 = inlined_call_operand.vmem [shape: f32[8,502,128], index: 0, kind: input, shape index: {}]
  %s1 = inlined_call_operand.vmem [shape: f32[502,128], index: 1, kind: output, shape index: {}]
  %s2 = sld [smem:[#allocation0]]
  $region14: #{forward.12} parent=0
    _
  %s4 = ssub.s32 1, %s2
  %s5 = scalar_select 0, %s4, %s2
  // Predicated region
  $region2: #{forward.12} parent=0 // pred_check
    _
  $region3: #{forward.12} parent=0 // pred_check_branch
    %7 = sbr.rel (0) target = $region5
  $region4: #{forward.12} parent=0 // pred_region
    _
  $region5: #{forward.12} parent=0 // pred_fallthru
    _
  %v8 = vld [vmem:[%s0] sm:$0xff]
  %v9 = vld [vmem:[%s0 + $0x8] sm:$0xff]
  %v10 = vld [vmem:[%s0 + $0x10] sm:$0xff]
  %v11 = vld [vmem:[%s0 + $0x18] sm:$0xff]
  %v12 = vld [vmem:[%s0 + $0x20] sm:$0xff]
  %v13 = vld [vmem:[%s0 + $0x28] sm:$0xff]
  %v14 = vld [vmem:[%s0 + $0x30] sm:$0xff]
  %v15 = vld [vmem:[%s0 + $0x38] sm:$0xff]
  %v16 = vld [vmem:[%s0 + $0x40] sm:$0xff]
  %v17 = vld [vmem:[%s0 + $0x48] sm:$0xff]
  %v18 = vld [vmem:[%s0 + $0x50] sm:$0xff]
  %v19 = vld [vmem:[%s0 + $0x58] sm:$0xff]
  %v20 = vld [vmem:[%s0 + $0x60] sm:$0xff]
  %v21 = vld [vmem:[%s0 + $0x68] sm:$0xff]
  %v22 = vld [vmem:[%s0 + $0x70] sm:$0xff]
  %v23 = vld [vmem:[%s0 + $0x78] sm:$0xff]
  %v24 = vld [vmem:[%s0 + $0x80] sm:$0xff]
  %v25 = vld [vmem:[%s0 + $0x88] sm:$0xff]
  %v26 = vld [vmem:[%s0 + $0x90] sm:$0xff]
  %v27 = vld [vmem:[%s0 + $0x98] sm:$0xff]
  %v28 = vld [vmem:[%s0 + $0xa0] sm:$0xff]
  %v29 = vld [vmem:[%s0 + $0xa8] sm:$0xff]
  %v30 = vld [vmem:[%s0 + $0xb0] sm:$0xff]
  %v31 = vld [vmem:[%s0 + $0xb8] sm:$0xff]
  %v32 = vld [vmem:[%s0 + $0xc0] sm:$0xff]
  %v33 = vld [vmem:[%s0 + $0xc8] sm:$0xff]
  %v34 = vld [vmem:[%s0 + $0xd0] sm:$0xff]
  %v35 = vld [vmem:[%s0 + $0xd8] sm:$0xff]
  %v36 = vld [vmem:[%s0 + $0xe0] sm:$0xff]
  %v37 = vld [vmem:[%s0 + $0xe8] sm:$0xff]
  %v38 = vld [vmem:[%s0 + $0xf0] sm:$0xff]
  %v39 = vld [vmem:[%s0 + $0xf8] sm:$0xff]
  %v40 = vld [vmem:[%s0 + $0x100] sm:$0xff]
  %v41 = vld [vmem:[%s0 + $0x108] sm:$0xff]
  %v42 = vld [vmem:[%s0 + $0x110] sm:$0xff]
  %v43 = vld [vmem:[%s0 + $0x118] sm:$0xff]
  %v44 = vld [vmem:[%s0 + $0x120] sm:$0xff]
  %v45 = vld [vmem:[%s0 + $0x128] sm:$0xff]
  %v46 = vld [vmem:[%s0 + $0x130] sm:$0xff]
  %v47 = vld [vmem:[%s0 + $0x138] sm:$0xff]
  %v48 = vld [vmem:[%s0 + $0x140] sm:$0xff]
  %v49 = vld [vmem:[%s0 + $0x148] sm:$0xff]
  %v50 = vld [vmem:[%s0 + $0x150] sm:$0xff]
  %v51 = vld [vmem:[%s0 + $0x158] sm:$0xff]
  %v52 = vld [vmem:[%s0 + $0x160] sm:$0xff]
  %v53 = vld [vmem:[%s0 + $0x168] sm:$0xff]
  %v54 = vld [vmem:[%s0 + $0x170] sm:$0xff]
  %v55 = vld [vmem:[%s0 + $0x178] sm:$0xff]
  %v56 = vld [vmem:[%s0 + $0x180] sm:$0xff]
  %v57 = vld [vmem:[%s0 + $0x188] sm:$0xff]
  %v58 = vld [vmem:[%s0 + $0x190] sm:$0xff]
  %v59 = vld [vmem:[%s0 + $0x198] sm:$0xff]
  %v60 = vld [vmem:[%s0 + $0x1a0] sm:$0xff]
  %v61 = vld [vmem:[%s0 + $0x1a8] sm:$0xff]
  %v62 = vld [vmem:[%s0 + $0x1b0] sm:$0xff]
  %v63 = vld [vmem:[%s0 + $0x1b8] sm:$0xff]
  %v64 = vld [vmem:[%s0 + $0x1c0] sm:$0xff]
  %v65 = vld [vmem:[%s0 + $0x1c8] sm:$0xff]
  %v66 = vld [vmem:[%s0 + $0x1d0] sm:$0xff]
  %v67 = vld [vmem:[%s0 + $0x1d8] sm:$0xff]
  %v68 = vld [vmem:[%s0 + $0x1e0] sm:$0xff]
  %v69 = vld [vmem:[%s0 + $0x1e8] sm:$0xff]
  %v70 = vld [vmem:[%s0 + $0x1f0] sm:$0x3f]
  %v71 = vld [vmem:[%s0 + $0x1f8] sm:$0xff]
  %v72 = vld [vmem:[%s0 + $0x200] sm:$0xff]
  %v73 = vld [vmem:[%s0 + $0x208] sm:$0xff]
  %v74 = vld [vmem:[%s0 + $0x210] sm:$0xff]
  %v75 = vld [vmem:[%s0 + $0x218] sm:$0xff]
  %v76 = vld [vmem:[%s0 + $0x220] sm:$0xff]
  %v77 = vld [vmem:[%s0 + $0x228] sm:$0xff]
  %v78 = vld [vmem:[%s0 + $0x230] sm:$0xff]
  %v79 = vld [vmem:[%s0 + $0x238] sm:$0xff]
  %v80 = vld [vmem:[%s0 + $0x240] sm:$0xff]
  %v81 = vld [vmem:[%s0 + $0x248] sm:$0xff]
  %v82 = vld [vmem:[%s0 + $0x250] sm:$0xff]
  %v83 = vld [vmem:[%s0 + $0x258] sm:$0xff]
  %v84 = vld [vmem:[%s0 + $0x260] sm:$0xff]
  %v85 = vld [vmem:[%s0 + $0x268] sm:$0xff]
  %v86 = vld [vmem:[%s0 + $0x270] sm:$0xff]
  %v87 = vld [vmem:[%s0 + $0x278] sm:$0xff]
  %v88 = vld [vmem:[%s0 + $0x280] sm:$0xff]
  %v89 = vld [vmem:[%s0 + $0x288] sm:$0xff]
  %v90 = vld [vmem:[%s0 + $0x290] sm:$0xff]
  %v91 = vld [vmem:[%s0 + $0x298] sm:$0xff]
  %v92 = vld [vmem:[%s0 + $0x2a0] sm:$0xff]
  %v93 = vld [vmem:[%s0 + $0x2a8] sm:$0xff]
  %v94 = vld [vmem:[%s0 + $0x2b0] sm:$0xff]
  %v95 = vld [vmem:[%s0 + $0x2b8] sm:$0xff]
  %v96 = vld [vmem:[%s0 + $0x2c0] sm:$0xff]
  %v97 = vld [vmem:[%s0 + $0x2c8] sm:$0xff]
  %v98 = vld [vmem:[%s0 + $0x2d0] sm:$0xff]
  %v99 = vld [vmem:[%s0 + $0x2d8] sm:$0xff]
  %v100 = vld [vmem:[%s0 + $0x2e0] sm:$0xff]
  %v101 = vld [vmem:[%s0 + $0x2e8] sm:$0xff]
  %v102 = vld [vmem:[%s0 + $0x2f0] sm:$0xff]
  %v103 = vld [vmem:[%s0 + $0x2f8] sm:$0xff]
  %v104 = vld [vmem:[%s0 + $0x300] sm:$0xff]
  %v105 = vld [vmem:[%s0 + $0x308] sm:$0xff]
  %v106 = vld [vmem:[%s0 + $0x310] sm:$0xff]
  %v107 = vld [vmem:[%s0 + $0x318] sm:$0xff]
  %v108 = vld [vmem:[%s0 + $0x320] sm:$0xff]
  %v109 = vld [vmem:[%s0 + $0x328] sm:$0xff]
  %v110 = vld [vmem:[%s0 + $0x330] sm:$0xff]
  %v111 = vld [vmem:[%s0 + $0x338] sm:$0xff]
  %v112 = vld [vmem:[%s0 + $0x340] sm:$0xff]
  %v113 = vld [vmem:[%s0 + $0x348] sm:$0xff]
  %v114 = vld [vmem:[%s0 + $0x350] sm:$0xff]
  %v115 = vld [vmem:[%s0 + $0x358] sm:$0xff]
  %v116 = vld [vmem:[%s0 + $0x360] sm:$0xff]
  %v117 = vld [vmem:[%s0 + $0x368] sm:$0xff]
  %v118 = vld [vmem:[%s0 + $0x370] sm:$0xff]
  %v119 = vld [vmem:[%s0 + $0x378] sm:$0xff]
  %v120 = vld [vmem:[%s0 + $0x380] sm:$0xff]
  %v121 = vld [vmem:[%s0 + $0x388] sm:$0xff]
  %v122 = vld [vmem:[%s0 + $0x390] sm:$0xff]
  %v123 = vld [vmem:[%s0 + $0x398] sm:$0xff]
  %v124 = vld [vmem:[%s0 + $0x3a0] sm:$0xff]
  %v125 = vld [vmem:[%s0 + $0x3a8] sm:$0xff]
  %v126 = vld [vmem:[%s0 + $0x3b0] sm:$0xff]
  %v127 = vld [vmem:[%s0 + $0x3b8] sm:$0xff]
  %v128 = vld [vmem:[%s0 + $0x3c0] sm:$0xff]
  %v129 = vld [vmem:[%s0 + $0x3c8] sm:$0xff]
  %v130 = vld [vmem:[%s0 + $0x3d0] sm:$0xff]
  %v131 = vld [vmem:[%s0 + $0x3d8] sm:$0xff]
  %v132 = vld [vmem:[%s0 + $0x3e0] sm:$0xff]
  %v133 = vld [vmem:[%s0 + $0x3e8] sm:$0x3f]
  %v134 = vld [vmem:[%s0 + $0x3f0] sm:$0xff]
  %v135 = vld [vmem:[%s0 + $0x3f8] sm:$0xff]
  %v136 = vld [vmem:[%s0 + $0x400] sm:$0xff]
  %v137 = vld [vmem:[%s0 + $0x408] sm:$0xff]
  %v138 = vld [vmem:[%s0 + $0x410] sm:$0xff]
  %v139 = vld [vmem:[%s0 + $0x418] sm:$0xff]
  %v140 = vld [vmem:[%s0 + $0x420] sm:$0xff]
  %v141 = vld [vmem:[%s0 + $0x428] sm:$0xff]
  %v142 = vld [vmem:[%s0 + $0x430] sm:$0xff]
  %v143 = vld [vmem:[%s0 + $0x438] sm:$0xff]
  %v144 = vld [vmem:[%s0 + $0x440] sm:$0xff]
  %v145 = vld [vmem:[%s0 + $0x448] sm:$0xff]
  %v146 = vld [vmem:[%s0 + $0x450] sm:$0xff]
  %v147 = vld [vmem:[%s0 + $0x458] sm:$0xff]
  %v148 = vld [vmem:[%s0 + $0x460] sm:$0xff]
  %v149 = vld [vmem:[%s0 + $0x468] sm:$0xff]
  %v150 = vld [vmem:[%s0 + $0x470] sm:$0xff]
  %v151 = vld [vmem:[%s0 + $0x478] sm:$0xff]
  %v152 = vld [vmem:[%s0 + $0x480] sm:$0xff]
  %v153 = vld [vmem:[%s0 + $0x488] sm:$0xff]
  %v154 = vld [vmem:[%s0 + $0x490] sm:$0xff]
  %v155 = vld [vmem:[%s0 + $0x498] sm:$0xff]
  %v156 = vld [vmem:[%s0 + $0x4a0] sm:$0xff]
  %v157 = vld [vmem:[%s0 + $0x4a8] sm:$0xff]
  %v158 = vld [vmem:[%s0 + $0x4b0] sm:$0xff]
  %v159 = vld [vmem:[%s0 + $0x4b8] sm:$0xff]
  %v160 = vld [vmem:[%s0 + $0x4c0] sm:$0xff]
  %v161 = vld [vmem:[%s0 + $0x4c8] sm:$0xff]
  %v162 = vld [vmem:[%s0 + $0x4d0] sm:$0xff]
  %v163 = vld [vmem:[%s0 + $0x4d8] sm:$0xff]
  %v164 = vld [vmem:[%s0 + $0x4e0] sm:$0xff]
  %v165 = vld [vmem:[%s0 + $0x4e8] sm:$0xff]
  %v166 = vld [vmem:[%s0 + $0x4f0] sm:$0xff]
  %v167 = vld [vmem:[%s0 + $0x4f8] sm:$0xff]
  %v168 = vld [vmem:[%s0 + $0x500] sm:$0xff]
  %v169 = vld [vmem:[%s0 + $0x508] sm:$0xff]
  %v170 = vld [vmem:[%s0 + $0x510] sm:$0xff]
  %v171 = vld [vmem:[%s0 + $0x518] sm:$0xff]
  %v172 = vld [vmem:[%s0 + $0x520] sm:$0xff]
  %v173 = vld [vmem:[%s0 + $0x528] sm:$0xff]
  %v174 = vld [vmem:[%s0 + $0x530] sm:$0xff]
  %v175 = vld [vmem:[%s0 + $0x538] sm:$0xff]
  %v176 = vld [vmem:[%s0 + $0x540] sm:$0xff]
  %v177 = vld [vmem:[%s0 + $0x548] sm:$0xff]
  %v178 = vld [vmem:[%s0 + $0x550] sm:$0xff]
  %v179 = vld [vmem:[%s0 + $0x558] sm:$0xff]
  %v180 = vld [vmem:[%s0 + $0x560] sm:$0xff]
  %v181 = vld [vmem:[%s0 + $0x568] sm:$0xff]
  %v182 = vld [vmem:[%s0 + $0x570] sm:$0xff]
  %v183 = vld [vmem:[%s0 + $0x578] sm:$0xff]
  %v184 = vld [vmem:[%s0 + $0x580] sm:$0xff]
  %v185 = vld [vmem:[%s0 + $0x588] sm:$0xff]
  %v186 = vld [vmem:[%s0 + $0x590] sm:$0xff]
  %v187 = vld [vmem:[%s0 + $0x598] sm:$0xff]
  %v188 = vld [vmem:[%s0 + $0x5a0] sm:$0xff]
  %v189 = vld [vmem:[%s0 + $0x5a8] sm:$0xff]
  %v190 = vld [vmem:[%s0 + $0x5b0] sm:$0xff]
  %v191 = vld [vmem:[%s0 + $0x5b8] sm:$0xff]
  %v192 = vld [vmem:[%s0 + $0x5c0] sm:$0xff]
  %v193 = vld [vmem:[%s0 + $0x5c8] sm:$0xff]
  %v194 = vld [vmem:[%s0 + $0x5d0] sm:$0xff]
  %v195 = vld [vmem:[%s0 + $0x5d8] sm:$0xff]
  %v196 = vld [vmem:[%s0 + $0x5e0] sm:$0x3f]
  %v197 = vld [vmem:[%s0 + $0x5e8] sm:$0xff]
  %v198 = vld [vmem:[%s0 + $0x5f0] sm:$0xff]
  %v199 = vld [vmem:[%s0 + $0x5f8] sm:$0xff]
  %v200 = vld [vmem:[%s0 + $0x600] sm:$0xff]
  %v201 = vld [vmem:[%s0 + $0x608] sm:$0xff]
  %v202 = vld [vmem:[%s0 + $0x610] sm:$0xff]
  %v203 = vld [vmem:[%s0 + $0x618] sm:$0xff]
  %v204 = vld [vmem:[%s0 + $0x620] sm:$0xff]
  %v205 = vld [vmem:[%s0 + $0x628] sm:$0xff]
  %v206 = vld [vmem:[%s0 + $0x630] sm:$0xff]
  %v207 = vld [vmem:[%s0 + $0x638] sm:$0xff]
  %v208 = vld [vmem:[%s0 + $0x640] sm:$0xff]
  %v209 = vld [vmem:[%s0 + $0x648] sm:$0xff]
  %v210 = vld [vmem:[%s0 + $0x650] sm:$0xff]
  %v211 = vld [vmem:[%s0 + $0x658] sm:$0xff]
  %v212 = vld [vmem:[%s0 + $0x660] sm:$0xff]
  %v213 = vld [vmem:[%s0 + $0x668] sm:$0xff]
  %v214 = vld [vmem:[%s0 + $0x670] sm:$0xff]
  %v215 = vld [vmem:[%s0 + $0x678] sm:$0xff]
  %v216 = vld [vmem:[%s0 + $0x680] sm:$0xff]
  %v217 = vld [vmem:[%s0 + $0x688] sm:$0xff]
  %v218 = vld [vmem:[%s0 + $0x690] sm:$0xff]
  %v219 = vld [vmem:[%s0 + $0x698] sm:$0xff]
  %v220 = vld [vmem:[%s0 + $0x6a0] sm:$0xff]
  %v221 = vld [vmem:[%s0 + $0x6a8] sm:$0xff]
  %v222 = vld [vmem:[%s0 + $0x6b0] sm:$0xff]
  %v223 = vld [vmem:[%s0 + $0x6b8] sm:$0xff]
  %v224 = vld [vmem:[%s0 + $0x6c0] sm:$0xff]
  %v225 = vld [vmem:[%s0 + $0x6c8] sm:$0xff]
  %v226 = vld [vmem:[%s0 + $0x6d0] sm:$0xff]
  %v227 = vld [vmem:[%s0 + $0x6d8] sm:$0xff]
  %v228 = vld [vmem:[%s0 + $0x6e0] sm:$0xff]
  %v229 = vld [vmem:[%s0 + $0x6e8] sm:$0xff]
  %v230 = vld [vmem:[%s0 + $0x6f0] sm:$0xff]
  %v231 = vld [vmem:[%s0 + $0x6f8] sm:$0xff]
  %v232 = vld [vmem:[%s0 + $0x700] sm:$0xff]
  %v233 = vld [vmem:[%s0 + $0x708] sm:$0xff]
  %v234 = vld [vmem:[%s0 + $0x710] sm:$0xff]
  %v235 = vld [vmem:[%s0 + $0x718] sm:$0xff]
  %v236 = vld [vmem:[%s0 + $0x720] sm:$0xff]
  %v237 = vld [vmem:[%s0 + $0x728] sm:$0xff]
  %v238 = vld [vmem:[%s0 + $0x730] sm:$0xff]
  %v239 = vld [vmem:[%s0 + $0x738] sm:$0xff]
  %v240 = vld [vmem:[%s0 + $0x740] sm:$0xff]
  %v241 = vld [vmem:[%s0 + $0x748] sm:$0xff]
  %v242 = vld [vmem:[%s0 + $0x750] sm:$0xff]
  %v243 = vld [vmem:[%s0 + $0x758] sm:$0xff]
  %v244 = vld [vmem:[%s0 + $0x760] sm:$0xff]
  %v245 = vld [vmem:[%s0 + $0x768] sm:$0xff]
  %v246 = vld [vmem:[%s0 + $0x770] sm:$0xff]
  %v247 = vld [vmem:[%s0 + $0x778] sm:$0xff]
  %v248 = vld [vmem:[%s0 + $0x780] sm:$0xff]
  %v249 = vld [vmem:[%s0 + $0x788] sm:$0xff]
  %v250 = vld [vmem:[%s0 + $0x790] sm:$0xff]
  %v251 = vld [vmem:[%s0 + $0x798] sm:$0xff]
  %v252 = vld [vmem:[%s0 + $0x7a0] sm:$0xff]
  %v253 = vld [vmem:[%s0 + $0x7a8] sm:$0xff]
  %v254 = vld [vmem:[%s0 + $0x7b0] sm:$0xff]
  %v255 = vld [vmem:[%s0 + $0x7b8] sm:$0xff]
  %v256 = vld [vmem:[%s0 + $0x7c0] sm:$0xff]
  %v257 = vld [vmem:[%s0 + $0x7c8] sm:$0xff]
  %v258 = vld [vmem:[%s0 + $0x7d0] sm:$0xff]
  %v259 = vld [vmem:[%s0 + $0x7d8] sm:$0x3f]
  %v260 = vld [vmem:[%s0 + $0x7e0] sm:$0xff]
  %v261 = vld [vmem:[%s0 + $0x7e8] sm:$0xff]
  %v262 = vld [vmem:[%s0 + $0x7f0] sm:$0xff]
  %v263 = vld [vmem:[%s0 + $0x7f8] sm:$0xff]
  %v264 = vld [vmem:[%s0 + $0x800] sm:$0xff]
  %v265 = vld [vmem:[%s0 + $0x808] sm:$0xff]
  %v266 = vld [vmem:[%s0 + $0x810] sm:$0xff]
  %v267 = vld [vmem:[%s0 + $0x818] sm:$0xff]
  %v268 = vld [vmem:[%s0 + $0x820] sm:$0xff]
  %v269 = vld [vmem:[%s0 + $0x828] sm:$0xff]
  %v270 = vld [vmem:[%s0 + $0x830] sm:$0xff]
  %v271 = vld [vmem:[%s0 + $0x838] sm:$0xff]
  %v272 = vld [vmem:[%s0 + $0x840] sm:$0xff]
  %v273 = vld [vmem:[%s0 + $0x848] sm:$0xff]
  %v274 = vld [vmem:[%s0 + $0x850] sm:$0xff]
  %v275 = vld [vmem:[%s0 + $0x858] sm:$0xff]
  %v276 = vld [vmem:[%s0 + $0x860] sm:$0xff]
  %v277 = vld [vmem:[%s0 + $0x868] sm:$0xff]
  %v278 = vld [vmem:[%s0 + $0x870] sm:$0xff]
  %v279 = vld [vmem:[%s0 + $0x878] sm:$0xff]
  %v280 = vld [vmem:[%s0 + $0x880] sm:$0xff]
  %v281 = vld [vmem:[%s0 + $0x888] sm:$0xff]
  %v282 = vld [vmem:[%s0 + $0x890] sm:$0xff]
  %v283 = vld [vmem:[%s0 + $0x898] sm:$0xff]
  %v284 = vld [vmem:[%s0 + $0x8a0] sm:$0xff]
  %v285 = vld [vmem:[%s0 + $0x8a8] sm:$0xff]
  %v286 = vld [vmem:[%s0 + $0x8b0] sm:$0xff]
  %v287 = vld [vmem:[%s0 + $0x8b8] sm:$0xff]
  %v288 = vld [vmem:[%s0 + $0x8c0] sm:$0xff]
  %v289 = vld [vmem:[%s0 + $0x8c8] sm:$0xff]
  %v290 = vld [vmem:[%s0 + $0x8d0] sm:$0xff]
  %v291 = vld [vmem:[%s0 + $0x8d8] sm:$0xff]
  %v292 = vld [vmem:[%s0 + $0x8e0] sm:$0xff]
  %v293 = vld [vmem:[%s0 + $0x8e8] sm:$0xff]
  %v294 = vld [vmem:[%s0 + $0x8f0] sm:$0xff]
  %v295 = vld [vmem:[%s0 + $0x8f8] sm:$0xff]
  %v296 = vld [vmem:[%s0 + $0x900] sm:$0xff]
  %v297 = vld [vmem:[%s0 + $0x908] sm:$0xff]
  %v298 = vld [vmem:[%s0 + $0x910] sm:$0xff]
  %v299 = vld [vmem:[%s0 + $0x918] sm:$0xff]
  %v300 = vld [vmem:[%s0 + $0x920] sm:$0xff]
  %v301 = vld [vmem:[%s0 + $0x928] sm:$0xff]
  %v302 = vld [vmem:[%s0 + $0x930] sm:$0xff]
  %v303 = vld [vmem:[%s0 + $0x938] sm:$0xff]
  %v304 = vld [vmem:[%s0 + $0x940] sm:$0xff]
  %v305 = vld [vmem:[%s0 + $0x948] sm:$0xff]
  %v306 = vld [vmem:[%s0 + $0x950] sm:$0xff]
  %v307 = vld [vmem:[%s0 + $0x958] sm:$0xff]
  %v308 = vld [vmem:[%s0 + $0x960] sm:$0xff]
  %v309 = vld [vmem:[%s0 + $0x968] sm:$0xff]
  %v310 = vld [vmem:[%s0 + $0x970] sm:$0xff]
  %v311 = vld [vmem:[%s0 + $0x978] sm:$0xff]
  %v312 = vld [vmem:[%s0 + $0x980] sm:$0xff]
  %v313 = vld [vmem:[%s0 + $0x988] sm:$0xff]
  %v314 = vld [vmem:[%s0 + $0x990] sm:$0xff]
  %v315 = vld [vmem:[%s0 + $0x998] sm:$0xff]
  %v316 = vld [vmem:[%s0 + $0x9a0] sm:$0xff]
  %v317 = vld [vmem:[%s0 + $0x9a8] sm:$0xff]
  %v318 = vld [vmem:[%s0 + $0x9b0] sm:$0xff]
  %v319 = vld [vmem:[%s0 + $0x9b8] sm:$0xff]
  %v320 = vld [vmem:[%s0 + $0x9c0] sm:$0xff]
  %v321 = vld [vmem:[%s0 + $0x9c8] sm:$0xff]
  %v322 = vld [vmem:[%s0 + $0x9d0] sm:$0x3f]
  %v323 = vld [vmem:[%s0 + $0x9d8] sm:$0xff]
  %v324 = vld [vmem:[%s0 + $0x9e0] sm:$0xff]
  %v325 = vld [vmem:[%s0 + $0x9e8] sm:$0xff]
  %v326 = vld [vmem:[%s0 + $0x9f0] sm:$0xff]
  %v327 = vld [vmem:[%s0 + $0x9f8] sm:$0xff]
  %v328 = vld [vmem:[%s0 + $0xa00] sm:$0xff]
  %v329 = vld [vmem:[%s0 + $0xa08] sm:$0xff]
  %v330 = vld [vmem:[%s0 + $0xa10] sm:$0xff]
  %v331 = vld [vmem:[%s0 + $0xa18] sm:$0xff]
  %v332 = vld [vmem:[%s0 + $0xa20] sm:$0xff]
  %v333 = vld [vmem:[%s0 + $0xa28] sm:$0xff]
  %v334 = vld [vmem:[%s0 + $0xa30] sm:$0xff]
  %v335 = vld [vmem:[%s0 + $0xa38] sm:$0xff]
  %v336 = vld [vmem:[%s0 + $0xa40] sm:$0xff]
  %v337 = vld [vmem:[%s0 + $0xa48] sm:$0xff]
  %v338 = vld [vmem:[%s0 + $0xa50] sm:$0xff]
  %v339 = vld [vmem:[%s0 + $0xa58] sm:$0xff]
  %v340 = vld [vmem:[%s0 + $0xa60] sm:$0xff]
  %v341 = vld [vmem:[%s0 + $0xa68] sm:$0xff]
  %v342 = vld [vmem:[%s0 + $0xa70] sm:$0xff]
  %v343 = vld [vmem:[%s0 + $0xa78] sm:$0xff]
  %v344 = vld [vmem:[%s0 + $0xa80] sm:$0xff]
  %v345 = vld [vmem:[%s0 + $0xa88] sm:$0xff]
  %v346 = vld [vmem:[%s0 + $0xa90] sm:$0xff]
  %v347 = vld [vmem:[%s0 + $0xa98] sm:$0xff]
  %v348 = vld [vmem:[%s0 + $0xaa0] sm:$0xff]
  %v349 = vld [vmem:[%s0 + $0xaa8] sm:$0xff]
  %v350 = vld [vmem:[%s0 + $0xab0] sm:$0xff]
  %v351 = vld [vmem:[%s0 + $0xab8] sm:$0xff]
  %v352 = vld [vmem:[%s0 + $0xac0] sm:$0xff]
  %v353 = vld [vmem:[%s0 + $0xac8] sm:$0xff]
  %v354 = vld [vmem:[%s0 + $0xad0] sm:$0xff]
  %v355 = vld [vmem:[%s0 + $0xad8] sm:$0xff]
  %v356 = vld [vmem:[%s0 + $0xae0] sm:$0xff]
  %v357 = vld [vmem:[%s0 + $0xae8] sm:$0xff]
  %v358 = vld [vmem:[%s0 + $0xaf0] sm:$0xff]
  %v359 = vld [vmem:[%s0 + $0xaf8] sm:$0xff]
  %v360 = vld [vmem:[%s0 + $0xb00] sm:$0xff]
  %v361 = vld [vmem:[%s0 + $0xb08] sm:$0xff]
  %v362 = vld [vmem:[%s0 + $0xb10] sm:$0xff]
  %v363 = vld [vmem:[%s0 + $0xb18] sm:$0xff]
  %v364 = vld [vmem:[%s0 + $0xb20] sm:$0xff]
  %v365 = vld [vmem:[%s0 + $0xb28] sm:$0xff]
  %v366 = vld [vmem:[%s0 + $0xb30] sm:$0xff]
  %v367 = vld [vmem:[%s0 + $0xb38] sm:$0xff]
  %v368 = vld [vmem:[%s0 + $0xb40] sm:$0xff]
  %v369 = vld [vmem:[%s0 + $0xb48] sm:$0xff]
  %v370 = vld [vmem:[%s0 + $0xb50] sm:$0xff]
  %v371 = vld [vmem:[%s0 + $0xb58] sm:$0xff]
  %v372 = vld [vmem:[%s0 + $0xb60] sm:$0xff]
  %v373 = vld [vmem:[%s0 + $0xb68] sm:$0xff]
  %v374 = vld [vmem:[%s0 + $0xb70] sm:$0xff]
  %v375 = vld [vmem:[%s0 + $0xb78] sm:$0xff]
  %v376 = vld [vmem:[%s0 + $0xb80] sm:$0xff]
  %v377 = vld [vmem:[%s0 + $0xb88] sm:$0xff]
  %v378 = vld [vmem:[%s0 + $0xb90] sm:$0xff]
  %v379 = vld [vmem:[%s0 + $0xb98] sm:$0xff]
  %v380 = vld [vmem:[%s0 + $0xba0] sm:$0xff]
  %v381 = vld [vmem:[%s0 + $0xba8] sm:$0xff]
  %v382 = vld [vmem:[%s0 + $0xbb0] sm:$0xff]
  %v383 = vld [vmem:[%s0 + $0xbb8] sm:$0xff]
  %v384 = vld [vmem:[%s0 + $0xbc0] sm:$0xff]
  %v385 = vld [vmem:[%s0 + $0xbc8] sm:$0x3f]
  %v386 = vld [vmem:[%s0 + $0xbd0] sm:$0xff]
  %v387 = vld [vmem:[%s0 + $0xbd8] sm:$0xff]
  %v388 = vld [vmem:[%s0 + $0xbe0] sm:$0xff]
  %v389 = vld [vmem:[%s0 + $0xbe8] sm:$0xff]
  %v390 = vld [vmem:[%s0 + $0xbf0] sm:$0xff]
  %v391 = vld [vmem:[%s0 + $0xbf8] sm:$0xff]
  %v392 = vld [vmem:[%s0 + $0xc00] sm:$0xff]
  %v393 = vld [vmem:[%s0 + $0xc08] sm:$0xff]
  %v394 = vld [vmem:[%s0 + $0xc10] sm:$0xff]
  %v395 = vld [vmem:[%s0 + $0xc18] sm:$0xff]
  %v396 = vld [vmem:[%s0 + $0xc20] sm:$0xff]
  %v397 = vld [vmem:[%s0 + $0xc28] sm:$0xff]
  %v398 = vld [vmem:[%s0 + $0xc30] sm:$0xff]
  %v399 = vld [vmem:[%s0 + $0xc38] sm:$0xff]
  %v400 = vld [vmem:[%s0 + $0xc40] sm:$0xff]
  %v401 = vld [vmem:[%s0 + $0xc48] sm:$0xff]
  %v402 = vld [vmem:[%s0 + $0xc50] sm:$0xff]
  %v403 = vld [vmem:[%s0 + $0xc58] sm:$0xff]
  %v404 = vld [vmem:[%s0 + $0xc60] sm:$0xff]
  %v405 = vld [vmem:[%s0 + $0xc68] sm:$0xff]
  %v406 = vld [vmem:[%s0 + $0xc70] sm:$0xff]
  %v407 = vld [vmem:[%s0 + $0xc78] sm:$0xff]
  %v408 = vld [vmem:[%s0 + $0xc80] sm:$0xff]
  %v409 = vld [vmem:[%s0 + $0xc88] sm:$0xff]
  %v410 = vld [vmem:[%s0 + $0xc90] sm:$0xff]
  %v411 = vld [vmem:[%s0 + $0xc98] sm:$0xff]
  %v412 = vld [vmem:[%s0 + $0xca0] sm:$0xff]
  %v413 = vld [vmem:[%s0 + $0xca8] sm:$0xff]
  %v414 = vld [vmem:[%s0 + $0xcb0] sm:$0xff]
  %v415 = vld [vmem:[%s0 + $0xcb8] sm:$0xff]
  %v416 = vld [vmem:[%s0 + $0xcc0] sm:$0xff]
  %v417 = vld [vmem:[%s0 + $0xcc8] sm:$0xff]
  %v418 = vld [vmem:[%s0 + $0xcd0] sm:$0xff]
  %v419 = vld [vmem:[%s0 + $0xcd8] sm:$0xff]
  %v420 = vld [vmem:[%s0 + $0xce0] sm:$0xff]
  %v421 = vld [vmem:[%s0 + $0xce8] sm:$0xff]
  %v422 = vld [vmem:[%s0 + $0xcf0] sm:$0xff]
  %v423 = vld [vmem:[%s0 + $0xcf8] sm:$0xff]
  %v424 = vld [vmem:[%s0 + $0xd00] sm:$0xff]
  %v425 = vld [vmem:[%s0 + $0xd08] sm:$0xff]
  %v426 = vld [vmem:[%s0 + $0xd10] sm:$0xff]
  %v427 = vld [vmem:[%s0 + $0xd18] sm:$0xff]
  %v428 = vld [vmem:[%s0 + $0xd20] sm:$0xff]
  %v429 = vld [vmem:[%s0 + $0xd28] sm:$0xff]
  %v430 = vld [vmem:[%s0 + $0xd30] sm:$0xff]
  %v431 = vld [vmem:[%s0 + $0xd38] sm:$0xff]
  %v432 = vld [vmem:[%s0 + $0xd40] sm:$0xff]
  %v433 = vld [vmem:[%s0 + $0xd48] sm:$0xff]
  %v434 = vld [vmem:[%s0 + $0xd50] sm:$0xff]
  %v435 = vld [vmem:[%s0 + $0xd58] sm:$0xff]
  %v436 = vld [vmem:[%s0 + $0xd60] sm:$0xff]
  %v437 = vld [vmem:[%s0 + $0xd68] sm:$0xff]
  %v438 = vld [vmem:[%s0 + $0xd70] sm:$0xff]
  %v439 = vld [vmem:[%s0 + $0xd78] sm:$0xff]
  %v440 = vld [vmem:[%s0 + $0xd80] sm:$0xff]
  %v441 = vld [vmem:[%s0 + $0xd88] sm:$0xff]
  %v442 = vld [vmem:[%s0 + $0xd90] sm:$0xff]
  %v443 = vld [vmem:[%s0 + $0xd98] sm:$0xff]
  %v444 = vld [vmem:[%s0 + $0xda0] sm:$0xff]
  %v445 = vld [vmem:[%s0 + $0xda8] sm:$0xff]
  %v446 = vld [vmem:[%s0 + $0xdb0] sm:$0xff]
  %v447 = vld [vmem:[%s0 + $0xdb8] sm:$0xff]
  %v448 = vld [vmem:[%s0 + $0xdc0] sm:$0x3f]
  %v449 = vld [vmem:[%s0 + $0xdc8] sm:$0xff]
  %v450 = vld [vmem:[%s0 + $0xdd0] sm:$0xff]
  %v451 = vld [vmem:[%s0 + $0xdd8] sm:$0xff]
  %v452 = vld [vmem:[%s0 + $0xde0] sm:$0xff]
  %v453 = vld [vmem:[%s0 + $0xde8] sm:$0xff]
  %v454 = vld [vmem:[%s0 + $0xdf0] sm:$0xff]
  %v455 = vld [vmem:[%s0 + $0xdf8] sm:$0xff]
  %v456 = vld [vmem:[%s0 + $0xe00] sm:$0xff]
  %v457 = vld [vmem:[%s0 + $0xe08] sm:$0xff]
  %v458 = vld [vmem:[%s0 + $0xe10] sm:$0xff]
  %v459 = vld [vmem:[%s0 + $0xe18] sm:$0xff]
  %v460 = vld [vmem:[%s0 + $0xe20] sm:$0xff]
  %v461 = vld [vmem:[%s0 + $0xe28] sm:$0xff]
  %v462 = vld [vmem:[%s0 + $0xe30] sm:$0xff]
  %v463 = vld [vmem:[%s0 + $0xe38] sm:$0xff]
  %v464 = vld [vmem:[%s0 + $0xe40] sm:$0xff]
  %v465 = vld [vmem:[%s0 + $0xe48] sm:$0xff]
  %v466 = vld [vmem:[%s0 + $0xe50] sm:$0xff]
  %v467 = vld [vmem:[%s0 + $0xe58] sm:$0xff]
  %v468 = vld [vmem:[%s0 + $0xe60] sm:$0xff]
  %v469 = vld [vmem:[%s0 + $0xe68] sm:$0xff]
  %v470 = vld [vmem:[%s0 + $0xe70] sm:$0xff]
  %v471 = vld [vmem:[%s0 + $0xe78] sm:$0xff]
  %v472 = vld [vmem:[%s0 + $0xe80] sm:$0xff]
  %v473 = vld [vmem:[%s0 + $0xe88] sm:$0xff]
  %v474 = vld [vmem:[%s0 + $0xe90] sm:$0xff]
  %v475 = vld [vmem:[%s0 + $0xe98] sm:$0xff]
  %v476 = vld [vmem:[%s0 + $0xea0] sm:$0xff]
  %v477 = vld [vmem:[%s0 + $0xea8] sm:$0xff]
  %v478 = vld [vmem:[%s0 + $0xeb0] sm:$0xff]
  %v479 = vld [vmem:[%s0 + $0xeb8] sm:$0xff]
  %v480 = vld [vmem:[%s0 + $0xec0] sm:$0xff]
  %v481 = vld [vmem:[%s0 + $0xec8] sm:$0xff]
  %v482 = vld [vmem:[%s0 + $0xed0] sm:$0xff]
  %v483 = vld [vmem:[%s0 + $0xed8] sm:$0xff]
  %v484 = vld [vmem:[%s0 + $0xee0] sm:$0xff]
  %v485 = vld [vmem:[%s0 + $0xee8] sm:$0xff]
  %v486 = vld [vmem:[%s0 + $0xef0] sm:$0xff]
  %v487 = vld [vmem:[%s0 + $0xef8] sm:$0xff]
  %v488 = vld [vmem:[%s0 + $0xf00] sm:$0xff]
  %v489 = vld [vmem:[%s0 + $0xf08] sm:$0xff]
  %v490 = vld [vmem:[%s0 + $0xf10] sm:$0xff]
  %v491 = vld [vmem:[%s0 + $0xf18] sm:$0xff]
  %v492 = vld [vmem:[%s0 + $0xf20] sm:$0xff]
  %v493 = vld [vmem:[%s0 + $0xf28] sm:$0xff]
  %v494 = vld [vmem:[%s0 + $0xf30] sm:$0xff]
  %v495 = vld [vmem:[%s0 + $0xf38] sm:$0xff]
  %v496 = vld [vmem:[%s0 + $0xf40] sm:$0xff]
  %v497 = vld [vmem:[%s0 + $0xf48] sm:$0xff]
  %v498 = vld [vmem:[%s0 + $0xf50] sm:$0xff]
  %v499 = vld [vmem:[%s0 + $0xf58] sm:$0xff]
  %v500 = vld [vmem:[%s0 + $0xf60] sm:$0xff]
  %v501 = vld [vmem:[%s0 + $0xf68] sm:$0xff]
  %v502 = vld [vmem:[%s0 + $0xf70] sm:$0xff]
  %v503 = vld [vmem:[%s0 + $0xf78] sm:$0xff]
  %v504 = vld [vmem:[%s0 + $0xf80] sm:$0xff]
  %v505 = vld [vmem:[%s0 + $0xf88] sm:$0xff]
  %v506 = vld [vmem:[%s0 + $0xf90] sm:$0xff]
  %v507 = vld [vmem:[%s0 + $0xf98] sm:$0xff]
  %v508 = vld [vmem:[%s0 + $0xfa0] sm:$0xff]
  %v509 = vld [vmem:[%s0 + $0xfa8] sm:$0xff]
  %v510 = vld [vmem:[%s0 + $0xfb0] sm:$0xff]
  %v511 = vld [vmem:[%s0 + $0xfb8] sm:$0x3f]
  %v512 = vmax.f32 %v8, %v71
  %v513 = vmax.f32 %v512, %v134
  %v514 = vmax.f32 %v513, %v197
  %v515 = vmax.f32 %v514, %v260
  %v516 = vmax.f32 %v515, %v323
  %v517 = vmax.f32 %v516, %v386
  %v518 = vmax.f32 %v517, %v449
  %v519 = vmax.f32 %v9, %v72
  %v520 = vmax.f32 %v519, %v135
  %v521 = vmax.f32 %v520, %v198
  %v522 = vmax.f32 %v521, %v261
  %v523 = vmax.f32 %v522, %v324
  %v524 = vmax.f32 %v523, %v387
  %v525 = vmax.f32 %v524, %v450
  %v526 = vmax.f32 %v10, %v73
  %v527 = vmax.f32 %v526, %v136
  %v528 = vmax.f32 %v527, %v199
  %v529 = vmax.f32 %v528, %v262
  %v530 = vmax.f32 %v529, %v325
  %v531 = vmax.f32 %v530, %v388
  %v532 = vmax.f32 %v531, %v451
  %v533 = vmax.f32 %v11, %v74
  %v534 = vmax.f32 %v533, %v137
  %v535 = vmax.f32 %v534, %v200
  %v536 = vmax.f32 %v535, %v263
  %v537 = vmax.f32 %v536, %v326
  %v538 = vmax.f32 %v537, %v389
  %v539 = vmax.f32 %v538, %v452
  %v540 = vmax.f32 %v12, %v75
  %v541 = vmax.f32 %v540, %v138
  %v542 = vmax.f32 %v541, %v201
  %v543 = vmax.f32 %v542, %v264
  %v544 = vmax.f32 %v543, %v327
  %v545 = vmax.f32 %v544, %v390
  %v546 = vmax.f32 %v545, %v453
  %v547 = vmax.f32 %v13, %v76
  %v548 = vmax.f32 %v547, %v139
  %v549 = vmax.f32 %v548, %v202
  %v550 = vmax.f32 %v549, %v265
  %v551 = vmax.f32 %v550, %v328
  %v552 = vmax.f32 %v551, %v391
  %v553 = vmax.f32 %v552, %v454
  %v554 = vmax.f32 %v14, %v77
  %v555 = vmax.f32 %v554, %v140
  %v556 = vmax.f32 %v555, %v203
  %v557 = vmax.f32 %v556, %v266
  %v558 = vmax.f32 %v557, %v329
  %v559 = vmax.f32 %v558, %v392
  %v560 = vmax.f32 %v559, %v455
  %v561 = vmax.f32 %v15, %v78
  %v562 = vmax.f32 %v561, %v141
  %v563 = vmax.f32 %v562, %v204
  %v564 = vmax.f32 %v563, %v267
  %v565 = vmax.f32 %v564, %v330
  %v566 = vmax.f32 %v565, %v393
  %v567 = vmax.f32 %v566, %v456
  %v568 = vmax.f32 %v16, %v79
  %v569 = vmax.f32 %v568, %v142
  %v570 = vmax.f32 %v569, %v205
  %v571 = vmax.f32 %v570, %v268
  %v572 = vmax.f32 %v571, %v331
  %v573 = vmax.f32 %v572, %v394
  %v574 = vmax.f32 %v573, %v457
  %v575 = vmax.f32 %v17, %v80
  %v576 = vmax.f32 %v575, %v143
  %v577 = vmax.f32 %v576, %v206
  %v578 = vmax.f32 %v577, %v269
  %v579 = vmax.f32 %v578, %v332
  %v580 = vmax.f32 %v579, %v395
  %v581 = vmax.f32 %v580, %v458
  %v582 = vmax.f32 %v18, %v81
  %v583 = vmax.f32 %v582, %v144
  %v584 = vmax.f32 %v583, %v207
  %v585 = vmax.f32 %v584, %v270
  %v586 = vmax.f32 %v585, %v333
  %v587 = vmax.f32 %v586, %v396
  %v588 = vmax.f32 %v587, %v459
  %v589 = vmax.f32 %v19, %v82
  %v590 = vmax.f32 %v589, %v145
  %v591 = vmax.f32 %v590, %v208
  %v592 = vmax.f32 %v591, %v271
  %v593 = vmax.f32 %v592, %v334
  %v594 = vmax.f32 %v593, %v397
  %v595 = vmax.f32 %v594, %v460
  %v596 = vmax.f32 %v20, %v83
  %v597 = vmax.f32 %v596, %v146
  %v598 = vmax.f32 %v597, %v209
  %v599 = vmax.f32 %v598, %v272
  %v600 = vmax.f32 %v599, %v335
  %v601 = vmax.f32 %v600, %v398
  %v602 = vmax.f32 %v601, %v461
  %v603 = vmax.f32 %v21, %v84
  %v604 = vmax.f32 %v603, %v147
  %v605 = vmax.f32 %v604, %v210
  %v606 = vmax.f32 %v605, %v273
  %v607 = vmax.f32 %v606, %v336
  %v608 = vmax.f32 %v607, %v399
  %v609 = vmax.f32 %v608, %v462
  %v610 = vmax.f32 %v22, %v85
  %v611 = vmax.f32 %v610, %v148
  %v612 = vmax.f32 %v611, %v211
  %v613 = vmax.f32 %v612, %v274
  %v614 = vmax.f32 %v613, %v337
  %v615 = vmax.f32 %v614, %v400
  %v616 = vmax.f32 %v615, %v463
  %v617 = vmax.f32 %v23, %v86
  %v618 = vmax.f32 %v617, %v149
  %v619 = vmax.f32 %v618, %v212
  %v620 = vmax.f32 %v619, %v275
  %v621 = vmax.f32 %v620, %v338
  %v622 = vmax.f32 %v621, %v401
  %v623 = vmax.f32 %v622, %v464
  %v624 = vmax.f32 %v24, %v87
  %v625 = vmax.f32 %v624, %v150
  %v626 = vmax.f32 %v625, %v213
  %v627 = vmax.f32 %v626, %v276
  %v628 = vmax.f32 %v627, %v339
  %v629 = vmax.f32 %v628, %v402
  %v630 = vmax.f32 %v629, %v465
  %v631 = vmax.f32 %v25, %v88
  %v632 = vmax.f32 %v631, %v151
  %v633 = vmax.f32 %v632, %v214
  %v634 = vmax.f32 %v633, %v277
  %v635 = vmax.f32 %v634, %v340
  %v636 = vmax.f32 %v635, %v403
  %v637 = vmax.f32 %v636, %v466
  %v638 = vmax.f32 %v26, %v89
  %v639 = vmax.f32 %v638, %v152
  %v640 = vmax.f32 %v639, %v215
  %v641 = vmax.f32 %v640, %v278
  %v642 = vmax.f32 %v641, %v341
  %v643 = vmax.f32 %v642, %v404
  %v644 = vmax.f32 %v643, %v467
  %v645 = vmax.f32 %v27, %v90
  %v646 = vmax.f32 %v645, %v153
  %v647 = vmax.f32 %v646, %v216
  %v648 = vmax.f32 %v647, %v279
  %v649 = vmax.f32 %v648, %v342
  %v650 = vmax.f32 %v649, %v405
  %v651 = vmax.f32 %v650, %v468
  %v652 = vmax.f32 %v28, %v91
  %v653 = vmax.f32 %v652, %v154
  %v654 = vmax.f32 %v653, %v217
  %v655 = vmax.f32 %v654, %v280
  %v656 = vmax.f32 %v655, %v343
  %v657 = vmax.f32 %v656, %v406
  %v658 = vmax.f32 %v657, %v469
  %v659 = vmax.f32 %v29, %v92
  %v660 = vmax.f32 %v659, %v155
  %v661 = vmax.f32 %v660, %v218
  %v662 = vmax.f32 %v661, %v281
  %v663 = vmax.f32 %v662, %v344
  %v664 = vmax.f32 %v663, %v407
  %v665 = vmax.f32 %v664, %v470
  %v666 = vmax.f32 %v30, %v93
  %v667 = vmax.f32 %v666, %v156
  %v668 = vmax.f32 %v667, %v219
  %v669 = vmax.f32 %v668, %v282
  %v670 = vmax.f32 %v669, %v345
  %v671 = vmax.f32 %v670, %v408
  %v672 = vmax.f32 %v671, %v471
  %v673 = vmax.f32 %v31, %v94
  %v674 = vmax.f32 %v673, %v157
  %v675 = vmax.f32 %v674, %v220
  %v676 = vmax.f32 %v675, %v283
  %v677 = vmax.f32 %v676, %v346
  %v678 = vmax.f32 %v677, %v409
  %v679 = vmax.f32 %v678, %v472
  %v680 = vmax.f32 %v32, %v95
  %v681 = vmax.f32 %v680, %v158
  %v682 = vmax.f32 %v681, %v221
  %v683 = vmax.f32 %v682, %v284
  %v684 = vmax.f32 %v683, %v347
  %v685 = vmax.f32 %v684, %v410
  %v686 = vmax.f32 %v685, %v473
  %v687 = vmax.f32 %v33, %v96
  %v688 = vmax.f32 %v687, %v159
  %v689 = vmax.f32 %v688, %v222
  %v690 = vmax.f32 %v689, %v285
  %v691 = vmax.f32 %v690, %v348
  %v692 = vmax.f32 %v691, %v411
  %v693 = vmax.f32 %v692, %v474
  %v694 = vmax.f32 %v34, %v97
  %v695 = vmax.f32 %v694, %v160
  %v696 = vmax.f32 %v695, %v223
  %v697 = vmax.f32 %v696, %v286
  %v698 = vmax.f32 %v697, %v349
  %v699 = vmax.f32 %v698, %v412
  %v700 = vmax.f32 %v699, %v475
  %v701 = vmax.f32 %v35, %v98
  %v702 = vmax.f32 %v701, %v161
  %v703 = vmax.f32 %v702, %v224
  %v704 = vmax.f32 %v703, %v287
  %v705 = vmax.f32 %v704, %v350
  %v706 = vmax.f32 %v705, %v413
  %v707 = vmax.f32 %v706, %v476
  %v708 = vmax.f32 %v36, %v99
  %v709 = vmax.f32 %v708, %v162
  %v710 = vmax.f32 %v709, %v225
  %v711 = vmax.f32 %v710, %v288
  %v712 = vmax.f32 %v711, %v351
  %v713 = vmax.f32 %v712, %v414
  %v714 = vmax.f32 %v713, %v477
  %v715 = vmax.f32 %v37, %v100
  %v716 = vmax.f32 %v715, %v163
  %v717 = vmax.f32 %v716, %v226
  %v718 = vmax.f32 %v717, %v289
  %v719 = vmax.f32 %v718, %v352
  %v720 = vmax.f32 %v719, %v415
  %v721 = vmax.f32 %v720, %v478
  %v722 = vmax.f32 %v38, %v101
  %v723 = vmax.f32 %v722, %v164
  %v724 = vmax.f32 %v723, %v227
  %v725 = vmax.f32 %v724, %v290
  %v726 = vmax.f32 %v725, %v353
  %v727 = vmax.f32 %v726, %v416
  %v728 = vmax.f32 %v727, %v479
  %v729 = vmax.f32 %v39, %v102
  %v730 = vmax.f32 %v729, %v165
  %v731 = vmax.f32 %v730, %v228
  %v732 = vmax.f32 %v731, %v291
  %v733 = vmax.f32 %v732, %v354
  %v734 = vmax.f32 %v733, %v417
  %v735 = vmax.f32 %v734, %v480
  %v736 = vmax.f32 %v40, %v103
  %v737 = vmax.f32 %v736, %v166
  %v738 = vmax.f32 %v737, %v229
  %v739 = vmax.f32 %v738, %v292
  %v740 = vmax.f32 %v739, %v355
  %v741 = vmax.f32 %v740, %v418
  %v742 = vmax.f32 %v741, %v481
  %v743 = vmax.f32 %v41, %v104
  %v744 = vmax.f32 %v743, %v167
  %v745 = vmax.f32 %v744, %v230
  %v746 = vmax.f32 %v745, %v293
  %v747 = vmax.f32 %v746, %v356
  %v748 = vmax.f32 %v747, %v419
  %v749 = vmax.f32 %v748, %v482
  %v750 = vmax.f32 %v42, %v105
  %v751 = vmax.f32 %v750, %v168
  %v752 = vmax.f32 %v751, %v231
  %v753 = vmax.f32 %v752, %v294
  %v754 = vmax.f32 %v753, %v357
  %v755 = vmax.f32 %v754, %v420
  %v756 = vmax.f32 %v755, %v483
  %v757 = vmax.f32 %v43, %v106
  %v758 = vmax.f32 %v757, %v169
  %v759 = vmax.f32 %v758, %v232
  %v760 = vmax.f32 %v759, %v295
  %v761 = vmax.f32 %v760, %v358
  %v762 = vmax.f32 %v761, %v421
  %v763 = vmax.f32 %v762, %v484
  %v764 = vmax.f32 %v44, %v107
  %v765 = vmax.f32 %v764, %v170
  %v766 = vmax.f32 %v765, %v233
  %v767 = vmax.f32 %v766, %v296
  %v768 = vmax.f32 %v767, %v359
  %v769 = vmax.f32 %v768, %v422
  %v770 = vmax.f32 %v769, %v485
  %v771 = vmax.f32 %v45, %v108
  %v772 = vmax.f32 %v771, %v171
  %v773 = vmax.f32 %v772, %v234
  %v774 = vmax.f32 %v773, %v297
  %v775 = vmax.f32 %v774, %v360
  %v776 = vmax.f32 %v775, %v423
  %v777 = vmax.f32 %v776, %v486
  %v778 = vmax.f32 %v46, %v109
  %v779 = vmax.f32 %v778, %v172
  %v780 = vmax.f32 %v779, %v235
  %v781 = vmax.f32 %v780, %v298
  %v782 = vmax.f32 %v781, %v361
  %v783 = vmax.f32 %v782, %v424
  %v784 = vmax.f32 %v783, %v487
  %v785 = vmax.f32 %v47, %v110
  %v786 = vmax.f32 %v785, %v173
  %v787 = vmax.f32 %v786, %v236
  %v788 = vmax.f32 %v787, %v299
  %v789 = vmax.f32 %v788, %v362
  %v790 = vmax.f32 %v789, %v425
  %v791 = vmax.f32 %v790, %v488
  %v792 = vmax.f32 %v48, %v111
  %v793 = vmax.f32 %v792, %v174
  %v794 = vmax.f32 %v793, %v237
  %v795 = vmax.f32 %v794, %v300
  %v796 = vmax.f32 %v795, %v363
  %v797 = vmax.f32 %v796, %v426
  %v798 = vmax.f32 %v797, %v489
  %v799 = vmax.f32 %v49, %v112
  %v800 = vmax.f32 %v799, %v175
  %v801 = vmax.f32 %v800, %v238
  %v802 = vmax.f32 %v801, %v301
  %v803 = vmax.f32 %v802, %v364
  %v804 = vmax.f32 %v803, %v427
  %v805 = vmax.f32 %v804, %v490
  %v806 = vmax.f32 %v50, %v113
  %v807 = vmax.f32 %v806, %v176
  %v808 = vmax.f32 %v807, %v239
  %v809 = vmax.f32 %v808, %v302
  %v810 = vmax.f32 %v809, %v365
  %v811 = vmax.f32 %v810, %v428
  %v812 = vmax.f32 %v811, %v491
  %v813 = vmax.f32 %v51, %v114
  %v814 = vmax.f32 %v813, %v177
  %v815 = vmax.f32 %v814, %v240
  %v816 = vmax.f32 %v815, %v303
  %v817 = vmax.f32 %v816, %v366
  %v818 = vmax.f32 %v817, %v429
  %v819 = vmax.f32 %v818, %v492
  %v820 = vmax.f32 %v52, %v115
  %v821 = vmax.f32 %v820, %v178
  %v822 = vmax.f32 %v821, %v241
  %v823 = vmax.f32 %v822, %v304
  %v824 = vmax.f32 %v823, %v367
  %v825 = vmax.f32 %v824, %v430
  %v826 = vmax.f32 %v825, %v493
  %v827 = vmax.f32 %v53, %v116
  %v828 = vmax.f32 %v827, %v179
  %v829 = vmax.f32 %v828, %v242
  %v830 = vmax.f32 %v829, %v305
  %v831 = vmax.f32 %v830, %v368
  %v832 = vmax.f32 %v831, %v431
  %v833 = vmax.f32 %v832, %v494
  %v834 = vmax.f32 %v54, %v117
  %v835 = vmax.f32 %v834, %v180
  %v836 = vmax.f32 %v835, %v243
  %v837 = vmax.f32 %v836, %v306
  %v838 = vmax.f32 %v837, %v369
  %v839 = vmax.f32 %v838, %v432
  %v840 = vmax.f32 %v839, %v495
  %v841 = vmax.f32 %v55, %v118
  %v842 = vmax.f32 %v841, %v181
  %v843 = vmax.f32 %v842, %v244
  %v844 = vmax.f32 %v843, %v307
  %v845 = vmax.f32 %v844, %v370
  %v846 = vmax.f32 %v845, %v433
  %v847 = vmax.f32 %v846, %v496
  %v848 = vmax.f32 %v56, %v119
  %v849 = vmax.f32 %v848, %v182
  %v850 = vmax.f32 %v849, %v245
  %v851 = vmax.f32 %v850, %v308
  %v852 = vmax.f32 %v851, %v371
  %v853 = vmax.f32 %v852, %v434
  %v854 = vmax.f32 %v853, %v497
  %v855 = vmax.f32 %v57, %v120
  %v856 = vmax.f32 %v855, %v183
  %v857 = vmax.f32 %v856, %v246
  %v858 = vmax.f32 %v857, %v309
  %v859 = vmax.f32 %v858, %v372
  %v860 = vmax.f32 %v859, %v435
  %v861 = vmax.f32 %v860, %v498
  %v862 = vmax.f32 %v58, %v121
  %v863 = vmax.f32 %v862, %v184
  %v864 = vmax.f32 %v863, %v247
  %v865 = vmax.f32 %v864, %v310
  %v866 = vmax.f32 %v865, %v373
  %v867 = vmax.f32 %v866, %v436
  %v868 = vmax.f32 %v867, %v499
  %v869 = vmax.f32 %v59, %v122
  %v870 = vmax.f32 %v869, %v185
  %v871 = vmax.f32 %v870, %v248
  %v872 = vmax.f32 %v871, %v311
  %v873 = vmax.f32 %v872, %v374
  %v874 = vmax.f32 %v873, %v437
  %v875 = vmax.f32 %v874, %v500
  %v876 = vmax.f32 %v60, %v123
  %v877 = vmax.f32 %v876, %v186
  %v878 = vmax.f32 %v877, %v249
  %v879 = vmax.f32 %v878, %v312
  %v880 = vmax.f32 %v879, %v375
  %v881 = vmax.f32 %v880, %v438
  %v882 = vmax.f32 %v881, %v501
  %v883 = vmax.f32 %v61, %v124
  %v884 = vmax.f32 %v883, %v187
  %v885 = vmax.f32 %v884, %v250
  %v886 = vmax.f32 %v885, %v313
  %v887 = vmax.f32 %v886, %v376
  %v888 = vmax.f32 %v887, %v439
  %v889 = vmax.f32 %v888, %v502
  %v890 = vmax.f32 %v62, %v125
  %v891 = vmax.f32 %v890, %v188
  %v892 = vmax.f32 %v891, %v251
  %v893 = vmax.f32 %v892, %v314
  %v894 = vmax.f32 %v893, %v377
  %v895 = vmax.f32 %v894, %v440
  %v896 = vmax.f32 %v895, %v503
  %v897 = vmax.f32 %v63, %v126
  %v898 = vmax.f32 %v897, %v189
  %v899 = vmax.f32 %v898, %v252
  %v900 = vmax.f32 %v899, %v315
  %v901 = vmax.f32 %v900, %v378
  %v902 = vmax.f32 %v901, %v441
  %v903 = vmax.f32 %v902, %v504
  %v904 = vmax.f32 %v64, %v127
  %v905 = vmax.f32 %v904, %v190
  %v906 = vmax.f32 %v905, %v253
  %v907 = vmax.f32 %v906, %v316
  %v908 = vmax.f32 %v907, %v379
  %v909 = vmax.f32 %v908, %v442
  %v910 = vmax.f32 %v909, %v505
  %v911 = vmax.f32 %v65, %v128
  %v912 = vmax.f32 %v911, %v191
  %v913 = vmax.f32 %v912, %v254
  %v914 = vmax.f32 %v913, %v317
  %v915 = vmax.f32 %v914, %v380
  %v916 = vmax.f32 %v915, %v443
  %v917 = vmax.f32 %v916, %v506
  %v918 = vmax.f32 %v66, %v129
  %v919 = vmax.f32 %v918, %v192
  %v920 = vmax.f32 %v919, %v255
  %v921 = vmax.f32 %v920, %v318
  %v922 = vmax.f32 %v921, %v381
  %v923 = vmax.f32 %v922, %v444
  %v924 = vmax.f32 %v923, %v507
  %v925 = vmax.f32 %v67, %v130
  %v926 = vmax.f32 %v925, %v193
  %v927 = vmax.f32 %v926, %v256
  %v928 = vmax.f32 %v927, %v319
  %v929 = vmax.f32 %v928, %v382
  %v930 = vmax.f32 %v929, %v445
  %v931 = vmax.f32 %v930, %v508
  %v932 = vmax.f32 %v68, %v131
  %v933 = vmax.f32 %v932, %v194
  %v934 = vmax.f32 %v933, %v257
  %v935 = vmax.f32 %v934, %v320
  %v936 = vmax.f32 %v935, %v383
  %v937 = vmax.f32 %v936, %v446
  %v938 = vmax.f32 %v937, %v509
  %v939 = vmax.f32 %v69, %v132
  %v940 = vmax.f32 %v939, %v195
  %v941 = vmax.f32 %v940, %v258
  %v942 = vmax.f32 %v941, %v321
  %v943 = vmax.f32 %v942, %v384
  %v944 = vmax.f32 %v943, %v447
  %v945 = vmax.f32 %v944, %v510
  %vm946 = vcmask 1045504
  %v947 = vsel %vm946, %v70, -inf
  %v948 = vsel %vm946, %v133, -inf
  %v949 = vmax.f32 %v947, %v948
  %v950 = vsel %vm946, %v196, -inf
  %v951 = vmax.f32 %v949, %v950
  %v952 = vsel %vm946, %v259, -inf
  %v953 = vmax.f32 %v951, %v952
  %v954 = vsel %vm946, %v322, -inf
  %v955 = vmax.f32 %v953, %v954
  %v956 = vsel %vm946, %v385, -inf
  %v957 = vmax.f32 %v955, %v956
  %v958 = vsel %vm946, %v448, -inf
  %v959 = vmax.f32 %v957, %v958
  %v960 = vsel %vm946, %v511, -inf
  %v961 = vmax.f32 %v959, %v960
  %962 = vst [vmem:[%s1] sm:$0xff] %v518
  %963 = vst [vmem:[%s1 + $0x8] sm:$0xff] %v525
  %964 = vst [vmem:[%s1 + $0x10] sm:$0xff] %v532
  %965 = vst [vmem:[%s1 + $0x18] sm:$0xff] %v539
  %966 = vst [vmem:[%s1 + $0x20] sm:$0xff] %v546
  %967 = vst [vmem:[%s1 + $0x28] sm:$0xff] %v553
  %968 = vst [vmem:[%s1 + $0x30] sm:$0xff] %v560
  %969 = vst [vmem:[%s1 + $0x38] sm:$0xff] %v567
  %970 = vst [vmem:[%s1 + $0x40] sm:$0xff] %v574
  %971 = vst [vmem:[%s1 + $0x48] sm:$0xff] %v581
  %972 = vst [vmem:[%s1 + $0x50] sm:$0xff] %v588
  %973 = vst [vmem:[%s1 + $0x58] sm:$0xff] %v595
  %974 = vst [vmem:[%s1 + $0x60] sm:$0xff] %v602
  %975 = vst [vmem:[%s1 + $0x68] sm:$0xff] %v609
  %976 = vst [vmem:[%s1 + $0x70] sm:$0xff] %v616
  %977 = vst [vmem:[%s1 + $0x78] sm:$0xff] %v623
  %978 = vst [vmem:[%s1 + $0x80] sm:$0xff] %v630
  %979 = vst [vmem:[%s1 + $0x88] sm:$0xff] %v637
  %980 = vst [vmem:[%s1 + $0x90] sm:$0xff] %v644
  %981 = vst [vmem:[%s1 + $0x98] sm:$0xff] %v651
  %982 = vst [vmem:[%s1 + $0xa0] sm:$0xff] %v658
  %983 = vst [vmem:[%s1 + $0xa8] sm:$0xff] %v665
  %984 = vst [vmem:[%s1 + $0xb0] sm:$0xff] %v672
  %985 = vst [vmem:[%s1 + $0xb8] sm:$0xff] %v679
  %986 = vst [vmem:[%s1 + $0xc0] sm:$0xff] %v686
  %987 = vst [vmem:[%s1 + $0xc8] sm:$0xff] %v693
  %988 = vst [vmem:[%s1 + $0xd0] sm:$0xff] %v700
  %989 = vst [vmem:[%s1 + $0xd8] sm:$0xff] %v707
  %990 = vst [vmem:[%s1 + $0xe0] sm:$0xff] %v714
  %991 = vst [vmem:[%s1 + $0xe8] sm:$0xff] %v721
  %992 = vst [vmem:[%s1 + $0xf0] sm:$0xff] %v728
  %993 = vst [vmem:[%s1 + $0xf8] sm:$0xff] %v735
  %994 = vst [vmem:[%s1 + $0x100] sm:$0xff] %v742
  %995 = vst [vmem:[%s1 + $0x108] sm:$0xff] %v749
  %996 = vst [vmem:[%s1 + $0x110] sm:$0xff] %v756
  %997 = vst [vmem:[%s1 + $0x118] sm:$0xff] %v763
  %998 = vst [vmem:[%s1 + $0x120] sm:$0xff] %v770
  %999 = vst [vmem:[%s1 + $0x128] sm:$0xff] %v777
  %1000 = vst [vmem:[%s1 + $0x130] sm:$0xff] %v784
  %1001 = vst [vmem:[%s1 + $0x138] sm:$0xff] %v791
  %1002 = vst [vmem:[%s1 + $0x140] sm:$0xff] %v798
  %1003 = vst [vmem:[%s1 + $0x148] sm:$0xff] %v805
  %1004 = vst [vmem:[%s1 + $0x150] sm:$0xff] %v812
  %1005 = vst [vmem:[%s1 + $0x158] sm:$0xff] %v819
  %1006 = vst [vmem:[%s1 + $0x160] sm:$0xff] %v826
  %1007 = vst [vmem:[%s1 + $0x168] sm:$0xff] %v833
  %1008 = vst [vmem:[%s1 + $0x170] sm:$0xff] %v840
  %1009 = vst [vmem:[%s1 + $0x178] sm:$0xff] %v847
  %1010 = vst [vmem:[%s1 + $0x180] sm:$0xff] %v854
  %1011 = vst [vmem:[%s1 + $0x188] sm:$0xff] %v861
  %1012 = vst [vmem:[%s1 + $0x190] sm:$0xff] %v868
  %1013 = vst [vmem:[%s1 + $0x198] sm:$0xff] %v875
  %1014 = vst [vmem:[%s1 + $0x1a0] sm:$0xff] %v882
  %1015 = vst [vmem:[%s1 + $0x1a8] sm:$0xff] %v889
  %1016 = vst [vmem:[%s1 + $0x1b0] sm:$0xff] %v896
  %1017 = vst [vmem:[%s1 + $0x1b8] sm:$0xff] %v903
  %1018 = vst [vmem:[%s1 + $0x1c0] sm:$0xff] %v910
  %1019 = vst [vmem:[%s1 + $0x1c8] sm:$0xff] %v917
  %1020 = vst [vmem:[%s1 + $0x1d0] sm:$0xff] %v924
  %1021 = vst [vmem:[%s1 + $0x1d8] sm:$0xff] %v931
  %1022 = vst [vmem:[%s1 + $0x1e0] sm:$0xff] %v938
  %1023 = vst [vmem:[%s1 + $0x1e8] sm:$0xff] %v945
  %1024 = vst [vmem:[%s1 + $0x1f0] sm:$0x3f] %v961
  // Predicated region
  $region6: #{forward.12} parent=0 // pred_check
    _
  $region7: #{forward.12} parent=0 // pred_check_branch
    %1026 = sbr.rel (0) target = $region9
  $region8: #{forward.12} parent=0 // pred_region
    _
  $region9: #{forward.12} parent=0 // pred_fallthru
    _
  // Predicated region
  $region10: #{forward.12} parent=0 // pred_check
    _
  $region11: #{forward.12} parent=0 // pred_check_branch
    %1028 = sbr.rel (0) target = $region13
  $region12: #{forward.12} parent=0 // pred_region
    _
  $region13: #{forward.12} parent=0 // pred_fallthru
    _

// kernel: forward.13
$region0: #{forward.13}
  #allocation0 [shape = 'u32[]', space=smem, size = 0x4, offset = 0x4, fixed_abs, tag = 'smem constant byte address 0x4 - core index']
  #allocation1 [shape = 'u32[144,128]{1,0:T(1,128)}', space=vmem, size = 0x12000, scoped, tag = 'internal scratch']
  %s0 = inlined_call_operand.vmem [shape: bf16[512,1024], index: 0, kind: input, shape index: {}]
  %s1 = inlined_call_operand.vmem [shape: bf16[1024,128], index: 1, kind: input, shape index: {}]
  %s2 = inlined_call_operand.vmem [shape: f32[1,128], index: 2, kind: input, shape index: {}]
  %s3 = inlined_call_operand.vmem [shape: f32[1,128], index: 3, kind: input, shape index: {}]
  %s4 = inlined_call_operand.vmem [shape: f32[512,128], index: 4, kind: output, shape index: {}]
  %s5 = sld [smem:[#allocation0]]
  $region49: #{forward.13} parent=0
    _
  %s7 = ssub.s32 1, %s5
  %s8 = scalar_select 0, %s7, %s5
  loop: start=0, step=1, limit=4
  $region2: #{forward.13} parent=0 // loop_pre_header
    _
  $region3: #{forward.13} parent=0 // loop_header
    %s10 = sphi 0, %s14
    %p11 = scmp.ge.s32.totalorder %s10, 4
    %s20 = sphi 0, %s22
    %s23 = sphi 0, %s20
    %s24 = sphi 0, %s23
    %s40 = sphi 0, %s24
    %s44 = sphi 0, %s44
    %s46 = sphi 0, %s44
    %s47 = sphi 0, %s46
    %s61 = sphi 0, %s47
    %s65 = sphi 0, %s65
    %s67 = sphi 0, %s65
    %s68 = sphi 0, %s67
    %s82 = sphi 0, %s68
    %s86 = sphi 0, %s86
    %s88 = sphi 0, %s86
    %s89 = sphi 0, %s88
    %s103 = sphi 0, %s89
    %s109 = sphi 0, %s111
    %s112 = sphi 0, %s109
    %s113 = sphi 0, %s112
    %s129 = sphi 0, %s113
  $region4: #{forward.13} parent=0 // loop_header_branch
    %13 = sbr.rel (%p11) target = $region8
  $region5: #{forward.13} parent=0 // loop_body
    %s15 = ssub.s32 %s10, 1
    %s16 = ssub.s32 %s10, 2
    %s17 = sadd.s32 %s10, 1
    %s18 = ssub.s32 %s10, %s17
    %p19 = scmp.eq.s32.totalorder %s18, 0
    %s21 = sadd.s32 %s20, 1
    %s22 = scalar_select %p19, %s20, %s21
    %p25 = pneg %p19
    %p26 = scmp.eq.s32.totalorder %s10, 1
    %p27 = por %p25, %p26
    %p28 = scmp.ne.s32.totalorder %s20, %s23
    %p29 = scmp.eq.s32.totalorder %s10, 0
    %p30 = por %p28, %p29
    %p31 = scmp.ne.s32.totalorder %s20, %s23
    %p32 = scmp.eq.s32.totalorder %s15, 1
    %p33 = por %p31, %p32
    %p34 = scmp.ne.s32.totalorder %s23, %s24
    %p35 = scmp.eq.s32.totalorder %s15, 0
    %p36 = por %p34, %p35
    %p37 = scmp.ne.s32.totalorder %s23, %s24
    %p38 = scmp.eq.s32.totalorder %s16, 1
    %p39 = por %p37, %p38
    %p41 = scmp.ne.s32.totalorder %s24, %s40
    %p42 = scmp.eq.s32.totalorder %s16, 0
    %p43 = por %p41, %p42
    %s45 = sadd.s32 %s44, 1
    %p48 = scmp.eq.s32.totalorder %s10, 1
    %p49 = scmp.ne.s32.totalorder %s44, %s46
    %p50 = scmp.eq.s32.totalorder %s10, 0
    %p51 = por %p49, %p50
    %p52 = scmp.ne.s32.totalorder %s44, %s46
    %p53 = scmp.eq.s32.totalorder %s15, 1
    %p54 = por %p52, %p53
    %p55 = scmp.ne.s32.totalorder %s46, %s47
    %p56 = scmp.eq.s32.totalorder %s15, 0
    %p57 = por %p55, %p56
    %p58 = scmp.ne.s32.totalorder %s46, %s47
    %p59 = scmp.eq.s32.totalorder %s16, 1
    %p60 = por %p58, %p59
    %p62 = scmp.ne.s32.totalorder %s47, %s61
    %p63 = scmp.eq.s32.totalorder %s16, 0
    %p64 = por %p62, %p63
    %s66 = sadd.s32 %s65, 1
    %p69 = scmp.eq.s32.totalorder %s10, 1
    %p70 = scmp.ne.s32.totalorder %s65, %s67
    %p71 = scmp.eq.s32.totalorder %s10, 0
    %p72 = por %p70, %p71
    %p73 = scmp.ne.s32.totalorder %s65, %s67
    %p74 = scmp.eq.s32.totalorder %s15, 1
    %p75 = por %p73, %p74
    %p76 = scmp.ne.s32.totalorder %s67, %s68
    %p77 = scmp.eq.s32.totalorder %s15, 0
    %p78 = por %p76, %p77
    %p79 = scmp.ne.s32.totalorder %s67, %s68
    %p80 = scmp.eq.s32.totalorder %s16, 1
    %p81 = por %p79, %p80
    %p83 = scmp.ne.s32.totalorder %s68, %s82
    %p84 = scmp.eq.s32.totalorder %s16, 0
    %p85 = por %p83, %p84
    %s87 = sadd.s32 %s86, 1
    %p90 = scmp.eq.s32.totalorder %s10, 1
    %p91 = scmp.ne.s32.totalorder %s86, %s88
    %p92 = scmp.eq.s32.totalorder %s10, 0
    %p93 = por %p91, %p92
    %p94 = scmp.ne.s32.totalorder %s86, %s88
    %p95 = scmp.eq.s32.totalorder %s15, 1
    %p96 = por %p94, %p95
    %p97 = scmp.ne.s32.totalorder %s88, %s89
    %p98 = scmp.eq.s32.totalorder %s15, 0
    %p99 = por %p97, %p98
    %p100 = scmp.ne.s32.totalorder %s88, %s89
    %p101 = scmp.eq.s32.totalorder %s16, 1
    %p102 = por %p100, %p101
    %p104 = scmp.ne.s32.totalorder %s89, %s103
    %p105 = scmp.eq.s32.totalorder %s16, 0
    %p106 = por %p104, %p105
    %s107 = ssub.s32 %s10, %s17
    %p108 = scmp.eq.s32.totalorder %s107, 0
    %s110 = sadd.s32 %s109, 1
    %s111 = scalar_select %p108, %s109, %s110
    %p114 = pneg %p108
    %p115 = scmp.eq.s32.totalorder %s10, 1
    %p116 = por %p114, %p115
    %p117 = scmp.ne.s32.totalorder %s109, %s112
    %p118 = scmp.eq.s32.totalorder %s10, 0
    %p119 = por %p117, %p118
    %p120 = scmp.ne.s32.totalorder %s109, %s112
    %p121 = scmp.eq.s32.totalorder %s15, 1
    %p122 = por %p120, %p121
    %p123 = scmp.ne.s32.totalorder %s112, %s113
    %p124 = scmp.eq.s32.totalorder %s15, 0
    %p125 = por %p123, %p124
    %p126 = scmp.ne.s32.totalorder %s112, %s113
    %p127 = scmp.eq.s32.totalorder %s16, 1
    %p128 = por %p126, %p127
    %p130 = scmp.ne.s32.totalorder %s113, %s129
    %p131 = scmp.eq.s32.totalorder %s16, 0
    %p132 = por %p130, %p131
    %p133 = scmp.le.s32.totalorder 1, %s10
    %p134 = scmp.lt.s32.totalorder %s10, 3
    %p135 = pnand %p133, %p134
    %p136 = pneg %p135
    // Predicated region
    $region9: #{forward.13} parent=5 // pred_check
      _
    $region10: #{forward.13} parent=5 // pred_check_branch
      %138 = sbr.rel (%p135) target = $region12
    $region11: #{forward.13} parent=5 // pred_region
      %s139 = ssub.s32 %s10, 1
      // Predicated region
      $region13: #{forward.13} parent=11 // pred_check
        %p140 = pneg %p57
      $region14: #{forward.13} parent=11 // pred_check_branch
        %142 = sbr.rel (%p140) target = $region16
      $region15: #{forward.13} parent=11 // pred_region
        _
      $region16: #{forward.13} parent=11 // pred_fallthru
        _
      // Predicated region
      $region17: #{forward.13} parent=11 // pred_check
        %p143 = pneg %p78
      $region18: #{forward.13} parent=11 // pred_check_branch
        %145 = sbr.rel (%p143) target = $region20
      $region19: #{forward.13} parent=11 // pred_region
        _
      $region20: #{forward.13} parent=11 // pred_fallthru
        _
      // Predicated region
      $region21: #{forward.13} parent=11 // pred_check
        %p146 = pneg %p99
      $region22: #{forward.13} parent=11 // pred_check_branch
        %148 = sbr.rel (%p146) target = $region24
      $region23: #{forward.13} parent=11 // pred_region
        _
      $region24: #{forward.13} parent=11 // pred_fallthru
        _
    $region12: #{forward.13} parent=5 // pred_fallthru
      _
    %p149 = scmp.lt.s32.totalorder %s10, 2
    // Predicated region
    $region25: #{forward.13} parent=5 // pred_check
      %p150 = pneg %p149
    $region26: #{forward.13} parent=5 // pred_check_branch
      %152 = sbr.rel (%p150) target = $region28
    $region27: #{forward.13} parent=5 // pred_region
      // Predicated region
      $region29: #{forward.13} parent=27 // pred_check
        %p153 = pneg %p30
      $region30: #{forward.13} parent=27 // pred_check_branch
        %155 = sbr.rel (%p153) target = $region32
      $region31: #{forward.13} parent=27 // pred_region
        %s156 = smul.u32 32, %s10
        %p157 = scmp.lt.s32.totalorder %s156, 63
        %s158 = scalar_select %p157, %s156, 63
        %s159 = smul.addr %s158, 8
        %s160 = smul.addr %s159, 4
        %s161 = scalar_lea.vmem %s0, %s160
        %s162 = smul.u32 32, %s10
      $region32: #{forward.13} parent=27 // pred_fallthru
        _
    $region28: #{forward.13} parent=5 // pred_fallthru
      _
    %p163 = scmp.le.s32.totalorder 1, %s10
    %p164 = scmp.lt.s32.totalorder %s10, 3
    %p165 = pnand %p163, %p164
    %p166 = pneg %p165
    // Predicated region
    $region33: #{forward.13} parent=5 // pred_check
      _
    $region34: #{forward.13} parent=5 // pred_check_branch
      %168 = sbr.rel (%p165) target = $region36
    $region35: #{forward.13} parent=5 // pred_region
      %s169 = ssub.s32 %s10, 1
      %s170 = smul.u32 32, %s15
      %p171 = scmp.lt.s32.totalorder %s170, 63
      %s172 = scalar_select %p171, %s170, 63
      %s173 = smul.addr %s172, 8
      %s174 = smul.addr %s173, 4
      %s175 = scalar_lea.vmem %s0, %s174
      %p176 = pneg %p36
      %p177 = pneg %p33
      %p178 = pneg %p57
      %p179 = pneg %p54
      %p180 = pneg %p78
      %p181 = pneg %p75
      %p182 = pneg %p99
      %p183 = pneg %p96
      %p184 = pneg %p125
      %p185 = pneg %p122
      %s186 = smul.u32 32, %s15
      %p187 = scmp.lt.s32.totalorder %s186, 63
      %s188 = scalar_select %p187, %s186, 63
      %s189 = smul.addr %s188, 8
      %s190 = scalar_lea.vmem %s4, %s189
      %s191 = smul.u32 32, %s15
      %p192 = scmp.lt.s32.totalorder %s191, 63
      %s193 = scalar_select %p192, %s191, 63
      %s194 = smul.addr %s193, 8
      %s195 = smul.addr %s194, 4
      %s196 = scalar_lea.vmem %s0, %s195
      %s197 = smul.u32 32, %s15
      %s198 = smul.u32 32, %s15
      %p199 = scmp.lt.s32.totalorder %s198, 63
      %s200 = scalar_select %p199, %s198, 63
      %s201 = smul.addr %s200, 8
      %s202 = scalar_lea.vmem %s4, %s201
      %s203 = smul.u32 32, %s15
      %v205 = vld [vmem:[%s196] sm:$0xff]
      %v206 = vld [vmem:[%s196 + $0x8] sm:$0xff]
      %v207 = vld [vmem:[%s196 + $0x10] sm:$0xff]
      %v208 = vld [vmem:[%s196 + $0x18] sm:$0xff]
      %v209 = vld [vmem:[%s196 + $0x20] sm:$0xff]
      %v210 = vld [vmem:[%s196 + $0x28] sm:$0xff]
      %v211 = vld [vmem:[%s196 + $0x30] sm:$0xff]
      %v212 = vld [vmem:[%s196 + $0x38] sm:$0xff]
      %v213 = vld [vmem:[%s196 + $0x40] sm:$0xff]
      %v214 = vld [vmem:[%s196 + $0x48] sm:$0xff]
      %v215 = vld [vmem:[%s196 + $0x50] sm:$0xff]
      %v216 = vld [vmem:[%s196 + $0x58] sm:$0xff]
      %v217 = vld [vmem:[%s196 + $0x60] sm:$0xff]
      %v218 = vld [vmem:[%s196 + $0x68] sm:$0xff]
      %v219 = vld [vmem:[%s196 + $0x70] sm:$0xff]
      %v220 = vld [vmem:[%s196 + $0x78] sm:$0xff]
      %v221 = vld [vmem:[%s196 + $0x80] sm:$0xff]
      %v222 = vld [vmem:[%s196 + $0x88] sm:$0xff]
      %v223 = vld [vmem:[%s196 + $0x90] sm:$0xff]
      %v224 = vld [vmem:[%s196 + $0x98] sm:$0xff]
      %v225 = vld [vmem:[%s196 + $0xa0] sm:$0xff]
      %v226 = vld [vmem:[%s196 + $0xa8] sm:$0xff]
      %v227 = vld [vmem:[%s196 + $0xb0] sm:$0xff]
      %v228 = vld [vmem:[%s196 + $0xb8] sm:$0xff]
      %v229 = vld [vmem:[%s196 + $0xc0] sm:$0xff]
      %v230 = vld [vmem:[%s196 + $0xc8] sm:$0xff]
      %v231 = vld [vmem:[%s196 + $0xd0] sm:$0xff]
      %v232 = vld [vmem:[%s196 + $0xd8] sm:$0xff]
      %v233 = vld [vmem:[%s196 + $0xe0] sm:$0xff]
      %v234 = vld [vmem:[%s196 + $0xe8] sm:$0xff]
      %v235 = vld [vmem:[%s196 + $0xf0] sm:$0xff]
      %v236 = vld [vmem:[%s196 + $0xf8] sm:$0xff]
      %v237 = vld [vmem:[%s196 + $0x100] sm:$0xff]
      %v238 = vld [vmem:[%s196 + $0x108] sm:$0xff]
      %v239 = vld [vmem:[%s196 + $0x110] sm:$0xff]
      %v240 = vld [vmem:[%s196 + $0x118] sm:$0xff]
      %v241 = vld [vmem:[%s196 + $0x120] sm:$0xff]
      %v242 = vld [vmem:[%s196 + $0x128] sm:$0xff]
      %v243 = vld [vmem:[%s196 + $0x130] sm:$0xff]
      %v244 = vld [vmem:[%s196 + $0x138] sm:$0xff]
      %v245 = vld [vmem:[%s196 + $0x140] sm:$0xff]
      %v246 = vld [vmem:[%s196 + $0x148] sm:$0xff]
      %v247 = vld [vmem:[%s196 + $0x150] sm:$0xff]
      %v248 = vld [vmem:[%s196 + $0x158] sm:$0xff]
      %v249 = vld [vmem:[%s196 + $0x160] sm:$0xff]
      %v250 = vld [vmem:[%s196 + $0x168] sm:$0xff]
      %v251 = vld [vmem:[%s196 + $0x170] sm:$0xff]
      %v252 = vld [vmem:[%s196 + $0x178] sm:$0xff]
      %v253 = vld [vmem:[%s196 + $0x180] sm:$0xff]
      %v254 = vld [vmem:[%s196 + $0x188] sm:$0xff]
      %v255 = vld [vmem:[%s196 + $0x190] sm:$0xff]
      %v256 = vld [vmem:[%s196 + $0x198] sm:$0xff]
      %v257 = vld [vmem:[%s196 + $0x1a0] sm:$0xff]
      %v258 = vld [vmem:[%s196 + $0x1a8] sm:$0xff]
      %v259 = vld [vmem:[%s196 + $0x1b0] sm:$0xff]
      %v260 = vld [vmem:[%s196 + $0x1b8] sm:$0xff]
      %v261 = vld [vmem:[%s196 + $0x1c0] sm:$0xff]
      %v262 = vld [vmem:[%s196 + $0x1c8] sm:$0xff]
      %v263 = vld [vmem:[%s196 + $0x1d0] sm:$0xff]
      %v264 = vld [vmem:[%s196 + $0x1d8] sm:$0xff]
      %v265 = vld [vmem:[%s196 + $0x1e0] sm:$0xff]
      %v266 = vld [vmem:[%s196 + $0x1e8] sm:$0xff]
      %v267 = vld [vmem:[%s196 + $0x1f0] sm:$0xff]
      %v268 = vld [vmem:[%s196 + $0x1f8] sm:$0xff]
      %v269 = vld [vmem:[%s196 + $0x200] sm:$0xff]
      %v270 = vld [vmem:[%s196 + $0x208] sm:$0xff]
      %v271 = vld [vmem:[%s196 + $0x210] sm:$0xff]
      %v272 = vld [vmem:[%s196 + $0x218] sm:$0xff]
      %v273 = vld [vmem:[%s196 + $0x220] sm:$0xff]
      %v274 = vld [vmem:[%s196 + $0x228] sm:$0xff]
      %v275 = vld [vmem:[%s196 + $0x230] sm:$0xff]
      %v276 = vld [vmem:[%s196 + $0x238] sm:$0xff]
      %v277 = vld [vmem:[%s196 + $0x240] sm:$0xff]
      %v278 = vld [vmem:[%s196 + $0x248] sm:$0xff]
      %v279 = vld [vmem:[%s196 + $0x250] sm:$0xff]
      %v280 = vld [vmem:[%s196 + $0x258] sm:$0xff]
      %v281 = vld [vmem:[%s196 + $0x260] sm:$0xff]
      %v282 = vld [vmem:[%s196 + $0x268] sm:$0xff]
      %v283 = vld [vmem:[%s196 + $0x270] sm:$0xff]
      %v284 = vld [vmem:[%s196 + $0x278] sm:$0xff]
      %v285 = vld [vmem:[%s196 + $0x280] sm:$0xff]
      %v286 = vld [vmem:[%s196 + $0x288] sm:$0xff]
      %v287 = vld [vmem:[%s196 + $0x290] sm:$0xff]
      %v288 = vld [vmem:[%s196 + $0x298] sm:$0xff]
      %v289 = vld [vmem:[%s196 + $0x2a0] sm:$0xff]
      %v290 = vld [vmem:[%s196 + $0x2a8] sm:$0xff]
      %v291 = vld [vmem:[%s196 + $0x2b0] sm:$0xff]
      %v292 = vld [vmem:[%s196 + $0x2b8] sm:$0xff]
      %v293 = vld [vmem:[%s196 + $0x2c0] sm:$0xff]
      %v294 = vld [vmem:[%s196 + $0x2c8] sm:$0xff]
      %v295 = vld [vmem:[%s196 + $0x2d0] sm:$0xff]
      %v296 = vld [vmem:[%s196 + $0x2d8] sm:$0xff]
      %v297 = vld [vmem:[%s196 + $0x2e0] sm:$0xff]
      %v298 = vld [vmem:[%s196 + $0x2e8] sm:$0xff]
      %v299 = vld [vmem:[%s196 + $0x2f0] sm:$0xff]
      %v300 = vld [vmem:[%s196 + $0x2f8] sm:$0xff]
      %v301 = vld [vmem:[%s196 + $0x300] sm:$0xff]
      %v302 = vld [vmem:[%s196 + $0x308] sm:$0xff]
      %v303 = vld [vmem:[%s196 + $0x310] sm:$0xff]
      %v304 = vld [vmem:[%s196 + $0x318] sm:$0xff]
      %v305 = vld [vmem:[%s196 + $0x320] sm:$0xff]
      %v306 = vld [vmem:[%s196 + $0x328] sm:$0xff]
      %v307 = vld [vmem:[%s196 + $0x330] sm:$0xff]
      %v308 = vld [vmem:[%s196 + $0x338] sm:$0xff]
      %v309 = vld [vmem:[%s196 + $0x340] sm:$0xff]
      %v310 = vld [vmem:[%s196 + $0x348] sm:$0xff]
      %v311 = vld [vmem:[%s196 + $0x350] sm:$0xff]
      %v312 = vld [vmem:[%s196 + $0x358] sm:$0xff]
      %v313 = vld [vmem:[%s196 + $0x360] sm:$0xff]
      %v314 = vld [vmem:[%s196 + $0x368] sm:$0xff]
      %v315 = vld [vmem:[%s196 + $0x370] sm:$0xff]
      %v316 = vld [vmem:[%s196 + $0x378] sm:$0xff]
      %v317 = vld [vmem:[%s196 + $0x380] sm:$0xff]
      %v318 = vld [vmem:[%s196 + $0x388] sm:$0xff]
      %v319 = vld [vmem:[%s196 + $0x390] sm:$0xff]
      %v320 = vld [vmem:[%s196 + $0x398] sm:$0xff]
      %v321 = vld [vmem:[%s196 + $0x3a0] sm:$0xff]
      %v322 = vld [vmem:[%s196 + $0x3a8] sm:$0xff]
      %v323 = vld [vmem:[%s196 + $0x3b0] sm:$0xff]
      %v324 = vld [vmem:[%s196 + $0x3b8] sm:$0xff]
      %v325 = vld [vmem:[%s196 + $0x3c0] sm:$0xff]
      %v326 = vld [vmem:[%s196 + $0x3c8] sm:$0xff]
      %v327 = vld [vmem:[%s196 + $0x3d0] sm:$0xff]
      %v328 = vld [vmem:[%s196 + $0x3d8] sm:$0xff]
      %v329 = vld [vmem:[%s196 + $0x3e0] sm:$0xff]
      %v330 = vld [vmem:[%s196 + $0x3e8] sm:$0xff]
      %v331 = vld [vmem:[%s196 + $0x3f0] sm:$0xff]
      %v332 = vld [vmem:[%s196 + $0x3f8] sm:$0xff]
      %v333 = vld [vmem:[%s1] sm:$0xf]
      %v334 = vld [vmem:[%s1 + $0x4] sm:$0xf]
      %v335 = vld [vmem:[%s1 + $0x8] sm:$0xf]
      %v336 = vld [vmem:[%s1 + $0xc] sm:$0xf]
      %v337 = vld [vmem:[%s1 + $0x10] sm:$0xf]
      %v338 = vld [vmem:[%s1 + $0x14] sm:$0xf]
      %v339 = vld [vmem:[%s1 + $0x18] sm:$0xf]
      %v340 = vld [vmem:[%s1 + $0x1c] sm:$0xf]
      %v341 = vld [vmem:[%s1 + $0x20] sm:$0xf]
      %v342 = vld [vmem:[%s1 + $0x24] sm:$0xf]
      %v343 = vld [vmem:[%s1 + $0x28] sm:$0xf]
      %v344 = vld [vmem:[%s1 + $0x2c] sm:$0xf]
      %v345 = vld [vmem:[%s1 + $0x30] sm:$0xf]
      %v346 = vld [vmem:[%s1 + $0x34] sm:$0xf]
      %v347 = vld [vmem:[%s1 + $0x38] sm:$0xf]
      %v348 = vld [vmem:[%s1 + $0x3c] sm:$0xf]
      %v349 = vld [vmem:[%s1 + $0x40] sm:$0xf]
      %v350 = vld [vmem:[%s1 + $0x44] sm:$0xf]
      %v351 = vld [vmem:[%s1 + $0x48] sm:$0xf]
      %v352 = vld [vmem:[%s1 + $0x4c] sm:$0xf]
      %v353 = vld [vmem:[%s1 + $0x50] sm:$0xf]
      %v354 = vld [vmem:[%s1 + $0x54] sm:$0xf]
      %v355 = vld [vmem:[%s1 + $0x58] sm:$0xf]
      %v356 = vld [vmem:[%s1 + $0x5c] sm:$0xf]
      %v357 = vld [vmem:[%s1 + $0x60] sm:$0xf]
      %v358 = vld [vmem:[%s1 + $0x64] sm:$0xf]
      %v359 = vld [vmem:[%s1 + $0x68] sm:$0xf]
      %v360 = vld [vmem:[%s1 + $0x6c] sm:$0xf]
      %v361 = vld [vmem:[%s1 + $0x70] sm:$0xf]
      %v362 = vld [vmem:[%s1 + $0x74] sm:$0xf]
      %v363 = vld [vmem:[%s1 + $0x78] sm:$0xf]
      %v364 = vld [vmem:[%s1 + $0x7c] sm:$0xf]
      %v365 = vld [vmem:[%s1 + $0x80] sm:$0xf]
      %v366 = vld [vmem:[%s1 + $0x84] sm:$0xf]
      %v367 = vld [vmem:[%s1 + $0x88] sm:$0xf]
      %v368 = vld [vmem:[%s1 + $0x8c] sm:$0xf]
      %v369 = vld [vmem:[%s1 + $0x90] sm:$0xf]
      %v370 = vld [vmem:[%s1 + $0x94] sm:$0xf]
      %v371 = vld [vmem:[%s1 + $0x98] sm:$0xf]
      %v372 = vld [vmem:[%s1 + $0x9c] sm:$0xf]
      %v373 = vld [vmem:[%s1 + $0xa0] sm:$0xf]
      %v374 = vld [vmem:[%s1 + $0xa4] sm:$0xf]
      %v375 = vld [vmem:[%s1 + $0xa8] sm:$0xf]
      %v376 = vld [vmem:[%s1 + $0xac] sm:$0xf]
      %v377 = vld [vmem:[%s1 + $0xb0] sm:$0xf]
      %v378 = vld [vmem:[%s1 + $0xb4] sm:$0xf]
      %v379 = vld [vmem:[%s1 + $0xb8] sm:$0xf]
      %v380 = vld [vmem:[%s1 + $0xbc] sm:$0xf]
      %v381 = vld [vmem:[%s1 + $0xc0] sm:$0xf]
      %v382 = vld [vmem:[%s1 + $0xc4] sm:$0xf]
      %v383 = vld [vmem:[%s1 + $0xc8] sm:$0xf]
      %v384 = vld [vmem:[%s1 + $0xcc] sm:$0xf]
      %v385 = vld [vmem:[%s1 + $0xd0] sm:$0xf]
      %v386 = vld [vmem:[%s1 + $0xd4] sm:$0xf]
      %v387 = vld [vmem:[%s1 + $0xd8] sm:$0xf]
      %v388 = vld [vmem:[%s1 + $0xdc] sm:$0xf]
      %v389 = vld [vmem:[%s1 + $0xe0] sm:$0xf]
      %v390 = vld [vmem:[%s1 + $0xe4] sm:$0xf]
      %v391 = vld [vmem:[%s1 + $0xe8] sm:$0xf]
      %v392 = vld [vmem:[%s1 + $0xec] sm:$0xf]
      %v393 = vld [vmem:[%s1 + $0xf0] sm:$0xf]
      %v394 = vld [vmem:[%s1 + $0xf4] sm:$0xf]
      %v395 = vld [vmem:[%s1 + $0xf8] sm:$0xf]
      %v396 = vld [vmem:[%s1 + $0xfc] sm:$0xf]
      %v397 = vld [vmem:[%s1 + $0x100] sm:$0xf]
      %v398 = vld [vmem:[%s1 + $0x104] sm:$0xf]
      %v399 = vld [vmem:[%s1 + $0x108] sm:$0xf]
      %v400 = vld [vmem:[%s1 + $0x10c] sm:$0xf]
      %v401 = vld [vmem:[%s1 + $0x110] sm:$0xf]
      %v402 = vld [vmem:[%s1 + $0x114] sm:$0xf]
      %v403 = vld [vmem:[%s1 + $0x118] sm:$0xf]
      %v404 = vld [vmem:[%s1 + $0x11c] sm:$0xf]
      %v405 = vld [vmem:[%s1 + $0x120] sm:$0xf]
      %v406 = vld [vmem:[%s1 + $0x124] sm:$0xf]
      %v407 = vld [vmem:[%s1 + $0x128] sm:$0xf]
      %v408 = vld [vmem:[%s1 + $0x12c] sm:$0xf]
      %v409 = vld [vmem:[%s1 + $0x130] sm:$0xf]
      %v410 = vld [vmem:[%s1 + $0x134] sm:$0xf]
      %v411 = vld [vmem:[%s1 + $0x138] sm:$0xf]
      %v412 = vld [vmem:[%s1 + $0x13c] sm:$0xf]
      %v413 = vld [vmem:[%s1 + $0x140] sm:$0xf]
      %v414 = vld [vmem:[%s1 + $0x144] sm:$0xf]
      %v415 = vld [vmem:[%s1 + $0x148] sm:$0xf]
      %v416 = vld [vmem:[%s1 + $0x14c] sm:$0xf]
      %v417 = vld [vmem:[%s1 + $0x150] sm:$0xf]
      %v418 = vld [vmem:[%s1 + $0x154] sm:$0xf]
      %v419 = vld [vmem:[%s1 + $0x158] sm:$0xf]
      %v420 = vld [vmem:[%s1 + $0x15c] sm:$0xf]
      %v421 = vld [vmem:[%s1 + $0x160] sm:$0xf]
      %v422 = vld [vmem:[%s1 + $0x164] sm:$0xf]
      %v423 = vld [vmem:[%s1 + $0x168] sm:$0xf]
      %v424 = vld [vmem:[%s1 + $0x16c] sm:$0xf]
      %v425 = vld [vmem:[%s1 + $0x170] sm:$0xf]
      %v426 = vld [vmem:[%s1 + $0x174] sm:$0xf]
      %v427 = vld [vmem:[%s1 + $0x178] sm:$0xf]
      %v428 = vld [vmem:[%s1 + $0x17c] sm:$0xf]
      %v429 = vld [vmem:[%s1 + $0x180] sm:$0xf]
      %v430 = vld [vmem:[%s1 + $0x184] sm:$0xf]
      %v431 = vld [vmem:[%s1 + $0x188] sm:$0xf]
      %v432 = vld [vmem:[%s1 + $0x18c] sm:$0xf]
      %v433 = vld [vmem:[%s1 + $0x190] sm:$0xf]
      %v434 = vld [vmem:[%s1 + $0x194] sm:$0xf]
      %v435 = vld [vmem:[%s1 + $0x198] sm:$0xf]
      %v436 = vld [vmem:[%s1 + $0x19c] sm:$0xf]
      %v437 = vld [vmem:[%s1 + $0x1a0] sm:$0xf]
      %v438 = vld [vmem:[%s1 + $0x1a4] sm:$0xf]
      %v439 = vld [vmem:[%s1 + $0x1a8] sm:$0xf]
      %v440 = vld [vmem:[%s1 + $0x1ac] sm:$0xf]
      %v441 = vld [vmem:[%s1 + $0x1b0] sm:$0xf]
      %v442 = vld [vmem:[%s1 + $0x1b4] sm:$0xf]
      %v443 = vld [vmem:[%s1 + $0x1b8] sm:$0xf]
      %v444 = vld [vmem:[%s1 + $0x1bc] sm:$0xf]
      %v445 = vld [vmem:[%s1 + $0x1c0] sm:$0xf]
      %v446 = vld [vmem:[%s1 + $0x1c4] sm:$0xf]
      %v447 = vld [vmem:[%s1 + $0x1c8] sm:$0xf]
      %v448 = vld [vmem:[%s1 + $0x1cc] sm:$0xf]
      %v449 = vld [vmem:[%s1 + $0x1d0] sm:$0xf]
      %v450 = vld [vmem:[%s1 + $0x1d4] sm:$0xf]
      %v451 = vld [vmem:[%s1 + $0x1d8] sm:$0xf]
      %v452 = vld [vmem:[%s1 + $0x1dc] sm:$0xf]
      %v453 = vld [vmem:[%s1 + $0x1e0] sm:$0xf]
      %v454 = vld [vmem:[%s1 + $0x1e4] sm:$0xf]
      %v455 = vld [vmem:[%s1 + $0x1e8] sm:$0xf]
      %v456 = vld [vmem:[%s1 + $0x1ec] sm:$0xf]
      %v457 = vld [vmem:[%s1 + $0x1f0] sm:$0xf]
      %v458 = vld [vmem:[%s1 + $0x1f4] sm:$0xf]
      %v459 = vld [vmem:[%s1 + $0x1f8] sm:$0xf]
      %v460 = vld [vmem:[%s1 + $0x1fc] sm:$0xf]
      %v589 = vunpack.c.l.b16 %v205
      %v590 = vunpack.c.h.b16 %v205
      %v591 = vunpack.c.l.b16 %v206
      %v592 = vunpack.c.h.b16 %v206
      %v593 = vunpack.c.l.b16 %v207
      %v594 = vunpack.c.h.b16 %v207
      %v595 = vunpack.c.l.b16 %v208
      %v596 = vunpack.c.h.b16 %v208
      %v597 = vunpack.c.l.b16 %v209
      %v598 = vunpack.c.h.b16 %v209
      %v599 = vunpack.c.l.b16 %v210
      %v600 = vunpack.c.h.b16 %v210
      %v601 = vunpack.c.l.b16 %v211
      %v602 = vunpack.c.h.b16 %v211
      %v603 = vunpack.c.l.b16 %v212
      %v604 = vunpack.c.h.b16 %v212
      %v605 = vunpack.c.l.b16 %v213
      %v606 = vunpack.c.h.b16 %v213
      %v607 = vunpack.c.l.b16 %v214
      %v608 = vunpack.c.h.b16 %v214
      %v609 = vunpack.c.l.b16 %v215
      %v610 = vunpack.c.h.b16 %v215
      %v611 = vunpack.c.l.b16 %v216
      %v612 = vunpack.c.h.b16 %v216
      %v613 = vunpack.c.l.b16 %v217
      %v614 = vunpack.c.h.b16 %v217
      %v615 = vunpack.c.l.b16 %v218
      %v616 = vunpack.c.h.b16 %v218
      %v617 = vunpack.c.l.b16 %v219
      %v618 = vunpack.c.h.b16 %v219
      %v619 = vunpack.c.l.b16 %v220
      %v620 = vunpack.c.h.b16 %v220
      %v621 = vunpack.c.l.b16 %v221
      %v622 = vunpack.c.h.b16 %v221
      %v623 = vunpack.c.l.b16 %v222
      %v624 = vunpack.c.h.b16 %v222
      %v625 = vunpack.c.l.b16 %v223
      %v626 = vunpack.c.h.b16 %v223
      %v627 = vunpack.c.l.b16 %v224
      %v628 = vunpack.c.h.b16 %v224
      %v629 = vunpack.c.l.b16 %v225
      %v630 = vunpack.c.h.b16 %v225
      %v631 = vunpack.c.l.b16 %v226
      %v632 = vunpack.c.h.b16 %v226
      %v633 = vunpack.c.l.b16 %v227
      %v634 = vunpack.c.h.b16 %v227
      %v635 = vunpack.c.l.b16 %v228
      %v636 = vunpack.c.h.b16 %v228
      %v637 = vunpack.c.l.b16 %v229
      %v638 = vunpack.c.h.b16 %v229
      %v639 = vunpack.c.l.b16 %v230
      %v640 = vunpack.c.h.b16 %v230
      %v641 = vunpack.c.l.b16 %v231
      %v642 = vunpack.c.h.b16 %v231
      %v643 = vunpack.c.l.b16 %v232
      %v644 = vunpack.c.h.b16 %v232
      %v645 = vunpack.c.l.b16 %v233
      %v646 = vunpack.c.h.b16 %v233
      %v647 = vunpack.c.l.b16 %v234
      %v648 = vunpack.c.h.b16 %v234
      %v649 = vunpack.c.l.b16 %v235
      %v650 = vunpack.c.h.b16 %v235
      %v651 = vunpack.c.l.b16 %v236
      %v652 = vunpack.c.h.b16 %v236
      %v653 = vunpack.c.l.b16 %v237
      %v654 = vunpack.c.h.b16 %v237
      %v655 = vunpack.c.l.b16 %v238
      %v656 = vunpack.c.h.b16 %v238
      %v657 = vunpack.c.l.b16 %v239
      %v658 = vunpack.c.h.b16 %v239
      %v659 = vunpack.c.l.b16 %v240
      %v660 = vunpack.c.h.b16 %v240
      %v661 = vunpack.c.l.b16 %v241
      %v662 = vunpack.c.h.b16 %v241
      %v663 = vunpack.c.l.b16 %v242
      %v664 = vunpack.c.h.b16 %v242
      %v665 = vunpack.c.l.b16 %v243
      %v666 = vunpack.c.h.b16 %v243
      %v667 = vunpack.c.l.b16 %v244
      %v668 = vunpack.c.h.b16 %v244
      %v669 = vunpack.c.l.b16 %v245
      %v670 = vunpack.c.h.b16 %v245
      %v671 = vunpack.c.l.b16 %v246
      %v672 = vunpack.c.h.b16 %v246
      %v673 = vunpack.c.l.b16 %v247
      %v674 = vunpack.c.h.b16 %v247
      %v675 = vunpack.c.l.b16 %v248
      %v676 = vunpack.c.h.b16 %v248
      %v677 = vunpack.c.l.b16 %v249
      %v678 = vunpack.c.h.b16 %v249
      %v679 = vunpack.c.l.b16 %v250
      %v680 = vunpack.c.h.b16 %v250
      %v681 = vunpack.c.l.b16 %v251
      %v682 = vunpack.c.h.b16 %v251
      %v683 = vunpack.c.l.b16 %v252
      %v684 = vunpack.c.h.b16 %v252
      %v685 = vunpack.c.l.b16 %v253
      %v686 = vunpack.c.h.b16 %v253
      %v687 = vunpack.c.l.b16 %v254
      %v688 = vunpack.c.h.b16 %v254
      %v689 = vunpack.c.l.b16 %v255
      %v690 = vunpack.c.h.b16 %v255
      %v691 = vunpack.c.l.b16 %v256
      %v692 = vunpack.c.h.b16 %v256
      %v693 = vunpack.c.l.b16 %v257
      %v694 = vunpack.c.h.b16 %v257
      %v695 = vunpack.c.l.b16 %v258
      %v696 = vunpack.c.h.b16 %v258
      %v697 = vunpack.c.l.b16 %v259
      %v698 = vunpack.c.h.b16 %v259
      %v699 = vunpack.c.l.b16 %v260
      %v700 = vunpack.c.h.b16 %v260
      %v701 = vunpack.c.l.b16 %v261
      %v702 = vunpack.c.h.b16 %v261
      %v703 = vunpack.c.l.b16 %v262
      %v704 = vunpack.c.h.b16 %v262
      %v705 = vunpack.c.l.b16 %v263
      %v706 = vunpack.c.h.b16 %v263
      %v707 = vunpack.c.l.b16 %v264
      %v708 = vunpack.c.h.b16 %v264
      %v709 = vunpack.c.l.b16 %v265
      %v710 = vunpack.c.h.b16 %v265
      %v711 = vunpack.c.l.b16 %v266
      %v712 = vunpack.c.h.b16 %v266
      %v713 = vunpack.c.l.b16 %v267
      %v714 = vunpack.c.h.b16 %v267
      %v715 = vunpack.c.l.b16 %v268
      %v716 = vunpack.c.h.b16 %v268
      %v717 = vunpack.c.l.b16 %v269
      %v718 = vunpack.c.h.b16 %v269
      %v719 = vunpack.c.l.b16 %v270
      %v720 = vunpack.c.h.b16 %v270
      %v721 = vunpack.c.l.b16 %v271
      %v722 = vunpack.c.h.b16 %v271
      %v723 = vunpack.c.l.b16 %v272
      %v724 = vunpack.c.h.b16 %v272
      %v725 = vunpack.c.l.b16 %v273
      %v726 = vunpack.c.h.b16 %v273
      %v727 = vunpack.c.l.b16 %v274
      %v728 = vunpack.c.h.b16 %v274
      %v729 = vunpack.c.l.b16 %v275
      %v730 = vunpack.c.h.b16 %v275
      %v731 = vunpack.c.l.b16 %v276
      %v732 = vunpack.c.h.b16 %v276
      %v733 = vunpack.c.l.b16 %v277
      %v734 = vunpack.c.h.b16 %v277
      %v735 = vunpack.c.l.b16 %v278
      %v736 = vunpack.c.h.b16 %v278
      %v737 = vunpack.c.l.b16 %v279
      %v738 = vunpack.c.h.b16 %v279
      %v739 = vunpack.c.l.b16 %v280
      %v740 = vunpack.c.h.b16 %v280
      %v741 = vunpack.c.l.b16 %v281
      %v742 = vunpack.c.h.b16 %v281
      %v743 = vunpack.c.l.b16 %v282
      %v744 = vunpack.c.h.b16 %v282
      %v745 = vunpack.c.l.b16 %v283
      %v746 = vunpack.c.h.b16 %v283
      %v747 = vunpack.c.l.b16 %v284
      %v748 = vunpack.c.h.b16 %v284
      %v749 = vunpack.c.l.b16 %v285
      %v750 = vunpack.c.h.b16 %v285
      %v751 = vunpack.c.l.b16 %v286
      %v752 = vunpack.c.h.b16 %v286
      %v753 = vunpack.c.l.b16 %v287
      %v754 = vunpack.c.h.b16 %v287
      %v755 = vunpack.c.l.b16 %v288
      %v756 = vunpack.c.h.b16 %v288
      %v757 = vunpack.c.l.b16 %v289
      %v758 = vunpack.c.h.b16 %v289
      %v759 = vunpack.c.l.b16 %v290
      %v760 = vunpack.c.h.b16 %v290
      %v761 = vunpack.c.l.b16 %v291
      %v762 = vunpack.c.h.b16 %v291
      %v763 = vunpack.c.l.b16 %v292
      %v764 = vunpack.c.h.b16 %v292
      %v765 = vunpack.c.l.b16 %v293
      %v766 = vunpack.c.h.b16 %v293
      %v767 = vunpack.c.l.b16 %v294
      %v768 = vunpack.c.h.b16 %v294
      %v769 = vunpack.c.l.b16 %v295
      %v770 = vunpack.c.h.b16 %v295
      %v771 = vunpack.c.l.b16 %v296
      %v772 = vunpack.c.h.b16 %v296
      %v773 = vunpack.c.l.b16 %v297
      %v774 = vunpack.c.h.b16 %v297
      %v775 = vunpack.c.l.b16 %v298
      %v776 = vunpack.c.h.b16 %v298
      %v777 = vunpack.c.l.b16 %v299
      %v778 = vunpack.c.h.b16 %v299
      %v779 = vunpack.c.l.b16 %v300
      %v780 = vunpack.c.h.b16 %v300
      %v781 = vunpack.c.l.b16 %v301
      %v782 = vunpack.c.h.b16 %v301
      %v783 = vunpack.c.l.b16 %v302
      %v784 = vunpack.c.h.b16 %v302
      %v785 = vunpack.c.l.b16 %v303
      %v786 = vunpack.c.h.b16 %v303
      %v787 = vunpack.c.l.b16 %v304
      %v788 = vunpack.c.h.b16 %v304
      %v789 = vunpack.c.l.b16 %v305
      %v790 = vunpack.c.h.b16 %v305
      %v791 = vunpack.c.l.b16 %v306
      %v792 = vunpack.c.h.b16 %v306
      %v793 = vunpack.c.l.b16 %v307
      %v794 = vunpack.c.h.b16 %v307
      %v795 = vunpack.c.l.b16 %v308
      %v796 = vunpack.c.h.b16 %v308
      %v797 = vunpack.c.l.b16 %v309
      %v798 = vunpack.c.h.b16 %v309
      %v799 = vunpack.c.l.b16 %v310
      %v800 = vunpack.c.h.b16 %v310
      %v801 = vunpack.c.l.b16 %v311
      %v802 = vunpack.c.h.b16 %v311
      %v803 = vunpack.c.l.b16 %v312
      %v804 = vunpack.c.h.b16 %v312
      %v805 = vunpack.c.l.b16 %v313
      %v806 = vunpack.c.h.b16 %v313
      %v807 = vunpack.c.l.b16 %v314
      %v808 = vunpack.c.h.b16 %v314
      %v809 = vunpack.c.l.b16 %v315
      %v810 = vunpack.c.h.b16 %v315
      %v811 = vunpack.c.l.b16 %v316
      %v812 = vunpack.c.h.b16 %v316
      %v813 = vunpack.c.l.b16 %v317
      %v814 = vunpack.c.h.b16 %v317
      %v815 = vunpack.c.l.b16 %v318
      %v816 = vunpack.c.h.b16 %v318
      %v817 = vunpack.c.l.b16 %v319
      %v818 = vunpack.c.h.b16 %v319
      %v819 = vunpack.c.l.b16 %v320
      %v820 = vunpack.c.h.b16 %v320
      %v821 = vunpack.c.l.b16 %v321
      %v822 = vunpack.c.h.b16 %v321
      %v823 = vunpack.c.l.b16 %v322
      %v824 = vunpack.c.h.b16 %v322
      %v825 = vunpack.c.l.b16 %v323
      %v826 = vunpack.c.h.b16 %v323
      %v827 = vunpack.c.l.b16 %v324
      %v828 = vunpack.c.h.b16 %v324
      %v829 = vunpack.c.l.b16 %v325
      %v830 = vunpack.c.h.b16 %v325
      %v831 = vunpack.c.l.b16 %v326
      %v832 = vunpack.c.h.b16 %v326
      %v833 = vunpack.c.l.b16 %v327
      %v834 = vunpack.c.h.b16 %v327
      %v835 = vunpack.c.l.b16 %v328
      %v836 = vunpack.c.h.b16 %v328
      %v837 = vunpack.c.l.b16 %v329
      %v838 = vunpack.c.h.b16 %v329
      %v839 = vunpack.c.l.b16 %v330
      %v840 = vunpack.c.h.b16 %v330
      %v841 = vunpack.c.l.b16 %v331
      %v842 = vunpack.c.h.b16 %v331
      %v843 = vunpack.c.l.b16 %v332
      %v844 = vunpack.c.h.b16 %v332
      %v845 = vpack.c.b16 %v597, %v589
      %v846 = vpack.c.b16 %v598, %v590
      %v847 = vpack.c.b16 %v599, %v591
      %v848 = vpack.c.b16 %v600, %v592
      %v849 = vpack.c.b16 %v601, %v593
      %v850 = vpack.c.b16 %v602, %v594
      %v851 = vpack.c.b16 %v603, %v595
      %v852 = vpack.c.b16 %v604, %v596
      %v853 = vpack.c.b16 %v613, %v605
      %v854 = vpack.c.b16 %v614, %v606
      %v855 = vpack.c.b16 %v615, %v607
      %v856 = vpack.c.b16 %v616, %v608
      %v857 = vpack.c.b16 %v617, %v609
      %v858 = vpack.c.b16 %v618, %v610
      %v859 = vpack.c.b16 %v619, %v611
      %v860 = vpack.c.b16 %v620, %v612
      %v861 = vpack.c.b16 %v629, %v621
      %v862 = vpack.c.b16 %v630, %v622
      %v863 = vpack.c.b16 %v631, %v623
      %v864 = vpack.c.b16 %v632, %v624
      %v865 = vpack.c.b16 %v633, %v625
      %v866 = vpack.c.b16 %v634, %v626
      %v867 = vpack.c.b16 %v635, %v627
      %v868 = vpack.c.b16 %v636, %v628
      %v869 = vpack.c.b16 %v645, %v637
      %v870 = vpack.c.b16 %v646, %v638
      %v871 = vpack.c.b16 %v647, %v639
      %v872 = vpack.c.b16 %v648, %v640
      %v873 = vpack.c.b16 %v649, %v641
      %v874 = vpack.c.b16 %v650, %v642
      %v875 = vpack.c.b16 %v651, %v643
      %v876 = vpack.c.b16 %v652, %v644
      %v877 = vpack.c.b16 %v661, %v653
      %v878 = vpack.c.b16 %v662, %v654
      %v879 = vpack.c.b16 %v663, %v655
      %v880 = vpack.c.b16 %v664, %v656
      %v881 = vpack.c.b16 %v665, %v657
      %v882 = vpack.c.b16 %v666, %v658
      %v883 = vpack.c.b16 %v667, %v659
      %v884 = vpack.c.b16 %v668, %v660
      %v885 = vpack.c.b16 %v677, %v669
      %v886 = vpack.c.b16 %v678, %v670
      %v887 = vpack.c.b16 %v679, %v671
      %v888 = vpack.c.b16 %v680, %v672
      %v889 = vpack.c.b16 %v681, %v673
      %v890 = vpack.c.b16 %v682, %v674
      %v891 = vpack.c.b16 %v683, %v675
      %v892 = vpack.c.b16 %v684, %v676
      %v893 = vpack.c.b16 %v693, %v685
      %v894 = vpack.c.b16 %v694, %v686
      %v895 = vpack.c.b16 %v695, %v687
      %v896 = vpack.c.b16 %v696, %v688
      %v897 = vpack.c.b16 %v697, %v689
      %v898 = vpack.c.b16 %v698, %v690
      %v899 = vpack.c.b16 %v699, %v691
      %v900 = vpack.c.b16 %v700, %v692
      %v901 = vpack.c.b16 %v709, %v701
      %v902 = vpack.c.b16 %v710, %v702
      %v903 = vpack.c.b16 %v711, %v703
      %v904 = vpack.c.b16 %v712, %v704
      %v905 = vpack.c.b16 %v713, %v705
      %v906 = vpack.c.b16 %v714, %v706
      %v907 = vpack.c.b16 %v715, %v707
      %v908 = vpack.c.b16 %v716, %v708
      %v909 = vpack.c.b16 %v725, %v717
      %v910 = vpack.c.b16 %v726, %v718
      %v911 = vpack.c.b16 %v727, %v719
      %v912 = vpack.c.b16 %v728, %v720
      %v913 = vpack.c.b16 %v729, %v721
      %v914 = vpack.c.b16 %v730, %v722
      %v915 = vpack.c.b16 %v731, %v723
      %v916 = vpack.c.b16 %v732, %v724
      %v917 = vpack.c.b16 %v741, %v733
      %v918 = vpack.c.b16 %v742, %v734
      %v919 = vpack.c.b16 %v743, %v735
      %v920 = vpack.c.b16 %v744, %v736
      %v921 = vpack.c.b16 %v745, %v737
      %v922 = vpack.c.b16 %v746, %v738
      %v923 = vpack.c.b16 %v747, %v739
      %v924 = vpack.c.b16 %v748, %v740
      %v925 = vpack.c.b16 %v757, %v749
      %v926 = vpack.c.b16 %v758, %v750
      %v927 = vpack.c.b16 %v759, %v751
      %v928 = vpack.c.b16 %v760, %v752
      %v929 = vpack.c.b16 %v761, %v753
      %v930 = vpack.c.b16 %v762, %v754
      %v931 = vpack.c.b16 %v763, %v755
      %v932 = vpack.c.b16 %v764, %v756
      %v933 = vpack.c.b16 %v773, %v765
      %v934 = vpack.c.b16 %v774, %v766
      %v935 = vpack.c.b16 %v775, %v767
      %v936 = vpack.c.b16 %v776, %v768
      %v937 = vpack.c.b16 %v777, %v769
      %v938 = vpack.c.b16 %v778, %v770
      %v939 = vpack.c.b16 %v779, %v771
      %v940 = vpack.c.b16 %v780, %v772
      %v941 = vpack.c.b16 %v789, %v781
      %v942 = vpack.c.b16 %v790, %v782
      %v943 = vpack.c.b16 %v791, %v783
      %v944 = vpack.c.b16 %v792, %v784
      %v945 = vpack.c.b16 %v793, %v785
      %v946 = vpack.c.b16 %v794, %v786
      %v947 = vpack.c.b16 %v795, %v787
      %v948 = vpack.c.b16 %v796, %v788
      %v949 = vpack.c.b16 %v805, %v797
      %v950 = vpack.c.b16 %v806, %v798
      %v951 = vpack.c.b16 %v807, %v799
      %v952 = vpack.c.b16 %v808, %v800
      %v953 = vpack.c.b16 %v809, %v801
      %v954 = vpack.c.b16 %v810, %v802
      %v955 = vpack.c.b16 %v811, %v803
      %v956 = vpack.c.b16 %v812, %v804
      %v957 = vpack.c.b16 %v821, %v813
      %v958 = vpack.c.b16 %v822, %v814
      %v959 = vpack.c.b16 %v823, %v815
      %v960 = vpack.c.b16 %v824, %v816
      %v961 = vpack.c.b16 %v825, %v817
      %v962 = vpack.c.b16 %v826, %v818
      %v963 = vpack.c.b16 %v827, %v819
      %v964 = vpack.c.b16 %v828, %v820
      %v965 = vpack.c.b16 %v837, %v829
      %v966 = vpack.c.b16 %v838, %v830
      %v967 = vpack.c.b16 %v839, %v831
      %v968 = vpack.c.b16 %v840, %v832
      %v969 = vpack.c.b16 %v841, %v833
      %v970 = vpack.c.b16 %v842, %v834
      %v971 = vpack.c.b16 %v843, %v835
      %v972 = vpack.c.b16 %v844, %v836
      %v1229 = vunpack.c.l.b16 %v333
      %v1230 = vunpack.c.l.b16 %v334
      %v1231 = vunpack.c.l.b16 %v335
      %v1232 = vunpack.c.l.b16 %v336
      %v1233 = vunpack.c.l.b16 %v337
      %v1234 = vunpack.c.l.b16 %v338
      %v1235 = vunpack.c.l.b16 %v339
      %v1236 = vunpack.c.l.b16 %v340
      %v1237 = vunpack.c.l.b16 %v341
      %v1238 = vunpack.c.l.b16 %v342
      %v1239 = vunpack.c.l.b16 %v343
      %v1240 = vunpack.c.l.b16 %v344
      %v1241 = vunpack.c.l.b16 %v345
      %v1242 = vunpack.c.l.b16 %v346
      %v1243 = vunpack.c.l.b16 %v347
      %v1244 = vunpack.c.l.b16 %v348
      %v1245 = vunpack.c.l.b16 %v349
      %v1246 = vunpack.c.l.b16 %v350
      %v1247 = vunpack.c.l.b16 %v351
      %v1248 = vunpack.c.l.b16 %v352
      %v1249 = vunpack.c.l.b16 %v353
      %v1250 = vunpack.c.l.b16 %v354
      %v1251 = vunpack.c.l.b16 %v355
      %v1252 = vunpack.c.l.b16 %v356
      %v1253 = vunpack.c.l.b16 %v357
      %v1254 = vunpack.c.l.b16 %v358
      %v1255 = vunpack.c.l.b16 %v359
      %v1256 = vunpack.c.l.b16 %v360
      %v1257 = vunpack.c.l.b16 %v361
      %v1258 = vunpack.c.l.b16 %v362
      %v1259 = vunpack.c.l.b16 %v363
      %v1260 = vunpack.c.l.b16 %v364
      %v1261 = vunpack.c.l.b16 %v365
      %v1262 = vunpack.c.l.b16 %v366
      %v1263 = vunpack.c.l.b16 %v367
      %v1264 = vunpack.c.l.b16 %v368
      %v1265 = vunpack.c.l.b16 %v369
      %v1266 = vunpack.c.l.b16 %v370
      %v1267 = vunpack.c.l.b16 %v371
      %v1268 = vunpack.c.l.b16 %v372
      %v1269 = vunpack.c.l.b16 %v373
      %v1270 = vunpack.c.l.b16 %v374
      %v1271 = vunpack.c.l.b16 %v375
      %v1272 = vunpack.c.l.b16 %v376
      %v1273 = vunpack.c.l.b16 %v377
      %v1274 = vunpack.c.l.b16 %v378
      %v1275 = vunpack.c.l.b16 %v379
      %v1276 = vunpack.c.l.b16 %v380
      %v1277 = vunpack.c.l.b16 %v381
      %v1278 = vunpack.c.l.b16 %v382
      %v1279 = vunpack.c.l.b16 %v383
      %v1280 = vunpack.c.l.b16 %v384
      %v1281 = vunpack.c.l.b16 %v385
      %v1282 = vunpack.c.l.b16 %v386
      %v1283 = vunpack.c.l.b16 %v387
      %v1284 = vunpack.c.l.b16 %v388
      %v1285 = vunpack.c.l.b16 %v389
      %v1286 = vunpack.c.l.b16 %v390
      %v1287 = vunpack.c.l.b16 %v391
      %v1288 = vunpack.c.l.b16 %v392
      %v1289 = vunpack.c.l.b16 %v393
      %v1290 = vunpack.c.l.b16 %v394
      %v1291 = vunpack.c.l.b16 %v395
      %v1292 = vunpack.c.l.b16 %v396
      %v1293 = vunpack.c.l.b16 %v397
      %v1294 = vunpack.c.l.b16 %v398
      %v1295 = vunpack.c.l.b16 %v399
      %v1296 = vunpack.c.l.b16 %v400
      %v1297 = vunpack.c.l.b16 %v401
      %v1298 = vunpack.c.l.b16 %v402
      %v1299 = vunpack.c.l.b16 %v403
      %v1300 = vunpack.c.l.b16 %v404
      %v1301 = vunpack.c.l.b16 %v405
      %v1302 = vunpack.c.l.b16 %v406
      %v1303 = vunpack.c.l.b16 %v407
      %v1304 = vunpack.c.l.b16 %v408
      %v1305 = vunpack.c.l.b16 %v409
      %v1306 = vunpack.c.l.b16 %v410
      %v1307 = vunpack.c.l.b16 %v411
      %v1308 = vunpack.c.l.b16 %v412
      %v1309 = vunpack.c.l.b16 %v413
      %v1310 = vunpack.c.l.b16 %v414
      %v1311 = vunpack.c.l.b16 %v415
      %v1312 = vunpack.c.l.b16 %v416
      %v1313 = vunpack.c.l.b16 %v417
      %v1314 = vunpack.c.l.b16 %v418
      %v1315 = vunpack.c.l.b16 %v419
      %v1316 = vunpack.c.l.b16 %v420
      %v1317 = vunpack.c.l.b16 %v421
      %v1318 = vunpack.c.l.b16 %v422
      %v1319 = vunpack.c.l.b16 %v423
      %v1320 = vunpack.c.l.b16 %v424
      %v1321 = vunpack.c.l.b16 %v425
      %v1322 = vunpack.c.l.b16 %v426
      %v1323 = vunpack.c.l.b16 %v427
      %v1324 = vunpack.c.l.b16 %v428
      %v1325 = vunpack.c.l.b16 %v429
      %v1326 = vunpack.c.l.b16 %v430
      %v1327 = vunpack.c.l.b16 %v431
      %v1328 = vunpack.c.l.b16 %v432
      %v1329 = vunpack.c.l.b16 %v433
      %v1330 = vunpack.c.l.b16 %v434
      %v1331 = vunpack.c.l.b16 %v435
      %v1332 = vunpack.c.l.b16 %v436
      %v1333 = vunpack.c.l.b16 %v437
      %v1334 = vunpack.c.l.b16 %v438
      %v1335 = vunpack.c.l.b16 %v439
      %v1336 = vunpack.c.l.b16 %v440
      %v1337 = vunpack.c.l.b16 %v441
      %v1338 = vunpack.c.l.b16 %v442
      %v1339 = vunpack.c.l.b16 %v443
      %v1340 = vunpack.c.l.b16 %v444
      %v1341 = vunpack.c.l.b16 %v445
      %v1342 = vunpack.c.l.b16 %v446
      %v1343 = vunpack.c.l.b16 %v447
      %v1344 = vunpack.c.l.b16 %v448
      %v1345 = vunpack.c.l.b16 %v449
      %v1346 = vunpack.c.l.b16 %v450
      %v1347 = vunpack.c.l.b16 %v451
      %v1348 = vunpack.c.l.b16 %v452
      %v1349 = vunpack.c.l.b16 %v453
      %v1350 = vunpack.c.l.b16 %v454
      %v1351 = vunpack.c.l.b16 %v455
      %v1352 = vunpack.c.l.b16 %v456
      %v1353 = vunpack.c.l.b16 %v457
      %v1354 = vunpack.c.l.b16 %v458
      %v1355 = vunpack.c.l.b16 %v459
      %v1356 = vunpack.c.l.b16 %v460
      %v1357 = vpack.c.b16 %v1230, %v1229
      %v1358 = vpack.c.b16 %v1232, %v1231
      %v1359 = vpack.c.b16 %v1234, %v1233
      %v1360 = vpack.c.b16 %v1236, %v1235
      %v1361 = vpack.c.b16 %v1238, %v1237
      %v1362 = vpack.c.b16 %v1240, %v1239
      %v1363 = vpack.c.b16 %v1242, %v1241
      %v1364 = vpack.c.b16 %v1244, %v1243
      %v1365 = vpack.c.b16 %v1246, %v1245
      %v1366 = vpack.c.b16 %v1248, %v1247
      %v1367 = vpack.c.b16 %v1250, %v1249
      %v1368 = vpack.c.b16 %v1252, %v1251
      %v1369 = vpack.c.b16 %v1254, %v1253
      %v1370 = vpack.c.b16 %v1256, %v1255
      %v1371 = vpack.c.b16 %v1258, %v1257
      %v1372 = vpack.c.b16 %v1260, %v1259
      %v1373 = vpack.c.b16 %v1262, %v1261
      %v1374 = vpack.c.b16 %v1264, %v1263
      %v1375 = vpack.c.b16 %v1266, %v1265
      %v1376 = vpack.c.b16 %v1268, %v1267
      %v1377 = vpack.c.b16 %v1270, %v1269
      %v1378 = vpack.c.b16 %v1272, %v1271
      %v1379 = vpack.c.b16 %v1274, %v1273
      %v1380 = vpack.c.b16 %v1276, %v1275
      %v1381 = vpack.c.b16 %v1278, %v1277
      %v1382 = vpack.c.b16 %v1280, %v1279
      %v1383 = vpack.c.b16 %v1282, %v1281
      %v1384 = vpack.c.b16 %v1284, %v1283
      %v1385 = vpack.c.b16 %v1286, %v1285
      %v1386 = vpack.c.b16 %v1288, %v1287
      %v1387 = vpack.c.b16 %v1290, %v1289
      %v1388 = vpack.c.b16 %v1292, %v1291
      %v1389 = vpack.c.b16 %v1294, %v1293
      %v1390 = vpack.c.b16 %v1296, %v1295
      %v1391 = vpack.c.b16 %v1298, %v1297
      %v1392 = vpack.c.b16 %v1300, %v1299
      %v1393 = vpack.c.b16 %v1302, %v1301
      %v1394 = vpack.c.b16 %v1304, %v1303
      %v1395 = vpack.c.b16 %v1306, %v1305
      %v1396 = vpack.c.b16 %v1308, %v1307
      %v1397 = vpack.c.b16 %v1310, %v1309
      %v1398 = vpack.c.b16 %v1312, %v1311
      %v1399 = vpack.c.b16 %v1314, %v1313
      %v1400 = vpack.c.b16 %v1316, %v1315
      %v1401 = vpack.c.b16 %v1318, %v1317
      %v1402 = vpack.c.b16 %v1320, %v1319
      %v1403 = vpack.c.b16 %v1322, %v1321
      %v1404 = vpack.c.b16 %v1324, %v1323
      %v1405 = vpack.c.b16 %v1326, %v1325
      %v1406 = vpack.c.b16 %v1328, %v1327
      %v1407 = vpack.c.b16 %v1330, %v1329
      %v1408 = vpack.c.b16 %v1332, %v1331
      %v1409 = vpack.c.b16 %v1334, %v1333
      %v1410 = vpack.c.b16 %v1336, %v1335
      %v1411 = vpack.c.b16 %v1338, %v1337
      %v1412 = vpack.c.b16 %v1340, %v1339
      %v1413 = vpack.c.b16 %v1342, %v1341
      %v1414 = vpack.c.b16 %v1344, %v1343
      %v1415 = vpack.c.b16 %v1346, %v1345
      %v1416 = vpack.c.b16 %v1348, %v1347
      %v1417 = vpack.c.b16 %v1350, %v1349
      %v1418 = vpack.c.b16 %v1352, %v1351
      %v1419 = vpack.c.b16 %v1354, %v1353
      %v1420 = vpack.c.b16 %v1356, %v1355
      %1485 = vmatprep.subr.bf16.mxu0 0
      %1486 = vmatpush1.bf16.msra.mxu0 %v1357
      %1487 = vmatprep.subr.bf16.mxu0 0
      %1488 = vmatpush1.bf16.msra.mxu0 %v1358
      %1489 = vmatprep.subr.bf16.mxu0 0
      %1490 = vmatpush1.bf16.msra.mxu0 %v1359
      %1491 = vmatprep.subr.bf16.mxu0 0
      %1492 = vmatpush1.bf16.msra.mxu0 %v1360
      %1493 = vmatprep.subr.bf16.mxu0 0
      %1494 = vmatpush1.bf16.msra.mxu0 %v1361
      %1495 = vmatprep.subr.bf16.mxu0 0
      %1496 = vmatpush1.bf16.msra.mxu0 %v1362
      %1497 = vmatprep.subr.bf16.mxu0 0
      %1498 = vmatpush1.bf16.msra.mxu0 %v1363
      %1499 = vmatprep.subr.bf16.mxu0 0
      %1500 = vmatpush1.bf16.msra.mxu0 %v1364
      %1501 = vmatprep.subr.bf16.mxu0 0
      %1502 = vmatpush1.bf16.msra.mxu0 %v1365
      %1503 = vmatprep.subr.bf16.mxu0 0
      %1504 = vmatpush1.bf16.msra.mxu0 %v1366
      %1505 = vmatprep.subr.bf16.mxu0 0
      %1506 = vmatpush1.bf16.msra.mxu0 %v1367
      %1507 = vmatprep.subr.bf16.mxu0 0
      %1508 = vmatpush1.bf16.msra.mxu0 %v1368
      %1509 = vmatprep.subr.bf16.mxu0 0
      %1510 = vmatpush1.bf16.msra.mxu0 %v1369
      %1511 = vmatprep.subr.bf16.mxu0 0
      %1512 = vmatpush1.bf16.msra.mxu0 %v1370
      %1513 = vmatprep.subr.bf16.mxu0 0
      %1514 = vmatpush1.bf16.msra.mxu0 %v1371
      %1515 = vmatprep.subr.bf16.mxu0 0
      %1516 = vmatpush1.bf16.msra.mxu0 %v1372
      %1517 = vmatprep.mubr.bf16.mxu0 %v846
      %1518 = vmatmul.mubr.bf16.gmra.mrb[0].mxu0 %v845
      %v1519 = vpop.f32.mrb[0].mxu0
      %v1520 = vadd.f32 0.0, %v1519
      %v1521 = vpop.f32.mrb[0].mxu0
      %v1522 = vpop.f32.mrb[0].mxu0
      %v1523 = vadd.f32 0.0, %v1522
      %v1524 = vpop.f32.mrb[0].mxu0
      %1525 = vmatprep.mubr.bf16.mxu0 %v854
      %1526 = vmatmul.mubr.bf16.gmra.mrb[0].mxu0 %v853
      %v1527 = vpop.f32.mrb[0].mxu0
      %v1528 = vadd.f32 0.0, %v1527
      %v1529 = vpop.f32.mrb[0].mxu0
      %v1530 = vpop.f32.mrb[0].mxu0
      %v1531 = vadd.f32 0.0, %v1530
      %v1532 = vpop.f32.mrb[0].mxu0
      %1533 = vmatprep.mubr.bf16.mxu0 %v862
      %1534 = vmatmul.mubr.bf16.gmra.mrb[0].mxu0 %v861
      %v1535 = vpop.f32.mrb[0].mxu0
      %v1536 = vadd.f32 0.0, %v1535
      %v1537 = vpop.f32.mrb[0].mxu0
      %v1538 = vpop.f32.mrb[0].mxu0
      %v1539 = vadd.f32 0.0, %v1538
      %v1540 = vpop.f32.mrb[0].mxu0
      %1541 = vmatprep.mubr.bf16.mxu0 %v870
      %1542 = vmatmul.mubr.bf16.gmra.mrb[0].mxu0 %v869
      %v1543 = vpop.f32.mrb[0].mxu0
      %v1544 = vadd.f32 0.0, %v1543
      %v1545 = vpop.f32.mrb[0].mxu0
      %v1546 = vpop.f32.mrb[0].mxu0
      %v1547 = vadd.f32 0.0, %v1546
      %v1548 = vpop.f32.mrb[0].mxu0
      %1549 = vmatprep.mubr.bf16.mxu0 %v878
      %1550 = vmatmul.mubr.bf16.gmra.mrb[0].mxu0 %v877
      %v1551 = vpop.f32.mrb[0].mxu0
      %v1552 = vadd.f32 0.0, %v1551
      %v1553 = vpop.f32.mrb[0].mxu0
      %v1554 = vpop.f32.mrb[0].mxu0
      %v1555 = vadd.f32 0.0, %v1554
      %v1556 = vpop.f32.mrb[0].mxu0
      %1557 = vmatprep.mubr.bf16.mxu0 %v886
      %1558 = vmatmul.mubr.bf16.gmra.mrb[0].mxu0 %v885
      %v1559 = vpop.f32.mrb[0].mxu0
      %v1560 = vadd.f32 0.0, %v1559
      %v1561 = vpop.f32.mrb[0].mxu0
      %v1562 = vpop.f32.mrb[0].mxu0
      %v1563 = vadd.f32 0.0, %v1562
      %v1564 = vpop.f32.mrb[0].mxu0
      %1565 = vmatprep.mubr.bf16.mxu0 %v894
      %1566 = vmatmul.mubr.bf16.gmra.mrb[0].mxu0 %v893
      %v1567 = vpop.f32.mrb[0].mxu0
      %v1568 = vadd.f32 0.0, %v1567
      %v1569 = vpop.f32.mrb[0].mxu0
      %v1570 = vpop.f32.mrb[0].mxu0
      %v1571 = vadd.f32 0.0, %v1570
      %v1572 = vpop.f32.mrb[0].mxu0
      %1573 = vmatprep.mubr.bf16.mxu0 %v902
      %1574 = vmatmul.mubr.bf16.gmra.mrb[0].mxu0 %v901
      %v1575 = vpop.f32.mrb[0].mxu0
      %v1576 = vadd.f32 0.0, %v1575
      %v1577 = vpop.f32.mrb[0].mxu0
      %v1578 = vpop.f32.mrb[0].mxu0
      %v1579 = vadd.f32 0.0, %v1578
      %v1580 = vpop.f32.mrb[0].mxu0
      %1581 = vmatprep.mubr.bf16.mxu0 %v910
      %1582 = vmatmul.mubr.bf16.gmra.mrb[0].mxu0 %v909
      %v1583 = vpop.f32.mrb[0].mxu0
      %v1584 = vadd.f32 0.0, %v1583
      %v1585 = vpop.f32.mrb[0].mxu0
      %v1586 = vpop.f32.mrb[0].mxu0
      %v1587 = vadd.f32 0.0, %v1586
      %v1588 = vpop.f32.mrb[0].mxu0
      %1589 = vmatprep.mubr.bf16.mxu0 %v918
      %1590 = vmatmul.mubr.bf16.gmra.mrb[0].mxu0 %v917
      %v1591 = vpop.f32.mrb[0].mxu0
      %v1592 = vadd.f32 0.0, %v1591
      %v1593 = vpop.f32.mrb[0].mxu0
      %v1594 = vpop.f32.mrb[0].mxu0
      %v1595 = vadd.f32 0.0, %v1594
      %v1596 = vpop.f32.mrb[0].mxu0
      %1597 = vmatprep.mubr.bf16.mxu0 %v926
      %1598 = vmatmul.mubr.bf16.gmra.mrb[0].mxu0 %v925
      %v1599 = vpop.f32.mrb[0].mxu0
      %v1600 = vadd.f32 0.0, %v1599
      %v1601 = vpop.f32.mrb[0].mxu0
      %v1602 = vpop.f32.mrb[0].mxu0
      %v1603 = vadd.f32 0.0, %v1602
      %v1604 = vpop.f32.mrb[0].mxu0
      %1605 = vmatprep.mubr.bf16.mxu0 %v934
      %1606 = vmatmul.mubr.bf16.gmra.mrb[0].mxu0 %v933
      %v1607 = vpop.f32.mrb[0].mxu0
      %v1608 = vadd.f32 0.0, %v1607
      %v1609 = vpop.f32.mrb[0].mxu0
      %v1610 = vpop.f32.mrb[0].mxu0
      %v1611 = vadd.f32 0.0, %v1610
      %v1612 = vpop.f32.mrb[0].mxu0
      %1613 = vmatprep.mubr.bf16.mxu0 %v942
      %1614 = vmatmul.mubr.bf16.gmra.mrb[0].mxu0 %v941
      %v1615 = vpop.f32.mrb[0].mxu0
      %v1616 = vadd.f32 0.0, %v1615
      %v1617 = vpop.f32.mrb[0].mxu0
      %v1618 = vpop.f32.mrb[0].mxu0
      %v1619 = vadd.f32 0.0, %v1618
      %v1620 = vpop.f32.mrb[0].mxu0
      %1621 = vmatprep.mubr.bf16.mxu0 %v950
      %1622 = vmatmul.mubr.bf16.gmra.mrb[0].mxu0 %v949
      %v1623 = vpop.f32.mrb[0].mxu0
      %v1624 = vadd.f32 0.0, %v1623
      %v1625 = vpop.f32.mrb[0].mxu0
      %v1626 = vpop.f32.mrb[0].mxu0
      %v1627 = vadd.f32 0.0, %v1626
      %v1628 = vpop.f32.mrb[0].mxu0
      %1629 = vmatprep.mubr.bf16.mxu0 %v958
      %1630 = vmatmul.mubr.bf16.gmra.mrb[0].mxu0 %v957
      %v1631 = vpop.f32.mrb[0].mxu0
      %v1632 = vadd.f32 0.0, %v1631
      %v1633 = vpop.f32.mrb[0].mxu0
      %v1634 = vpop.f32.mrb[0].mxu0
      %v1635 = vadd.f32 0.0, %v1634
      %v1636 = vpop.f32.mrb[0].mxu0
      %1637 = vmatprep.mubr.bf16.mxu0 %v966
      %1638 = vmatmul.mubr.bf16.gmra.mrb[0].mxu0 %v965
      %v1639 = vpop.f32.mrb[0].mxu0
      %v1640 = vadd.f32 0.0, %v1639
      %v1641 = vpop.f32.mrb[0].mxu0
      %v1642 = vpop.f32.mrb[0].mxu0
      %v1643 = vadd.f32 0.0, %v1642
      %v1644 = vpop.f32.mrb[0].mxu0
      %1645 = vdwg.mxu0
      %1646 = vmatprep.subr.bf16.mxu0 0
      %1647 = vmatpush1.bf16.msra.mxu0 %v1373
      %1648 = vmatprep.subr.bf16.mxu0 0
      %1649 = vmatpush1.bf16.msra.mxu0 %v1374
      %1650 = vmatprep.subr.bf16.mxu0 0
      %1651 = vmatpush1.bf16.msra.mxu0 %v1375
      %1652 = vmatprep.subr.bf16.mxu0 0
      %1653 = vmatpush1.bf16.msra.mxu0 %v1376
      %1654 = vmatprep.subr.bf16.mxu0 0
      %1655 = vmatpush1.bf16.msra.mxu0 %v1377
      %1656 = vmatprep.subr.bf16.mxu0 0
      %1657 = vmatpush1.bf16.msra.mxu0 %v1378
      %1658 = vmatprep.subr.bf16.mxu0 0
      %1659 = vmatpush1.bf16.msra.mxu0 %v1379
      %1660 = vmatprep.subr.bf16.mxu0 0
      %1661 = vmatpush1.bf16.msra.mxu0 %v1380
      %1662 = vmatprep.subr.bf16.mxu0 0
      %1663 = vmatpush1.bf16.msra.mxu0 %v1381
      %1664 = vmatprep.subr.bf16.mxu0 0
      %1665 = vmatpush1.bf16.msra.mxu0 %v1382
      %1666 = vmatprep.subr.bf16.mxu0 0
      %1667 = vmatpush1.bf16.msra.mxu0 %v1383
      %1668 = vmatprep.subr.bf16.mxu0 0
      %1669 = vmatpush1.bf16.msra.mxu0 %v1384
      %1670 = vmatprep.subr.bf16.mxu0 0
      %1671 = vmatpush1.bf16.msra.mxu0 %v1385
      %1672 = vmatprep.subr.bf16.mxu0 0
      %1673 = vmatpush1.bf16.msra.mxu0 %v1386
      %1674 = vmatprep.subr.bf16.mxu0 0
      %1675 = vmatpush1.bf16.msra.mxu0 %v1387
      %1676 = vmatprep.subr.bf16.mxu0 0
      %1677 = vmatpush1.bf16.msra.mxu0 %v1388
      %1678 = vmatprep.mubr.bf16.mxu0 %v848
      %1679 = vmatmul.mubr.bf16.gmra.mrb[0].mxu0 %v847
      %v1680 = vpop.f32.mrb[0].mxu0
      %v1681 = vadd.f32 %v1520, %v1680
      %v1682 = vpop.f32.mrb[0].mxu0
      %v1683 = vpop.f32.mrb[0].mxu0
      %v1684 = vadd.f32 %v1523, %v1683
      %v1685 = vpop.f32.mrb[0].mxu0
      %1686 = vmatprep.mubr.bf16.mxu0 %v856
      %1687 = vmatmul.mubr.bf16.gmra.mrb[0].mxu0 %v855
      %v1688 = vpop.f32.mrb[0].mxu0
      %v1689 = vadd.f32 %v1528, %v1688
      %v1690 = vpop.f32.mrb[0].mxu0
      %v1691 = vpop.f32.mrb[0].mxu0
      %v1692 = vadd.f32 %v1531, %v1691
      %v1693 = vpop.f32.mrb[0].mxu0
      %1694 = vmatprep.mubr.bf16.mxu0 %v864
      %1695 = vmatmul.mubr.bf16.gmra.mrb[0].mxu0 %v863
      %v1696 = vpop.f32.mrb[0].mxu0
      %v1697 = vadd.f32 %v1536, %v1696
      %v1698 = vpop.f32.mrb[0].mxu0
      %v1699 = vpop.f32.mrb[0].mxu0
      %v1700 = vadd.f32 %v1539, %v1699
      %v1701 = vpop.f32.mrb[0].mxu0
      %1702 = vmatprep.mubr.bf16.mxu0 %v872
      %1703 = vmatmul.mubr.bf16.gmra.mrb[0].mxu0 %v871
      %v1704 = vpop.f32.mrb[0].mxu0
      %v1705 = vadd.f32 %v1544, %v1704
      %v1706 = vpop.f32.mrb[0].mxu0
      %v1707 = vpop.f32.mrb[0].mxu0
      %v1708 = vadd.f32 %v1547, %v1707
      %v1709 = vpop.f32.mrb[0].mxu0
      %1710 = vmatprep.mubr.bf16.mxu0 %v880
      %1711 = vmatmul.mubr.bf16.gmra.mrb[0].mxu0 %v879
      %v1712 = vpop.f32.mrb[0].mxu0
      %v1713 = vadd.f32 %v1552, %v1712
      %v1714 = vpop.f32.mrb[0].mxu0
      %v1715 = vpop.f32.mrb[0].mxu0
      %v1716 = vadd.f32 %v1555, %v1715
      %v1717 = vpop.f32.mrb[0].mxu0
      %1718 = vmatprep.mubr.bf16.mxu0 %v888
      %1719 = vmatmul.mubr.bf16.gmra.mrb[0].mxu0 %v887
      %v1720 = vpop.f32.mrb[0].mxu0
      %v1721 = vadd.f32 %v1560, %v1720
      %v1722 = vpop.f32.mrb[0].mxu0
      %v1723 = vpop.f32.mrb[0].mxu0
      %v1724 = vadd.f32 %v1563, %v1723
      %v1725 = vpop.f32.mrb[0].mxu0
      %1726 = vmatprep.mubr.bf16.mxu0 %v896
      %1727 = vmatmul.mubr.bf16.gmra.mrb[0].mxu0 %v895
      %v1728 = vpop.f32.mrb[0].mxu0
      %v1729 = vadd.f32 %v1568, %v1728
      %v1730 = vpop.f32.mrb[0].mxu0
      %v1731 = vpop.f32.mrb[0].mxu0
      %v1732 = vadd.f32 %v1571, %v1731
      %v1733 = vpop.f32.mrb[0].mxu0
      %1734 = vmatprep.mubr.bf16.mxu0 %v904
      %1735 = vmatmul.mubr.bf16.gmra.mrb[0].mxu0 %v903
      %v1736 = vpop.f32.mrb[0].mxu0
      %v1737 = vadd.f32 %v1576, %v1736
      %v1738 = vpop.f32.mrb[0].mxu0
      %v1739 = vpop.f32.mrb[0].mxu0
      %v1740 = vadd.f32 %v1579, %v1739
      %v1741 = vpop.f32.mrb[0].mxu0
      %1742 = vmatprep.mubr.bf16.mxu0 %v912
      %1743 = vmatmul.mubr.bf16.gmra.mrb[0].mxu0 %v911
      %v1744 = vpop.f32.mrb[0].mxu0
      %v1745 = vadd.f32 %v1584, %v1744
      %v1746 = vpop.f32.mrb[0].mxu0
      %v1747 = vpop.f32.mrb[0].mxu0
      %v1748 = vadd.f32 %v1587, %v1747
      %v1749 = vpop.f32.mrb[0].mxu0
      %1750 = vmatprep.mubr.bf16.mxu0 %v920
      %1751 = vmatmul.mubr.bf16.gmra.mrb[0].mxu0 %v919
      %v1752 = vpop.f32.mrb[0].mxu0
      %v1753 = vadd.f32 %v1592, %v1752
      %v1754 = vpop.f32.mrb[0].mxu0
      %v1755 = vpop.f32.mrb[0].mxu0
      %v1756 = vadd.f32 %v1595, %v1755
      %v1757 = vpop.f32.mrb[0].mxu0
      %1758 = vmatprep.mubr.bf16.mxu0 %v928
      %1759 = vmatmul.mubr.bf16.gmra.mrb[0].mxu0 %v927
      %v1760 = vpop.f32.mrb[0].mxu0
      %v1761 = vadd.f32 %v1600, %v1760
      %v1762 = vpop.f32.mrb[0].mxu0
      %v1763 = vpop.f32.mrb[0].mxu0
      %v1764 = vadd.f32 %v1603, %v1763
      %v1765 = vpop.f32.mrb[0].mxu0
      %1766 = vmatprep.mubr.bf16.mxu0 %v936
      %1767 = vmatmul.mubr.bf16.gmra.mrb[0].mxu0 %v935
      %v1768 = vpop.f32.mrb[0].mxu0
      %v1769 = vadd.f32 %v1608, %v1768
      %v1770 = vpop.f32.mrb[0].mxu0
      %v1771 = vpop.f32.mrb[0].mxu0
      %v1772 = vadd.f32 %v1611, %v1771
      %v1773 = vpop.f32.mrb[0].mxu0
      %1774 = vmatprep.mubr.bf16.mxu0 %v944
      %1775 = vmatmul.mubr.bf16.gmra.mrb[0].mxu0 %v943
      %v1776 = vpop.f32.mrb[0].mxu0
      %v1777 = vadd.f32 %v1616, %v1776
      %v1778 = vpop.f32.mrb[0].mxu0
      %v1779 = vpop.f32.mrb[0].mxu0
      %v1780 = vadd.f32 %v1619, %v1779
      %v1781 = vpop.f32.mrb[0].mxu0
      %1782 = vmatprep.mubr.bf16.mxu0 %v952
      %1783 = vmatmul.mubr.bf16.gmra.mrb[0].mxu0 %v951
      %v1784 = vpop.f32.mrb[0].mxu0
      %v1785 = vadd.f32 %v1624, %v1784
      %v1786 = vpop.f32.mrb[0].mxu0
      %v1787 = vpop.f32.mrb[0].mxu0
      %v1788 = vadd.f32 %v1627, %v1787
      %v1789 = vpop.f32.mrb[0].mxu0
      %1790 = vmatprep.mubr.bf16.mxu0 %v960
      %1791 = vmatmul.mubr.bf16.gmra.mrb[0].mxu0 %v959
      %v1792 = vpop.f32.mrb[0].mxu0
      %v1793 = vadd.f32 %v1632, %v1792
      %v1794 = vpop.f32.mrb[0].mxu0
      %v1795 = vpop.f32.mrb[0].mxu0
      %v1796 = vadd.f32 %v1635, %v1795
      %v1797 = vpop.f32.mrb[0].mxu0
      %1798 = vmatprep.mubr.bf16.mxu0 %v968
      %1799 = vmatmul.mubr.bf16.gmra.mrb[0].mxu0 %v967
      %v1800 = vpop.f32.mrb[0].mxu0
      %v1801 = vadd.f32 %v1640, %v1800
      %v1802 = vpop.f32.mrb[0].mxu0
      %v1803 = vpop.f32.mrb[0].mxu0
      %v1804 = vadd.f32 %v1643, %v1803
      %v1805 = vpop.f32.mrb[0].mxu0
      %1806 = vdwg.mxu0
      %1807 = vmatprep.subr.bf16.mxu0 0
      %1808 = vmatpush1.bf16.msra.mxu0 %v1389
      %1809 = vmatprep.subr.bf16.mxu0 0
      %1810 = vmatpush1.bf16.msra.mxu0 %v1390
      %1811 = vmatprep.subr.bf16.mxu0 0
      %1812 = vmatpush1.bf16.msra.mxu0 %v1391
      %1813 = vmatprep.subr.bf16.mxu0 0
      %1814 = vmatpush1.bf16.msra.mxu0 %v1392
      %1815 = vmatprep.subr.bf16.mxu0 0
      %1816 = vmatpush1.bf16.msra.mxu0 %v1393
      %1817 = vmatprep.subr.bf16.mxu0 0
      %1818 = vmatpush1.bf16.msra.mxu0 %v1394
      %1819 = vmatprep.subr.bf16.mxu0 0
      %1820 = vmatpush1.bf16.msra.mxu0 %v1395
      %1821 = vmatprep.subr.bf16.mxu0 0
      %1822 = vmatpush1.bf16.msra.mxu0 %v1396
      %1823 = vmatprep.subr.bf16.mxu0 0
      %1824 = vmatpush1.bf16.msra.mxu0 %v1397
      %1825 = vmatprep.subr.bf16.mxu0 0
      %1826 = vmatpush1.bf16.msra.mxu0 %v1398
      %1827 = vmatprep.subr.bf16.mxu0 0
      %1828 = vmatpush1.bf16.msra.mxu0 %v1399
      %1829 = vmatprep.subr.bf16.mxu0 0
      %1830 = vmatpush1.bf16.msra.mxu0 %v1400
      %1831 = vmatprep.subr.bf16.mxu0 0
      %1832 = vmatpush1.bf16.msra.mxu0 %v1401
      %1833 = vmatprep.subr.bf16.mxu0 0
      %1834 = vmatpush1.bf16.msra.mxu0 %v1402
      %1835 = vmatprep.subr.bf16.mxu0 0
      %1836 = vmatpush1.bf16.msra.mxu0 %v1403
      %1837 = vmatprep.subr.bf16.mxu0 0
      %1838 = vmatpush1.bf16.msra.mxu0 %v1404
      %1839 = vmatprep.mubr.bf16.mxu0 %v850
      %1840 = vmatmul.mubr.bf16.gmra.mrb[0].mxu0 %v849
      %v1841 = vpop.f32.mrb[0].mxu0
      %v1842 = vadd.f32 %v1681, %v1841
      %v1843 = vpop.f32.mrb[0].mxu0
      %v1844 = vpop.f32.mrb[0].mxu0
      %v1845 = vadd.f32 %v1684, %v1844
      %v1846 = vpop.f32.mrb[0].mxu0
      %1847 = vmatprep.mubr.bf16.mxu0 %v858
      %1848 = vmatmul.mubr.bf16.gmra.mrb[0].mxu0 %v857
      %v1849 = vpop.f32.mrb[0].mxu0
      %v1850 = vadd.f32 %v1689, %v1849
      %v1851 = vpop.f32.mrb[0].mxu0
      %v1852 = vpop.f32.mrb[0].mxu0
      %v1853 = vadd.f32 %v1692, %v1852
      %v1854 = vpop.f32.mrb[0].mxu0
      %1855 = vmatprep.mubr.bf16.mxu0 %v866
      %1856 = vmatmul.mubr.bf16.gmra.mrb[0].mxu0 %v865
      %v1857 = vpop.f32.mrb[0].mxu0
      %v1858 = vadd.f32 %v1697, %v1857
      %v1859 = vpop.f32.mrb[0].mxu0
      %v1860 = vpop.f32.mrb[0].mxu0
      %v1861 = vadd.f32 %v1700, %v1860
      %v1862 = vpop.f32.mrb[0].mxu0
      %1863 = vmatprep.mubr.bf16.mxu0 %v874
      %1864 = vmatmul.mubr.bf16.gmra.mrb[0].mxu0 %v873
      %v1865 = vpop.f32.mrb[0].mxu0
      %v1866 = vadd.f32 %v1705, %v1865
      %v1867 = vpop.f32.mrb[0].mxu0
      %v1868 = vpop.f32.mrb[0].mxu0
      %v1869 = vadd.f32 %v1708, %v1868
      %v1870 = vpop.f32.mrb[0].mxu0
      %1871 = vmatprep.mubr.bf16.mxu0 %v882
      %1872 = vmatmul.mubr.bf16.gmra.mrb[0].mxu0 %v881
      %v1873 = vpop.f32.mrb[0].mxu0
      %v1874 = vadd.f32 %v1713, %v1873
      %v1875 = vpop.f32.mrb[0].mxu0
      %v1876 = vpop.f32.mrb[0].mxu0
      %v1877 = vadd.f32 %v1716, %v1876
      %v1878 = vpop.f32.mrb[0].mxu0
      %1879 = vmatprep.mubr.bf16.mxu0 %v890
      %1880 = vmatmul.mubr.bf16.gmra.mrb[0].mxu0 %v889
      %v1881 = vpop.f32.mrb[0].mxu0
      %v1882 = vadd.f32 %v1721, %v1881
      %v1883 = vpop.f32.mrb[0].mxu0
      %v1884 = vpop.f32.mrb[0].mxu0
      %v1885 = vadd.f32 %v1724, %v1884
      %v1886 = vpop.f32.mrb[0].mxu0
      %1887 = vmatprep.mubr.bf16.mxu0 %v898
      %1888 = vmatmul.mubr.bf16.gmra.mrb[0].mxu0 %v897
      %v1889 = vpop.f32.mrb[0].mxu0
      %v1890 = vadd.f32 %v1729, %v1889
      %v1891 = vpop.f32.mrb[0].mxu0
      %v1892 = vpop.f32.mrb[0].mxu0
      %v1893 = vadd.f32 %v1732, %v1892
      %v1894 = vpop.f32.mrb[0].mxu0
      %1895 = vmatprep.mubr.bf16.mxu0 %v906
      %1896 = vmatmul.mubr.bf16.gmra.mrb[0].mxu0 %v905
      %v1897 = vpop.f32.mrb[0].mxu0
      %v1898 = vadd.f32 %v1737, %v1897
      %v1899 = vpop.f32.mrb[0].mxu0
      %v1900 = vpop.f32.mrb[0].mxu0
      %v1901 = vadd.f32 %v1740, %v1900
      %v1902 = vpop.f32.mrb[0].mxu0
      %1903 = vmatprep.mubr.bf16.mxu0 %v914
      %1904 = vmatmul.mubr.bf16.gmra.mrb[0].mxu0 %v913
      %v1905 = vpop.f32.mrb[0].mxu0
      %v1906 = vadd.f32 %v1745, %v1905
      %v1907 = vpop.f32.mrb[0].mxu0
      %v1908 = vpop.f32.mrb[0].mxu0
      %v1909 = vadd.f32 %v1748, %v1908
      %v1910 = vpop.f32.mrb[0].mxu0
      %1911 = vmatprep.mubr.bf16.mxu0 %v922
      %1912 = vmatmul.mubr.bf16.gmra.mrb[0].mxu0 %v921
      %v1913 = vpop.f32.mrb[0].mxu0
      %v1914 = vadd.f32 %v1753, %v1913
      %v1915 = vpop.f32.mrb[0].mxu0
      %v1916 = vpop.f32.mrb[0].mxu0
      %v1917 = vadd.f32 %v1756, %v1916
      %v1918 = vpop.f32.mrb[0].mxu0
      %1919 = vmatprep.mubr.bf16.mxu0 %v930
      %1920 = vmatmul.mubr.bf16.gmra.mrb[0].mxu0 %v929
      %v1921 = vpop.f32.mrb[0].mxu0
      %v1922 = vadd.f32 %v1761, %v1921
      %v1923 = vpop.f32.mrb[0].mxu0
      %v1924 = vpop.f32.mrb[0].mxu0
      %v1925 = vadd.f32 %v1764, %v1924
      %v1926 = vpop.f32.mrb[0].mxu0
      %1927 = vmatprep.mubr.bf16.mxu0 %v938
      %1928 = vmatmul.mubr.bf16.gmra.mrb[0].mxu0 %v937
      %v1929 = vpop.f32.mrb[0].mxu0
      %v1930 = vadd.f32 %v1769, %v1929
      %v1931 = vpop.f32.mrb[0].mxu0
      %v1932 = vpop.f32.mrb[0].mxu0
      %v1933 = vadd.f32 %v1772, %v1932
      %v1934 = vpop.f32.mrb[0].mxu0
      %1935 = vmatprep.mubr.bf16.mxu0 %v946
      %1936 = vmatmul.mubr.bf16.gmra.mrb[0].mxu0 %v945
      %v1937 = vpop.f32.mrb[0].mxu0
      %v1938 = vadd.f32 %v1777, %v1937
      %v1939 = vpop.f32.mrb[0].mxu0
      %v1940 = vpop.f32.mrb[0].mxu0
      %v1941 = vadd.f32 %v1780, %v1940
      %v1942 = vpop.f32.mrb[0].mxu0
      %1943 = vmatprep.mubr.bf16.mxu0 %v954
      %1944 = vmatmul.mubr.bf16.gmra.mrb[0].mxu0 %v953
      %v1945 = vpop.f32.mrb[0].mxu0
      %v1946 = vadd.f32 %v1785, %v1945
      %v1947 = vpop.f32.mrb[0].mxu0
      %v1948 = vpop.f32.mrb[0].mxu0
      %v1949 = vadd.f32 %v1788, %v1948
      %v1950 = vpop.f32.mrb[0].mxu0
      %1951 = vmatprep.mubr.bf16.mxu0 %v962
      %1952 = vmatmul.mubr.bf16.gmra.mrb[0].mxu0 %v961
      %v1953 = vpop.f32.mrb[0].mxu0
      %v1954 = vadd.f32 %v1793, %v1953
      %v1955 = vpop.f32.mrb[0].mxu0
      %v1956 = vpop.f32.mrb[0].mxu0
      %v1957 = vadd.f32 %v1796, %v1956
      %v1958 = vpop.f32.mrb[0].mxu0
      %1959 = vmatprep.mubr.bf16.mxu0 %v970
      %1960 = vmatmul.mubr.bf16.gmra.mrb[0].mxu0 %v969
      %v1961 = vpop.f32.mrb[0].mxu0
      %v1962 = vadd.f32 %v1801, %v1961
      %v1963 = vpop.f32.mrb[0].mxu0
      %v1964 = vpop.f32.mrb[0].mxu0
      %v1965 = vadd.f32 %v1804, %v1964
      %v1966 = vpop.f32.mrb[0].mxu0
      %1967 = vdwg.mxu0
      %1968 = vmatprep.subr.bf16.mxu0 0
      %1969 = vmatpush1.bf16.msra.mxu0 %v1405
      %1970 = vmatprep.subr.bf16.mxu0 0
      %1971 = vmatpush1.bf16.msra.mxu0 %v1406
      %1972 = vmatprep.subr.bf16.mxu0 0
      %1973 = vmatpush1.bf16.msra.mxu0 %v1407
      %1974 = vmatprep.subr.bf16.mxu0 0
      %1975 = vmatpush1.bf16.msra.mxu0 %v1408
      %1976 = vmatprep.subr.bf16.mxu0 0
      %1977 = vmatpush1.bf16.msra.mxu0 %v1409
      %1978 = vmatprep.subr.bf16.mxu0 0
      %1979 = vmatpush1.bf16.msra.mxu0 %v1410
      %1980 = vmatprep.subr.bf16.mxu0 0
      %1981 = vmatpush1.bf16.msra.mxu0 %v1411
      %1982 = vmatprep.subr.bf16.mxu0 0
      %1983 = vmatpush1.bf16.msra.mxu0 %v1412
      %1984 = vmatprep.subr.bf16.mxu0 0
      %1985 = vmatpush1.bf16.msra.mxu0 %v1413
      %1986 = vmatprep.subr.bf16.mxu0 0
      %1987 = vmatpush1.bf16.msra.mxu0 %v1414
      %1988 = vmatprep.subr.bf16.mxu0 0
      %1989 = vmatpush1.bf16.msra.mxu0 %v1415
      %1990 = vmatprep.subr.bf16.mxu0 0
      %1991 = vmatpush1.bf16.msra.mxu0 %v1416
      %1992 = vmatprep.subr.bf16.mxu0 0
      %1993 = vmatpush1.bf16.msra.mxu0 %v1417
      %1994 = vmatprep.subr.bf16.mxu0 0
      %1995 = vmatpush1.bf16.msra.mxu0 %v1418
      %1996 = vmatprep.subr.bf16.mxu0 0
      %1997 = vmatpush1.bf16.msra.mxu0 %v1419
      %1998 = vmatprep.subr.bf16.mxu0 0
      %1999 = vmatpush1.bf16.msra.mxu0 %v1420
      %2000 = vmatprep.mubr.bf16.mxu0 %v852
      %2001 = vmatmul.mubr.bf16.gmra.mrb[0].mxu0 %v851
      %v2002 = vpop.f32.mrb[0].mxu0
      %v2003 = vadd.f32 %v1842, %v2002
      %v2004 = vpop.f32.mrb[0].mxu0
      %v2005 = vpop.f32.mrb[0].mxu0
      %v2006 = vadd.f32 %v1845, %v2005
      %v2007 = vpop.f32.mrb[0].mxu0
      %2008 = vmatprep.mubr.bf16.mxu0 %v860
      %2009 = vmatmul.mubr.bf16.gmra.mrb[0].mxu0 %v859
      %v2010 = vpop.f32.mrb[0].mxu0
      %v2011 = vadd.f32 %v1850, %v2010
      %v2012 = vpop.f32.mrb[0].mxu0
      %v2013 = vpop.f32.mrb[0].mxu0
      %v2014 = vadd.f32 %v1853, %v2013
      %v2015 = vpop.f32.mrb[0].mxu0
      %2016 = vmatprep.mubr.bf16.mxu0 %v868
      %2017 = vmatmul.mubr.bf16.gmra.mrb[0].mxu0 %v867
      %v2018 = vpop.f32.mrb[0].mxu0
      %v2019 = vadd.f32 %v1858, %v2018
      %v2020 = vpop.f32.mrb[0].mxu0
      %v2021 = vpop.f32.mrb[0].mxu0
      %v2022 = vadd.f32 %v1861, %v2021
      %v2023 = vpop.f32.mrb[0].mxu0
      %2024 = vmatprep.mubr.bf16.mxu0 %v876
      %2025 = vmatmul.mubr.bf16.gmra.mrb[0].mxu0 %v875
      %v2026 = vpop.f32.mrb[0].mxu0
      %v2027 = vadd.f32 %v1866, %v2026
      %v2028 = vpop.f32.mrb[0].mxu0
      %v2029 = vpop.f32.mrb[0].mxu0
      %v2030 = vadd.f32 %v1869, %v2029
      %v2031 = vpop.f32.mrb[0].mxu0
      %2032 = vmatprep.mubr.bf16.mxu0 %v884
      %2033 = vmatmul.mubr.bf16.gmra.mrb[0].mxu0 %v883
      %v2034 = vpop.f32.mrb[0].mxu0
      %v2035 = vadd.f32 %v1874, %v2034
      %v2036 = vpop.f32.mrb[0].mxu0
      %v2037 = vpop.f32.mrb[0].mxu0
      %v2038 = vadd.f32 %v1877, %v2037
      %v2039 = vpop.f32.mrb[0].mxu0
      %2040 = vmatprep.mubr.bf16.mxu0 %v892
      %2041 = vmatmul.mubr.bf16.gmra.mrb[0].mxu0 %v891
      %v2042 = vpop.f32.mrb[0].mxu0
      %v2043 = vadd.f32 %v1882, %v2042
      %v2044 = vpop.f32.mrb[0].mxu0
      %v2045 = vpop.f32.mrb[0].mxu0
      %v2046 = vadd.f32 %v1885, %v2045
      %v2047 = vpop.f32.mrb[0].mxu0
      %2048 = vmatprep.mubr.bf16.mxu0 %v900
      %2049 = vmatmul.mubr.bf16.gmra.mrb[0].mxu0 %v899
      %v2050 = vpop.f32.mrb[0].mxu0
      %v2051 = vadd.f32 %v1890, %v2050
      %v2052 = vpop.f32.mrb[0].mxu0
      %v2053 = vpop.f32.mrb[0].mxu0
      %v2054 = vadd.f32 %v1893, %v2053
      %v2055 = vpop.f32.mrb[0].mxu0
      %2056 = vmatprep.mubr.bf16.mxu0 %v908
      %2057 = vmatmul.mubr.bf16.gmra.mrb[0].mxu0 %v907
      %v2058 = vpop.f32.mrb[0].mxu0
      %v2059 = vadd.f32 %v1898, %v2058
      %v2060 = vpop.f32.mrb[0].mxu0
      %v2061 = vpop.f32.mrb[0].mxu0
      %v2062 = vadd.f32 %v1901, %v2061
      %v2063 = vpop.f32.mrb[0].mxu0
      %2064 = vmatprep.mubr.bf16.mxu0 %v916
      %2065 = vmatmul.mubr.bf16.gmra.mrb[0].mxu0 %v915
      %v2066 = vpop.f32.mrb[0].mxu0
      %v2067 = vadd.f32 %v1906, %v2066
      %v2068 = vpop.f32.mrb[0].mxu0
      %v2069 = vpop.f32.mrb[0].mxu0
      %v2070 = vadd.f32 %v1909, %v2069
      %v2071 = vpop.f32.mrb[0].mxu0
      %2072 = vmatprep.mubr.bf16.mxu0 %v924
      %2073 = vmatmul.mubr.bf16.gmra.mrb[0].mxu0 %v923
      %v2074 = vpop.f32.mrb[0].mxu0
      %v2075 = vadd.f32 %v1914, %v2074
      %v2076 = vpop.f32.mrb[0].mxu0
      %v2077 = vpop.f32.mrb[0].mxu0
      %v2078 = vadd.f32 %v1917, %v2077
      %v2079 = vpop.f32.mrb[0].mxu0
      %2080 = vmatprep.mubr.bf16.mxu0 %v932
      %2081 = vmatmul.mubr.bf16.gmra.mrb[0].mxu0 %v931
      %v2082 = vpop.f32.mrb[0].mxu0
      %v2083 = vadd.f32 %v1922, %v2082
      %v2084 = vpop.f32.mrb[0].mxu0
      %v2085 = vpop.f32.mrb[0].mxu0
      %v2086 = vadd.f32 %v1925, %v2085
      %v2087 = vpop.f32.mrb[0].mxu0
      %2088 = vmatprep.mubr.bf16.mxu0 %v940
      %2089 = vmatmul.mubr.bf16.gmra.mrb[0].mxu0 %v939
      %v2090 = vpop.f32.mrb[0].mxu0
      %v2091 = vadd.f32 %v1930, %v2090
      %v2092 = vpop.f32.mrb[0].mxu0
      %v2093 = vpop.f32.mrb[0].mxu0
      %v2094 = vadd.f32 %v1933, %v2093
      %v2095 = vpop.f32.mrb[0].mxu0
      %2096 = vmatprep.mubr.bf16.mxu0 %v948
      %2097 = vmatmul.mubr.bf16.gmra.mrb[0].mxu0 %v947
      %v2098 = vpop.f32.mrb[0].mxu0
      %v2099 = vadd.f32 %v1938, %v2098
      %v2100 = vpop.f32.mrb[0].mxu0
      %v2101 = vpop.f32.mrb[0].mxu0
      %v2102 = vadd.f32 %v1941, %v2101
      %v2103 = vpop.f32.mrb[0].mxu0
      %2104 = vmatprep.mubr.bf16.mxu0 %v956
      %2105 = vmatmul.mubr.bf16.gmra.mrb[0].mxu0 %v955
      %v2106 = vpop.f32.mrb[0].mxu0
      %v2107 = vadd.f32 %v1946, %v2106
      %v2108 = vpop.f32.mrb[0].mxu0
      %v2109 = vpop.f32.mrb[0].mxu0
      %v2110 = vadd.f32 %v1949, %v2109
      %v2111 = vpop.f32.mrb[0].mxu0
      %2112 = vmatprep.mubr.bf16.mxu0 %v964
      %2113 = vmatmul.mubr.bf16.gmra.mrb[0].mxu0 %v963
      %v2114 = vpop.f32.mrb[0].mxu0
      %v2115 = vadd.f32 %v1954, %v2114
      %v2116 = vpop.f32.mrb[0].mxu0
      %v2117 = vpop.f32.mrb[0].mxu0
      %v2118 = vadd.f32 %v1957, %v2117
      %v2119 = vpop.f32.mrb[0].mxu0
      %2120 = vmatprep.mubr.bf16.mxu0 %v972
      %2121 = vmatmul.mubr.bf16.gmra.mrb[0].mxu0 %v971
      %v2122 = vpop.f32.mrb[0].mxu0
      %v2123 = vadd.f32 %v1962, %v2122
      %v2124 = vpop.f32.mrb[0].mxu0
      %v2125 = vpop.f32.mrb[0].mxu0
      %v2126 = vadd.f32 %v1965, %v2125
      %v2127 = vpop.f32.mrb[0].mxu0
      %2128 = vdwg.mxu0
      %v2129 = vld [vmem:[%s2] sm:$0x1]
      %v2131 = vlaneseq
      %v2132 = vshrl.u32 %v2131, 7
      %v2133 = vsub.s32 0, %v2132
      %v2134 = vrot.slane %v2129, %v2133
      %v2136 = vmul.f32 %v2003, %v2134
      %v2137 = vmul.f32 %v2006, %v2134
      %v2138 = vmul.f32 %v2011, %v2134
      %v2139 = vmul.f32 %v2014, %v2134
      %v2140 = vmul.f32 %v2019, %v2134
      %v2141 = vmul.f32 %v2022, %v2134
      %v2142 = vmul.f32 %v2027, %v2134
      %v2143 = vmul.f32 %v2030, %v2134
      %v2144 = vmul.f32 %v2035, %v2134
      %v2145 = vmul.f32 %v2038, %v2134
      %v2146 = vmul.f32 %v2043, %v2134
      %v2147 = vmul.f32 %v2046, %v2134
      %v2148 = vmul.f32 %v2051, %v2134
      %v2149 = vmul.f32 %v2054, %v2134
      %v2150 = vmul.f32 %v2059, %v2134
      %v2151 = vmul.f32 %v2062, %v2134
      %v2152 = vmul.f32 %v2067, %v2134
      %v2153 = vmul.f32 %v2070, %v2134
      %v2154 = vmul.f32 %v2075, %v2134
      %v2155 = vmul.f32 %v2078, %v2134
      %v2156 = vmul.f32 %v2083, %v2134
      %v2157 = vmul.f32 %v2086, %v2134
      %v2158 = vmul.f32 %v2091, %v2134
      %v2159 = vmul.f32 %v2094, %v2134
      %v2160 = vmul.f32 %v2099, %v2134
      %v2161 = vmul.f32 %v2102, %v2134
      %v2162 = vmul.f32 %v2107, %v2134
      %v2163 = vmul.f32 %v2110, %v2134
      %v2164 = vmul.f32 %v2115, %v2134
      %v2165 = vmul.f32 %v2118, %v2134
      %v2166 = vmul.f32 %v2123, %v2134
      %v2167 = vmul.f32 %v2126, %v2134
      %v2168 = vld [vmem:[%s3] sm:$0x1]
      %v2170 = vlaneseq
      %v2171 = vshrl.u32 %v2170, 7
      %v2172 = vsub.s32 0, %v2171
      %v2173 = vrot.slane %v2168, %v2172
      %v2175 = vadd.f32 %v2136, %v2173
      %v2176 = vadd.f32 %v2137, %v2173
      %v2177 = vadd.f32 %v2138, %v2173
      %v2178 = vadd.f32 %v2139, %v2173
      %v2179 = vadd.f32 %v2140, %v2173
      %v2180 = vadd.f32 %v2141, %v2173
      %v2181 = vadd.f32 %v2142, %v2173
      %v2182 = vadd.f32 %v2143, %v2173
      %v2183 = vadd.f32 %v2144, %v2173
      %v2184 = vadd.f32 %v2145, %v2173
      %v2185 = vadd.f32 %v2146, %v2173
      %v2186 = vadd.f32 %v2147, %v2173
      %v2187 = vadd.f32 %v2148, %v2173
      %v2188 = vadd.f32 %v2149, %v2173
      %v2189 = vadd.f32 %v2150, %v2173
      %v2190 = vadd.f32 %v2151, %v2173
      %v2191 = vadd.f32 %v2152, %v2173
      %v2192 = vadd.f32 %v2153, %v2173
      %v2193 = vadd.f32 %v2154, %v2173
      %v2194 = vadd.f32 %v2155, %v2173
      %v2195 = vadd.f32 %v2156, %v2173
      %v2196 = vadd.f32 %v2157, %v2173
      %v2197 = vadd.f32 %v2158, %v2173
      %v2198 = vadd.f32 %v2159, %v2173
      %v2199 = vadd.f32 %v2160, %v2173
      %v2200 = vadd.f32 %v2161, %v2173
      %v2201 = vadd.f32 %v2162, %v2173
      %v2202 = vadd.f32 %v2163, %v2173
      %v2203 = vadd.f32 %v2164, %v2173
      %v2204 = vadd.f32 %v2165, %v2173
      %v2205 = vadd.f32 %v2166, %v2173
      %v2206 = vadd.f32 %v2167, %v2173
      %v2207 = vmax.f32 %v2175, 0.0
      %v2208 = vmax.f32 %v2176, 0.0
      %v2209 = vmax.f32 %v2177, 0.0
      %v2210 = vmax.f32 %v2178, 0.0
      %v2211 = vmax.f32 %v2179, 0.0
      %v2212 = vmax.f32 %v2180, 0.0
      %v2213 = vmax.f32 %v2181, 0.0
      %v2214 = vmax.f32 %v2182, 0.0
      %v2215 = vmax.f32 %v2183, 0.0
      %v2216 = vmax.f32 %v2184, 0.0
      %v2217 = vmax.f32 %v2185, 0.0
      %v2218 = vmax.f32 %v2186, 0.0
      %v2219 = vmax.f32 %v2187, 0.0
      %v2220 = vmax.f32 %v2188, 0.0
      %v2221 = vmax.f32 %v2189, 0.0
      %v2222 = vmax.f32 %v2190, 0.0
      %v2223 = vmax.f32 %v2191, 0.0
      %v2224 = vmax.f32 %v2192, 0.0
      %v2225 = vmax.f32 %v2193, 0.0
      %v2226 = vmax.f32 %v2194, 0.0
      %v2227 = vmax.f32 %v2195, 0.0
      %v2228 = vmax.f32 %v2196, 0.0
      %v2229 = vmax.f32 %v2197, 0.0
      %v2230 = vmax.f32 %v2198, 0.0
      %v2231 = vmax.f32 %v2199, 0.0
      %v2232 = vmax.f32 %v2200, 0.0
      %v2233 = vmax.f32 %v2201, 0.0
      %v2234 = vmax.f32 %v2202, 0.0
      %v2235 = vmax.f32 %v2203, 0.0
      %v2236 = vmax.f32 %v2204, 0.0
      %v2237 = vmax.f32 %v2205, 0.0
      %v2238 = vmax.f32 %v2206, 0.0
      %2239 = vst [vmem:[%s202] sm:$0xff] %v2207
      %2240 = vst [vmem:[%s202 + $0x8] sm:$0xff] %v2208
      %2241 = vst [vmem:[%s202 + $0x10] sm:$0xff] %v2209
      %2242 = vst [vmem:[%s202 + $0x18] sm:$0xff] %v2210
      %2243 = vst [vmem:[%s202 + $0x20] sm:$0xff] %v2211
      %2244 = vst [vmem:[%s202 + $0x28] sm:$0xff] %v2212
      %2245 = vst [vmem:[%s202 + $0x30] sm:$0xff] %v2213
      %2246 = vst [vmem:[%s202 + $0x38] sm:$0xff] %v2214
      %2247 = vst [vmem:[%s202 + $0x40] sm:$0xff] %v2215
      %2248 = vst [vmem:[%s202 + $0x48] sm:$0xff] %v2216
      %2249 = vst [vmem:[%s202 + $0x50] sm:$0xff] %v2217
      %2250 = vst [vmem:[%s202 + $0x58] sm:$0xff] %v2218
      %2251 = vst [vmem:[%s202 + $0x60] sm:$0xff] %v2219
      %2252 = vst [vmem:[%s202 + $0x68] sm:$0xff] %v2220
      %2253 = vst [vmem:[%s202 + $0x70] sm:$0xff] %v2221
      %2254 = vst [vmem:[%s202 + $0x78] sm:$0xff] %v2222
      %2255 = vst [vmem:[%s202 + $0x80] sm:$0xff] %v2223
      %2256 = vst [vmem:[%s202 + $0x88] sm:$0xff] %v2224
      %2257 = vst [vmem:[%s202 + $0x90] sm:$0xff] %v2225
      %2258 = vst [vmem:[%s202 + $0x98] sm:$0xff] %v2226
      %2259 = vst [vmem:[%s202 + $0xa0] sm:$0xff] %v2227
      %2260 = vst [vmem:[%s202 + $0xa8] sm:$0xff] %v2228
      %2261 = vst [vmem:[%s202 + $0xb0] sm:$0xff] %v2229
      %2262 = vst [vmem:[%s202 + $0xb8] sm:$0xff] %v2230
      %2263 = vst [vmem:[%s202 + $0xc0] sm:$0xff] %v2231
      %2264 = vst [vmem:[%s202 + $0xc8] sm:$0xff] %v2232
      %2265 = vst [vmem:[%s202 + $0xd0] sm:$0xff] %v2233
      %2266 = vst [vmem:[%s202 + $0xd8] sm:$0xff] %v2234
      %2267 = vst [vmem:[%s202 + $0xe0] sm:$0xff] %v2235
      %2268 = vst [vmem:[%s202 + $0xe8] sm:$0xff] %v2236
      %2269 = vst [vmem:[%s202 + $0xf0] sm:$0xff] %v2237
      %2270 = vst [vmem:[%s202 + $0xf8] sm:$0xff] %v2238
      %s2271 = smul.u32 32, %s15
      %p2272 = scmp.lt.s32.totalorder %s2271, 63
      %s2273 = scalar_select %p2272, %s2271, 63
      %s2274 = smul.addr %s2273, 8
      %s2275 = scalar_lea.vmem %s4, %s2274
      // Predicated region
      $region37: #{forward.13} parent=35 // pred_check
        %p2276 = pneg %p122
      $region38: #{forward.13} parent=35 // pred_check_branch
        %2278 = sbr.rel (%p2276) target = $region40
      $region39: #{forward.13} parent=35 // pred_region
        %s2279 = smul.u32 32, %s15
      $region40: #{forward.13} parent=35 // pred_fallthru
        _
    $region36: #{forward.13} parent=5 // pred_fallthru
      _
    %p2280 = scmp.le.s32.totalorder 2, %s10
    // Predicated region
    $region41: #{forward.13} parent=5 // pred_check
      %p2281 = pneg %p2280
    $region42: #{forward.13} parent=5 // pred_check_branch
      %2283 = sbr.rel (%p2281) target = $region44
    $region43: #{forward.13} parent=5 // pred_region
      %s2284 = ssub.s32 %s10, 2
      // Predicated region
      $region45: #{forward.13} parent=43 // pred_check
        %p2285 = pneg %p128
      $region46: #{forward.13} parent=43 // pred_check_branch
        %2287 = sbr.rel (%p2285) target = $region48
      $region47: #{forward.13} parent=43 // pred_region
        %s2288 = smul.u32 32, %s16
        %p2289 = scmp.lt.s32.totalorder %s2288, 63
        %s2290 = scalar_select %p2289, %s2288, 63
        %s2291 = smul.addr %s2290, 8
        %s2292 = scalar_lea.vmem %s4, %s2291
      $region48: #{forward.13} parent=43 // pred_fallthru
        _
    $region44: #{forward.13} parent=5 // pred_fallthru
      _
  $region6: #{forward.13} parent=0 // loop_footer
    %s14 = sadd.s32 1, %s10
  $region7: #{forward.13} parent=0 // loop_footer_branch
    %9 = sbr.rel target = $region3
  $region8: #{forward.13} parent=0 // loop_exit
    _

// kernel: forward.15
$region0: #{forward.15}
  #allocation0 [shape = 'u32[]', space=smem, size = 0x4, offset = 0x4, fixed_abs, tag = 'smem constant byte address 0x4 - core index']
  #allocation1 [shape = 'u32[144,128]{1,0:T(1,128)}', space=vmem, size = 0x12000, scoped, tag = 'internal scratch']
  %s0 = inlined_call_operand.vmem [shape: f32[4,128,128], index: 0, kind: input, shape index: {}]
  %s1 = inlined_call_operand.vmem [shape: f32[128,128], index: 1, kind: output, shape index: {}]
  %s2 = sld [smem:[#allocation0]]
  $region14: #{forward.15} parent=0
    _
  %s4 = ssub.s32 1, %s2
  %s5 = scalar_select 0, %s4, %s2
  // Predicated region
  $region2: #{forward.15} parent=0 // pred_check
    _
  $region3: #{forward.15} parent=0 // pred_check_branch
    %7 = sbr.rel (0) target = $region5
  $region4: #{forward.15} parent=0 // pred_region
    _
  $region5: #{forward.15} parent=0 // pred_fallthru
    _
  %v8 = vld [vmem:[%s0] sm:$0xff]
  %v9 = vld [vmem:[%s0 + $0x8] sm:$0xff]
  %v10 = vld [vmem:[%s0 + $0x10] sm:$0xff]
  %v11 = vld [vmem:[%s0 + $0x18] sm:$0xff]
  %v12 = vld [vmem:[%s0 + $0x20] sm:$0xff]
  %v13 = vld [vmem:[%s0 + $0x28] sm:$0xff]
  %v14 = vld [vmem:[%s0 + $0x30] sm:$0xff]
  %v15 = vld [vmem:[%s0 + $0x38] sm:$0xff]
  %v16 = vld [vmem:[%s0 + $0x40] sm:$0xff]
  %v17 = vld [vmem:[%s0 + $0x48] sm:$0xff]
  %v18 = vld [vmem:[%s0 + $0x50] sm:$0xff]
  %v19 = vld [vmem:[%s0 + $0x58] sm:$0xff]
  %v20 = vld [vmem:[%s0 + $0x60] sm:$0xff]
  %v21 = vld [vmem:[%s0 + $0x68] sm:$0xff]
  %v22 = vld [vmem:[%s0 + $0x70] sm:$0xff]
  %v23 = vld [vmem:[%s0 + $0x78] sm:$0xff]
  %v24 = vld [vmem:[%s0 + $0x80] sm:$0xff]
  %v25 = vld [vmem:[%s0 + $0x88] sm:$0xff]
  %v26 = vld [vmem:[%s0 + $0x90] sm:$0xff]
  %v27 = vld [vmem:[%s0 + $0x98] sm:$0xff]
  %v28 = vld [vmem:[%s0 + $0xa0] sm:$0xff]
  %v29 = vld [vmem:[%s0 + $0xa8] sm:$0xff]
  %v30 = vld [vmem:[%s0 + $0xb0] sm:$0xff]
  %v31 = vld [vmem:[%s0 + $0xb8] sm:$0xff]
  %v32 = vld [vmem:[%s0 + $0xc0] sm:$0xff]
  %v33 = vld [vmem:[%s0 + $0xc8] sm:$0xff]
  %v34 = vld [vmem:[%s0 + $0xd0] sm:$0xff]
  %v35 = vld [vmem:[%s0 + $0xd8] sm:$0xff]
  %v36 = vld [vmem:[%s0 + $0xe0] sm:$0xff]
  %v37 = vld [vmem:[%s0 + $0xe8] sm:$0xff]
  %v38 = vld [vmem:[%s0 + $0xf0] sm:$0xff]
  %v39 = vld [vmem:[%s0 + $0xf8] sm:$0xff]
  %v40 = vld [vmem:[%s0 + $0x100] sm:$0xff]
  %v41 = vld [vmem:[%s0 + $0x108] sm:$0xff]
  %v42 = vld [vmem:[%s0 + $0x110] sm:$0xff]
  %v43 = vld [vmem:[%s0 + $0x118] sm:$0xff]
  %v44 = vld [vmem:[%s0 + $0x120] sm:$0xff]
  %v45 = vld [vmem:[%s0 + $0x128] sm:$0xff]
  %v46 = vld [vmem:[%s0 + $0x130] sm:$0xff]
  %v47 = vld [vmem:[%s0 + $0x138] sm:$0xff]
  %v48 = vld [vmem:[%s0 + $0x140] sm:$0xff]
  %v49 = vld [vmem:[%s0 + $0x148] sm:$0xff]
  %v50 = vld [vmem:[%s0 + $0x150] sm:$0xff]
  %v51 = vld [vmem:[%s0 + $0x158] sm:$0xff]
  %v52 = vld [vmem:[%s0 + $0x160] sm:$0xff]
  %v53 = vld [vmem:[%s0 + $0x168] sm:$0xff]
  %v54 = vld [vmem:[%s0 + $0x170] sm:$0xff]
  %v55 = vld [vmem:[%s0 + $0x178] sm:$0xff]
  %v56 = vld [vmem:[%s0 + $0x180] sm:$0xff]
  %v57 = vld [vmem:[%s0 + $0x188] sm:$0xff]
  %v58 = vld [vmem:[%s0 + $0x190] sm:$0xff]
  %v59 = vld [vmem:[%s0 + $0x198] sm:$0xff]
  %v60 = vld [vmem:[%s0 + $0x1a0] sm:$0xff]
  %v61 = vld [vmem:[%s0 + $0x1a8] sm:$0xff]
  %v62 = vld [vmem:[%s0 + $0x1b0] sm:$0xff]
  %v63 = vld [vmem:[%s0 + $0x1b8] sm:$0xff]
  %v64 = vld [vmem:[%s0 + $0x1c0] sm:$0xff]
  %v65 = vld [vmem:[%s0 + $0x1c8] sm:$0xff]
  %v66 = vld [vmem:[%s0 + $0x1d0] sm:$0xff]
  %v67 = vld [vmem:[%s0 + $0x1d8] sm:$0xff]
  %v68 = vld [vmem:[%s0 + $0x1e0] sm:$0xff]
  %v69 = vld [vmem:[%s0 + $0x1e8] sm:$0xff]
  %v70 = vld [vmem:[%s0 + $0x1f0] sm:$0xff]
  %v71 = vld [vmem:[%s0 + $0x1f8] sm:$0xff]
  %v72 = vmax.f32 %v8, %v24
  %v73 = vmax.f32 %v72, %v40
  %v74 = vmax.f32 %v73, %v56
  %v75 = vmax.f32 %v9, %v25
  %v76 = vmax.f32 %v75, %v41
  %v77 = vmax.f32 %v76, %v57
  %v78 = vmax.f32 %v10, %v26
  %v79 = vmax.f32 %v78, %v42
  %v80 = vmax.f32 %v79, %v58
  %v81 = vmax.f32 %v11, %v27
  %v82 = vmax.f32 %v81, %v43
  %v83 = vmax.f32 %v82, %v59
  %v84 = vmax.f32 %v12, %v28
  %v85 = vmax.f32 %v84, %v44
  %v86 = vmax.f32 %v85, %v60
  %v87 = vmax.f32 %v13, %v29
  %v88 = vmax.f32 %v87, %v45
  %v89 = vmax.f32 %v88, %v61
  %v90 = vmax.f32 %v14, %v30
  %v91 = vmax.f32 %v90, %v46
  %v92 = vmax.f32 %v91, %v62
  %v93 = vmax.f32 %v15, %v31
  %v94 = vmax.f32 %v93, %v47
  %v95 = vmax.f32 %v94, %v63
  %v96 = vmax.f32 %v16, %v32
  %v97 = vmax.f32 %v96, %v48
  %v98 = vmax.f32 %v97, %v64
  %v99 = vmax.f32 %v17, %v33
  %v100 = vmax.f32 %v99, %v49
  %v101 = vmax.f32 %v100, %v65
  %v102 = vmax.f32 %v18, %v34
  %v103 = vmax.f32 %v102, %v50
  %v104 = vmax.f32 %v103, %v66
  %v105 = vmax.f32 %v19, %v35
  %v106 = vmax.f32 %v105, %v51
  %v107 = vmax.f32 %v106, %v67
  %v108 = vmax.f32 %v20, %v36
  %v109 = vmax.f32 %v108, %v52
  %v110 = vmax.f32 %v109, %v68
  %v111 = vmax.f32 %v21, %v37
  %v112 = vmax.f32 %v111, %v53
  %v113 = vmax.f32 %v112, %v69
  %v114 = vmax.f32 %v22, %v38
  %v115 = vmax.f32 %v114, %v54
  %v116 = vmax.f32 %v115, %v70
  %v117 = vmax.f32 %v23, %v39
  %v118 = vmax.f32 %v117, %v55
  %v119 = vmax.f32 %v118, %v71
  %120 = vst [vmem:[%s1] sm:$0xff] %v74
  %121 = vst [vmem:[%s1 + $0x8] sm:$0xff] %v77
  %122 = vst [vmem:[%s1 + $0x10] sm:$0xff] %v80
  %123 = vst [vmem:[%s1 + $0x18] sm:$0xff] %v83
  %124 = vst [vmem:[%s1 + $0x20] sm:$0xff] %v86
  %125 = vst [vmem:[%s1 + $0x28] sm:$0xff] %v89
  %126 = vst [vmem:[%s1 + $0x30] sm:$0xff] %v92
  %127 = vst [vmem:[%s1 + $0x38] sm:$0xff] %v95
  %128 = vst [vmem:[%s1 + $0x40] sm:$0xff] %v98
  %129 = vst [vmem:[%s1 + $0x48] sm:$0xff] %v101
  %130 = vst [vmem:[%s1 + $0x50] sm:$0xff] %v104
  %131 = vst [vmem:[%s1 + $0x58] sm:$0xff] %v107
  %132 = vst [vmem:[%s1 + $0x60] sm:$0xff] %v110
  %133 = vst [vmem:[%s1 + $0x68] sm:$0xff] %v113
  %134 = vst [vmem:[%s1 + $0x70] sm:$0xff] %v116
  %135 = vst [vmem:[%s1 + $0x78] sm:$0xff] %v119
  // Predicated region
  $region6: #{forward.15} parent=0 // pred_check
    _
  $region7: #{forward.15} parent=0 // pred_check_branch
    %137 = sbr.rel (0) target = $region9
  $region8: #{forward.15} parent=0 // pred_region
    _
  $region9: #{forward.15} parent=0 // pred_fallthru
    _
  // Predicated region
  $region10: #{forward.15} parent=0 // pred_check
    _
  $region11: #{forward.15} parent=0 // pred_check_branch
    %139 = sbr.rel (0) target = $region13
  $region12: #{forward.15} parent=0 // pred_region
    _
  $region13: #{forward.15} parent=0 // pred_fallthru
    _

// kernel: forward.21
$region0: #{forward.21}
  #allocation0 [shape = 'u32[]', space=smem, size = 0x4, offset = 0x4, fixed_abs, tag = 'smem constant byte address 0x4 - core index']
  #allocation1 [shape = 'u32[144,128]{1,0:T(1,128)}', space=vmem, size = 0x12000, scoped, tag = 'internal scratch']
  %s0 = inlined_call_operand.vmem [shape: bf16[16,10240], index: 0, kind: input, shape index: {}]
  %s1 = inlined_call_operand.vmem [shape: bf16[10240,128], index: 1, kind: input, shape index: {}]
  %s2 = inlined_call_operand.vmem [shape: f32[1,128], index: 2, kind: input, shape index: {}]
  %s3 = inlined_call_operand.vmem [shape: f32[1,128], index: 3, kind: input, shape index: {}]
  %s4 = inlined_call_operand.vmem [shape: f32[16,128], index: 4, kind: output, shape index: {}]
  %s5 = sld [smem:[#allocation0]]
  $region26: #{forward.21} parent=0
    _
  %s7 = ssub.s32 1, %s5
  %s8 = scalar_select 0, %s7, %s5
  // Predicated region
  $region2: #{forward.21} parent=0 // pred_check
    _
  $region3: #{forward.21} parent=0 // pred_check_branch
    %10 = sbr.rel (0) target = $region5
  $region4: #{forward.21} parent=0 // pred_region
    _
  $region5: #{forward.21} parent=0 // pred_fallthru
    _
  // Predicated region
  $region6: #{forward.21} parent=0 // pred_check
    _
  $region7: #{forward.21} parent=0 // pred_check_branch
    %12 = sbr.rel (0) target = $region9
  $region8: #{forward.21} parent=0 // pred_region
    _
  $region9: #{forward.21} parent=0 // pred_fallthru
    _
  // Predicated region
  $region10: #{forward.21} parent=0 // pred_check
    _
  $region11: #{forward.21} parent=0 // pred_check_branch
    %14 = sbr.rel (0) target = $region13
  $region12: #{forward.21} parent=0 // pred_region
    _
  $region13: #{forward.21} parent=0 // pred_fallthru
    _
  // Predicated region
  $region14: #{forward.21} parent=0 // pred_check
    _
  $region15: #{forward.21} parent=0 // pred_check_branch
    %16 = sbr.rel (0) target = $region17
  $region16: #{forward.21} parent=0 // pred_region
    _
  $region17: #{forward.21} parent=0 // pred_fallthru
    _
  %v18 = vld [vmem:[%s0] sm:$0xff]
  %v19 = vld [vmem:[%s0 + $0x8] sm:$0xff]
  %v20 = vld [vmem:[%s0 + $0x10] sm:$0xff]
  %v21 = vld [vmem:[%s0 + $0x18] sm:$0xff]
  %v22 = vld [vmem:[%s0 + $0x20] sm:$0xff]
  %v23 = vld [vmem:[%s0 + $0x28] sm:$0xff]
  %v24 = vld [vmem:[%s0 + $0x30] sm:$0xff]
  %v25 = vld [vmem:[%s0 + $0x38] sm:$0xff]
  %v26 = vld [vmem:[%s0 + $0x40] sm:$0xff]
  %v27 = vld [vmem:[%s0 + $0x48] sm:$0xff]
  %v28 = vld [vmem:[%s0 + $0x50] sm:$0xff]
  %v29 = vld [vmem:[%s0 + $0x58] sm:$0xff]
  %v30 = vld [vmem:[%s0 + $0x60] sm:$0xff]
  %v31 = vld [vmem:[%s0 + $0x68] sm:$0xff]
  %v32 = vld [vmem:[%s0 + $0x70] sm:$0xff]
  %v33 = vld [vmem:[%s0 + $0x78] sm:$0xff]
  %v34 = vld [vmem:[%s0 + $0x80] sm:$0xff]
  %v35 = vld [vmem:[%s0 + $0x88] sm:$0xff]
  %v36 = vld [vmem:[%s0 + $0x90] sm:$0xff]
  %v37 = vld [vmem:[%s0 + $0x98] sm:$0xff]
  %v38 = vld [vmem:[%s0 + $0xa0] sm:$0xff]
  %v39 = vld [vmem:[%s0 + $0xa8] sm:$0xff]
  %v40 = vld [vmem:[%s0 + $0xb0] sm:$0xff]
  %v41 = vld [vmem:[%s0 + $0xb8] sm:$0xff]
  %v42 = vld [vmem:[%s0 + $0xc0] sm:$0xff]
  %v43 = vld [vmem:[%s0 + $0xc8] sm:$0xff]
  %v44 = vld [vmem:[%s0 + $0xd0] sm:$0xff]
  %v45 = vld [vmem:[%s0 + $0xd8] sm:$0xff]
  %v46 = vld [vmem:[%s0 + $0xe0] sm:$0xff]
  %v47 = vld [vmem:[%s0 + $0xe8] sm:$0xff]
  %v48 = vld [vmem:[%s0 + $0xf0] sm:$0xff]
  %v49 = vld [vmem:[%s0 + $0xf8] sm:$0xff]
  %v50 = vld [vmem:[%s0 + $0x100] sm:$0xff]
  %v51 = vld [vmem:[%s0 + $0x108] sm:$0xff]
  %v52 = vld [vmem:[%s0 + $0x110] sm:$0xff]
  %v53 = vld [vmem:[%s0 + $0x118] sm:$0xff]
  %v54 = vld [vmem:[%s0 + $0x120] sm:$0xff]
  %v55 = vld [vmem:[%s0 + $0x128] sm:$0xff]
  %v56 = vld [vmem:[%s0 + $0x130] sm:$0xff]
  %v57 = vld [vmem:[%s0 + $0x138] sm:$0xff]
  %v58 = vld [vmem:[%s0 + $0x140] sm:$0xff]
  %v59 = vld [vmem:[%s0 + $0x148] sm:$0xff]
  %v60 = vld [vmem:[%s0 + $0x150] sm:$0xff]
  %v61 = vld [vmem:[%s0 + $0x158] sm:$0xff]
  %v62 = vld [vmem:[%s0 + $0x160] sm:$0xff]
  %v63 = vld [vmem:[%s0 + $0x168] sm:$0xff]
  %v64 = vld [vmem:[%s0 + $0x170] sm:$0xff]
  %v65 = vld [vmem:[%s0 + $0x178] sm:$0xff]
  %v66 = vld [vmem:[%s0 + $0x180] sm:$0xff]
  %v67 = vld [vmem:[%s0 + $0x188] sm:$0xff]
  %v68 = vld [vmem:[%s0 + $0x190] sm:$0xff]
  %v69 = vld [vmem:[%s0 + $0x198] sm:$0xff]
  %v70 = vld [vmem:[%s0 + $0x1a0] sm:$0xff]
  %v71 = vld [vmem:[%s0 + $0x1a8] sm:$0xff]
  %v72 = vld [vmem:[%s0 + $0x1b0] sm:$0xff]
  %v73 = vld [vmem:[%s0 + $0x1b8] sm:$0xff]
  %v74 = vld [vmem:[%s0 + $0x1c0] sm:$0xff]
  %v75 = vld [vmem:[%s0 + $0x1c8] sm:$0xff]
  %v76 = vld [vmem:[%s0 + $0x1d0] sm:$0xff]
  %v77 = vld [vmem:[%s0 + $0x1d8] sm:$0xff]
  %v78 = vld [vmem:[%s0 + $0x1e0] sm:$0xff]
  %v79 = vld [vmem:[%s0 + $0x1e8] sm:$0xff]
  %v80 = vld [vmem:[%s0 + $0x1f0] sm:$0xff]
  %v81 = vld [vmem:[%s0 + $0x1f8] sm:$0xff]
  %v82 = vld [vmem:[%s0 + $0x200] sm:$0xff]
  %v83 = vld [vmem:[%s0 + $0x208] sm:$0xff]
  %v84 = vld [vmem:[%s0 + $0x210] sm:$0xff]
  %v85 = vld [vmem:[%s0 + $0x218] sm:$0xff]
  %v86 = vld [vmem:[%s0 + $0x220] sm:$0xff]
  %v87 = vld [vmem:[%s0 + $0x228] sm:$0xff]
  %v88 = vld [vmem:[%s0 + $0x230] sm:$0xff]
  %v89 = vld [vmem:[%s0 + $0x238] sm:$0xff]
  %v90 = vld [vmem:[%s0 + $0x240] sm:$0xff]
  %v91 = vld [vmem:[%s0 + $0x248] sm:$0xff]
  %v92 = vld [vmem:[%s0 + $0x250] sm:$0xff]
  %v93 = vld [vmem:[%s0 + $0x258] sm:$0xff]
  %v94 = vld [vmem:[%s0 + $0x260] sm:$0xff]
  %v95 = vld [vmem:[%s0 + $0x268] sm:$0xff]
  %v96 = vld [vmem:[%s0 + $0x270] sm:$0xff]
  %v97 = vld [vmem:[%s0 + $0x278] sm:$0xff]
  %v98 = vld [vmem:[%s1] sm:$0xf]
  %v99 = vld [vmem:[%s1 + $0x4] sm:$0xf]
  %v100 = vld [vmem:[%s1 + $0x8] sm:$0xf]
  %v101 = vld [vmem:[%s1 + $0xc] sm:$0xf]
  %v102 = vld [vmem:[%s1 + $0x10] sm:$0xf]
  %v103 = vld [vmem:[%s1 + $0x14] sm:$0xf]
  %v104 = vld [vmem:[%s1 + $0x18] sm:$0xf]
  %v105 = vld [vmem:[%s1 + $0x1c] sm:$0xf]
  %v106 = vld [vmem:[%s1 + $0x20] sm:$0xf]
  %v107 = vld [vmem:[%s1 + $0x24] sm:$0xf]
  %v108 = vld [vmem:[%s1 + $0x28] sm:$0xf]
  %v109 = vld [vmem:[%s1 + $0x2c] sm:$0xf]
  %v110 = vld [vmem:[%s1 + $0x30] sm:$0xf]
  %v111 = vld [vmem:[%s1 + $0x34] sm:$0xf]
  %v112 = vld [vmem:[%s1 + $0x38] sm:$0xf]
  %v113 = vld [vmem:[%s1 + $0x3c] sm:$0xf]
  %v114 = vld [vmem:[%s1 + $0x40] sm:$0xf]
  %v115 = vld [vmem:[%s1 + $0x44] sm:$0xf]
  %v116 = vld [vmem:[%s1 + $0x48] sm:$0xf]
  %v117 = vld [vmem:[%s1 + $0x4c] sm:$0xf]
  %v118 = vld [vmem:[%s1 + $0x50] sm:$0xf]
  %v119 = vld [vmem:[%s1 + $0x54] sm:$0xf]
  %v120 = vld [vmem:[%s1 + $0x58] sm:$0xf]
  %v121 = vld [vmem:[%s1 + $0x5c] sm:$0xf]
  %v122 = vld [vmem:[%s1 + $0x60] sm:$0xf]
  %v123 = vld [vmem:[%s1 + $0x64] sm:$0xf]
  %v124 = vld [vmem:[%s1 + $0x68] sm:$0xf]
  %v125 = vld [vmem:[%s1 + $0x6c] sm:$0xf]
  %v126 = vld [vmem:[%s1 + $0x70] sm:$0xf]
  %v127 = vld [vmem:[%s1 + $0x74] sm:$0xf]
  %v128 = vld [vmem:[%s1 + $0x78] sm:$0xf]
  %v129 = vld [vmem:[%s1 + $0x7c] sm:$0xf]
  %v130 = vld [vmem:[%s1 + $0x80] sm:$0xf]
  %v131 = vld [vmem:[%s1 + $0x84] sm:$0xf]
  %v132 = vld [vmem:[%s1 + $0x88] sm:$0xf]
  %v133 = vld [vmem:[%s1 + $0x8c] sm:$0xf]
  %v134 = vld [vmem:[%s1 + $0x90] sm:$0xf]
  %v135 = vld [vmem:[%s1 + $0x94] sm:$0xf]
  %v136 = vld [vmem:[%s1 + $0x98] sm:$0xf]
  %v137 = vld [vmem:[%s1 + $0x9c] sm:$0xf]
  %v138 = vld [vmem:[%s1 + $0xa0] sm:$0xf]
  %v139 = vld [vmem:[%s1 + $0xa4] sm:$0xf]
  %v140 = vld [vmem:[%s1 + $0xa8] sm:$0xf]
  %v141 = vld [vmem:[%s1 + $0xac] sm:$0xf]
  %v142 = vld [vmem:[%s1 + $0xb0] sm:$0xf]
  %v143 = vld [vmem:[%s1 + $0xb4] sm:$0xf]
  %v144 = vld [vmem:[%s1 + $0xb8] sm:$0xf]
  %v145 = vld [vmem:[%s1 + $0xbc] sm:$0xf]
  %v146 = vld [vmem:[%s1 + $0xc0] sm:$0xf]
  %v147 = vld [vmem:[%s1 + $0xc4] sm:$0xf]
  %v148 = vld [vmem:[%s1 + $0xc8] sm:$0xf]
  %v149 = vld [vmem:[%s1 + $0xcc] sm:$0xf]
  %v150 = vld [vmem:[%s1 + $0xd0] sm:$0xf]
  %v151 = vld [vmem:[%s1 + $0xd4] sm:$0xf]
  %v152 = vld [vmem:[%s1 + $0xd8] sm:$0xf]
  %v153 = vld [vmem:[%s1 + $0xdc] sm:$0xf]
  %v154 = vld [vmem:[%s1 + $0xe0] sm:$0xf]
  %v155 = vld [vmem:[%s1 + $0xe4] sm:$0xf]
  %v156 = vld [vmem:[%s1 + $0xe8] sm:$0xf]
  %v157 = vld [vmem:[%s1 + $0xec] sm:$0xf]
  %v158 = vld [vmem:[%s1 + $0xf0] sm:$0xf]
  %v159 = vld [vmem:[%s1 + $0xf4] sm:$0xf]
  %v160 = vld [vmem:[%s1 + $0xf8] sm:$0xf]
  %v161 = vld [vmem:[%s1 + $0xfc] sm:$0xf]
  %v162 = vld [vmem:[%s1 + $0x100] sm:$0xf]
  %v163 = vld [vmem:[%s1 + $0x104] sm:$0xf]
  %v164 = vld [vmem:[%s1 + $0x108] sm:$0xf]
  %v165 = vld [vmem:[%s1 + $0x10c] sm:$0xf]
  %v166 = vld [vmem:[%s1 + $0x110] sm:$0xf]
  %v167 = vld [vmem:[%s1 + $0x114] sm:$0xf]
  %v168 = vld [vmem:[%s1 + $0x118] sm:$0xf]
  %v169 = vld [vmem:[%s1 + $0x11c] sm:$0xf]
  %v170 = vld [vmem:[%s1 + $0x120] sm:$0xf]
  %v171 = vld [vmem:[%s1 + $0x124] sm:$0xf]
  %v172 = vld [vmem:[%s1 + $0x128] sm:$0xf]
  %v173 = vld [vmem:[%s1 + $0x12c] sm:$0xf]
  %v174 = vld [vmem:[%s1 + $0x130] sm:$0xf]
  %v175 = vld [vmem:[%s1 + $0x134] sm:$0xf]
  %v176 = vld [vmem:[%s1 + $0x138] sm:$0xf]
  %v177 = vld [vmem:[%s1 + $0x13c] sm:$0xf]
  %v178 = vld [vmem:[%s1 + $0x140] sm:$0xf]
  %v179 = vld [vmem:[%s1 + $0x144] sm:$0xf]
  %v180 = vld [vmem:[%s1 + $0x148] sm:$0xf]
  %v181 = vld [vmem:[%s1 + $0x14c] sm:$0xf]
  %v182 = vld [vmem:[%s1 + $0x150] sm:$0xf]
  %v183 = vld [vmem:[%s1 + $0x154] sm:$0xf]
  %v184 = vld [vmem:[%s1 + $0x158] sm:$0xf]
  %v185 = vld [vmem:[%s1 + $0x15c] sm:$0xf]
  %v186 = vld [vmem:[%s1 + $0x160] sm:$0xf]
  %v187 = vld [vmem:[%s1 + $0x164] sm:$0xf]
  %v188 = vld [vmem:[%s1 + $0x168] sm:$0xf]
  %v189 = vld [vmem:[%s1 + $0x16c] sm:$0xf]
  %v190 = vld [vmem:[%s1 + $0x170] sm:$0xf]
  %v191 = vld [vmem:[%s1 + $0x174] sm:$0xf]
  %v192 = vld [vmem:[%s1 + $0x178] sm:$0xf]
  %v193 = vld [vmem:[%s1 + $0x17c] sm:$0xf]
  %v194 = vld [vmem:[%s1 + $0x180] sm:$0xf]
  %v195 = vld [vmem:[%s1 + $0x184] sm:$0xf]
  %v196 = vld [vmem:[%s1 + $0x188] sm:$0xf]
  %v197 = vld [vmem:[%s1 + $0x18c] sm:$0xf]
  %v198 = vld [vmem:[%s1 + $0x190] sm:$0xf]
  %v199 = vld [vmem:[%s1 + $0x194] sm:$0xf]
  %v200 = vld [vmem:[%s1 + $0x198] sm:$0xf]
  %v201 = vld [vmem:[%s1 + $0x19c] sm:$0xf]
  %v202 = vld [vmem:[%s1 + $0x1a0] sm:$0xf]
  %v203 = vld [vmem:[%s1 + $0x1a4] sm:$0xf]
  %v204 = vld [vmem:[%s1 + $0x1a8] sm:$0xf]
  %v205 = vld [vmem:[%s1 + $0x1ac] sm:$0xf]
  %v206 = vld [vmem:[%s1 + $0x1b0] sm:$0xf]
  %v207 = vld [vmem:[%s1 + $0x1b4] sm:$0xf]
  %v208 = vld [vmem:[%s1 + $0x1b8] sm:$0xf]
  %v209 = vld [vmem:[%s1 + $0x1bc] sm:$0xf]
  %v210 = vld [vmem:[%s1 + $0x1c0] sm:$0xf]
  %v211 = vld [vmem:[%s1 + $0x1c4] sm:$0xf]
  %v212 = vld [vmem:[%s1 + $0x1c8] sm:$0xf]
  %v213 = vld [vmem:[%s1 + $0x1cc] sm:$0xf]
  %v214 = vld [vmem:[%s1 + $0x1d0] sm:$0xf]
  %v215 = vld [vmem:[%s1 + $0x1d4] sm:$0xf]
  %v216 = vld [vmem:[%s1 + $0x1d8] sm:$0xf]
  %v217 = vld [vmem:[%s1 + $0x1dc] sm:$0xf]
  %v218 = vld [vmem:[%s1 + $0x1e0] sm:$0xf]
  %v219 = vld [vmem:[%s1 + $0x1e4] sm:$0xf]
  %v220 = vld [vmem:[%s1 + $0x1e8] sm:$0xf]
  %v221 = vld [vmem:[%s1 + $0x1ec] sm:$0xf]
  %v222 = vld [vmem:[%s1 + $0x1f0] sm:$0xf]
  %v223 = vld [vmem:[%s1 + $0x1f4] sm:$0xf]
  %v224 = vld [vmem:[%s1 + $0x1f8] sm:$0xf]
  %v225 = vld [vmem:[%s1 + $0x1fc] sm:$0xf]
  %v226 = vld [vmem:[%s1 + $0x200] sm:$0xf]
  %v227 = vld [vmem:[%s1 + $0x204] sm:$0xf]
  %v228 = vld [vmem:[%s1 + $0x208] sm:$0xf]
  %v229 = vld [vmem:[%s1 + $0x20c] sm:$0xf]
  %v230 = vld [vmem:[%s1 + $0x210] sm:$0xf]
  %v231 = vld [vmem:[%s1 + $0x214] sm:$0xf]
  %v232 = vld [vmem:[%s1 + $0x218] sm:$0xf]
  %v233 = vld [vmem:[%s1 + $0x21c] sm:$0xf]
  %v234 = vld [vmem:[%s1 + $0x220] sm:$0xf]
  %v235 = vld [vmem:[%s1 + $0x224] sm:$0xf]
  %v236 = vld [vmem:[%s1 + $0x228] sm:$0xf]
  %v237 = vld [vmem:[%s1 + $0x22c] sm:$0xf]
  %v238 = vld [vmem:[%s1 + $0x230] sm:$0xf]
  %v239 = vld [vmem:[%s1 + $0x234] sm:$0xf]
  %v240 = vld [vmem:[%s1 + $0x238] sm:$0xf]
  %v241 = vld [vmem:[%s1 + $0x23c] sm:$0xf]
  %v242 = vld [vmem:[%s1 + $0x240] sm:$0xf]
  %v243 = vld [vmem:[%s1 + $0x244] sm:$0xf]
  %v244 = vld [vmem:[%s1 + $0x248] sm:$0xf]
  %v245 = vld [vmem:[%s1 + $0x24c] sm:$0xf]
  %v246 = vld [vmem:[%s1 + $0x250] sm:$0xf]
  %v247 = vld [vmem:[%s1 + $0x254] sm:$0xf]
  %v248 = vld [vmem:[%s1 + $0x258] sm:$0xf]
  %v249 = vld [vmem:[%s1 + $0x25c] sm:$0xf]
  %v250 = vld [vmem:[%s1 + $0x260] sm:$0xf]
  %v251 = vld [vmem:[%s1 + $0x264] sm:$0xf]
  %v252 = vld [vmem:[%s1 + $0x268] sm:$0xf]
  %v253 = vld [vmem:[%s1 + $0x26c] sm:$0xf]
  %v254 = vld [vmem:[%s1 + $0x270] sm:$0xf]
  %v255 = vld [vmem:[%s1 + $0x274] sm:$0xf]
  %v256 = vld [vmem:[%s1 + $0x278] sm:$0xf]
  %v257 = vld [vmem:[%s1 + $0x27c] sm:$0xf]
  %v258 = vld [vmem:[%s1 + $0x280] sm:$0xf]
  %v259 = vld [vmem:[%s1 + $0x284] sm:$0xf]
  %v260 = vld [vmem:[%s1 + $0x288] sm:$0xf]
  %v261 = vld [vmem:[%s1 + $0x28c] sm:$0xf]
  %v262 = vld [vmem:[%s1 + $0x290] sm:$0xf]
  %v263 = vld [vmem:[%s1 + $0x294] sm:$0xf]
  %v264 = vld [vmem:[%s1 + $0x298] sm:$0xf]
  %v265 = vld [vmem:[%s1 + $0x29c] sm:$0xf]
  %v266 = vld [vmem:[%s1 + $0x2a0] sm:$0xf]
  %v267 = vld [vmem:[%s1 + $0x2a4] sm:$0xf]
  %v268 = vld [vmem:[%s1 + $0x2a8] sm:$0xf]
  %v269 = vld [vmem:[%s1 + $0x2ac] sm:$0xf]
  %v270 = vld [vmem:[%s1 + $0x2b0] sm:$0xf]
  %v271 = vld [vmem:[%s1 + $0x2b4] sm:$0xf]
  %v272 = vld [vmem:[%s1 + $0x2b8] sm:$0xf]
  %v273 = vld [vmem:[%s1 + $0x2bc] sm:$0xf]
  %v274 = vld [vmem:[%s1 + $0x2c0] sm:$0xf]
  %v275 = vld [vmem:[%s1 + $0x2c4] sm:$0xf]
  %v276 = vld [vmem:[%s1 + $0x2c8] sm:$0xf]
  %v277 = vld [vmem:[%s1 + $0x2cc] sm:$0xf]
  %v278 = vld [vmem:[%s1 + $0x2d0] sm:$0xf]
  %v279 = vld [vmem:[%s1 + $0x2d4] sm:$0xf]
  %v280 = vld [vmem:[%s1 + $0x2d8] sm:$0xf]
  %v281 = vld [vmem:[%s1 + $0x2dc] sm:$0xf]
  %v282 = vld [vmem:[%s1 + $0x2e0] sm:$0xf]
  %v283 = vld [vmem:[%s1 + $0x2e4] sm:$0xf]
  %v284 = vld [vmem:[%s1 + $0x2e8] sm:$0xf]
  %v285 = vld [vmem:[%s1 + $0x2ec] sm:$0xf]
  %v286 = vld [vmem:[%s1 + $0x2f0] sm:$0xf]
  %v287 = vld [vmem:[%s1 + $0x2f4] sm:$0xf]
  %v288 = vld [vmem:[%s1 + $0x2f8] sm:$0xf]
  %v289 = vld [vmem:[%s1 + $0x2fc] sm:$0xf]
  %v290 = vld [vmem:[%s1 + $0x300] sm:$0xf]
  %v291 = vld [vmem:[%s1 + $0x304] sm:$0xf]
  %v292 = vld [vmem:[%s1 + $0x308] sm:$0xf]
  %v293 = vld [vmem:[%s1 + $0x30c] sm:$0xf]
  %v294 = vld [vmem:[%s1 + $0x310] sm:$0xf]
  %v295 = vld [vmem:[%s1 + $0x314] sm:$0xf]
  %v296 = vld [vmem:[%s1 + $0x318] sm:$0xf]
  %v297 = vld [vmem:[%s1 + $0x31c] sm:$0xf]
  %v298 = vld [vmem:[%s1 + $0x320] sm:$0xf]
  %v299 = vld [vmem:[%s1 + $0x324] sm:$0xf]
  %v300 = vld [vmem:[%s1 + $0x328] sm:$0xf]
  %v301 = vld [vmem:[%s1 + $0x32c] sm:$0xf]
  %v302 = vld [vmem:[%s1 + $0x330] sm:$0xf]
  %v303 = vld [vmem:[%s1 + $0x334] sm:$0xf]
  %v304 = vld [vmem:[%s1 + $0x338] sm:$0xf]
  %v305 = vld [vmem:[%s1 + $0x33c] sm:$0xf]
  %v306 = vld [vmem:[%s1 + $0x340] sm:$0xf]
  %v307 = vld [vmem:[%s1 + $0x344] sm:$0xf]
  %v308 = vld [vmem:[%s1 + $0x348] sm:$0xf]
  %v309 = vld [vmem:[%s1 + $0x34c] sm:$0xf]
  %v310 = vld [vmem:[%s1 + $0x350] sm:$0xf]
  %v311 = vld [vmem:[%s1 + $0x354] sm:$0xf]
  %v312 = vld [vmem:[%s1 + $0x358] sm:$0xf]
  %v313 = vld [vmem:[%s1 + $0x35c] sm:$0xf]
  %v314 = vld [vmem:[%s1 + $0x360] sm:$0xf]
  %v315 = vld [vmem:[%s1 + $0x364] sm:$0xf]
  %v316 = vld [vmem:[%s1 + $0x368] sm:$0xf]
  %v317 = vld [vmem:[%s1 + $0x36c] sm:$0xf]
  %v318 = vld [vmem:[%s1 + $0x370] sm:$0xf]
  %v319 = vld [vmem:[%s1 + $0x374] sm:$0xf]
  %v320 = vld [vmem:[%s1 + $0x378] sm:$0xf]
  %v321 = vld [vmem:[%s1 + $0x37c] sm:$0xf]
  %v322 = vld [vmem:[%s1 + $0x380] sm:$0xf]
  %v323 = vld [vmem:[%s1 + $0x384] sm:$0xf]
  %v324 = vld [vmem:[%s1 + $0x388] sm:$0xf]
  %v325 = vld [vmem:[%s1 + $0x38c] sm:$0xf]
  %v326 = vld [vmem:[%s1 + $0x390] sm:$0xf]
  %v327 = vld [vmem:[%s1 + $0x394] sm:$0xf]
  %v328 = vld [vmem:[%s1 + $0x398] sm:$0xf]
  %v329 = vld [vmem:[%s1 + $0x39c] sm:$0xf]
  %v330 = vld [vmem:[%s1 + $0x3a0] sm:$0xf]
  %v331 = vld [vmem:[%s1 + $0x3a4] sm:$0xf]
  %v332 = vld [vmem:[%s1 + $0x3a8] sm:$0xf]
  %v333 = vld [vmem:[%s1 + $0x3ac] sm:$0xf]
  %v334 = vld [vmem:[%s1 + $0x3b0] sm:$0xf]
  %v335 = vld [vmem:[%s1 + $0x3b4] sm:$0xf]
  %v336 = vld [vmem:[%s1 + $0x3b8] sm:$0xf]
  %v337 = vld [vmem:[%s1 + $0x3bc] sm:$0xf]
  %v338 = vld [vmem:[%s1 + $0x3c0] sm:$0xf]
  %v339 = vld [vmem:[%s1 + $0x3c4] sm:$0xf]
  %v340 = vld [vmem:[%s1 + $0x3c8] sm:$0xf]
  %v341 = vld [vmem:[%s1 + $0x3cc] sm:$0xf]
  %v342 = vld [vmem:[%s1 + $0x3d0] sm:$0xf]
  %v343 = vld [vmem:[%s1 + $0x3d4] sm:$0xf]
  %v344 = vld [vmem:[%s1 + $0x3d8] sm:$0xf]
  %v345 = vld [vmem:[%s1 + $0x3dc] sm:$0xf]
  %v346 = vld [vmem:[%s1 + $0x3e0] sm:$0xf]
  %v347 = vld [vmem:[%s1 + $0x3e4] sm:$0xf]
  %v348 = vld [vmem:[%s1 + $0x3e8] sm:$0xf]
  %v349 = vld [vmem:[%s1 + $0x3ec] sm:$0xf]
  %v350 = vld [vmem:[%s1 + $0x3f0] sm:$0xf]
  %v351 = vld [vmem:[%s1 + $0x3f4] sm:$0xf]
  %v352 = vld [vmem:[%s1 + $0x3f8] sm:$0xf]
  %v353 = vld [vmem:[%s1 + $0x3fc] sm:$0xf]
  %v354 = vld [vmem:[%s1 + $0x400] sm:$0xf]
  %v355 = vld [vmem:[%s1 + $0x404] sm:$0xf]
  %v356 = vld [vmem:[%s1 + $0x408] sm:$0xf]
  %v357 = vld [vmem:[%s1 + $0x40c] sm:$0xf]
  %v358 = vld [vmem:[%s1 + $0x410] sm:$0xf]
  %v359 = vld [vmem:[%s1 + $0x414] sm:$0xf]
  %v360 = vld [vmem:[%s1 + $0x418] sm:$0xf]
  %v361 = vld [vmem:[%s1 + $0x41c] sm:$0xf]
  %v362 = vld [vmem:[%s1 + $0x420] sm:$0xf]
  %v363 = vld [vmem:[%s1 + $0x424] sm:$0xf]
  %v364 = vld [vmem:[%s1 + $0x428] sm:$0xf]
  %v365 = vld [vmem:[%s1 + $0x42c] sm:$0xf]
  %v366 = vld [vmem:[%s1 + $0x430] sm:$0xf]
  %v367 = vld [vmem:[%s1 + $0x434] sm:$0xf]
  %v368 = vld [vmem:[%s1 + $0x438] sm:$0xf]
  %v369 = vld [vmem:[%s1 + $0x43c] sm:$0xf]
  %v370 = vld [vmem:[%s1 + $0x440] sm:$0xf]
  %v371 = vld [vmem:[%s1 + $0x444] sm:$0xf]
  %v372 = vld [vmem:[%s1 + $0x448] sm:$0xf]
  %v373 = vld [vmem:[%s1 + $0x44c] sm:$0xf]
  %v374 = vld [vmem:[%s1 + $0x450] sm:$0xf]
  %v375 = vld [vmem:[%s1 + $0x454] sm:$0xf]
  %v376 = vld [vmem:[%s1 + $0x458] sm:$0xf]
  %v377 = vld [vmem:[%s1 + $0x45c] sm:$0xf]
  %v378 = vld [vmem:[%s1 + $0x460] sm:$0xf]
  %v379 = vld [vmem:[%s1 + $0x464] sm:$0xf]
  %v380 = vld [vmem:[%s1 + $0x468] sm:$0xf]
  %v381 = vld [vmem:[%s1 + $0x46c] sm:$0xf]
  %v382 = vld [vmem:[%s1 + $0x470] sm:$0xf]
  %v383 = vld [vmem:[%s1 + $0x474] sm:$0xf]
  %v384 = vld [vmem:[%s1 + $0x478] sm:$0xf]
  %v385 = vld [vmem:[%s1 + $0x47c] sm:$0xf]
  %v386 = vld [vmem:[%s1 + $0x480] sm:$0xf]
  %v387 = vld [vmem:[%s1 + $0x484] sm:$0xf]
  %v388 = vld [vmem:[%s1 + $0x488] sm:$0xf]
  %v389 = vld [vmem:[%s1 + $0x48c] sm:$0xf]
  %v390 = vld [vmem:[%s1 + $0x490] sm:$0xf]
  %v391 = vld [vmem:[%s1 + $0x494] sm:$0xf]
  %v392 = vld [vmem:[%s1 + $0x498] sm:$0xf]
  %v393 = vld [vmem:[%s1 + $0x49c] sm:$0xf]
  %v394 = vld [vmem:[%s1 + $0x4a0] sm:$0xf]
  %v395 = vld [vmem:[%s1 + $0x4a4] sm:$0xf]
  %v396 = vld [vmem:[%s1 + $0x4a8] sm:$0xf]
  %v397 = vld [vmem:[%s1 + $0x4ac] sm:$0xf]
  %v398 = vld [vmem:[%s1 + $0x4b0] sm:$0xf]
  %v399 = vld [vmem:[%s1 + $0x4b4] sm:$0xf]
  %v400 = vld [vmem:[%s1 + $0x4b8] sm:$0xf]
  %v401 = vld [vmem:[%s1 + $0x4bc] sm:$0xf]
  %v402 = vld [vmem:[%s1 + $0x4c0] sm:$0xf]
  %v403 = vld [vmem:[%s1 + $0x4c4] sm:$0xf]
  %v404 = vld [vmem:[%s1 + $0x4c8] sm:$0xf]
  %v405 = vld [vmem:[%s1 + $0x4cc] sm:$0xf]
  %v406 = vld [vmem:[%s1 + $0x4d0] sm:$0xf]
  %v407 = vld [vmem:[%s1 + $0x4d4] sm:$0xf]
  %v408 = vld [vmem:[%s1 + $0x4d8] sm:$0xf]
  %v409 = vld [vmem:[%s1 + $0x4dc] sm:$0xf]
  %v410 = vld [vmem:[%s1 + $0x4e0] sm:$0xf]
  %v411 = vld [vmem:[%s1 + $0x4e4] sm:$0xf]
  %v412 = vld [vmem:[%s1 + $0x4e8] sm:$0xf]
  %v413 = vld [vmem:[%s1 + $0x4ec] sm:$0xf]
  %v414 = vld [vmem:[%s1 + $0x4f0] sm:$0xf]
  %v415 = vld [vmem:[%s1 + $0x4f4] sm:$0xf]
  %v416 = vld [vmem:[%s1 + $0x4f8] sm:$0xf]
  %v417 = vld [vmem:[%s1 + $0x4fc] sm:$0xf]
  %v418 = vld [vmem:[%s1 + $0x500] sm:$0xf]
  %v419 = vld [vmem:[%s1 + $0x504] sm:$0xf]
  %v420 = vld [vmem:[%s1 + $0x508] sm:$0xf]
  %v421 = vld [vmem:[%s1 + $0x50c] sm:$0xf]
  %v422 = vld [vmem:[%s1 + $0x510] sm:$0xf]
  %v423 = vld [vmem:[%s1 + $0x514] sm:$0xf]
  %v424 = vld [vmem:[%s1 + $0x518] sm:$0xf]
  %v425 = vld [vmem:[%s1 + $0x51c] sm:$0xf]
  %v426 = vld [vmem:[%s1 + $0x520] sm:$0xf]
  %v427 = vld [vmem:[%s1 + $0x524] sm:$0xf]
  %v428 = vld [vmem:[%s1 + $0x528] sm:$0xf]
  %v429 = vld [vmem:[%s1 + $0x52c] sm:$0xf]
  %v430 = vld [vmem:[%s1 + $0x530] sm:$0xf]
  %v431 = vld [vmem:[%s1 + $0x534] sm:$0xf]
  %v432 = vld [vmem:[%s1 + $0x538] sm:$0xf]
  %v433 = vld [vmem:[%s1 + $0x53c] sm:$0xf]
  %v434 = vld [vmem:[%s1 + $0x540] sm:$0xf]
  %v435 = vld [vmem:[%s1 + $0x544] sm:$0xf]
  %v436 = vld [vmem:[%s1 + $0x548] sm:$0xf]
  %v437 = vld [vmem:[%s1 + $0x54c] sm:$0xf]
  %v438 = vld [vmem:[%s1 + $0x550] sm:$0xf]
  %v439 = vld [vmem:[%s1 + $0x554] sm:$0xf]
  %v440 = vld [vmem:[%s1 + $0x558] sm:$0xf]
  %v441 = vld [vmem:[%s1 + $0x55c] sm:$0xf]
  %v442 = vld [vmem:[%s1 + $0x560] sm:$0xf]
  %v443 = vld [vmem:[%s1 + $0x564] sm:$0xf]
  %v444 = vld [vmem:[%s1 + $0x568] sm:$0xf]
  %v445 = vld [vmem:[%s1 + $0x56c] sm:$0xf]
  %v446 = vld [vmem:[%s1 + $0x570] sm:$0xf]
  %v447 = vld [vmem:[%s1 + $0x574] sm:$0xf]
  %v448 = vld [vmem:[%s1 + $0x578] sm:$0xf]
  %v449 = vld [vmem:[%s1 + $0x57c] sm:$0xf]
  %v450 = vld [vmem:[%s1 + $0x580] sm:$0xf]
  %v451 = vld [vmem:[%s1 + $0x584] sm:$0xf]
  %v452 = vld [vmem:[%s1 + $0x588] sm:$0xf]
  %v453 = vld [vmem:[%s1 + $0x58c] sm:$0xf]
  %v454 = vld [vmem:[%s1 + $0x590] sm:$0xf]
  %v455 = vld [vmem:[%s1 + $0x594] sm:$0xf]
  %v456 = vld [vmem:[%s1 + $0x598] sm:$0xf]
  %v457 = vld [vmem:[%s1 + $0x59c] sm:$0xf]
  %v458 = vld [vmem:[%s1 + $0x5a0] sm:$0xf]
  %v459 = vld [vmem:[%s1 + $0x5a4] sm:$0xf]
  %v460 = vld [vmem:[%s1 + $0x5a8] sm:$0xf]
  %v461 = vld [vmem:[%s1 + $0x5ac] sm:$0xf]
  %v462 = vld [vmem:[%s1 + $0x5b0] sm:$0xf]
  %v463 = vld [vmem:[%s1 + $0x5b4] sm:$0xf]
  %v464 = vld [vmem:[%s1 + $0x5b8] sm:$0xf]
  %v465 = vld [vmem:[%s1 + $0x5bc] sm:$0xf]
  %v466 = vld [vmem:[%s1 + $0x5c0] sm:$0xf]
  %v467 = vld [vmem:[%s1 + $0x5c4] sm:$0xf]
  %v468 = vld [vmem:[%s1 + $0x5c8] sm:$0xf]
  %v469 = vld [vmem:[%s1 + $0x5cc] sm:$0xf]
  %v470 = vld [vmem:[%s1 + $0x5d0] sm:$0xf]
  %v471 = vld [vmem:[%s1 + $0x5d4] sm:$0xf]
  %v472 = vld [vmem:[%s1 + $0x5d8] sm:$0xf]
  %v473 = vld [vmem:[%s1 + $0x5dc] sm:$0xf]
  %v474 = vld [vmem:[%s1 + $0x5e0] sm:$0xf]
  %v475 = vld [vmem:[%s1 + $0x5e4] sm:$0xf]
  %v476 = vld [vmem:[%s1 + $0x5e8] sm:$0xf]
  %v477 = vld [vmem:[%s1 + $0x5ec] sm:$0xf]
  %v478 = vld [vmem:[%s1 + $0x5f0] sm:$0xf]
  %v479 = vld [vmem:[%s1 + $0x5f4] sm:$0xf]
  %v480 = vld [vmem:[%s1 + $0x5f8] sm:$0xf]
  %v481 = vld [vmem:[%s1 + $0x5fc] sm:$0xf]
  %v482 = vld [vmem:[%s1 + $0x600] sm:$0xf]
  %v483 = vld [vmem:[%s1 + $0x604] sm:$0xf]
  %v484 = vld [vmem:[%s1 + $0x608] sm:$0xf]
  %v485 = vld [vmem:[%s1 + $0x60c] sm:$0xf]
  %v486 = vld [vmem:[%s1 + $0x610] sm:$0xf]
  %v487 = vld [vmem:[%s1 + $0x614] sm:$0xf]
  %v488 = vld [vmem:[%s1 + $0x618] sm:$0xf]
  %v489 = vld [vmem:[%s1 + $0x61c] sm:$0xf]
  %v490 = vld [vmem:[%s1 + $0x620] sm:$0xf]
  %v491 = vld [vmem:[%s1 + $0x624] sm:$0xf]
  %v492 = vld [vmem:[%s1 + $0x628] sm:$0xf]
  %v493 = vld [vmem:[%s1 + $0x62c] sm:$0xf]
  %v494 = vld [vmem:[%s1 + $0x630] sm:$0xf]
  %v495 = vld [vmem:[%s1 + $0x634] sm:$0xf]
  %v496 = vld [vmem:[%s1 + $0x638] sm:$0xf]
  %v497 = vld [vmem:[%s1 + $0x63c] sm:$0xf]
  %v498 = vld [vmem:[%s1 + $0x640] sm:$0xf]
  %v499 = vld [vmem:[%s1 + $0x644] sm:$0xf]
  %v500 = vld [vmem:[%s1 + $0x648] sm:$0xf]
  %v501 = vld [vmem:[%s1 + $0x64c] sm:$0xf]
  %v502 = vld [vmem:[%s1 + $0x650] sm:$0xf]
  %v503 = vld [vmem:[%s1 + $0x654] sm:$0xf]
  %v504 = vld [vmem:[%s1 + $0x658] sm:$0xf]
  %v505 = vld [vmem:[%s1 + $0x65c] sm:$0xf]
  %v506 = vld [vmem:[%s1 + $0x660] sm:$0xf]
  %v507 = vld [vmem:[%s1 + $0x664] sm:$0xf]
  %v508 = vld [vmem:[%s1 + $0x668] sm:$0xf]
  %v509 = vld [vmem:[%s1 + $0x66c] sm:$0xf]
  %v510 = vld [vmem:[%s1 + $0x670] sm:$0xf]
  %v511 = vld [vmem:[%s1 + $0x674] sm:$0xf]
  %v512 = vld [vmem:[%s1 + $0x678] sm:$0xf]
  %v513 = vld [vmem:[%s1 + $0x67c] sm:$0xf]
  %v514 = vld [vmem:[%s1 + $0x680] sm:$0xf]
  %v515 = vld [vmem:[%s1 + $0x684] sm:$0xf]
  %v516 = vld [vmem:[%s1 + $0x688] sm:$0xf]
  %v517 = vld [vmem:[%s1 + $0x68c] sm:$0xf]
  %v518 = vld [vmem:[%s1 + $0x690] sm:$0xf]
  %v519 = vld [vmem:[%s1 + $0x694] sm:$0xf]
  %v520 = vld [vmem:[%s1 + $0x698] sm:$0xf]
  %v521 = vld [vmem:[%s1 + $0x69c] sm:$0xf]
  %v522 = vld [vmem:[%s1 + $0x6a0] sm:$0xf]
  %v523 = vld [vmem:[%s1 + $0x6a4] sm:$0xf]
  %v524 = vld [vmem:[%s1 + $0x6a8] sm:$0xf]
  %v525 = vld [vmem:[%s1 + $0x6ac] sm:$0xf]
  %v526 = vld [vmem:[%s1 + $0x6b0] sm:$0xf]
  %v527 = vld [vmem:[%s1 + $0x6b4] sm:$0xf]
  %v528 = vld [vmem:[%s1 + $0x6b8] sm:$0xf]
  %v529 = vld [vmem:[%s1 + $0x6bc] sm:$0xf]
  %v530 = vld [vmem:[%s1 + $0x6c0] sm:$0xf]
  %v531 = vld [vmem:[%s1 + $0x6c4] sm:$0xf]
  %v532 = vld [vmem:[%s1 + $0x6c8] sm:$0xf]
  %v533 = vld [vmem:[%s1 + $0x6cc] sm:$0xf]
  %v534 = vld [vmem:[%s1 + $0x6d0] sm:$0xf]
  %v535 = vld [vmem:[%s1 + $0x6d4] sm:$0xf]
  %v536 = vld [vmem:[%s1 + $0x6d8] sm:$0xf]
  %v537 = vld [vmem:[%s1 + $0x6dc] sm:$0xf]
  %v538 = vld [vmem:[%s1 + $0x6e0] sm:$0xf]
  %v539 = vld [vmem:[%s1 + $0x6e4] sm:$0xf]
  %v540 = vld [vmem:[%s1 + $0x6e8] sm:$0xf]
  %v541 = vld [vmem:[%s1 + $0x6ec] sm:$0xf]
  %v542 = vld [vmem:[%s1 + $0x6f0] sm:$0xf]
  %v543 = vld [vmem:[%s1 + $0x6f4] sm:$0xf]
  %v544 = vld [vmem:[%s1 + $0x6f8] sm:$0xf]
  %v545 = vld [vmem:[%s1 + $0x6fc] sm:$0xf]
  %v546 = vld [vmem:[%s1 + $0x700] sm:$0xf]
  %v547 = vld [vmem:[%s1 + $0x704] sm:$0xf]
  %v548 = vld [vmem:[%s1 + $0x708] sm:$0xf]
  %v549 = vld [vmem:[%s1 + $0x70c] sm:$0xf]
  %v550 = vld [vmem:[%s1 + $0x710] sm:$0xf]
  %v551 = vld [vmem:[%s1 + $0x714] sm:$0xf]
  %v552 = vld [vmem:[%s1 + $0x718] sm:$0xf]
  %v553 = vld [vmem:[%s1 + $0x71c] sm:$0xf]
  %v554 = vld [vmem:[%s1 + $0x720] sm:$0xf]
  %v555 = vld [vmem:[%s1 + $0x724] sm:$0xf]
  %v556 = vld [vmem:[%s1 + $0x728] sm:$0xf]
  %v557 = vld [vmem:[%s1 + $0x72c] sm:$0xf]
  %v558 = vld [vmem:[%s1 + $0x730] sm:$0xf]
  %v559 = vld [vmem:[%s1 + $0x734] sm:$0xf]
  %v560 = vld [vmem:[%s1 + $0x738] sm:$0xf]
  %v561 = vld [vmem:[%s1 + $0x73c] sm:$0xf]
  %v562 = vld [vmem:[%s1 + $0x740] sm:$0xf]
  %v563 = vld [vmem:[%s1 + $0x744] sm:$0xf]
  %v564 = vld [vmem:[%s1 + $0x748] sm:$0xf]
  %v565 = vld [vmem:[%s1 + $0x74c] sm:$0xf]
  %v566 = vld [vmem:[%s1 + $0x750] sm:$0xf]
  %v567 = vld [vmem:[%s1 + $0x754] sm:$0xf]
  %v568 = vld [vmem:[%s1 + $0x758] sm:$0xf]
  %v569 = vld [vmem:[%s1 + $0x75c] sm:$0xf]
  %v570 = vld [vmem:[%s1 + $0x760] sm:$0xf]
  %v571 = vld [vmem:[%s1 + $0x764] sm:$0xf]
  %v572 = vld [vmem:[%s1 + $0x768] sm:$0xf]
  %v573 = vld [vmem:[%s1 + $0x76c] sm:$0xf]
  %v574 = vld [vmem:[%s1 + $0x770] sm:$0xf]
  %v575 = vld [vmem:[%s1 + $0x774] sm:$0xf]
  %v576 = vld [vmem:[%s1 + $0x778] sm:$0xf]
  %v577 = vld [vmem:[%s1 + $0x77c] sm:$0xf]
  %v578 = vld [vmem:[%s1 + $0x780] sm:$0xf]
  %v579 = vld [vmem:[%s1 + $0x784] sm:$0xf]
  %v580 = vld [vmem:[%s1 + $0x788] sm:$0xf]
  %v581 = vld [vmem:[%s1 + $0x78c] sm:$0xf]
  %v582 = vld [vmem:[%s1 + $0x790] sm:$0xf]
  %v583 = vld [vmem:[%s1 + $0x794] sm:$0xf]
  %v584 = vld [vmem:[%s1 + $0x798] sm:$0xf]
  %v585 = vld [vmem:[%s1 + $0x79c] sm:$0xf]
  %v586 = vld [vmem:[%s1 + $0x7a0] sm:$0xf]
  %v587 = vld [vmem:[%s1 + $0x7a4] sm:$0xf]
  %v588 = vld [vmem:[%s1 + $0x7a8] sm:$0xf]
  %v589 = vld [vmem:[%s1 + $0x7ac] sm:$0xf]
  %v590 = vld [vmem:[%s1 + $0x7b0] sm:$0xf]
  %v591 = vld [vmem:[%s1 + $0x7b4] sm:$0xf]
  %v592 = vld [vmem:[%s1 + $0x7b8] sm:$0xf]
  %v593 = vld [vmem:[%s1 + $0x7bc] sm:$0xf]
  %v594 = vld [vmem:[%s1 + $0x7c0] sm:$0xf]
  %v595 = vld [vmem:[%s1 + $0x7c4] sm:$0xf]
  %v596 = vld [vmem:[%s1 + $0x7c8] sm:$0xf]
  %v597 = vld [vmem:[%s1 + $0x7cc] sm:$0xf]
  %v598 = vld [vmem:[%s1 + $0x7d0] sm:$0xf]
  %v599 = vld [vmem:[%s1 + $0x7d4] sm:$0xf]
  %v600 = vld [vmem:[%s1 + $0x7d8] sm:$0xf]
  %v601 = vld [vmem:[%s1 + $0x7dc] sm:$0xf]
  %v602 = vld [vmem:[%s1 + $0x7e0] sm:$0xf]
  %v603 = vld [vmem:[%s1 + $0x7e4] sm:$0xf]
  %v604 = vld [vmem:[%s1 + $0x7e8] sm:$0xf]
  %v605 = vld [vmem:[%s1 + $0x7ec] sm:$0xf]
  %v606 = vld [vmem:[%s1 + $0x7f0] sm:$0xf]
  %v607 = vld [vmem:[%s1 + $0x7f4] sm:$0xf]
  %v608 = vld [vmem:[%s1 + $0x7f8] sm:$0xf]
  %v609 = vld [vmem:[%s1 + $0x7fc] sm:$0xf]
  %v610 = vld [vmem:[%s1 + $0x800] sm:$0xf]
  %v611 = vld [vmem:[%s1 + $0x804] sm:$0xf]
  %v612 = vld [vmem:[%s1 + $0x808] sm:$0xf]
  %v613 = vld [vmem:[%s1 + $0x80c] sm:$0xf]
  %v614 = vld [vmem:[%s1 + $0x810] sm:$0xf]
  %v615 = vld [vmem:[%s1 + $0x814] sm:$0xf]
  %v616 = vld [vmem:[%s1 + $0x818] sm:$0xf]
  %v617 = vld [vmem:[%s1 + $0x81c] sm:$0xf]
  %v618 = vld [vmem:[%s1 + $0x820] sm:$0xf]
  %v619 = vld [vmem:[%s1 + $0x824] sm:$0xf]
  %v620 = vld [vmem:[%s1 + $0x828] sm:$0xf]
  %v621 = vld [vmem:[%s1 + $0x82c] sm:$0xf]
  %v622 = vld [vmem:[%s1 + $0x830] sm:$0xf]
  %v623 = vld [vmem:[%s1 + $0x834] sm:$0xf]
  %v624 = vld [vmem:[%s1 + $0x838] sm:$0xf]
  %v625 = vld [vmem:[%s1 + $0x83c] sm:$0xf]
  %v626 = vld [vmem:[%s1 + $0x840] sm:$0xf]
  %v627 = vld [vmem:[%s1 + $0x844] sm:$0xf]
  %v628 = vld [vmem:[%s1 + $0x848] sm:$0xf]
  %v629 = vld [vmem:[%s1 + $0x84c] sm:$0xf]
  %v630 = vld [vmem:[%s1 + $0x850] sm:$0xf]
  %v631 = vld [vmem:[%s1 + $0x854] sm:$0xf]
  %v632 = vld [vmem:[%s1 + $0x858] sm:$0xf]
  %v633 = vld [vmem:[%s1 + $0x85c] sm:$0xf]
  %v634 = vld [vmem:[%s1 + $0x860] sm:$0xf]
  %v635 = vld [vmem:[%s1 + $0x864] sm:$0xf]
  %v636 = vld [vmem:[%s1 + $0x868] sm:$0xf]
  %v637 = vld [vmem:[%s1 + $0x86c] sm:$0xf]
  %v638 = vld [vmem:[%s1 + $0x870] sm:$0xf]
  %v639 = vld [vmem:[%s1 + $0x874] sm:$0xf]
  %v640 = vld [vmem:[%s1 + $0x878] sm:$0xf]
  %v641 = vld [vmem:[%s1 + $0x87c] sm:$0xf]
  %v642 = vld [vmem:[%s1 + $0x880] sm:$0xf]
  %v643 = vld [vmem:[%s1 + $0x884] sm:$0xf]
  %v644 = vld [vmem:[%s1 + $0x888] sm:$0xf]
  %v645 = vld [vmem:[%s1 + $0x88c] sm:$0xf]
  %v646 = vld [vmem:[%s1 + $0x890] sm:$0xf]
  %v647 = vld [vmem:[%s1 + $0x894] sm:$0xf]
  %v648 = vld [vmem:[%s1 + $0x898] sm:$0xf]
  %v649 = vld [vmem:[%s1 + $0x89c] sm:$0xf]
  %v650 = vld [vmem:[%s1 + $0x8a0] sm:$0xf]
  %v651 = vld [vmem:[%s1 + $0x8a4] sm:$0xf]
  %v652 = vld [vmem:[%s1 + $0x8a8] sm:$0xf]
  %v653 = vld [vmem:[%s1 + $0x8ac] sm:$0xf]
  %v654 = vld [vmem:[%s1 + $0x8b0] sm:$0xf]
  %v655 = vld [vmem:[%s1 + $0x8b4] sm:$0xf]
  %v656 = vld [vmem:[%s1 + $0x8b8] sm:$0xf]
  %v657 = vld [vmem:[%s1 + $0x8bc] sm:$0xf]
  %v658 = vld [vmem:[%s1 + $0x8c0] sm:$0xf]
  %v659 = vld [vmem:[%s1 + $0x8c4] sm:$0xf]
  %v660 = vld [vmem:[%s1 + $0x8c8] sm:$0xf]
  %v661 = vld [vmem:[%s1 + $0x8cc] sm:$0xf]
  %v662 = vld [vmem:[%s1 + $0x8d0] sm:$0xf]
  %v663 = vld [vmem:[%s1 + $0x8d4] sm:$0xf]
  %v664 = vld [vmem:[%s1 + $0x8d8] sm:$0xf]
  %v665 = vld [vmem:[%s1 + $0x8dc] sm:$0xf]
  %v666 = vld [vmem:[%s1 + $0x8e0] sm:$0xf]
  %v667 = vld [vmem:[%s1 + $0x8e4] sm:$0xf]
  %v668 = vld [vmem:[%s1 + $0x8e8] sm:$0xf]
  %v669 = vld [vmem:[%s1 + $0x8ec] sm:$0xf]
  %v670 = vld [vmem:[%s1 + $0x8f0] sm:$0xf]
  %v671 = vld [vmem:[%s1 + $0x8f4] sm:$0xf]
  %v672 = vld [vmem:[%s1 + $0x8f8] sm:$0xf]
  %v673 = vld [vmem:[%s1 + $0x8fc] sm:$0xf]
  %v674 = vld [vmem:[%s1 + $0x900] sm:$0xf]
  %v675 = vld [vmem:[%s1 + $0x904] sm:$0xf]
  %v676 = vld [vmem:[%s1 + $0x908] sm:$0xf]
  %v677 = vld [vmem:[%s1 + $0x90c] sm:$0xf]
  %v678 = vld [vmem:[%s1 + $0x910] sm:$0xf]
  %v679 = vld [vmem:[%s1 + $0x914] sm:$0xf]
  %v680 = vld [vmem:[%s1 + $0x918] sm:$0xf]
  %v681 = vld [vmem:[%s1 + $0x91c] sm:$0xf]
  %v682 = vld [vmem:[%s1 + $0x920] sm:$0xf]
  %v683 = vld [vmem:[%s1 + $0x924] sm:$0xf]
  %v684 = vld [vmem:[%s1 + $0x928] sm:$0xf]
  %v685 = vld [vmem:[%s1 + $0x92c] sm:$0xf]
  %v686 = vld [vmem:[%s1 + $0x930] sm:$0xf]
  %v687 = vld [vmem:[%s1 + $0x934] sm:$0xf]
  %v688 = vld [vmem:[%s1 + $0x938] sm:$0xf]
  %v689 = vld [vmem:[%s1 + $0x93c] sm:$0xf]
  %v690 = vld [vmem:[%s1 + $0x940] sm:$0xf]
  %v691 = vld [vmem:[%s1 + $0x944] sm:$0xf]
  %v692 = vld [vmem:[%s1 + $0x948] sm:$0xf]
  %v693 = vld [vmem:[%s1 + $0x94c] sm:$0xf]
  %v694 = vld [vmem:[%s1 + $0x950] sm:$0xf]
  %v695 = vld [vmem:[%s1 + $0x954] sm:$0xf]
  %v696 = vld [vmem:[%s1 + $0x958] sm:$0xf]
  %v697 = vld [vmem:[%s1 + $0x95c] sm:$0xf]
  %v698 = vld [vmem:[%s1 + $0x960] sm:$0xf]
  %v699 = vld [vmem:[%s1 + $0x964] sm:$0xf]
  %v700 = vld [vmem:[%s1 + $0x968] sm:$0xf]
  %v701 = vld [vmem:[%s1 + $0x96c] sm:$0xf]
  %v702 = vld [vmem:[%s1 + $0x970] sm:$0xf]
  %v703 = vld [vmem:[%s1 + $0x974] sm:$0xf]
  %v704 = vld [vmem:[%s1 + $0x978] sm:$0xf]
  %v705 = vld [vmem:[%s1 + $0x97c] sm:$0xf]
  %v706 = vld [vmem:[%s1 + $0x980] sm:$0xf]
  %v707 = vld [vmem:[%s1 + $0x984] sm:$0xf]
  %v708 = vld [vmem:[%s1 + $0x988] sm:$0xf]
  %v709 = vld [vmem:[%s1 + $0x98c] sm:$0xf]
  %v710 = vld [vmem:[%s1 + $0x990] sm:$0xf]
  %v711 = vld [vmem:[%s1 + $0x994] sm:$0xf]
  %v712 = vld [vmem:[%s1 + $0x998] sm:$0xf]
  %v713 = vld [vmem:[%s1 + $0x99c] sm:$0xf]
  %v714 = vld [vmem:[%s1 + $0x9a0] sm:$0xf]
  %v715 = vld [vmem:[%s1 + $0x9a4] sm:$0xf]
  %v716 = vld [vmem:[%s1 + $0x9a8] sm:$0xf]
  %v717 = vld [vmem:[%s1 + $0x9ac] sm:$0xf]
  %v718 = vld [vmem:[%s1 + $0x9b0] sm:$0xf]
  %v719 = vld [vmem:[%s1 + $0x9b4] sm:$0xf]
  %v720 = vld [vmem:[%s1 + $0x9b8] sm:$0xf]
  %v721 = vld [vmem:[%s1 + $0x9bc] sm:$0xf]
  %v722 = vld [vmem:[%s1 + $0x9c0] sm:$0xf]
  %v723 = vld [vmem:[%s1 + $0x9c4] sm:$0xf]
  %v724 = vld [vmem:[%s1 + $0x9c8] sm:$0xf]
  %v725 = vld [vmem:[%s1 + $0x9cc] sm:$0xf]
  %v726 = vld [vmem:[%s1 + $0x9d0] sm:$0xf]
  %v727 = vld [vmem:[%s1 + $0x9d4] sm:$0xf]
  %v728 = vld [vmem:[%s1 + $0x9d8] sm:$0xf]
  %v729 = vld [vmem:[%s1 + $0x9dc] sm:$0xf]
  %v730 = vld [vmem:[%s1 + $0x9e0] sm:$0xf]
  %v731 = vld [vmem:[%s1 + $0x9e4] sm:$0xf]
  %v732 = vld [vmem:[%s1 + $0x9e8] sm:$0xf]
  %v733 = vld [vmem:[%s1 + $0x9ec] sm:$0xf]
  %v734 = vld [vmem:[%s1 + $0x9f0] sm:$0xf]
  %v735 = vld [vmem:[%s1 + $0x9f4] sm:$0xf]
  %v736 = vld [vmem:[%s1 + $0x9f8] sm:$0xf]
  %v737 = vld [vmem:[%s1 + $0x9fc] sm:$0xf]
  %v738 = vld [vmem:[%s1 + $0xa00] sm:$0xf]
  %v739 = vld [vmem:[%s1 + $0xa04] sm:$0xf]
  %v740 = vld [vmem:[%s1 + $0xa08] sm:$0xf]
  %v741 = vld [vmem:[%s1 + $0xa0c] sm:$0xf]
  %v742 = vld [vmem:[%s1 + $0xa10] sm:$0xf]
  %v743 = vld [vmem:[%s1 + $0xa14] sm:$0xf]
  %v744 = vld [vmem:[%s1 + $0xa18] sm:$0xf]
  %v745 = vld [vmem:[%s1 + $0xa1c] sm:$0xf]
  %v746 = vld [vmem:[%s1 + $0xa20] sm:$0xf]
  %v747 = vld [vmem:[%s1 + $0xa24] sm:$0xf]
  %v748 = vld [vmem:[%s1 + $0xa28] sm:$0xf]
  %v749 = vld [vmem:[%s1 + $0xa2c] sm:$0xf]
  %v750 = vld [vmem:[%s1 + $0xa30] sm:$0xf]
  %v751 = vld [vmem:[%s1 + $0xa34] sm:$0xf]
  %v752 = vld [vmem:[%s1 + $0xa38] sm:$0xf]
  %v753 = vld [vmem:[%s1 + $0xa3c] sm:$0xf]
  %v754 = vld [vmem:[%s1 + $0xa40] sm:$0xf]
  %v755 = vld [vmem:[%s1 + $0xa44] sm:$0xf]
  %v756 = vld [vmem:[%s1 + $0xa48] sm:$0xf]
  %v757 = vld [vmem:[%s1 + $0xa4c] sm:$0xf]
  %v758 = vld [vmem:[%s1 + $0xa50] sm:$0xf]
  %v759 = vld [vmem:[%s1 + $0xa54] sm:$0xf]
  %v760 = vld [vmem:[%s1 + $0xa58] sm:$0xf]
  %v761 = vld [vmem:[%s1 + $0xa5c] sm:$0xf]
  %v762 = vld [vmem:[%s1 + $0xa60] sm:$0xf]
  %v763 = vld [vmem:[%s1 + $0xa64] sm:$0xf]
  %v764 = vld [vmem:[%s1 + $0xa68] sm:$0xf]
  %v765 = vld [vmem:[%s1 + $0xa6c] sm:$0xf]
  %v766 = vld [vmem:[%s1 + $0xa70] sm:$0xf]
  %v767 = vld [vmem:[%s1 + $0xa74] sm:$0xf]
  %v768 = vld [vmem:[%s1 + $0xa78] sm:$0xf]
  %v769 = vld [vmem:[%s1 + $0xa7c] sm:$0xf]
  %v770 = vld [vmem:[%s1 + $0xa80] sm:$0xf]
  %v771 = vld [vmem:[%s1 + $0xa84] sm:$0xf]
  %v772 = vld [vmem:[%s1 + $0xa88] sm:$0xf]
  %v773 = vld [vmem:[%s1 + $0xa8c] sm:$0xf]
  %v774 = vld [vmem:[%s1 + $0xa90] sm:$0xf]
  %v775 = vld [vmem:[%s1 + $0xa94] sm:$0xf]
  %v776 = vld [vmem:[%s1 + $0xa98] sm:$0xf]
  %v777 = vld [vmem:[%s1 + $0xa9c] sm:$0xf]
  %v778 = vld [vmem:[%s1 + $0xaa0] sm:$0xf]
  %v779 = vld [vmem:[%s1 + $0xaa4] sm:$0xf]
  %v780 = vld [vmem:[%s1 + $0xaa8] sm:$0xf]
  %v781 = vld [vmem:[%s1 + $0xaac] sm:$0xf]
  %v782 = vld [vmem:[%s1 + $0xab0] sm:$0xf]
  %v783 = vld [vmem:[%s1 + $0xab4] sm:$0xf]
  %v784 = vld [vmem:[%s1 + $0xab8] sm:$0xf]
  %v785 = vld [vmem:[%s1 + $0xabc] sm:$0xf]
  %v786 = vld [vmem:[%s1 + $0xac0] sm:$0xf]
  %v787 = vld [vmem:[%s1 + $0xac4] sm:$0xf]
  %v788 = vld [vmem:[%s1 + $0xac8] sm:$0xf]
  %v789 = vld [vmem:[%s1 + $0xacc] sm:$0xf]
  %v790 = vld [vmem:[%s1 + $0xad0] sm:$0xf]
  %v791 = vld [vmem:[%s1 + $0xad4] sm:$0xf]
  %v792 = vld [vmem:[%s1 + $0xad8] sm:$0xf]
  %v793 = vld [vmem:[%s1 + $0xadc] sm:$0xf]
  %v794 = vld [vmem:[%s1 + $0xae0] sm:$0xf]
  %v795 = vld [vmem:[%s1 + $0xae4] sm:$0xf]
  %v796 = vld [vmem:[%s1 + $0xae8] sm:$0xf]
  %v797 = vld [vmem:[%s1 + $0xaec] sm:$0xf]
  %v798 = vld [vmem:[%s1 + $0xaf0] sm:$0xf]
  %v799 = vld [vmem:[%s1 + $0xaf4] sm:$0xf]
  %v800 = vld [vmem:[%s1 + $0xaf8] sm:$0xf]
  %v801 = vld [vmem:[%s1 + $0xafc] sm:$0xf]
  %v802 = vld [vmem:[%s1 + $0xb00] sm:$0xf]
  %v803 = vld [vmem:[%s1 + $0xb04] sm:$0xf]
  %v804 = vld [vmem:[%s1 + $0xb08] sm:$0xf]
  %v805 = vld [vmem:[%s1 + $0xb0c] sm:$0xf]
  %v806 = vld [vmem:[%s1 + $0xb10] sm:$0xf]
  %v807 = vld [vmem:[%s1 + $0xb14] sm:$0xf]
  %v808 = vld [vmem:[%s1 + $0xb18] sm:$0xf]
  %v809 = vld [vmem:[%s1 + $0xb1c] sm:$0xf]
  %v810 = vld [vmem:[%s1 + $0xb20] sm:$0xf]
  %v811 = vld [vmem:[%s1 + $0xb24] sm:$0xf]
  %v812 = vld [vmem:[%s1 + $0xb28] sm:$0xf]
  %v813 = vld [vmem:[%s1 + $0xb2c] sm:$0xf]
  %v814 = vld [vmem:[%s1 + $0xb30] sm:$0xf]
  %v815 = vld [vmem:[%s1 + $0xb34] sm:$0xf]
  %v816 = vld [vmem:[%s1 + $0xb38] sm:$0xf]
  %v817 = vld [vmem:[%s1 + $0xb3c] sm:$0xf]
  %v818 = vld [vmem:[%s1 + $0xb40] sm:$0xf]
  %v819 = vld [vmem:[%s1 + $0xb44] sm:$0xf]
  %v820 = vld [vmem:[%s1 + $0xb48] sm:$0xf]
  %v821 = vld [vmem:[%s1 + $0xb4c] sm:$0xf]
  %v822 = vld [vmem:[%s1 + $0xb50] sm:$0xf]
  %v823 = vld [vmem:[%s1 + $0xb54] sm:$0xf]
  %v824 = vld [vmem:[%s1 + $0xb58] sm:$0xf]
  %v825 = vld [vmem:[%s1 + $0xb5c] sm:$0xf]
  %v826 = vld [vmem:[%s1 + $0xb60] sm:$0xf]
  %v827 = vld [vmem:[%s1 + $0xb64] sm:$0xf]
  %v828 = vld [vmem:[%s1 + $0xb68] sm:$0xf]
  %v829 = vld [vmem:[%s1 + $0xb6c] sm:$0xf]
  %v830 = vld [vmem:[%s1 + $0xb70] sm:$0xf]
  %v831 = vld [vmem:[%s1 + $0xb74] sm:$0xf]
  %v832 = vld [vmem:[%s1 + $0xb78] sm:$0xf]
  %v833 = vld [vmem:[%s1 + $0xb7c] sm:$0xf]
  %v834 = vld [vmem:[%s1 + $0xb80] sm:$0xf]
  %v835 = vld [vmem:[%s1 + $0xb84] sm:$0xf]
  %v836 = vld [vmem:[%s1 + $0xb88] sm:$0xf]
  %v837 = vld [vmem:[%s1 + $0xb8c] sm:$0xf]
  %v838 = vld [vmem:[%s1 + $0xb90] sm:$0xf]
  %v839 = vld [vmem:[%s1 + $0xb94] sm:$0xf]
  %v840 = vld [vmem:[%s1 + $0xb98] sm:$0xf]
  %v841 = vld [vmem:[%s1 + $0xb9c] sm:$0xf]
  %v842 = vld [vmem:[%s1 + $0xba0] sm:$0xf]
  %v843 = vld [vmem:[%s1 + $0xba4] sm:$0xf]
  %v844 = vld [vmem:[%s1 + $0xba8] sm:$0xf]
  %v845 = vld [vmem:[%s1 + $0xbac] sm:$0xf]
  %v846 = vld [vmem:[%s1 + $0xbb0] sm:$0xf]
  %v847 = vld [vmem:[%s1 + $0xbb4] sm:$0xf]
  %v848 = vld [vmem:[%s1 + $0xbb8] sm:$0xf]
  %v849 = vld [vmem:[%s1 + $0xbbc] sm:$0xf]
  %v850 = vld [vmem:[%s1 + $0xbc0] sm:$0xf]
  %v851 = vld [vmem:[%s1 + $0xbc4] sm:$0xf]
  %v852 = vld [vmem:[%s1 + $0xbc8] sm:$0xf]
  %v853 = vld [vmem:[%s1 + $0xbcc] sm:$0xf]
  %v854 = vld [vmem:[%s1 + $0xbd0] sm:$0xf]
  %v855 = vld [vmem:[%s1 + $0xbd4] sm:$0xf]
  %v856 = vld [vmem:[%s1 + $0xbd8] sm:$0xf]
  %v857 = vld [vmem:[%s1 + $0xbdc] sm:$0xf]
  %v858 = vld [vmem:[%s1 + $0xbe0] sm:$0xf]
  %v859 = vld [vmem:[%s1 + $0xbe4] sm:$0xf]
  %v860 = vld [vmem:[%s1 + $0xbe8] sm:$0xf]
  %v861 = vld [vmem:[%s1 + $0xbec] sm:$0xf]
  %v862 = vld [vmem:[%s1 + $0xbf0] sm:$0xf]
  %v863 = vld [vmem:[%s1 + $0xbf4] sm:$0xf]
  %v864 = vld [vmem:[%s1 + $0xbf8] sm:$0xf]
  %v865 = vld [vmem:[%s1 + $0xbfc] sm:$0xf]
  %v866 = vld [vmem:[%s1 + $0xc00] sm:$0xf]
  %v867 = vld [vmem:[%s1 + $0xc04] sm:$0xf]
  %v868 = vld [vmem:[%s1 + $0xc08] sm:$0xf]
  %v869 = vld [vmem:[%s1 + $0xc0c] sm:$0xf]
  %v870 = vld [vmem:[%s1 + $0xc10] sm:$0xf]
  %v871 = vld [vmem:[%s1 + $0xc14] sm:$0xf]
  %v872 = vld [vmem:[%s1 + $0xc18] sm:$0xf]
  %v873 = vld [vmem:[%s1 + $0xc1c] sm:$0xf]
  %v874 = vld [vmem:[%s1 + $0xc20] sm:$0xf]
  %v875 = vld [vmem:[%s1 + $0xc24] sm:$0xf]
  %v876 = vld [vmem:[%s1 + $0xc28] sm:$0xf]
  %v877 = vld [vmem:[%s1 + $0xc2c] sm:$0xf]
  %v878 = vld [vmem:[%s1 + $0xc30] sm:$0xf]
  %v879 = vld [vmem:[%s1 + $0xc34] sm:$0xf]
  %v880 = vld [vmem:[%s1 + $0xc38] sm:$0xf]
  %v881 = vld [vmem:[%s1 + $0xc3c] sm:$0xf]
  %v882 = vld [vmem:[%s1 + $0xc40] sm:$0xf]
  %v883 = vld [vmem:[%s1 + $0xc44] sm:$0xf]
  %v884 = vld [vmem:[%s1 + $0xc48] sm:$0xf]
  %v885 = vld [vmem:[%s1 + $0xc4c] sm:$0xf]
  %v886 = vld [vmem:[%s1 + $0xc50] sm:$0xf]
  %v887 = vld [vmem:[%s1 + $0xc54] sm:$0xf]
  %v888 = vld [vmem:[%s1 + $0xc58] sm:$0xf]
  %v889 = vld [vmem:[%s1 + $0xc5c] sm:$0xf]
  %v890 = vld [vmem:[%s1 + $0xc60] sm:$0xf]
  %v891 = vld [vmem:[%s1 + $0xc64] sm:$0xf]
  %v892 = vld [vmem:[%s1 + $0xc68] sm:$0xf]
  %v893 = vld [vmem:[%s1 + $0xc6c] sm:$0xf]
  %v894 = vld [vmem:[%s1 + $0xc70] sm:$0xf]
  %v895 = vld [vmem:[%s1 + $0xc74] sm:$0xf]
  %v896 = vld [vmem:[%s1 + $0xc78] sm:$0xf]
  %v897 = vld [vmem:[%s1 + $0xc7c] sm:$0xf]
  %v898 = vld [vmem:[%s1 + $0xc80] sm:$0xf]
  %v899 = vld [vmem:[%s1 + $0xc84] sm:$0xf]
  %v900 = vld [vmem:[%s1 + $0xc88] sm:$0xf]
  %v901 = vld [vmem:[%s1 + $0xc8c] sm:$0xf]
  %v902 = vld [vmem:[%s1 + $0xc90] sm:$0xf]
  %v903 = vld [vmem:[%s1 + $0xc94] sm:$0xf]
  %v904 = vld [vmem:[%s1 + $0xc98] sm:$0xf]
  %v905 = vld [vmem:[%s1 + $0xc9c] sm:$0xf]
  %v906 = vld [vmem:[%s1 + $0xca0] sm:$0xf]
  %v907 = vld [vmem:[%s1 + $0xca4] sm:$0xf]
  %v908 = vld [vmem:[%s1 + $0xca8] sm:$0xf]
  %v909 = vld [vmem:[%s1 + $0xcac] sm:$0xf]
  %v910 = vld [vmem:[%s1 + $0xcb0] sm:$0xf]
  %v911 = vld [vmem:[%s1 + $0xcb4] sm:$0xf]
  %v912 = vld [vmem:[%s1 + $0xcb8] sm:$0xf]
  %v913 = vld [vmem:[%s1 + $0xcbc] sm:$0xf]
  %v914 = vld [vmem:[%s1 + $0xcc0] sm:$0xf]
  %v915 = vld [vmem:[%s1 + $0xcc4] sm:$0xf]
  %v916 = vld [vmem:[%s1 + $0xcc8] sm:$0xf]
  %v917 = vld [vmem:[%s1 + $0xccc] sm:$0xf]
  %v918 = vld [vmem:[%s1 + $0xcd0] sm:$0xf]
  %v919 = vld [vmem:[%s1 + $0xcd4] sm:$0xf]
  %v920 = vld [vmem:[%s1 + $0xcd8] sm:$0xf]
  %v921 = vld [vmem:[%s1 + $0xcdc] sm:$0xf]
  %v922 = vld [vmem:[%s1 + $0xce0] sm:$0xf]
  %v923 = vld [vmem:[%s1 + $0xce4] sm:$0xf]
  %v924 = vld [vmem:[%s1 + $0xce8] sm:$0xf]
  %v925 = vld [vmem:[%s1 + $0xcec] sm:$0xf]
  %v926 = vld [vmem:[%s1 + $0xcf0] sm:$0xf]
  %v927 = vld [vmem:[%s1 + $0xcf4] sm:$0xf]
  %v928 = vld [vmem:[%s1 + $0xcf8] sm:$0xf]
  %v929 = vld [vmem:[%s1 + $0xcfc] sm:$0xf]
  %v930 = vld [vmem:[%s1 + $0xd00] sm:$0xf]
  %v931 = vld [vmem:[%s1 + $0xd04] sm:$0xf]
  %v932 = vld [vmem:[%s1 + $0xd08] sm:$0xf]
  %v933 = vld [vmem:[%s1 + $0xd0c] sm:$0xf]
  %v934 = vld [vmem:[%s1 + $0xd10] sm:$0xf]
  %v935 = vld [vmem:[%s1 + $0xd14] sm:$0xf]
  %v936 = vld [vmem:[%s1 + $0xd18] sm:$0xf]
  %v937 = vld [vmem:[%s1 + $0xd1c] sm:$0xf]
  %v938 = vld [vmem:[%s1 + $0xd20] sm:$0xf]
  %v939 = vld [vmem:[%s1 + $0xd24] sm:$0xf]
  %v940 = vld [vmem:[%s1 + $0xd28] sm:$0xf]
  %v941 = vld [vmem:[%s1 + $0xd2c] sm:$0xf]
  %v942 = vld [vmem:[%s1 + $0xd30] sm:$0xf]
  %v943 = vld [vmem:[%s1 + $0xd34] sm:$0xf]
  %v944 = vld [vmem:[%s1 + $0xd38] sm:$0xf]
  %v945 = vld [vmem:[%s1 + $0xd3c] sm:$0xf]
  %v946 = vld [vmem:[%s1 + $0xd40] sm:$0xf]
  %v947 = vld [vmem:[%s1 + $0xd44] sm:$0xf]
  %v948 = vld [vmem:[%s1 + $0xd48] sm:$0xf]
  %v949 = vld [vmem:[%s1 + $0xd4c] sm:$0xf]
  %v950 = vld [vmem:[%s1 + $0xd50] sm:$0xf]
  %v951 = vld [vmem:[%s1 + $0xd54] sm:$0xf]
  %v952 = vld [vmem:[%s1 + $0xd58] sm:$0xf]
  %v953 = vld [vmem:[%s1 + $0xd5c] sm:$0xf]
  %v954 = vld [vmem:[%s1 + $0xd60] sm:$0xf]
  %v955 = vld [vmem:[%s1 + $0xd64] sm:$0xf]
  %v956 = vld [vmem:[%s1 + $0xd68] sm:$0xf]
  %v957 = vld [vmem:[%s1 + $0xd6c] sm:$0xf]
  %v958 = vld [vmem:[%s1 + $0xd70] sm:$0xf]
  %v959 = vld [vmem:[%s1 + $0xd74] sm:$0xf]
  %v960 = vld [vmem:[%s1 + $0xd78] sm:$0xf]
  %v961 = vld [vmem:[%s1 + $0xd7c] sm:$0xf]
  %v962 = vld [vmem:[%s1 + $0xd80] sm:$0xf]
  %v963 = vld [vmem:[%s1 + $0xd84] sm:$0xf]
  %v964 = vld [vmem:[%s1 + $0xd88] sm:$0xf]
  %v965 = vld [vmem:[%s1 + $0xd8c] sm:$0xf]
  %v966 = vld [vmem:[%s1 + $0xd90] sm:$0xf]
  %v967 = vld [vmem:[%s1 + $0xd94] sm:$0xf]
  %v968 = vld [vmem:[%s1 + $0xd98] sm:$0xf]
  %v969 = vld [vmem:[%s1 + $0xd9c] sm:$0xf]
  %v970 = vld [vmem:[%s1 + $0xda0] sm:$0xf]
  %v971 = vld [vmem:[%s1 + $0xda4] sm:$0xf]
  %v972 = vld [vmem:[%s1 + $0xda8] sm:$0xf]
  %v973 = vld [vmem:[%s1 + $0xdac] sm:$0xf]
  %v974 = vld [vmem:[%s1 + $0xdb0] sm:$0xf]
  %v975 = vld [vmem:[%s1 + $0xdb4] sm:$0xf]
  %v976 = vld [vmem:[%s1 + $0xdb8] sm:$0xf]
  %v977 = vld [vmem:[%s1 + $0xdbc] sm:$0xf]
  %v978 = vld [vmem:[%s1 + $0xdc0] sm:$0xf]
  %v979 = vld [vmem:[%s1 + $0xdc4] sm:$0xf]
  %v980 = vld [vmem:[%s1 + $0xdc8] sm:$0xf]
  %v981 = vld [vmem:[%s1 + $0xdcc] sm:$0xf]
  %v982 = vld [vmem:[%s1 + $0xdd0] sm:$0xf]
  %v983 = vld [vmem:[%s1 + $0xdd4] sm:$0xf]
  %v984 = vld [vmem:[%s1 + $0xdd8] sm:$0xf]
  %v985 = vld [vmem:[%s1 + $0xddc] sm:$0xf]
  %v986 = vld [vmem:[%s1 + $0xde0] sm:$0xf]
  %v987 = vld [vmem:[%s1 + $0xde4] sm:$0xf]
  %v988 = vld [vmem:[%s1 + $0xde8] sm:$0xf]
  %v989 = vld [vmem:[%s1 + $0xdec] sm:$0xf]
  %v990 = vld [vmem:[%s1 + $0xdf0] sm:$0xf]
  %v991 = vld [vmem:[%s1 + $0xdf4] sm:$0xf]
  %v992 = vld [vmem:[%s1 + $0xdf8] sm:$0xf]
  %v993 = vld [vmem:[%s1 + $0xdfc] sm:$0xf]
  %v994 = vld [vmem:[%s1 + $0xe00] sm:$0xf]
  %v995 = vld [vmem:[%s1 + $0xe04] sm:$0xf]
  %v996 = vld [vmem:[%s1 + $0xe08] sm:$0xf]
  %v997 = vld [vmem:[%s1 + $0xe0c] sm:$0xf]
  %v998 = vld [vmem:[%s1 + $0xe10] sm:$0xf]
  %v999 = vld [vmem:[%s1 + $0xe14] sm:$0xf]
  %v1000 = vld [vmem:[%s1 + $0xe18] sm:$0xf]
  %v1001 = vld [vmem:[%s1 + $0xe1c] sm:$0xf]
  %v1002 = vld [vmem:[%s1 + $0xe20] sm:$0xf]
  %v1003 = vld [vmem:[%s1 + $0xe24] sm:$0xf]
  %v1004 = vld [vmem:[%s1 + $0xe28] sm:$0xf]
  %v1005 = vld [vmem:[%s1 + $0xe2c] sm:$0xf]
  %v1006 = vld [vmem:[%s1 + $0xe30] sm:$0xf]
  %v1007 = vld [vmem:[%s1 + $0xe34] sm:$0xf]
  %v1008 = vld [vmem:[%s1 + $0xe38] sm:$0xf]
  %v1009 = vld [vmem:[%s1 + $0xe3c] sm:$0xf]
  %v1010 = vld [vmem:[%s1 + $0xe40] sm:$0xf]
  %v1011 = vld [vmem:[%s1 + $0xe44] sm:$0xf]
  %v1012 = vld [vmem:[%s1 + $0xe48] sm:$0xf]
  %v1013 = vld [vmem:[%s1 + $0xe4c] sm:$0xf]
  %v1014 = vld [vmem:[%s1 + $0xe50] sm:$0xf]
  %v1015 = vld [vmem:[%s1 + $0xe54] sm:$0xf]
  %v1016 = vld [vmem:[%s1 + $0xe58] sm:$0xf]
  %v1017 = vld [vmem:[%s1 + $0xe5c] sm:$0xf]
  %v1018 = vld [vmem:[%s1 + $0xe60] sm:$0xf]
  %v1019 = vld [vmem:[%s1 + $0xe64] sm:$0xf]
  %v1020 = vld [vmem:[%s1 + $0xe68] sm:$0xf]
  %v1021 = vld [vmem:[%s1 + $0xe6c] sm:$0xf]
  %v1022 = vld [vmem:[%s1 + $0xe70] sm:$0xf]
  %v1023 = vld [vmem:[%s1 + $0xe74] sm:$0xf]
  %v1024 = vld [vmem:[%s1 + $0xe78] sm:$0xf]
  %v1025 = vld [vmem:[%s1 + $0xe7c] sm:$0xf]
  %v1026 = vld [vmem:[%s1 + $0xe80] sm:$0xf]
  %v1027 = vld [vmem:[%s1 + $0xe84] sm:$0xf]
  %v1028 = vld [vmem:[%s1 + $0xe88] sm:$0xf]
  %v1029 = vld [vmem:[%s1 + $0xe8c] sm:$0xf]
  %v1030 = vld [vmem:[%s1 + $0xe90] sm:$0xf]
  %v1031 = vld [vmem:[%s1 + $0xe94] sm:$0xf]
  %v1032 = vld [vmem:[%s1 + $0xe98] sm:$0xf]
  %v1033 = vld [vmem:[%s1 + $0xe9c] sm:$0xf]
  %v1034 = vld [vmem:[%s1 + $0xea0] sm:$0xf]
  %v1035 = vld [vmem:[%s1 + $0xea4] sm:$0xf]
  %v1036 = vld [vmem:[%s1 + $0xea8] sm:$0xf]
  %v1037 = vld [vmem:[%s1 + $0xeac] sm:$0xf]
  %v1038 = vld [vmem:[%s1 + $0xeb0] sm:$0xf]
  %v1039 = vld [vmem:[%s1 + $0xeb4] sm:$0xf]
  %v1040 = vld [vmem:[%s1 + $0xeb8] sm:$0xf]
  %v1041 = vld [vmem:[%s1 + $0xebc] sm:$0xf]
  %v1042 = vld [vmem:[%s1 + $0xec0] sm:$0xf]
  %v1043 = vld [vmem:[%s1 + $0xec4] sm:$0xf]
  %v1044 = vld [vmem:[%s1 + $0xec8] sm:$0xf]
  %v1045 = vld [vmem:[%s1 + $0xecc] sm:$0xf]
  %v1046 = vld [vmem:[%s1 + $0xed0] sm:$0xf]
  %v1047 = vld [vmem:[%s1 + $0xed4] sm:$0xf]
  %v1048 = vld [vmem:[%s1 + $0xed8] sm:$0xf]
  %v1049 = vld [vmem:[%s1 + $0xedc] sm:$0xf]
  %v1050 = vld [vmem:[%s1 + $0xee0] sm:$0xf]
  %v1051 = vld [vmem:[%s1 + $0xee4] sm:$0xf]
  %v1052 = vld [vmem:[%s1 + $0xee8] sm:$0xf]
  %v1053 = vld [vmem:[%s1 + $0xeec] sm:$0xf]
  %v1054 = vld [vmem:[%s1 + $0xef0] sm:$0xf]
  %v1055 = vld [vmem:[%s1 + $0xef4] sm:$0xf]
  %v1056 = vld [vmem:[%s1 + $0xef8] sm:$0xf]
  %v1057 = vld [vmem:[%s1 + $0xefc] sm:$0xf]
  %v1058 = vld [vmem:[%s1 + $0xf00] sm:$0xf]
  %v1059 = vld [vmem:[%s1 + $0xf04] sm:$0xf]
  %v1060 = vld [vmem:[%s1 + $0xf08] sm:$0xf]
  %v1061 = vld [vmem:[%s1 + $0xf0c] sm:$0xf]
  %v1062 = vld [vmem:[%s1 + $0xf10] sm:$0xf]
  %v1063 = vld [vmem:[%s1 + $0xf14] sm:$0xf]
  %v1064 = vld [vmem:[%s1 + $0xf18] sm:$0xf]
  %v1065 = vld [vmem:[%s1 + $0xf1c] sm:$0xf]
  %v1066 = vld [vmem:[%s1 + $0xf20] sm:$0xf]
  %v1067 = vld [vmem:[%s1 + $0xf24] sm:$0xf]
  %v1068 = vld [vmem:[%s1 + $0xf28] sm:$0xf]
  %v1069 = vld [vmem:[%s1 + $0xf2c] sm:$0xf]
  %v1070 = vld [vmem:[%s1 + $0xf30] sm:$0xf]
  %v1071 = vld [vmem:[%s1 + $0xf34] sm:$0xf]
  %v1072 = vld [vmem:[%s1 + $0xf38] sm:$0xf]
  %v1073 = vld [vmem:[%s1 + $0xf3c] sm:$0xf]
  %v1074 = vld [vmem:[%s1 + $0xf40] sm:$0xf]
  %v1075 = vld [vmem:[%s1 + $0xf44] sm:$0xf]
  %v1076 = vld [vmem:[%s1 + $0xf48] sm:$0xf]
  %v1077 = vld [vmem:[%s1 + $0xf4c] sm:$0xf]
  %v1078 = vld [vmem:[%s1 + $0xf50] sm:$0xf]
  %v1079 = vld [vmem:[%s1 + $0xf54] sm:$0xf]
  %v1080 = vld [vmem:[%s1 + $0xf58] sm:$0xf]
  %v1081 = vld [vmem:[%s1 + $0xf5c] sm:$0xf]
  %v1082 = vld [vmem:[%s1 + $0xf60] sm:$0xf]
  %v1083 = vld [vmem:[%s1 + $0xf64] sm:$0xf]
  %v1084 = vld [vmem:[%s1 + $0xf68] sm:$0xf]
  %v1085 = vld [vmem:[%s1 + $0xf6c] sm:$0xf]
  %v1086 = vld [vmem:[%s1 + $0xf70] sm:$0xf]
  %v1087 = vld [vmem:[%s1 + $0xf74] sm:$0xf]
  %v1088 = vld [vmem:[%s1 + $0xf78] sm:$0xf]
  %v1089 = vld [vmem:[%s1 + $0xf7c] sm:$0xf]
  %v1090 = vld [vmem:[%s1 + $0xf80] sm:$0xf]
  %v1091 = vld [vmem:[%s1 + $0xf84] sm:$0xf]
  %v1092 = vld [vmem:[%s1 + $0xf88] sm:$0xf]
  %v1093 = vld [vmem:[%s1 + $0xf8c] sm:$0xf]
  %v1094 = vld [vmem:[%s1 + $0xf90] sm:$0xf]
  %v1095 = vld [vmem:[%s1 + $0xf94] sm:$0xf]
  %v1096 = vld [vmem:[%s1 + $0xf98] sm:$0xf]
  %v1097 = vld [vmem:[%s1 + $0xf9c] sm:$0xf]
  %v1098 = vld [vmem:[%s1 + $0xfa0] sm:$0xf]
  %v1099 = vld [vmem:[%s1 + $0xfa4] sm:$0xf]
  %v1100 = vld [vmem:[%s1 + $0xfa8] sm:$0xf]
  %v1101 = vld [vmem:[%s1 + $0xfac] sm:$0xf]
  %v1102 = vld [vmem:[%s1 + $0xfb0] sm:$0xf]
  %v1103 = vld [vmem:[%s1 + $0xfb4] sm:$0xf]
  %v1104 = vld [vmem:[%s1 + $0xfb8] sm:$0xf]
  %v1105 = vld [vmem:[%s1 + $0xfbc] sm:$0xf]
  %v1106 = vld [vmem:[%s1 + $0xfc0] sm:$0xf]
  %v1107 = vld [vmem:[%s1 + $0xfc4] sm:$0xf]
  %v1108 = vld [vmem:[%s1 + $0xfc8] sm:$0xf]
  %v1109 = vld [vmem:[%s1 + $0xfcc] sm:$0xf]
  %v1110 = vld [vmem:[%s1 + $0xfd0] sm:$0xf]
  %v1111 = vld [vmem:[%s1 + $0xfd4] sm:$0xf]
  %v1112 = vld [vmem:[%s1 + $0xfd8] sm:$0xf]
  %v1113 = vld [vmem:[%s1 + $0xfdc] sm:$0xf]
  %v1114 = vld [vmem:[%s1 + $0xfe0] sm:$0xf]
  %v1115 = vld [vmem:[%s1 + $0xfe4] sm:$0xf]
  %v1116 = vld [vmem:[%s1 + $0xfe8] sm:$0xf]
  %v1117 = vld [vmem:[%s1 + $0xfec] sm:$0xf]
  %v1118 = vld [vmem:[%s1 + $0xff0] sm:$0xf]
  %v1119 = vld [vmem:[%s1 + $0xff4] sm:$0xf]
  %v1120 = vld [vmem:[%s1 + $0xff8] sm:$0xf]
  %v1121 = vld [vmem:[%s1 + $0xffc] sm:$0xf]
  %v1122 = vld [vmem:[%s1 + $0x1000] sm:$0xf]
  %v1123 = vld [vmem:[%s1 + $0x1004] sm:$0xf]
  %v1124 = vld [vmem:[%s1 + $0x1008] sm:$0xf]
  %v1125 = vld [vmem:[%s1 + $0x100c] sm:$0xf]
  %v1126 = vld [vmem:[%s1 + $0x1010] sm:$0xf]
  %v1127 = vld [vmem:[%s1 + $0x1014] sm:$0xf]
  %v1128 = vld [vmem:[%s1 + $0x1018] sm:$0xf]
  %v1129 = vld [vmem:[%s1 + $0x101c] sm:$0xf]
  %v1130 = vld [vmem:[%s1 + $0x1020] sm:$0xf]
  %v1131 = vld [vmem:[%s1 + $0x1024] sm:$0xf]
  %v1132 = vld [vmem:[%s1 + $0x1028] sm:$0xf]
  %v1133 = vld [vmem:[%s1 + $0x102c] sm:$0xf]
  %v1134 = vld [vmem:[%s1 + $0x1030] sm:$0xf]
  %v1135 = vld [vmem:[%s1 + $0x1034] sm:$0xf]
  %v1136 = vld [vmem:[%s1 + $0x1038] sm:$0xf]
  %v1137 = vld [vmem:[%s1 + $0x103c] sm:$0xf]
  %v1138 = vld [vmem:[%s1 + $0x1040] sm:$0xf]
  %v1139 = vld [vmem:[%s1 + $0x1044] sm:$0xf]
  %v1140 = vld [vmem:[%s1 + $0x1048] sm:$0xf]
  %v1141 = vld [vmem:[%s1 + $0x104c] sm:$0xf]
  %v1142 = vld [vmem:[%s1 + $0x1050] sm:$0xf]
  %v1143 = vld [vmem:[%s1 + $0x1054] sm:$0xf]
  %v1144 = vld [vmem:[%s1 + $0x1058] sm:$0xf]
  %v1145 = vld [vmem:[%s1 + $0x105c] sm:$0xf]
  %v1146 = vld [vmem:[%s1 + $0x1060] sm:$0xf]
  %v1147 = vld [vmem:[%s1 + $0x1064] sm:$0xf]
  %v1148 = vld [vmem:[%s1 + $0x1068] sm:$0xf]
  %v1149 = vld [vmem:[%s1 + $0x106c] sm:$0xf]
  %v1150 = vld [vmem:[%s1 + $0x1070] sm:$0xf]
  %v1151 = vld [vmem:[%s1 + $0x1074] sm:$0xf]
  %v1152 = vld [vmem:[%s1 + $0x1078] sm:$0xf]
  %v1153 = vld [vmem:[%s1 + $0x107c] sm:$0xf]
  %v1154 = vld [vmem:[%s1 + $0x1080] sm:$0xf]
  %v1155 = vld [vmem:[%s1 + $0x1084] sm:$0xf]
  %v1156 = vld [vmem:[%s1 + $0x1088] sm:$0xf]
  %v1157 = vld [vmem:[%s1 + $0x108c] sm:$0xf]
  %v1158 = vld [vmem:[%s1 + $0x1090] sm:$0xf]
  %v1159 = vld [vmem:[%s1 + $0x1094] sm:$0xf]
  %v1160 = vld [vmem:[%s1 + $0x1098] sm:$0xf]
  %v1161 = vld [vmem:[%s1 + $0x109c] sm:$0xf]
  %v1162 = vld [vmem:[%s1 + $0x10a0] sm:$0xf]
  %v1163 = vld [vmem:[%s1 + $0x10a4] sm:$0xf]
  %v1164 = vld [vmem:[%s1 + $0x10a8] sm:$0xf]
  %v1165 = vld [vmem:[%s1 + $0x10ac] sm:$0xf]
  %v1166 = vld [vmem:[%s1 + $0x10b0] sm:$0xf]
  %v1167 = vld [vmem:[%s1 + $0x10b4] sm:$0xf]
  %v1168 = vld [vmem:[%s1 + $0x10b8] sm:$0xf]
  %v1169 = vld [vmem:[%s1 + $0x10bc] sm:$0xf]
  %v1170 = vld [vmem:[%s1 + $0x10c0] sm:$0xf]
  %v1171 = vld [vmem:[%s1 + $0x10c4] sm:$0xf]
  %v1172 = vld [vmem:[%s1 + $0x10c8] sm:$0xf]
  %v1173 = vld [vmem:[%s1 + $0x10cc] sm:$0xf]
  %v1174 = vld [vmem:[%s1 + $0x10d0] sm:$0xf]
  %v1175 = vld [vmem:[%s1 + $0x10d4] sm:$0xf]
  %v1176 = vld [vmem:[%s1 + $0x10d8] sm:$0xf]
  %v1177 = vld [vmem:[%s1 + $0x10dc] sm:$0xf]
  %v1178 = vld [vmem:[%s1 + $0x10e0] sm:$0xf]
  %v1179 = vld [vmem:[%s1 + $0x10e4] sm:$0xf]
  %v1180 = vld [vmem:[%s1 + $0x10e8] sm:$0xf]
  %v1181 = vld [vmem:[%s1 + $0x10ec] sm:$0xf]
  %v1182 = vld [vmem:[%s1 + $0x10f0] sm:$0xf]
  %v1183 = vld [vmem:[%s1 + $0x10f4] sm:$0xf]
  %v1184 = vld [vmem:[%s1 + $0x10f8] sm:$0xf]
  %v1185 = vld [vmem:[%s1 + $0x10fc] sm:$0xf]
  %v1186 = vld [vmem:[%s1 + $0x1100] sm:$0xf]
  %v1187 = vld [vmem:[%s1 + $0x1104] sm:$0xf]
  %v1188 = vld [vmem:[%s1 + $0x1108] sm:$0xf]
  %v1189 = vld [vmem:[%s1 + $0x110c] sm:$0xf]
  %v1190 = vld [vmem:[%s1 + $0x1110] sm:$0xf]
  %v1191 = vld [vmem:[%s1 + $0x1114] sm:$0xf]
  %v1192 = vld [vmem:[%s1 + $0x1118] sm:$0xf]
  %v1193 = vld [vmem:[%s1 + $0x111c] sm:$0xf]
  %v1194 = vld [vmem:[%s1 + $0x1120] sm:$0xf]
  %v1195 = vld [vmem:[%s1 + $0x1124] sm:$0xf]
  %v1196 = vld [vmem:[%s1 + $0x1128] sm:$0xf]
  %v1197 = vld [vmem:[%s1 + $0x112c] sm:$0xf]
  %v1198 = vld [vmem:[%s1 + $0x1130] sm:$0xf]
  %v1199 = vld [vmem:[%s1 + $0x1134] sm:$0xf]
  %v1200 = vld [vmem:[%s1 + $0x1138] sm:$0xf]
  %v1201 = vld [vmem:[%s1 + $0x113c] sm:$0xf]
  %v1202 = vld [vmem:[%s1 + $0x1140] sm:$0xf]
  %v1203 = vld [vmem:[%s1 + $0x1144] sm:$0xf]
  %v1204 = vld [vmem:[%s1 + $0x1148] sm:$0xf]
  %v1205 = vld [vmem:[%s1 + $0x114c] sm:$0xf]
  %v1206 = vld [vmem:[%s1 + $0x1150] sm:$0xf]
  %v1207 = vld [vmem:[%s1 + $0x1154] sm:$0xf]
  %v1208 = vld [vmem:[%s1 + $0x1158] sm:$0xf]
  %v1209 = vld [vmem:[%s1 + $0x115c] sm:$0xf]
  %v1210 = vld [vmem:[%s1 + $0x1160] sm:$0xf]
  %v1211 = vld [vmem:[%s1 + $0x1164] sm:$0xf]
  %v1212 = vld [vmem:[%s1 + $0x1168] sm:$0xf]
  %v1213 = vld [vmem:[%s1 + $0x116c] sm:$0xf]
  %v1214 = vld [vmem:[%s1 + $0x1170] sm:$0xf]
  %v1215 = vld [vmem:[%s1 + $0x1174] sm:$0xf]
  %v1216 = vld [vmem:[%s1 + $0x1178] sm:$0xf]
  %v1217 = vld [vmem:[%s1 + $0x117c] sm:$0xf]
  %v1218 = vld [vmem:[%s1 + $0x1180] sm:$0xf]
  %v1219 = vld [vmem:[%s1 + $0x1184] sm:$0xf]
  %v1220 = vld [vmem:[%s1 + $0x1188] sm:$0xf]
  %v1221 = vld [vmem:[%s1 + $0x118c] sm:$0xf]
  %v1222 = vld [vmem:[%s1 + $0x1190] sm:$0xf]
  %v1223 = vld [vmem:[%s1 + $0x1194] sm:$0xf]
  %v1224 = vld [vmem:[%s1 + $0x1198] sm:$0xf]
  %v1225 = vld [vmem:[%s1 + $0x119c] sm:$0xf]
  %v1226 = vld [vmem:[%s1 + $0x11a0] sm:$0xf]
  %v1227 = vld [vmem:[%s1 + $0x11a4] sm:$0xf]
  %v1228 = vld [vmem:[%s1 + $0x11a8] sm:$0xf]
  %v1229 = vld [vmem:[%s1 + $0x11ac] sm:$0xf]
  %v1230 = vld [vmem:[%s1 + $0x11b0] sm:$0xf]
  %v1231 = vld [vmem:[%s1 + $0x11b4] sm:$0xf]
  %v1232 = vld [vmem:[%s1 + $0x11b8] sm:$0xf]
  %v1233 = vld [vmem:[%s1 + $0x11bc] sm:$0xf]
  %v1234 = vld [vmem:[%s1 + $0x11c0] sm:$0xf]
  %v1235 = vld [vmem:[%s1 + $0x11c4] sm:$0xf]
  %v1236 = vld [vmem:[%s1 + $0x11c8] sm:$0xf]
  %v1237 = vld [vmem:[%s1 + $0x11cc] sm:$0xf]
  %v1238 = vld [vmem:[%s1 + $0x11d0] sm:$0xf]
  %v1239 = vld [vmem:[%s1 + $0x11d4] sm:$0xf]
  %v1240 = vld [vmem:[%s1 + $0x11d8] sm:$0xf]
  %v1241 = vld [vmem:[%s1 + $0x11dc] sm:$0xf]
  %v1242 = vld [vmem:[%s1 + $0x11e0] sm:$0xf]
  %v1243 = vld [vmem:[%s1 + $0x11e4] sm:$0xf]
  %v1244 = vld [vmem:[%s1 + $0x11e8] sm:$0xf]
  %v1245 = vld [vmem:[%s1 + $0x11ec] sm:$0xf]
  %v1246 = vld [vmem:[%s1 + $0x11f0] sm:$0xf]
  %v1247 = vld [vmem:[%s1 + $0x11f4] sm:$0xf]
  %v1248 = vld [vmem:[%s1 + $0x11f8] sm:$0xf]
  %v1249 = vld [vmem:[%s1 + $0x11fc] sm:$0xf]
  %v1250 = vld [vmem:[%s1 + $0x1200] sm:$0xf]
  %v1251 = vld [vmem:[%s1 + $0x1204] sm:$0xf]
  %v1252 = vld [vmem:[%s1 + $0x1208] sm:$0xf]
  %v1253 = vld [vmem:[%s1 + $0x120c] sm:$0xf]
  %v1254 = vld [vmem:[%s1 + $0x1210] sm:$0xf]
  %v1255 = vld [vmem:[%s1 + $0x1214] sm:$0xf]
  %v1256 = vld [vmem:[%s1 + $0x1218] sm:$0xf]
  %v1257 = vld [vmem:[%s1 + $0x121c] sm:$0xf]
  %v1258 = vld [vmem:[%s1 + $0x1220] sm:$0xf]
  %v1259 = vld [vmem:[%s1 + $0x1224] sm:$0xf]
  %v1260 = vld [vmem:[%s1 + $0x1228] sm:$0xf]
  %v1261 = vld [vmem:[%s1 + $0x122c] sm:$0xf]
  %v1262 = vld [vmem:[%s1 + $0x1230] sm:$0xf]
  %v1263 = vld [vmem:[%s1 + $0x1234] sm:$0xf]
  %v1264 = vld [vmem:[%s1 + $0x1238] sm:$0xf]
  %v1265 = vld [vmem:[%s1 + $0x123c] sm:$0xf]
  %v1266 = vld [vmem:[%s1 + $0x1240] sm:$0xf]
  %v1267 = vld [vmem:[%s1 + $0x1244] sm:$0xf]
  %v1268 = vld [vmem:[%s1 + $0x1248] sm:$0xf]
  %v1269 = vld [vmem:[%s1 + $0x124c] sm:$0xf]
  %v1270 = vld [vmem:[%s1 + $0x1250] sm:$0xf]
  %v1271 = vld [vmem:[%s1 + $0x1254] sm:$0xf]
  %v1272 = vld [vmem:[%s1 + $0x1258] sm:$0xf]
  %v1273 = vld [vmem:[%s1 + $0x125c] sm:$0xf]
  %v1274 = vld [vmem:[%s1 + $0x1260] sm:$0xf]
  %v1275 = vld [vmem:[%s1 + $0x1264] sm:$0xf]
  %v1276 = vld [vmem:[%s1 + $0x1268] sm:$0xf]
  %v1277 = vld [vmem:[%s1 + $0x126c] sm:$0xf]
  %v1278 = vld [vmem:[%s1 + $0x1270] sm:$0xf]
  %v1279 = vld [vmem:[%s1 + $0x1274] sm:$0xf]
  %v1280 = vld [vmem:[%s1 + $0x1278] sm:$0xf]
  %v1281 = vld [vmem:[%s1 + $0x127c] sm:$0xf]
  %v1282 = vld [vmem:[%s1 + $0x1280] sm:$0xf]
  %v1283 = vld [vmem:[%s1 + $0x1284] sm:$0xf]
  %v1284 = vld [vmem:[%s1 + $0x1288] sm:$0xf]
  %v1285 = vld [vmem:[%s1 + $0x128c] sm:$0xf]
  %v1286 = vld [vmem:[%s1 + $0x1290] sm:$0xf]
  %v1287 = vld [vmem:[%s1 + $0x1294] sm:$0xf]
  %v1288 = vld [vmem:[%s1 + $0x1298] sm:$0xf]
  %v1289 = vld [vmem:[%s1 + $0x129c] sm:$0xf]
  %v1290 = vld [vmem:[%s1 + $0x12a0] sm:$0xf]
  %v1291 = vld [vmem:[%s1 + $0x12a4] sm:$0xf]
  %v1292 = vld [vmem:[%s1 + $0x12a8] sm:$0xf]
  %v1293 = vld [vmem:[%s1 + $0x12ac] sm:$0xf]
  %v1294 = vld [vmem:[%s1 + $0x12b0] sm:$0xf]
  %v1295 = vld [vmem:[%s1 + $0x12b4] sm:$0xf]
  %v1296 = vld [vmem:[%s1 + $0x12b8] sm:$0xf]
  %v1297 = vld [vmem:[%s1 + $0x12bc] sm:$0xf]
  %v1298 = vld [vmem:[%s1 + $0x12c0] sm:$0xf]
  %v1299 = vld [vmem:[%s1 + $0x12c4] sm:$0xf]
  %v1300 = vld [vmem:[%s1 + $0x12c8] sm:$0xf]
  %v1301 = vld [vmem:[%s1 + $0x12cc] sm:$0xf]
  %v1302 = vld [vmem:[%s1 + $0x12d0] sm:$0xf]
  %v1303 = vld [vmem:[%s1 + $0x12d4] sm:$0xf]
  %v1304 = vld [vmem:[%s1 + $0x12d8] sm:$0xf]
  %v1305 = vld [vmem:[%s1 + $0x12dc] sm:$0xf]
  %v1306 = vld [vmem:[%s1 + $0x12e0] sm:$0xf]
  %v1307 = vld [vmem:[%s1 + $0x12e4] sm:$0xf]
  %v1308 = vld [vmem:[%s1 + $0x12e8] sm:$0xf]
  %v1309 = vld [vmem:[%s1 + $0x12ec] sm:$0xf]
  %v1310 = vld [vmem:[%s1 + $0x12f0] sm:$0xf]
  %v1311 = vld [vmem:[%s1 + $0x12f4] sm:$0xf]
  %v1312 = vld [vmem:[%s1 + $0x12f8] sm:$0xf]
  %v1313 = vld [vmem:[%s1 + $0x12fc] sm:$0xf]
  %v1314 = vld [vmem:[%s1 + $0x1300] sm:$0xf]
  %v1315 = vld [vmem:[%s1 + $0x1304] sm:$0xf]
  %v1316 = vld [vmem:[%s1 + $0x1308] sm:$0xf]
  %v1317 = vld [vmem:[%s1 + $0x130c] sm:$0xf]
  %v1318 = vld [vmem:[%s1 + $0x1310] sm:$0xf]
  %v1319 = vld [vmem:[%s1 + $0x1314] sm:$0xf]
  %v1320 = vld [vmem:[%s1 + $0x1318] sm:$0xf]
  %v1321 = vld [vmem:[%s1 + $0x131c] sm:$0xf]
  %v1322 = vld [vmem:[%s1 + $0x1320] sm:$0xf]
  %v1323 = vld [vmem:[%s1 + $0x1324] sm:$0xf]
  %v1324 = vld [vmem:[%s1 + $0x1328] sm:$0xf]
  %v1325 = vld [vmem:[%s1 + $0x132c] sm:$0xf]
  %v1326 = vld [vmem:[%s1 + $0x1330] sm:$0xf]
  %v1327 = vld [vmem:[%s1 + $0x1334] sm:$0xf]
  %v1328 = vld [vmem:[%s1 + $0x1338] sm:$0xf]
  %v1329 = vld [vmem:[%s1 + $0x133c] sm:$0xf]
  %v1330 = vld [vmem:[%s1 + $0x1340] sm:$0xf]
  %v1331 = vld [vmem:[%s1 + $0x1344] sm:$0xf]
  %v1332 = vld [vmem:[%s1 + $0x1348] sm:$0xf]
  %v1333 = vld [vmem:[%s1 + $0x134c] sm:$0xf]
  %v1334 = vld [vmem:[%s1 + $0x1350] sm:$0xf]
  %v1335 = vld [vmem:[%s1 + $0x1354] sm:$0xf]
  %v1336 = vld [vmem:[%s1 + $0x1358] sm:$0xf]
  %v1337 = vld [vmem:[%s1 + $0x135c] sm:$0xf]
  %v1338 = vld [vmem:[%s1 + $0x1360] sm:$0xf]
  %v1339 = vld [vmem:[%s1 + $0x1364] sm:$0xf]
  %v1340 = vld [vmem:[%s1 + $0x1368] sm:$0xf]
  %v1341 = vld [vmem:[%s1 + $0x136c] sm:$0xf]
  %v1342 = vld [vmem:[%s1 + $0x1370] sm:$0xf]
  %v1343 = vld [vmem:[%s1 + $0x1374] sm:$0xf]
  %v1344 = vld [vmem:[%s1 + $0x1378] sm:$0xf]
  %v1345 = vld [vmem:[%s1 + $0x137c] sm:$0xf]
  %v1346 = vld [vmem:[%s1 + $0x1380] sm:$0xf]
  %v1347 = vld [vmem:[%s1 + $0x1384] sm:$0xf]
  %v1348 = vld [vmem:[%s1 + $0x1388] sm:$0xf]
  %v1349 = vld [vmem:[%s1 + $0x138c] sm:$0xf]
  %v1350 = vld [vmem:[%s1 + $0x1390] sm:$0xf]
  %v1351 = vld [vmem:[%s1 + $0x1394] sm:$0xf]
  %v1352 = vld [vmem:[%s1 + $0x1398] sm:$0xf]
  %v1353 = vld [vmem:[%s1 + $0x139c] sm:$0xf]
  %v1354 = vld [vmem:[%s1 + $0x13a0] sm:$0xf]
  %v1355 = vld [vmem:[%s1 + $0x13a4] sm:$0xf]
  %v1356 = vld [vmem:[%s1 + $0x13a8] sm:$0xf]
  %v1357 = vld [vmem:[%s1 + $0x13ac] sm:$0xf]
  %v1358 = vld [vmem:[%s1 + $0x13b0] sm:$0xf]
  %v1359 = vld [vmem:[%s1 + $0x13b4] sm:$0xf]
  %v1360 = vld [vmem:[%s1 + $0x13b8] sm:$0xf]
  %v1361 = vld [vmem:[%s1 + $0x13bc] sm:$0xf]
  %v1362 = vld [vmem:[%s1 + $0x13c0] sm:$0xf]
  %v1363 = vld [vmem:[%s1 + $0x13c4] sm:$0xf]
  %v1364 = vld [vmem:[%s1 + $0x13c8] sm:$0xf]
  %v1365 = vld [vmem:[%s1 + $0x13cc] sm:$0xf]
  %v1366 = vld [vmem:[%s1 + $0x13d0] sm:$0xf]
  %v1367 = vld [vmem:[%s1 + $0x13d4] sm:$0xf]
  %v1368 = vld [vmem:[%s1 + $0x13d8] sm:$0xf]
  %v1369 = vld [vmem:[%s1 + $0x13dc] sm:$0xf]
  %v1370 = vld [vmem:[%s1 + $0x13e0] sm:$0xf]
  %v1371 = vld [vmem:[%s1 + $0x13e4] sm:$0xf]
  %v1372 = vld [vmem:[%s1 + $0x13e8] sm:$0xf]
  %v1373 = vld [vmem:[%s1 + $0x13ec] sm:$0xf]
  %v1374 = vld [vmem:[%s1 + $0x13f0] sm:$0xf]
  %v1375 = vld [vmem:[%s1 + $0x13f4] sm:$0xf]
  %v1376 = vld [vmem:[%s1 + $0x13f8] sm:$0xf]
  %v1377 = vld [vmem:[%s1 + $0x13fc] sm:$0xf]
  %v1458 = vunpack.c.l.b16 %v18
  %v1459 = vunpack.c.h.b16 %v18
  %v1460 = vunpack.c.l.b16 %v19
  %v1461 = vunpack.c.h.b16 %v19
  %v1462 = vunpack.c.l.b16 %v20
  %v1463 = vunpack.c.h.b16 %v20
  %v1464 = vunpack.c.l.b16 %v21
  %v1465 = vunpack.c.h.b16 %v21
  %v1466 = vunpack.c.l.b16 %v22
  %v1467 = vunpack.c.h.b16 %v22
  %v1468 = vunpack.c.l.b16 %v23
  %v1469 = vunpack.c.h.b16 %v23
  %v1470 = vunpack.c.l.b16 %v24
  %v1471 = vunpack.c.h.b16 %v24
  %v1472 = vunpack.c.l.b16 %v25
  %v1473 = vunpack.c.h.b16 %v25
  %v1474 = vunpack.c.l.b16 %v26
  %v1475 = vunpack.c.h.b16 %v26
  %v1476 = vunpack.c.l.b16 %v27
  %v1477 = vunpack.c.h.b16 %v27
  %v1478 = vunpack.c.l.b16 %v28
  %v1479 = vunpack.c.h.b16 %v28
  %v1480 = vunpack.c.l.b16 %v29
  %v1481 = vunpack.c.h.b16 %v29
  %v1482 = vunpack.c.l.b16 %v30
  %v1483 = vunpack.c.h.b16 %v30
  %v1484 = vunpack.c.l.b16 %v31
  %v1485 = vunpack.c.h.b16 %v31
  %v1486 = vunpack.c.l.b16 %v32
  %v1487 = vunpack.c.h.b16 %v32
  %v1488 = vunpack.c.l.b16 %v33
  %v1489 = vunpack.c.h.b16 %v33
  %v1490 = vunpack.c.l.b16 %v34
  %v1491 = vunpack.c.h.b16 %v34
  %v1492 = vunpack.c.l.b16 %v35
  %v1493 = vunpack.c.h.b16 %v35
  %v1494 = vunpack.c.l.b16 %v36
  %v1495 = vunpack.c.h.b16 %v36
  %v1496 = vunpack.c.l.b16 %v37
  %v1497 = vunpack.c.h.b16 %v37
  %v1498 = vunpack.c.l.b16 %v38
  %v1499 = vunpack.c.h.b16 %v38
  %v1500 = vunpack.c.l.b16 %v39
  %v1501 = vunpack.c.h.b16 %v39
  %v1502 = vunpack.c.l.b16 %v40
  %v1503 = vunpack.c.h.b16 %v40
  %v1504 = vunpack.c.l.b16 %v41
  %v1505 = vunpack.c.h.b16 %v41
  %v1506 = vunpack.c.l.b16 %v42
  %v1507 = vunpack.c.h.b16 %v42
  %v1508 = vunpack.c.l.b16 %v43
  %v1509 = vunpack.c.h.b16 %v43
  %v1510 = vunpack.c.l.b16 %v44
  %v1511 = vunpack.c.h.b16 %v44
  %v1512 = vunpack.c.l.b16 %v45
  %v1513 = vunpack.c.h.b16 %v45
  %v1514 = vunpack.c.l.b16 %v46
  %v1515 = vunpack.c.h.b16 %v46
  %v1516 = vunpack.c.l.b16 %v47
  %v1517 = vunpack.c.h.b16 %v47
  %v1518 = vunpack.c.l.b16 %v48
  %v1519 = vunpack.c.h.b16 %v48
  %v1520 = vunpack.c.l.b16 %v49
  %v1521 = vunpack.c.h.b16 %v49
  %v1522 = vunpack.c.l.b16 %v50
  %v1523 = vunpack.c.h.b16 %v50
  %v1524 = vunpack.c.l.b16 %v51
  %v1525 = vunpack.c.h.b16 %v51
  %v1526 = vunpack.c.l.b16 %v52
  %v1527 = vunpack.c.h.b16 %v52
  %v1528 = vunpack.c.l.b16 %v53
  %v1529 = vunpack.c.h.b16 %v53
  %v1530 = vunpack.c.l.b16 %v54
  %v1531 = vunpack.c.h.b16 %v54
  %v1532 = vunpack.c.l.b16 %v55
  %v1533 = vunpack.c.h.b16 %v55
  %v1534 = vunpack.c.l.b16 %v56
  %v1535 = vunpack.c.h.b16 %v56
  %v1536 = vunpack.c.l.b16 %v57
  %v1537 = vunpack.c.h.b16 %v57
  %v1538 = vunpack.c.l.b16 %v58
  %v1539 = vunpack.c.h.b16 %v58
  %v1540 = vunpack.c.l.b16 %v59
  %v1541 = vunpack.c.h.b16 %v59
  %v1542 = vunpack.c.l.b16 %v60
  %v1543 = vunpack.c.h.b16 %v60
  %v1544 = vunpack.c.l.b16 %v61
  %v1545 = vunpack.c.h.b16 %v61
  %v1546 = vunpack.c.l.b16 %v62
  %v1547 = vunpack.c.h.b16 %v62
  %v1548 = vunpack.c.l.b16 %v63
  %v1549 = vunpack.c.h.b16 %v63
  %v1550 = vunpack.c.l.b16 %v64
  %v1551 = vunpack.c.h.b16 %v64
  %v1552 = vunpack.c.l.b16 %v65
  %v1553 = vunpack.c.h.b16 %v65
  %v1554 = vunpack.c.l.b16 %v66
  %v1555 = vunpack.c.h.b16 %v66
  %v1556 = vunpack.c.l.b16 %v67
  %v1557 = vunpack.c.h.b16 %v67
  %v1558 = vunpack.c.l.b16 %v68
  %v1559 = vunpack.c.h.b16 %v68
  %v1560 = vunpack.c.l.b16 %v69
  %v1561 = vunpack.c.h.b16 %v69
  %v1562 = vunpack.c.l.b16 %v70
  %v1563 = vunpack.c.h.b16 %v70
  %v1564 = vunpack.c.l.b16 %v71
  %v1565 = vunpack.c.h.b16 %v71
  %v1566 = vunpack.c.l.b16 %v72
  %v1567 = vunpack.c.h.b16 %v72
  %v1568 = vunpack.c.l.b16 %v73
  %v1569 = vunpack.c.h.b16 %v73
  %v1570 = vunpack.c.l.b16 %v74
  %v1571 = vunpack.c.h.b16 %v74
  %v1572 = vunpack.c.l.b16 %v75
  %v1573 = vunpack.c.h.b16 %v75
  %v1574 = vunpack.c.l.b16 %v76
  %v1575 = vunpack.c.h.b16 %v76
  %v1576 = vunpack.c.l.b16 %v77
  %v1577 = vunpack.c.h.b16 %v77
  %v1578 = vunpack.c.l.b16 %v78
  %v1579 = vunpack.c.h.b16 %v78
  %v1580 = vunpack.c.l.b16 %v79
  %v1581 = vunpack.c.h.b16 %v79
  %v1582 = vunpack.c.l.b16 %v80
  %v1583 = vunpack.c.h.b16 %v80
  %v1584 = vunpack.c.l.b16 %v81
  %v1585 = vunpack.c.h.b16 %v81
  %v1586 = vunpack.c.l.b16 %v82
  %v1587 = vunpack.c.h.b16 %v82
  %v1588 = vunpack.c.l.b16 %v83
  %v1589 = vunpack.c.h.b16 %v83
  %v1590 = vunpack.c.l.b16 %v84
  %v1591 = vunpack.c.h.b16 %v84
  %v1592 = vunpack.c.l.b16 %v85
  %v1593 = vunpack.c.h.b16 %v85
  %v1594 = vunpack.c.l.b16 %v86
  %v1595 = vunpack.c.h.b16 %v86
  %v1596 = vunpack.c.l.b16 %v87
  %v1597 = vunpack.c.h.b16 %v87
  %v1598 = vunpack.c.l.b16 %v88
  %v1599 = vunpack.c.h.b16 %v88
  %v1600 = vunpack.c.l.b16 %v89
  %v1601 = vunpack.c.h.b16 %v89
  %v1602 = vunpack.c.l.b16 %v90
  %v1603 = vunpack.c.h.b16 %v90
  %v1604 = vunpack.c.l.b16 %v91
  %v1605 = vunpack.c.h.b16 %v91
  %v1606 = vunpack.c.l.b16 %v92
  %v1607 = vunpack.c.h.b16 %v92
  %v1608 = vunpack.c.l.b16 %v93
  %v1609 = vunpack.c.h.b16 %v93
  %v1610 = vunpack.c.l.b16 %v94
  %v1611 = vunpack.c.h.b16 %v94
  %v1612 = vunpack.c.l.b16 %v95
  %v1613 = vunpack.c.h.b16 %v95
  %v1614 = vunpack.c.l.b16 %v96
  %v1615 = vunpack.c.h.b16 %v96
  %v1616 = vunpack.c.l.b16 %v97
  %v1617 = vunpack.c.h.b16 %v97
  %v1618 = vpack.c.b16 %v1538, %v1458
  %v1619 = vpack.c.b16 %v1539, %v1459
  %v1620 = vpack.c.b16 %v1540, %v1460
  %v1621 = vpack.c.b16 %v1541, %v1461
  %v1622 = vpack.c.b16 %v1542, %v1462
  %v1623 = vpack.c.b16 %v1543, %v1463
  %v1624 = vpack.c.b16 %v1544, %v1464
  %v1625 = vpack.c.b16 %v1545, %v1465
  %v1626 = vpack.c.b16 %v1546, %v1466
  %v1627 = vpack.c.b16 %v1547, %v1467
  %v1628 = vpack.c.b16 %v1548, %v1468
  %v1629 = vpack.c.b16 %v1549, %v1469
  %v1630 = vpack.c.b16 %v1550, %v1470
  %v1631 = vpack.c.b16 %v1551, %v1471
  %v1632 = vpack.c.b16 %v1552, %v1472
  %v1633 = vpack.c.b16 %v1553, %v1473
  %v1634 = vpack.c.b16 %v1554, %v1474
  %v1635 = vpack.c.b16 %v1555, %v1475
  %v1636 = vpack.c.b16 %v1556, %v1476
  %v1637 = vpack.c.b16 %v1557, %v1477
  %v1638 = vpack.c.b16 %v1558, %v1478
  %v1639 = vpack.c.b16 %v1559, %v1479
  %v1640 = vpack.c.b16 %v1560, %v1480
  %v1641 = vpack.c.b16 %v1561, %v1481
  %v1642 = vpack.c.b16 %v1562, %v1482
  %v1643 = vpack.c.b16 %v1563, %v1483
  %v1644 = vpack.c.b16 %v1564, %v1484
  %v1645 = vpack.c.b16 %v1565, %v1485
  %v1646 = vpack.c.b16 %v1566, %v1486
  %v1647 = vpack.c.b16 %v1567, %v1487
  %v1648 = vpack.c.b16 %v1568, %v1488
  %v1649 = vpack.c.b16 %v1569, %v1489
  %v1650 = vpack.c.b16 %v1570, %v1490
  %v1651 = vpack.c.b16 %v1571, %v1491
  %v1652 = vpack.c.b16 %v1572, %v1492
  %v1653 = vpack.c.b16 %v1573, %v1493
  %v1654 = vpack.c.b16 %v1574, %v1494
  %v1655 = vpack.c.b16 %v1575, %v1495
  %v1656 = vpack.c.b16 %v1576, %v1496
  %v1657 = vpack.c.b16 %v1577, %v1497
  %v1658 = vpack.c.b16 %v1578, %v1498
  %v1659 = vpack.c.b16 %v1579, %v1499
  %v1660 = vpack.c.b16 %v1580, %v1500
  %v1661 = vpack.c.b16 %v1581, %v1501
  %v1662 = vpack.c.b16 %v1582, %v1502
  %v1663 = vpack.c.b16 %v1583, %v1503
  %v1664 = vpack.c.b16 %v1584, %v1504
  %v1665 = vpack.c.b16 %v1585, %v1505
  %v1666 = vpack.c.b16 %v1586, %v1506
  %v1667 = vpack.c.b16 %v1587, %v1507
  %v1668 = vpack.c.b16 %v1588, %v1508
  %v1669 = vpack.c.b16 %v1589, %v1509
  %v1670 = vpack.c.b16 %v1590, %v1510
  %v1671 = vpack.c.b16 %v1591, %v1511
  %v1672 = vpack.c.b16 %v1592, %v1512
  %v1673 = vpack.c.b16 %v1593, %v1513
  %v1674 = vpack.c.b16 %v1594, %v1514
  %v1675 = vpack.c.b16 %v1595, %v1515
  %v1676 = vpack.c.b16 %v1596, %v1516
  %v1677 = vpack.c.b16 %v1597, %v1517
  %v1678 = vpack.c.b16 %v1598, %v1518
  %v1679 = vpack.c.b16 %v1599, %v1519
  %v1680 = vpack.c.b16 %v1600, %v1520
  %v1681 = vpack.c.b16 %v1601, %v1521
  %v1682 = vpack.c.b16 %v1602, %v1522
  %v1683 = vpack.c.b16 %v1603, %v1523
  %v1684 = vpack.c.b16 %v1604, %v1524
  %v1685 = vpack.c.b16 %v1605, %v1525
  %v1686 = vpack.c.b16 %v1606, %v1526
  %v1687 = vpack.c.b16 %v1607, %v1527
  %v1688 = vpack.c.b16 %v1608, %v1528
  %v1689 = vpack.c.b16 %v1609, %v1529
  %v1690 = vpack.c.b16 %v1610, %v1530
  %v1691 = vpack.c.b16 %v1611, %v1531
  %v1692 = vpack.c.b16 %v1612, %v1532
  %v1693 = vpack.c.b16 %v1613, %v1533
  %v1694 = vpack.c.b16 %v1614, %v1534
  %v1695 = vpack.c.b16 %v1615, %v1535
  %v1696 = vpack.c.b16 %v1616, %v1536
  %v1697 = vpack.c.b16 %v1617, %v1537
  %v3058 = vunpack.c.l.b16 %v98
  %v3059 = vunpack.c.l.b16 %v99
  %v3060 = vunpack.c.l.b16 %v100
  %v3061 = vunpack.c.l.b16 %v101
  %v3062 = vunpack.c.l.b16 %v102
  %v3063 = vunpack.c.l.b16 %v103
  %v3064 = vunpack.c.l.b16 %v104
  %v3065 = vunpack.c.l.b16 %v105
  %v3066 = vunpack.c.l.b16 %v106
  %v3067 = vunpack.c.l.b16 %v107
  %v3068 = vunpack.c.l.b16 %v108
  %v3069 = vunpack.c.l.b16 %v109
  %v3070 = vunpack.c.l.b16 %v110
  %v3071 = vunpack.c.l.b16 %v111
  %v3072 = vunpack.c.l.b16 %v112
  %v3073 = vunpack.c.l.b16 %v113
  %v3074 = vunpack.c.l.b16 %v114
  %v3075 = vunpack.c.l.b16 %v115
  %v3076 = vunpack.c.l.b16 %v116
  %v3077 = vunpack.c.l.b16 %v117
  %v3078 = vunpack.c.l.b16 %v118
  %v3079 = vunpack.c.l.b16 %v119
  %v3080 = vunpack.c.l.b16 %v120
  %v3081 = vunpack.c.l.b16 %v121
  %v3082 = vunpack.c.l.b16 %v122
  %v3083 = vunpack.c.l.b16 %v123
  %v3084 = vunpack.c.l.b16 %v124
  %v3085 = vunpack.c.l.b16 %v125
  %v3086 = vunpack.c.l.b16 %v126
  %v3087 = vunpack.c.l.b16 %v127
  %v3088 = vunpack.c.l.b16 %v128
  %v3089 = vunpack.c.l.b16 %v129
  %v3090 = vunpack.c.l.b16 %v130
  %v3091 = vunpack.c.l.b16 %v131
  %v3092 = vunpack.c.l.b16 %v132
  %v3093 = vunpack.c.l.b16 %v133
  %v3094 = vunpack.c.l.b16 %v134
  %v3095 = vunpack.c.l.b16 %v135
  %v3096 = vunpack.c.l.b16 %v136
  %v3097 = vunpack.c.l.b16 %v137
  %v3098 = vunpack.c.l.b16 %v138
  %v3099 = vunpack.c.l.b16 %v139
  %v3100 = vunpack.c.l.b16 %v140
  %v3101 = vunpack.c.l.b16 %v141
  %v3102 = vunpack.c.l.b16 %v142
  %v3103 = vunpack.c.l.b16 %v143
  %v3104 = vunpack.c.l.b16 %v144
  %v3105 = vunpack.c.l.b16 %v145
  %v3106 = vunpack.c.l.b16 %v146
  %v3107 = vunpack.c.l.b16 %v147
  %v3108 = vunpack.c.l.b16 %v148
  %v3109 = vunpack.c.l.b16 %v149
  %v3110 = vunpack.c.l.b16 %v150
  %v3111 = vunpack.c.l.b16 %v151
  %v3112 = vunpack.c.l.b16 %v152
  %v3113 = vunpack.c.l.b16 %v153
  %v3114 = vunpack.c.l.b16 %v154
  %v3115 = vunpack.c.l.b16 %v155
  %v3116 = vunpack.c.l.b16 %v156
  %v3117 = vunpack.c.l.b16 %v157
  %v3118 = vunpack.c.l.b16 %v158
  %v3119 = vunpack.c.l.b16 %v159
  %v3120 = vunpack.c.l.b16 %v160
  %v3121 = vunpack.c.l.b16 %v161
  %v3122 = vunpack.c.l.b16 %v162
  %v3123 = vunpack.c.l.b16 %v163
  %v3124 = vunpack.c.l.b16 %v164
  %v3125 = vunpack.c.l.b16 %v165
  %v3126 = vunpack.c.l.b16 %v166
  %v3127 = vunpack.c.l.b16 %v167
  %v3128 = vunpack.c.l.b16 %v168
  %v3129 = vunpack.c.l.b16 %v169
  %v3130 = vunpack.c.l.b16 %v170
  %v3131 = vunpack.c.l.b16 %v171
  %v3132 = vunpack.c.l.b16 %v172
  %v3133 = vunpack.c.l.b16 %v173
  %v3134 = vunpack.c.l.b16 %v174
  %v3135 = vunpack.c.l.b16 %v175
  %v3136 = vunpack.c.l.b16 %v176
  %v3137 = vunpack.c.l.b16 %v177
  %v3138 = vunpack.c.l.b16 %v178
  %v3139 = vunpack.c.l.b16 %v179
  %v3140 = vunpack.c.l.b16 %v180
  %v3141 = vunpack.c.l.b16 %v181
  %v3142 = vunpack.c.l.b16 %v182
  %v3143 = vunpack.c.l.b16 %v183
  %v3144 = vunpack.c.l.b16 %v184
  %v3145 = vunpack.c.l.b16 %v185
  %v3146 = vunpack.c.l.b16 %v186
  %v3147 = vunpack.c.l.b16 %v187
  %v3148 = vunpack.c.l.b16 %v188
  %v3149 = vunpack.c.l.b16 %v189
  %v3150 = vunpack.c.l.b16 %v190
  %v3151 = vunpack.c.l.b16 %v191
  %v3152 = vunpack.c.l.b16 %v192
  %v3153 = vunpack.c.l.b16 %v193
  %v3154 = vunpack.c.l.b16 %v194
  %v3155 = vunpack.c.l.b16 %v195
  %v3156 = vunpack.c.l.b16 %v196
  %v3157 = vunpack.c.l.b16 %v197
  %v3158 = vunpack.c.l.b16 %v198
  %v3159 = vunpack.c.l.b16 %v199
  %v3160 = vunpack.c.l.b16 %v200
  %v3161 = vunpack.c.l.b16 %v201
  %v3162 = vunpack.c.l.b16 %v202
  %v3163 = vunpack.c.l.b16 %v203
  %v3164 = vunpack.c.l.b16 %v204
  %v3165 = vunpack.c.l.b16 %v205
  %v3166 = vunpack.c.l.b16 %v206
  %v3167 = vunpack.c.l.b16 %v207
  %v3168 = vunpack.c.l.b16 %v208
  %v3169 = vunpack.c.l.b16 %v209
  %v3170 = vunpack.c.l.b16 %v210
  %v3171 = vunpack.c.l.b16 %v211
  %v3172 = vunpack.c.l.b16 %v212
  %v3173 = vunpack.c.l.b16 %v213
  %v3174 = vunpack.c.l.b16 %v214
  %v3175 = vunpack.c.l.b16 %v215
  %v3176 = vunpack.c.l.b16 %v216
  %v3177 = vunpack.c.l.b16 %v217
  %v3178 = vunpack.c.l.b16 %v218
  %v3179 = vunpack.c.l.b16 %v219
  %v3180 = vunpack.c.l.b16 %v220
  %v3181 = vunpack.c.l.b16 %v221
  %v3182 = vunpack.c.l.b16 %v222
  %v3183 = vunpack.c.l.b16 %v223
  %v3184 = vunpack.c.l.b16 %v224
  %v3185 = vunpack.c.l.b16 %v225
  %v3186 = vunpack.c.l.b16 %v226
  %v3187 = vunpack.c.l.b16 %v227
  %v3188 = vunpack.c.l.b16 %v228
  %v3189 = vunpack.c.l.b16 %v229
  %v3190 = vunpack.c.l.b16 %v230
  %v3191 = vunpack.c.l.b16 %v231
  %v3192 = vunpack.c.l.b16 %v232
  %v3193 = vunpack.c.l.b16 %v233
  %v3194 = vunpack.c.l.b16 %v234
  %v3195 = vunpack.c.l.b16 %v235
  %v3196 = vunpack.c.l.b16 %v236
  %v3197 = vunpack.c.l.b16 %v237
  %v3198 = vunpack.c.l.b16 %v238
  %v3199 = vunpack.c.l.b16 %v239
  %v3200 = vunpack.c.l.b16 %v240
  %v3201 = vunpack.c.l.b16 %v241
  %v3202 = vunpack.c.l.b16 %v242
  %v3203 = vunpack.c.l.b16 %v243
  %v3204 = vunpack.c.l.b16 %v244
  %v3205 = vunpack.c.l.b16 %v245
  %v3206 = vunpack.c.l.b16 %v246
  %v3207 = vunpack.c.l.b16 %v247
  %v3208 = vunpack.c.l.b16 %v248
  %v3209 = vunpack.c.l.b16 %v249
  %v3210 = vunpack.c.l.b16 %v250
  %v3211 = vunpack.c.l.b16 %v251
  %v3212 = vunpack.c.l.b16 %v252
  %v3213 = vunpack.c.l.b16 %v253
  %v3214 = vunpack.c.l.b16 %v254
  %v3215 = vunpack.c.l.b16 %v255
  %v3216 = vunpack.c.l.b16 %v256
  %v3217 = vunpack.c.l.b16 %v257
  %v3218 = vunpack.c.l.b16 %v258
  %v3219 = vunpack.c.l.b16 %v259
  %v3220 = vunpack.c.l.b16 %v260
  %v3221 = vunpack.c.l.b16 %v261
  %v3222 = vunpack.c.l.b16 %v262
  %v3223 = vunpack.c.l.b16 %v263
  %v3224 = vunpack.c.l.b16 %v264
  %v3225 = vunpack.c.l.b16 %v265
  %v3226 = vunpack.c.l.b16 %v266
  %v3227 = vunpack.c.l.b16 %v267
  %v3228 = vunpack.c.l.b16 %v268
  %v3229 = vunpack.c.l.b16 %v269
  %v3230 = vunpack.c.l.b16 %v270
  %v3231 = vunpack.c.l.b16 %v271
  %v3232 = vunpack.c.l.b16 %v272
  %v3233 = vunpack.c.l.b16 %v273
  %v3234 = vunpack.c.l.b16 %v274
  %v3235 = vunpack.c.l.b16 %v275
  %v3236 = vunpack.c.l.b16 %v276
  %v3237 = vunpack.c.l.b16 %v277
  %v3238 = vunpack.c.l.b16 %v278
  %v3239 = vunpack.c.l.b16 %v279
  %v3240 = vunpack.c.l.b16 %v280
  %v3241 = vunpack.c.l.b16 %v281
  %v3242 = vunpack.c.l.b16 %v282
  %v3243 = vunpack.c.l.b16 %v283
  %v3244 = vunpack.c.l.b16 %v284
  %v3245 = vunpack.c.l.b16 %v285
  %v3246 = vunpack.c.l.b16 %v286
  %v3247 = vunpack.c.l.b16 %v287
  %v3248 = vunpack.c.l.b16 %v288
  %v3249 = vunpack.c.l.b16 %v289
  %v3250 = vunpack.c.l.b16 %v290
  %v3251 = vunpack.c.l.b16 %v291
  %v3252 = vunpack.c.l.b16 %v292
  %v3253 = vunpack.c.l.b16 %v293
  %v3254 = vunpack.c.l.b16 %v294
  %v3255 = vunpack.c.l.b16 %v295
  %v3256 = vunpack.c.l.b16 %v296
  %v3257 = vunpack.c.l.b16 %v297
  %v3258 = vunpack.c.l.b16 %v298
  %v3259 = vunpack.c.l.b16 %v299
  %v3260 = vunpack.c.l.b16 %v300
  %v3261 = vunpack.c.l.b16 %v301
  %v3262 = vunpack.c.l.b16 %v302
  %v3263 = vunpack.c.l.b16 %v303
  %v3264 = vunpack.c.l.b16 %v304
  %v3265 = vunpack.c.l.b16 %v305
  %v3266 = vunpack.c.l.b16 %v306
  %v3267 = vunpack.c.l.b16 %v307
  %v3268 = vunpack.c.l.b16 %v308
  %v3269 = vunpack.c.l.b16 %v309
  %v3270 = vunpack.c.l.b16 %v310
  %v3271 = vunpack.c.l.b16 %v311
  %v3272 = vunpack.c.l.b16 %v312
  %v3273 = vunpack.c.l.b16 %v313
  %v3274 = vunpack.c.l.b16 %v314
  %v3275 = vunpack.c.l.b16 %v315
  %v3276 = vunpack.c.l.b16 %v316
  %v3277 = vunpack.c.l.b16 %v317
  %v3278 = vunpack.c.l.b16 %v318
  %v3279 = vunpack.c.l.b16 %v319
  %v3280 = vunpack.c.l.b16 %v320
  %v3281 = vunpack.c.l.b16 %v321
  %v3282 = vunpack.c.l.b16 %v322
  %v3283 = vunpack.c.l.b16 %v323
  %v3284 = vunpack.c.l.b16 %v324
  %v3285 = vunpack.c.l.b16 %v325
  %v3286 = vunpack.c.l.b16 %v326
  %v3287 = vunpack.c.l.b16 %v327
  %v3288 = vunpack.c.l.b16 %v328
  %v3289 = vunpack.c.l.b16 %v329
  %v3290 = vunpack.c.l.b16 %v330
  %v3291 = vunpack.c.l.b16 %v331
  %v3292 = vunpack.c.l.b16 %v332
  %v3293 = vunpack.c.l.b16 %v333
  %v3294 = vunpack.c.l.b16 %v334
  %v3295 = vunpack.c.l.b16 %v335
  %v3296 = vunpack.c.l.b16 %v336
  %v3297 = vunpack.c.l.b16 %v337
  %v3298 = vunpack.c.l.b16 %v338
  %v3299 = vunpack.c.l.b16 %v339
  %v3300 = vunpack.c.l.b16 %v340
  %v3301 = vunpack.c.l.b16 %v341
  %v3302 = vunpack.c.l.b16 %v342
  %v3303 = vunpack.c.l.b16 %v343
  %v3304 = vunpack.c.l.b16 %v344
  %v3305 = vunpack.c.l.b16 %v345
  %v3306 = vunpack.c.l.b16 %v346
  %v3307 = vunpack.c.l.b16 %v347
  %v3308 = vunpack.c.l.b16 %v348
  %v3309 = vunpack.c.l.b16 %v349
  %v3310 = vunpack.c.l.b16 %v350
  %v3311 = vunpack.c.l.b16 %v351
  %v3312 = vunpack.c.l.b16 %v352
  %v3313 = vunpack.c.l.b16 %v353
  %v3314 = vunpack.c.l.b16 %v354
  %v3315 = vunpack.c.l.b16 %v355
  %v3316 = vunpack.c.l.b16 %v356
  %v3317 = vunpack.c.l.b16 %v357
  %v3318 = vunpack.c.l.b16 %v358
  %v3319 = vunpack.c.l.b16 %v359
  %v3320 = vunpack.c.l.b16 %v360
  %v3321 = vunpack.c.l.b16 %v361
  %v3322 = vunpack.c.l.b16 %v362
  %v3323 = vunpack.c.l.b16 %v363
  %v3324 = vunpack.c.l.b16 %v364
  %v3325 = vunpack.c.l.b16 %v365
  %v3326 = vunpack.c.l.b16 %v366
  %v3327 = vunpack.c.l.b16 %v367
  %v3328 = vunpack.c.l.b16 %v368
  %v3329 = vunpack.c.l.b16 %v369
  %v3330 = vunpack.c.l.b16 %v370
  %v3331 = vunpack.c.l.b16 %v371
  %v3332 = vunpack.c.l.b16 %v372
  %v3333 = vunpack.c.l.b16 %v373
  %v3334 = vunpack.c.l.b16 %v374
  %v3335 = vunpack.c.l.b16 %v375
  %v3336 = vunpack.c.l.b16 %v376
  %v3337 = vunpack.c.l.b16 %v377
  %v3338 = vunpack.c.l.b16 %v378
  %v3339 = vunpack.c.l.b16 %v379
  %v3340 = vunpack.c.l.b16 %v380
  %v3341 = vunpack.c.l.b16 %v381
  %v3342 = vunpack.c.l.b16 %v382
  %v3343 = vunpack.c.l.b16 %v383
  %v3344 = vunpack.c.l.b16 %v384
  %v3345 = vunpack.c.l.b16 %v385
  %v3346 = vunpack.c.l.b16 %v386
  %v3347 = vunpack.c.l.b16 %v387
  %v3348 = vunpack.c.l.b16 %v388
  %v3349 = vunpack.c.l.b16 %v389
  %v3350 = vunpack.c.l.b16 %v390
  %v3351 = vunpack.c.l.b16 %v391
  %v3352 = vunpack.c.l.b16 %v392
  %v3353 = vunpack.c.l.b16 %v393
  %v3354 = vunpack.c.l.b16 %v394
  %v3355 = vunpack.c.l.b16 %v395
  %v3356 = vunpack.c.l.b16 %v396
  %v3357 = vunpack.c.l.b16 %v397
  %v3358 = vunpack.c.l.b16 %v398
  %v3359 = vunpack.c.l.b16 %v399
  %v3360 = vunpack.c.l.b16 %v400
  %v3361 = vunpack.c.l.b16 %v401
  %v3362 = vunpack.c.l.b16 %v402
  %v3363 = vunpack.c.l.b16 %v403
  %v3364 = vunpack.c.l.b16 %v404
  %v3365 = vunpack.c.l.b16 %v405
  %v3366 = vunpack.c.l.b16 %v406
  %v3367 = vunpack.c.l.b16 %v407
  %v3368 = vunpack.c.l.b16 %v408
  %v3369 = vunpack.c.l.b16 %v409
  %v3370 = vunpack.c.l.b16 %v410
  %v3371 = vunpack.c.l.b16 %v411
  %v3372 = vunpack.c.l.b16 %v412
  %v3373 = vunpack.c.l.b16 %v413
  %v3374 = vunpack.c.l.b16 %v414
  %v3375 = vunpack.c.l.b16 %v415
  %v3376 = vunpack.c.l.b16 %v416
  %v3377 = vunpack.c.l.b16 %v417
  %v3378 = vunpack.c.l.b16 %v418
  %v3379 = vunpack.c.l.b16 %v419
  %v3380 = vunpack.c.l.b16 %v420
  %v3381 = vunpack.c.l.b16 %v421
  %v3382 = vunpack.c.l.b16 %v422
  %v3383 = vunpack.c.l.b16 %v423
  %v3384 = vunpack.c.l.b16 %v424
  %v3385 = vunpack.c.l.b16 %v425
  %v3386 = vunpack.c.l.b16 %v426
  %v3387 = vunpack.c.l.b16 %v427
  %v3388 = vunpack.c.l.b16 %v428
  %v3389 = vunpack.c.l.b16 %v429
  %v3390 = vunpack.c.l.b16 %v430
  %v3391 = vunpack.c.l.b16 %v431
  %v3392 = vunpack.c.l.b16 %v432
  %v3393 = vunpack.c.l.b16 %v433
  %v3394 = vunpack.c.l.b16 %v434
  %v3395 = vunpack.c.l.b16 %v435
  %v3396 = vunpack.c.l.b16 %v436
  %v3397 = vunpack.c.l.b16 %v437
  %v3398 = vunpack.c.l.b16 %v438
  %v3399 = vunpack.c.l.b16 %v439
  %v3400 = vunpack.c.l.b16 %v440
  %v3401 = vunpack.c.l.b16 %v441
  %v3402 = vunpack.c.l.b16 %v442
  %v3403 = vunpack.c.l.b16 %v443
  %v3404 = vunpack.c.l.b16 %v444
  %v3405 = vunpack.c.l.b16 %v445
  %v3406 = vunpack.c.l.b16 %v446
  %v3407 = vunpack.c.l.b16 %v447
  %v3408 = vunpack.c.l.b16 %v448
  %v3409 = vunpack.c.l.b16 %v449
  %v3410 = vunpack.c.l.b16 %v450
  %v3411 = vunpack.c.l.b16 %v451
  %v3412 = vunpack.c.l.b16 %v452
  %v3413 = vunpack.c.l.b16 %v453
  %v3414 = vunpack.c.l.b16 %v454
  %v3415 = vunpack.c.l.b16 %v455
  %v3416 = vunpack.c.l.b16 %v456
  %v3417 = vunpack.c.l.b16 %v457
  %v3418 = vunpack.c.l.b16 %v458
  %v3419 = vunpack.c.l.b16 %v459
  %v3420 = vunpack.c.l.b16 %v460
  %v3421 = vunpack.c.l.b16 %v461
  %v3422 = vunpack.c.l.b16 %v462
  %v3423 = vunpack.c.l.b16 %v463
  %v3424 = vunpack.c.l.b16 %v464
  %v3425 = vunpack.c.l.b16 %v465
  %v3426 = vunpack.c.l.b16 %v466
  %v3427 = vunpack.c.l.b16 %v467
  %v3428 = vunpack.c.l.b16 %v468
  %v3429 = vunpack.c.l.b16 %v469
  %v3430 = vunpack.c.l.b16 %v470
  %v3431 = vunpack.c.l.b16 %v471
  %v3432 = vunpack.c.l.b16 %v472
  %v3433 = vunpack.c.l.b16 %v473
  %v3434 = vunpack.c.l.b16 %v474
  %v3435 = vunpack.c.l.b16 %v475
  %v3436 = vunpack.c.l.b16 %v476
  %v3437 = vunpack.c.l.b16 %v477
  %v3438 = vunpack.c.l.b16 %v478
  %v3439 = vunpack.c.l.b16 %v479
  %v3440 = vunpack.c.l.b16 %v480
  %v3441 = vunpack.c.l.b16 %v481
  %v3442 = vunpack.c.l.b16 %v482
  %v3443 = vunpack.c.l.b16 %v483
  %v3444 = vunpack.c.l.b16 %v484
  %v3445 = vunpack.c.l.b16 %v485
  %v3446 = vunpack.c.l.b16 %v486
  %v3447 = vunpack.c.l.b16 %v487
  %v3448 = vunpack.c.l.b16 %v488
  %v3449 = vunpack.c.l.b16 %v489
  %v3450 = vunpack.c.l.b16 %v490
  %v3451 = vunpack.c.l.b16 %v491
  %v3452 = vunpack.c.l.b16 %v492
  %v3453 = vunpack.c.l.b16 %v493
  %v3454 = vunpack.c.l.b16 %v494
  %v3455 = vunpack.c.l.b16 %v495
  %v3456 = vunpack.c.l.b16 %v496
  %v3457 = vunpack.c.l.b16 %v497
  %v3458 = vunpack.c.l.b16 %v498
  %v3459 = vunpack.c.l.b16 %v499
  %v3460 = vunpack.c.l.b16 %v500
  %v3461 = vunpack.c.l.b16 %v501
  %v3462 = vunpack.c.l.b16 %v502
  %v3463 = vunpack.c.l.b16 %v503
  %v3464 = vunpack.c.l.b16 %v504
  %v3465 = vunpack.c.l.b16 %v505
  %v3466 = vunpack.c.l.b16 %v506
  %v3467 = vunpack.c.l.b16 %v507
  %v3468 = vunpack.c.l.b16 %v508
  %v3469 = vunpack.c.l.b16 %v509
  %v3470 = vunpack.c.l.b16 %v510
  %v3471 = vunpack.c.l.b16 %v511
  %v3472 = vunpack.c.l.b16 %v512
  %v3473 = vunpack.c.l.b16 %v513
  %v3474 = vunpack.c.l.b16 %v514
  %v3475 = vunpack.c.l.b16 %v515
  %v3476 = vunpack.c.l.b16 %v516
  %v3477 = vunpack.c.l.b16 %v517
  %v3478 = vunpack.c.l.b16 %v518
  %v3479 = vunpack.c.l.b16 %v519
  %v3480 = vunpack.c.l.b16 %v520
  %v3481 = vunpack.c.l.b16 %v521
  %v3482 = vunpack.c.l.b16 %v522
  %v3483 = vunpack.c.l.b16 %v523
  %v3484 = vunpack.c.l.b16 %v524
  %v3485 = vunpack.c.l.b16 %v525
  %v3486 = vunpack.c.l.b16 %v526
  %v3487 = vunpack.c.l.b16 %v527
  %v3488 = vunpack.c.l.b16 %v528
  %v3489 = vunpack.c.l.b16 %v529
  %v3490 = vunpack.c.l.b16 %v530
  %v3491 = vunpack.c.l.b16 %v531
  %v3492 = vunpack.c.l.b16 %v532
  %v3493 = vunpack.c.l.b16 %v533
  %v3494 = vunpack.c.l.b16 %v534
  %v3495 = vunpack.c.l.b16 %v535
  %v3496 = vunpack.c.l.b16 %v536
  %v3497 = vunpack.c.l.b16 %v537
  %v3498 = vunpack.c.l.b16 %v538
  %v3499 = vunpack.c.l.b16 %v539
  %v3500 = vunpack.c.l.b16 %v540
  %v3501 = vunpack.c.l.b16 %v541
  %v3502 = vunpack.c.l.b16 %v542
  %v3503 = vunpack.c.l.b16 %v543
  %v3504 = vunpack.c.l.b16 %v544
  %v3505 = vunpack.c.l.b16 %v545
  %v3506 = vunpack.c.l.b16 %v546
  %v3507 = vunpack.c.l.b16 %v547
  %v3508 = vunpack.c.l.b16 %v548
  %v3509 = vunpack.c.l.b16 %v549
  %v3510 = vunpack.c.l.b16 %v550
  %v3511 = vunpack.c.l.b16 %v551
  %v3512 = vunpack.c.l.b16 %v552
  %v3513 = vunpack.c.l.b16 %v553
  %v3514 = vunpack.c.l.b16 %v554
  %v3515 = vunpack.c.l.b16 %v555
  %v3516 = vunpack.c.l.b16 %v556
  %v3517 = vunpack.c.l.b16 %v557
  %v3518 = vunpack.c.l.b16 %v558
  %v3519 = vunpack.c.l.b16 %v559
  %v3520 = vunpack.c.l.b16 %v560
  %v3521 = vunpack.c.l.b16 %v561
  %v3522 = vunpack.c.l.b16 %v562
  %v3523 = vunpack.c.l.b16 %v563
  %v3524 = vunpack.c.l.b16 %v564
  %v3525 = vunpack.c.l.b16 %v565
  %v3526 = vunpack.c.l.b16 %v566
  %v3527 = vunpack.c.l.b16 %v567
  %v3528 = vunpack.c.l.b16 %v568
  %v3529 = vunpack.c.l.b16 %v569
  %v3530 = vunpack.c.l.b16 %v570
  %v3531 = vunpack.c.l.b16 %v571
  %v3532 = vunpack.c.l.b16 %v572
  %v3533 = vunpack.c.l.b16 %v573
  %v3534 = vunpack.c.l.b16 %v574
  %v3535 = vunpack.c.l.b16 %v575
  %v3536 = vunpack.c.l.b16 %v576
  %v3537 = vunpack.c.l.b16 %v577
  %v3538 = vunpack.c.l.b16 %v578
  %v3539 = vunpack.c.l.b16 %v579
  %v3540 = vunpack.c.l.b16 %v580
  %v3541 = vunpack.c.l.b16 %v581
  %v3542 = vunpack.c.l.b16 %v582
  %v3543 = vunpack.c.l.b16 %v583
  %v3544 = vunpack.c.l.b16 %v584
  %v3545 = vunpack.c.l.b16 %v585
  %v3546 = vunpack.c.l.b16 %v586
  %v3547 = vunpack.c.l.b16 %v587
  %v3548 = vunpack.c.l.b16 %v588
  %v3549 = vunpack.c.l.b16 %v589
  %v3550 = vunpack.c.l.b16 %v590
  %v3551 = vunpack.c.l.b16 %v591
  %v3552 = vunpack.c.l.b16 %v592
  %v3553 = vunpack.c.l.b16 %v593
  %v3554 = vunpack.c.l.b16 %v594
  %v3555 = vunpack.c.l.b16 %v595
  %v3556 = vunpack.c.l.b16 %v596
  %v3557 = vunpack.c.l.b16 %v597
  %v3558 = vunpack.c.l.b16 %v598
  %v3559 = vunpack.c.l.b16 %v599
  %v3560 = vunpack.c.l.b16 %v600
  %v3561 = vunpack.c.l.b16 %v601
  %v3562 = vunpack.c.l.b16 %v602
  %v3563 = vunpack.c.l.b16 %v603
  %v3564 = vunpack.c.l.b16 %v604
  %v3565 = vunpack.c.l.b16 %v605
  %v3566 = vunpack.c.l.b16 %v606
  %v3567 = vunpack.c.l.b16 %v607
  %v3568 = vunpack.c.l.b16 %v608
  %v3569 = vunpack.c.l.b16 %v609
  %v3570 = vunpack.c.l.b16 %v610
  %v3571 = vunpack.c.l.b16 %v611
  %v3572 = vunpack.c.l.b16 %v612
  %v3573 = vunpack.c.l.b16 %v613
  %v3574 = vunpack.c.l.b16 %v614
  %v3575 = vunpack.c.l.b16 %v615
  %v3576 = vunpack.c.l.b16 %v616
  %v3577 = vunpack.c.l.b16 %v617
  %v3578 = vunpack.c.l.b16 %v618
  %v3579 = vunpack.c.l.b16 %v619
  %v3580 = vunpack.c.l.b16 %v620
  %v3581 = vunpack.c.l.b16 %v621
  %v3582 = vunpack.c.l.b16 %v622
  %v3583 = vunpack.c.l.b16 %v623
  %v3584 = vunpack.c.l.b16 %v624
  %v3585 = vunpack.c.l.b16 %v625
  %v3586 = vunpack.c.l.b16 %v626
  %v3587 = vunpack.c.l.b16 %v627
  %v3588 = vunpack.c.l.b16 %v628
  %v3589 = vunpack.c.l.b16 %v629
  %v3590 = vunpack.c.l.b16 %v630
  %v3591 = vunpack.c.l.b16 %v631
  %v3592 = vunpack.c.l.b16 %v632
  %v3593 = vunpack.c.l.b16 %v633
  %v3594 = vunpack.c.l.b16 %v634
  %v3595 = vunpack.c.l.b16 %v635
  %v3596 = vunpack.c.l.b16 %v636
  %v3597 = vunpack.c.l.b16 %v637
  %v3598 = vunpack.c.l.b16 %v638
  %v3599 = vunpack.c.l.b16 %v639
  %v3600 = vunpack.c.l.b16 %v640
  %v3601 = vunpack.c.l.b16 %v641
  %v3602 = vunpack.c.l.b16 %v642
  %v3603 = vunpack.c.l.b16 %v643
  %v3604 = vunpack.c.l.b16 %v644
  %v3605 = vunpack.c.l.b16 %v645
  %v3606 = vunpack.c.l.b16 %v646
  %v3607 = vunpack.c.l.b16 %v647
  %v3608 = vunpack.c.l.b16 %v648
  %v3609 = vunpack.c.l.b16 %v649
  %v3610 = vunpack.c.l.b16 %v650
  %v3611 = vunpack.c.l.b16 %v651
  %v3612 = vunpack.c.l.b16 %v652
  %v3613 = vunpack.c.l.b16 %v653
  %v3614 = vunpack.c.l.b16 %v654
  %v3615 = vunpack.c.l.b16 %v655
  %v3616 = vunpack.c.l.b16 %v656
  %v3617 = vunpack.c.l.b16 %v657
  %v3618 = vunpack.c.l.b16 %v658
  %v3619 = vunpack.c.l.b16 %v659
  %v3620 = vunpack.c.l.b16 %v660
  %v3621 = vunpack.c.l.b16 %v661
  %v3622 = vunpack.c.l.b16 %v662
  %v3623 = vunpack.c.l.b16 %v663
  %v3624 = vunpack.c.l.b16 %v664
  %v3625 = vunpack.c.l.b16 %v665
  %v3626 = vunpack.c.l.b16 %v666
  %v3627 = vunpack.c.l.b16 %v667
  %v3628 = vunpack.c.l.b16 %v668
  %v3629 = vunpack.c.l.b16 %v669
  %v3630 = vunpack.c.l.b16 %v670
  %v3631 = vunpack.c.l.b16 %v671
  %v3632 = vunpack.c.l.b16 %v672
  %v3633 = vunpack.c.l.b16 %v673
  %v3634 = vunpack.c.l.b16 %v674
  %v3635 = vunpack.c.l.b16 %v675
  %v3636 = vunpack.c.l.b16 %v676
  %v3637 = vunpack.c.l.b16 %v677
  %v3638 = vunpack.c.l.b16 %v678
  %v3639 = vunpack.c.l.b16 %v679
  %v3640 = vunpack.c.l.b16 %v680
  %v3641 = vunpack.c.l.b16 %v681
  %v3642 = vunpack.c.l.b16 %v682
  %v3643 = vunpack.c.l.b16 %v683
  %v3644 = vunpack.c.l.b16 %v684
  %v3645 = vunpack.c.l.b16 %v685
  %v3646 = vunpack.c.l.b16 %v686
  %v3647 = vunpack.c.l.b16 %v687
  %v3648 = vunpack.c.l.b16 %v688
  %v3649 = vunpack.c.l.b16 %v689
  %v3650 = vunpack.c.l.b16 %v690
  %v3651 = vunpack.c.l.b16 %v691
  %v3652 = vunpack.c.l.b16 %v692
  %v3653 = vunpack.c.l.b16 %v693
  %v3654 = vunpack.c.l.b16 %v694
  %v3655 = vunpack.c.l.b16 %v695
  %v3656 = vunpack.c.l.b16 %v696
  %v3657 = vunpack.c.l.b16 %v697
  %v3658 = vunpack.c.l.b16 %v698
  %v3659 = vunpack.c.l.b16 %v699
  %v3660 = vunpack.c.l.b16 %v700
  %v3661 = vunpack.c.l.b16 %v701
  %v3662 = vunpack.c.l.b16 %v702
  %v3663 = vunpack.c.l.b16 %v703
  %v3664 = vunpack.c.l.b16 %v704
  %v3665 = vunpack.c.l.b16 %v705
  %v3666 = vunpack.c.l.b16 %v706
  %v3667 = vunpack.c.l.b16 %v707
  %v3668 = vunpack.c.l.b16 %v708
  %v3669 = vunpack.c.l.b16 %v709
  %v3670 = vunpack.c.l.b16 %v710
  %v3671 = vunpack.c.l.b16 %v711
  %v3672 = vunpack.c.l.b16 %v712
  %v3673 = vunpack.c.l.b16 %v713
  %v3674 = vunpack.c.l.b16 %v714
  %v3675 = vunpack.c.l.b16 %v715
  %v3676 = vunpack.c.l.b16 %v716
  %v3677 = vunpack.c.l.b16 %v717
  %v3678 = vunpack.c.l.b16 %v718
  %v3679 = vunpack.c.l.b16 %v719
  %v3680 = vunpack.c.l.b16 %v720
  %v3681 = vunpack.c.l.b16 %v721
  %v3682 = vunpack.c.l.b16 %v722
  %v3683 = vunpack.c.l.b16 %v723
  %v3684 = vunpack.c.l.b16 %v724
  %v3685 = vunpack.c.l.b16 %v725
  %v3686 = vunpack.c.l.b16 %v726
  %v3687 = vunpack.c.l.b16 %v727
  %v3688 = vunpack.c.l.b16 %v728
  %v3689 = vunpack.c.l.b16 %v729
  %v3690 = vunpack.c.l.b16 %v730
  %v3691 = vunpack.c.l.b16 %v731
  %v3692 = vunpack.c.l.b16 %v732
  %v3693 = vunpack.c.l.b16 %v733
  %v3694 = vunpack.c.l.b16 %v734
  %v3695 = vunpack.c.l.b16 %v735
  %v3696 = vunpack.c.l.b16 %v736
  %v3697 = vunpack.c.l.b16 %v737
  %v3698 = vunpack.c.l.b16 %v738
  %v3699 = vunpack.c.l.b16 %v739
  %v3700 = vunpack.c.l.b16 %v740
  %v3701 = vunpack.c.l.b16 %v741
  %v3702 = vunpack.c.l.b16 %v742
  %v3703 = vunpack.c.l.b16 %v743
  %v3704 = vunpack.c.l.b16 %v744
  %v3705 = vunpack.c.l.b16 %v745
  %v3706 = vunpack.c.l.b16 %v746
  %v3707 = vunpack.c.l.b16 %v747
  %v3708 = vunpack.c.l.b16 %v748
  %v3709 = vunpack.c.l.b16 %v749
  %v3710 = vunpack.c.l.b16 %v750
  %v3711 = vunpack.c.l.b16 %v751
  %v3712 = vunpack.c.l.b16 %v752
  %v3713 = vunpack.c.l.b16 %v753
  %v3714 = vunpack.c.l.b16 %v754
  %v3715 = vunpack.c.l.b16 %v755
  %v3716 = vunpack.c.l.b16 %v756
  %v3717 = vunpack.c.l.b16 %v757
  %v3718 = vunpack.c.l.b16 %v758
  %v3719 = vunpack.c.l.b16 %v759
  %v3720 = vunpack.c.l.b16 %v760
  %v3721 = vunpack.c.l.b16 %v761
  %v3722 = vunpack.c.l.b16 %v762
  %v3723 = vunpack.c.l.b16 %v763
  %v3724 = vunpack.c.l.b16 %v764
  %v3725 = vunpack.c.l.b16 %v765
  %v3726 = vunpack.c.l.b16 %v766
  %v3727 = vunpack.c.l.b16 %v767
  %v3728 = vunpack.c.l.b16 %v768
  %v3729 = vunpack.c.l.b16 %v769
  %v3730 = vunpack.c.l.b16 %v770
  %v3731 = vunpack.c.l.b16 %v771
  %v3732 = vunpack.c.l.b16 %v772
  %v3733 = vunpack.c.l.b16 %v773
  %v3734 = vunpack.c.l.b16 %v774
  %v3735 = vunpack.c.l.b16 %v775
  %v3736 = vunpack.c.l.b16 %v776
  %v3737 = vunpack.c.l.b16 %v777
  %v3738 = vunpack.c.l.b16 %v778
  %v3739 = vunpack.c.l.b16 %v779
  %v3740 = vunpack.c.l.b16 %v780
  %v3741 = vunpack.c.l.b16 %v781
  %v3742 = vunpack.c.l.b16 %v782
  %v3743 = vunpack.c.l.b16 %v783
  %v3744 = vunpack.c.l.b16 %v784
  %v3745 = vunpack.c.l.b16 %v785
  %v3746 = vunpack.c.l.b16 %v786
  %v3747 = vunpack.c.l.b16 %v787
  %v3748 = vunpack.c.l.b16 %v788
  %v3749 = vunpack.c.l.b16 %v789
  %v3750 = vunpack.c.l.b16 %v790
  %v3751 = vunpack.c.l.b16 %v791
  %v3752 = vunpack.c.l.b16 %v792
  %v3753 = vunpack.c.l.b16 %v793
  %v3754 = vunpack.c.l.b16 %v794
  %v3755 = vunpack.c.l.b16 %v795
  %v3756 = vunpack.c.l.b16 %v796
  %v3757 = vunpack.c.l.b16 %v797
  %v3758 = vunpack.c.l.b16 %v798
  %v3759 = vunpack.c.l.b16 %v799
  %v3760 = vunpack.c.l.b16 %v800
  %v3761 = vunpack.c.l.b16 %v801
  %v3762 = vunpack.c.l.b16 %v802
  %v3763 = vunpack.c.l.b16 %v803
  %v3764 = vunpack.c.l.b16 %v804
  %v3765 = vunpack.c.l.b16 %v805
  %v3766 = vunpack.c.l.b16 %v806
  %v3767 = vunpack.c.l.b16 %v807
  %v3768 = vunpack.c.l.b16 %v808
  %v3769 = vunpack.c.l.b16 %v809
  %v3770 = vunpack.c.l.b16 %v810
  %v3771 = vunpack.c.l.b16 %v811
  %v3772 = vunpack.c.l.b16 %v812
  %v3773 = vunpack.c.l.b16 %v813
  %v3774 = vunpack.c.l.b16 %v814
  %v3775 = vunpack.c.l.b16 %v815
  %v3776 = vunpack.c.l.b16 %v816
  %v3777 = vunpack.c.l.b16 %v817
  %v3778 = vunpack.c.l.b16 %v818
  %v3779 = vunpack.c.l.b16 %v819
  %v3780 = vunpack.c.l.b16 %v820
  %v3781 = vunpack.c.l.b16 %v821
  %v3782 = vunpack.c.l.b16 %v822
  %v3783 = vunpack.c.l.b16 %v823
  %v3784 = vunpack.c.l.b16 %v824
  %v3785 = vunpack.c.l.b16 %v825
  %v3786 = vunpack.c.l.b16 %v826
  %v3787 = vunpack.c.l.b16 %v827
  %v3788 = vunpack.c.l.b16 %v828
  %v3789 = vunpack.c.l.b16 %v829
  %v3790 = vunpack.c.l.b16 %v830
  %v3791 = vunpack.c.l.b16 %v831
  %v3792 = vunpack.c.l.b16 %v832
  %v3793 = vunpack.c.l.b16 %v833
  %v3794 = vunpack.c.l.b16 %v834
  %v3795 = vunpack.c.l.b16 %v835
  %v3796 = vunpack.c.l.b16 %v836
  %v3797 = vunpack.c.l.b16 %v837
  %v3798 = vunpack.c.l.b16 %v838
  %v3799 = vunpack.c.l.b16 %v839
  %v3800 = vunpack.c.l.b16 %v840
  %v3801 = vunpack.c.l.b16 %v841
  %v3802 = vunpack.c.l.b16 %v842
  %v3803 = vunpack.c.l.b16 %v843
  %v3804 = vunpack.c.l.b16 %v844
  %v3805 = vunpack.c.l.b16 %v845
  %v3806 = vunpack.c.l.b16 %v846
  %v3807 = vunpack.c.l.b16 %v847
  %v3808 = vunpack.c.l.b16 %v848
  %v3809 = vunpack.c.l.b16 %v849
  %v3810 = vunpack.c.l.b16 %v850
  %v3811 = vunpack.c.l.b16 %v851
  %v3812 = vunpack.c.l.b16 %v852
  %v3813 = vunpack.c.l.b16 %v853
  %v3814 = vunpack.c.l.b16 %v854
  %v3815 = vunpack.c.l.b16 %v855
  %v3816 = vunpack.c.l.b16 %v856
  %v3817 = vunpack.c.l.b16 %v857
  %v3818 = vunpack.c.l.b16 %v858
  %v3819 = vunpack.c.l.b16 %v859
  %v3820 = vunpack.c.l.b16 %v860
  %v3821 = vunpack.c.l.b16 %v861
  %v3822 = vunpack.c.l.b16 %v862
  %v3823 = vunpack.c.l.b16 %v863
  %v3824 = vunpack.c.l.b16 %v864
  %v3825 = vunpack.c.l.b16 %v865
  %v3826 = vunpack.c.l.b16 %v866
  %v3827 = vunpack.c.l.b16 %v867
  %v3828 = vunpack.c.l.b16 %v868
  %v3829 = vunpack.c.l.b16 %v869
  %v3830 = vunpack.c.l.b16 %v870
  %v3831 = vunpack.c.l.b16 %v871
  %v3832 = vunpack.c.l.b16 %v872
  %v3833 = vunpack.c.l.b16 %v873
  %v3834 = vunpack.c.l.b16 %v874
  %v3835 = vunpack.c.l.b16 %v875
  %v3836 = vunpack.c.l.b16 %v876
  %v3837 = vunpack.c.l.b16 %v877
  %v3838 = vunpack.c.l.b16 %v878
  %v3839 = vunpack.c.l.b16 %v879
  %v3840 = vunpack.c.l.b16 %v880
  %v3841 = vunpack.c.l.b16 %v881
  %v3842 = vunpack.c.l.b16 %v882
  %v3843 = vunpack.c.l.b16 %v883
  %v3844 = vunpack.c.l.b16 %v884
  %v3845 = vunpack.c.l.b16 %v885
  %v3846 = vunpack.c.l.b16 %v886
  %v3847 = vunpack.c.l.b16 %v887
  %v3848 = vunpack.c.l.b16 %v888
  %v3849 = vunpack.c.l.b16 %v889
  %v3850 = vunpack.c.l.b16 %v890
  %v3851 = vunpack.c.l.b16 %v891
  %v3852 = vunpack.c.l.b16 %v892
  %v3853 = vunpack.c.l.b16 %v893
  %v3854 = vunpack.c.l.b16 %v894
  %v3855 = vunpack.c.l.b16 %v895
  %v3856 = vunpack.c.l.b16 %v896
  %v3857 = vunpack.c.l.b16 %v897
  %v3858 = vunpack.c.l.b16 %v898
  %v3859 = vunpack.c.l.b16 %v899
  %v3860 = vunpack.c.l.b16 %v900
  %v3861 = vunpack.c.l.b16 %v901
  %v3862 = vunpack.c.l.b16 %v902
  %v3863 = vunpack.c.l.b16 %v903
  %v3864 = vunpack.c.l.b16 %v904
  %v3865 = vunpack.c.l.b16 %v905
  %v3866 = vunpack.c.l.b16 %v906
  %v3867 = vunpack.c.l.b16 %v907
  %v3868 = vunpack.c.l.b16 %v908
  %v3869 = vunpack.c.l.b16 %v909
  %v3870 = vunpack.c.l.b16 %v910
  %v3871 = vunpack.c.l.b16 %v911
  %v3872 = vunpack.c.l.b16 %v912
  %v3873 = vunpack.c.l.b16 %v913
  %v3874 = vunpack.c.l.b16 %v914
  %v3875 = vunpack.c.l.b16 %v915
  %v3876 = vunpack.c.l.b16 %v916
  %v3877 = vunpack.c.l.b16 %v917
  %v3878 = vunpack.c.l.b16 %v918
  %v3879 = vunpack.c.l.b16 %v919
  %v3880 = vunpack.c.l.b16 %v920
  %v3881 = vunpack.c.l.b16 %v921
  %v3882 = vunpack.c.l.b16 %v922
  %v3883 = vunpack.c.l.b16 %v923
  %v3884 = vunpack.c.l.b16 %v924
  %v3885 = vunpack.c.l.b16 %v925
  %v3886 = vunpack.c.l.b16 %v926
  %v3887 = vunpack.c.l.b16 %v927
  %v3888 = vunpack.c.l.b16 %v928
  %v3889 = vunpack.c.l.b16 %v929
  %v3890 = vunpack.c.l.b16 %v930
  %v3891 = vunpack.c.l.b16 %v931
  %v3892 = vunpack.c.l.b16 %v932
  %v3893 = vunpack.c.l.b16 %v933
  %v3894 = vunpack.c.l.b16 %v934
  %v3895 = vunpack.c.l.b16 %v935
  %v3896 = vunpack.c.l.b16 %v936
  %v3897 = vunpack.c.l.b16 %v937
  %v3898 = vunpack.c.l.b16 %v938
  %v3899 = vunpack.c.l.b16 %v939
  %v3900 = vunpack.c.l.b16 %v940
  %v3901 = vunpack.c.l.b16 %v941
  %v3902 = vunpack.c.l.b16 %v942
  %v3903 = vunpack.c.l.b16 %v943
  %v3904 = vunpack.c.l.b16 %v944
  %v3905 = vunpack.c.l.b16 %v945
  %v3906 = vunpack.c.l.b16 %v946
  %v3907 = vunpack.c.l.b16 %v947
  %v3908 = vunpack.c.l.b16 %v948
  %v3909 = vunpack.c.l.b16 %v949
  %v3910 = vunpack.c.l.b16 %v950
  %v3911 = vunpack.c.l.b16 %v951
  %v3912 = vunpack.c.l.b16 %v952
  %v3913 = vunpack.c.l.b16 %v953
  %v3914 = vunpack.c.l.b16 %v954
  %v3915 = vunpack.c.l.b16 %v955
  %v3916 = vunpack.c.l.b16 %v956
  %v3917 = vunpack.c.l.b16 %v957
  %v3918 = vunpack.c.l.b16 %v958
  %v3919 = vunpack.c.l.b16 %v959
  %v3920 = vunpack.c.l.b16 %v960
  %v3921 = vunpack.c.l.b16 %v961
  %v3922 = vunpack.c.l.b16 %v962
  %v3923 = vunpack.c.l.b16 %v963
  %v3924 = vunpack.c.l.b16 %v964
  %v3925 = vunpack.c.l.b16 %v965
  %v3926 = vunpack.c.l.b16 %v966
  %v3927 = vunpack.c.l.b16 %v967
  %v3928 = vunpack.c.l.b16 %v968
  %v3929 = vunpack.c.l.b16 %v969
  %v3930 = vunpack.c.l.b16 %v970
  %v3931 = vunpack.c.l.b16 %v971
  %v3932 = vunpack.c.l.b16 %v972
  %v3933 = vunpack.c.l.b16 %v973
  %v3934 = vunpack.c.l.b16 %v974
  %v3935 = vunpack.c.l.b16 %v975
  %v3936 = vunpack.c.l.b16 %v976
  %v3937 = vunpack.c.l.b16 %v977
  %v3938 = vunpack.c.l.b16 %v978
  %v3939 = vunpack.c.l.b16 %v979
  %v3940 = vunpack.c.l.b16 %v980
  %v3941 = vunpack.c.l.b16 %v981
  %v3942 = vunpack.c.l.b16 %v982
  %v3943 = vunpack.c.l.b16 %v983
  %v3944 = vunpack.c.l.b16 %v984
  %v3945 = vunpack.c.l.b16 %v985
  %v3946 = vunpack.c.l.b16 %v986
  %v3947 = vunpack.c.l.b16 %v987
  %v3948 = vunpack.c.l.b16 %v988
  %v3949 = vunpack.c.l.b16 %v989
  %v3950 = vunpack.c.l.b16 %v990
  %v3951 = vunpack.c.l.b16 %v991
  %v3952 = vunpack.c.l.b16 %v992
  %v3953 = vunpack.c.l.b16 %v993
  %v3954 = vunpack.c.l.b16 %v994
  %v3955 = vunpack.c.l.b16 %v995
  %v3956 = vunpack.c.l.b16 %v996
  %v3957 = vunpack.c.l.b16 %v997
  %v3958 = vunpack.c.l.b16 %v998
  %v3959 = vunpack.c.l.b16 %v999
  %v3960 = vunpack.c.l.b16 %v1000
  %v3961 = vunpack.c.l.b16 %v1001
  %v3962 = vunpack.c.l.b16 %v1002
  %v3963 = vunpack.c.l.b16 %v1003
  %v3964 = vunpack.c.l.b16 %v1004
  %v3965 = vunpack.c.l.b16 %v1005
  %v3966 = vunpack.c.l.b16 %v1006
  %v3967 = vunpack.c.l.b16 %v1007
  %v3968 = vunpack.c.l.b16 %v1008
  %v3969 = vunpack.c.l.b16 %v1009
  %v3970 = vunpack.c.l.b16 %v1010
  %v3971 = vunpack.c.l.b16 %v1011
  %v3972 = vunpack.c.l.b16 %v1012
  %v3973 = vunpack.c.l.b16 %v1013
  %v3974 = vunpack.c.l.b16 %v1014
  %v3975 = vunpack.c.l.b16 %v1015
  %v3976 = vunpack.c.l.b16 %v1016
  %v3977 = vunpack.c.l.b16 %v1017
  %v3978 = vunpack.c.l.b16 %v1018
  %v3979 = vunpack.c.l.b16 %v1019
  %v3980 = vunpack.c.l.b16 %v1020
  %v3981 = vunpack.c.l.b16 %v1021
  %v3982 = vunpack.c.l.b16 %v1022
  %v3983 = vunpack.c.l.b16 %v1023
  %v3984 = vunpack.c.l.b16 %v1024
  %v3985 = vunpack.c.l.b16 %v1025
  %v3986 = vunpack.c.l.b16 %v1026
  %v3987 = vunpack.c.l.b16 %v1027
  %v3988 = vunpack.c.l.b16 %v1028
  %v3989 = vunpack.c.l.b16 %v1029
  %v3990 = vunpack.c.l.b16 %v1030
  %v3991 = vunpack.c.l.b16 %v1031
  %v3992 = vunpack.c.l.b16 %v1032
  %v3993 = vunpack.c.l.b16 %v1033
  %v3994 = vunpack.c.l.b16 %v1034
  %v3995 = vunpack.c.l.b16 %v1035
  %v3996 = vunpack.c.l.b16 %v1036
  %v3997 = vunpack.c.l.b16 %v1037
  %v3998 = vunpack.c.l.b16 %v1038
  %v3999 = vunpack.c.l.b16 %v1039
  %v4000 = vunpack.c.l.b16 %v1040
  %v4001 = vunpack.c.l.b16 %v1041
  %v4002 = vunpack.c.l.b16 %v1042
  %v4003 = vunpack.c.l.b16 %v1043
  %v4004 = vunpack.c.l.b16 %v1044
  %v4005 = vunpack.c.l.b16 %v1045
  %v4006 = vunpack.c.l.b16 %v1046
  %v4007 = vunpack.c.l.b16 %v1047
  %v4008 = vunpack.c.l.b16 %v1048
  %v4009 = vunpack.c.l.b16 %v1049
  %v4010 = vunpack.c.l.b16 %v1050
  %v4011 = vunpack.c.l.b16 %v1051
  %v4012 = vunpack.c.l.b16 %v1052
  %v4013 = vunpack.c.l.b16 %v1053
  %v4014 = vunpack.c.l.b16 %v1054
  %v4015 = vunpack.c.l.b16 %v1055
  %v4016 = vunpack.c.l.b16 %v1056
  %v4017 = vunpack.c.l.b16 %v1057
  %v4018 = vunpack.c.l.b16 %v1058
  %v4019 = vunpack.c.l.b16 %v1059
  %v4020 = vunpack.c.l.b16 %v1060
  %v4021 = vunpack.c.l.b16 %v1061
  %v4022 = vunpack.c.l.b16 %v1062
  %v4023 = vunpack.c.l.b16 %v1063
  %v4024 = vunpack.c.l.b16 %v1064
  %v4025 = vunpack.c.l.b16 %v1065
  %v4026 = vunpack.c.l.b16 %v1066
  %v4027 = vunpack.c.l.b16 %v1067
  %v4028 = vunpack.c.l.b16 %v1068
  %v4029 = vunpack.c.l.b16 %v1069
  %v4030 = vunpack.c.l.b16 %v1070
  %v4031 = vunpack.c.l.b16 %v1071
  %v4032 = vunpack.c.l.b16 %v1072
  %v4033 = vunpack.c.l.b16 %v1073
  %v4034 = vunpack.c.l.b16 %v1074
  %v4035 = vunpack.c.l.b16 %v1075
  %v4036 = vunpack.c.l.b16 %v1076
  %v4037 = vunpack.c.l.b16 %v1077
  %v4038 = vunpack.c.l.b16 %v1078
  %v4039 = vunpack.c.l.b16 %v1079
  %v4040 = vunpack.c.l.b16 %v1080
  %v4041 = vunpack.c.l.b16 %v1081
  %v4042 = vunpack.c.l.b16 %v1082
  %v4043 = vunpack.c.l.b16 %v1083
  %v4044 = vunpack.c.l.b16 %v1084
  %v4045 = vunpack.c.l.b16 %v1085
  %v4046 = vunpack.c.l.b16 %v1086
  %v4047 = vunpack.c.l.b16 %v1087
  %v4048 = vunpack.c.l.b16 %v1088
  %v4049 = vunpack.c.l.b16 %v1089
  %v4050 = vunpack.c.l.b16 %v1090
  %v4051 = vunpack.c.l.b16 %v1091
  %v4052 = vunpack.c.l.b16 %v1092
  %v4053 = vunpack.c.l.b16 %v1093
  %v4054 = vunpack.c.l.b16 %v1094
  %v4055 = vunpack.c.l.b16 %v1095
  %v4056 = vunpack.c.l.b16 %v1096
  %v4057 = vunpack.c.l.b16 %v1097
  %v4058 = vunpack.c.l.b16 %v1098
  %v4059 = vunpack.c.l.b16 %v1099
  %v4060 = vunpack.c.l.b16 %v1100
  %v4061 = vunpack.c.l.b16 %v1101
  %v4062 = vunpack.c.l.b16 %v1102
  %v4063 = vunpack.c.l.b16 %v1103
  %v4064 = vunpack.c.l.b16 %v1104
  %v4065 = vunpack.c.l.b16 %v1105
  %v4066 = vunpack.c.l.b16 %v1106
  %v4067 = vunpack.c.l.b16 %v1107
  %v4068 = vunpack.c.l.b16 %v1108
  %v4069 = vunpack.c.l.b16 %v1109
  %v4070 = vunpack.c.l.b16 %v1110
  %v4071 = vunpack.c.l.b16 %v1111
  %v4072 = vunpack.c.l.b16 %v1112
  %v4073 = vunpack.c.l.b16 %v1113
  %v4074 = vunpack.c.l.b16 %v1114
  %v4075 = vunpack.c.l.b16 %v1115
  %v4076 = vunpack.c.l.b16 %v1116
  %v4077 = vunpack.c.l.b16 %v1117
  %v4078 = vunpack.c.l.b16 %v1118
  %v4079 = vunpack.c.l.b16 %v1119
  %v4080 = vunpack.c.l.b16 %v1120
  %v4081 = vunpack.c.l.b16 %v1121
  %v4082 = vunpack.c.l.b16 %v1122
  %v4083 = vunpack.c.l.b16 %v1123
  %v4084 = vunpack.c.l.b16 %v1124
  %v4085 = vunpack.c.l.b16 %v1125
  %v4086 = vunpack.c.l.b16 %v1126
  %v4087 = vunpack.c.l.b16 %v1127
  %v4088 = vunpack.c.l.b16 %v1128
  %v4089 = vunpack.c.l.b16 %v1129
  %v4090 = vunpack.c.l.b16 %v1130
  %v4091 = vunpack.c.l.b16 %v1131
  %v4092 = vunpack.c.l.b16 %v1132
  %v4093 = vunpack.c.l.b16 %v1133
  %v4094 = vunpack.c.l.b16 %v1134
  %v4095 = vunpack.c.l.b16 %v1135
  %v4096 = vunpack.c.l.b16 %v1136
  %v4097 = vunpack.c.l.b16 %v1137
  %v4098 = vunpack.c.l.b16 %v1138
  %v4099 = vunpack.c.l.b16 %v1139
  %v4100 = vunpack.c.l.b16 %v1140
  %v4101 = vunpack.c.l.b16 %v1141
  %v4102 = vunpack.c.l.b16 %v1142
  %v4103 = vunpack.c.l.b16 %v1143
  %v4104 = vunpack.c.l.b16 %v1144
  %v4105 = vunpack.c.l.b16 %v1145
  %v4106 = vunpack.c.l.b16 %v1146
  %v4107 = vunpack.c.l.b16 %v1147
  %v4108 = vunpack.c.l.b16 %v1148
  %v4109 = vunpack.c.l.b16 %v1149
  %v4110 = vunpack.c.l.b16 %v1150
  %v4111 = vunpack.c.l.b16 %v1151
  %v4112 = vunpack.c.l.b16 %v1152
  %v4113 = vunpack.c.l.b16 %v1153
  %v4114 = vunpack.c.l.b16 %v1154
  %v4115 = vunpack.c.l.b16 %v1155
  %v4116 = vunpack.c.l.b16 %v1156
  %v4117 = vunpack.c.l.b16 %v1157
  %v4118 = vunpack.c.l.b16 %v1158
  %v4119 = vunpack.c.l.b16 %v1159
  %v4120 = vunpack.c.l.b16 %v1160
  %v4121 = vunpack.c.l.b16 %v1161
  %v4122 = vunpack.c.l.b16 %v1162
  %v4123 = vunpack.c.l.b16 %v1163
  %v4124 = vunpack.c.l.b16 %v1164
  %v4125 = vunpack.c.l.b16 %v1165
  %v4126 = vunpack.c.l.b16 %v1166
  %v4127 = vunpack.c.l.b16 %v1167
  %v4128 = vunpack.c.l.b16 %v1168
  %v4129 = vunpack.c.l.b16 %v1169
  %v4130 = vunpack.c.l.b16 %v1170
  %v4131 = vunpack.c.l.b16 %v1171
  %v4132 = vunpack.c.l.b16 %v1172
  %v4133 = vunpack.c.l.b16 %v1173
  %v4134 = vunpack.c.l.b16 %v1174
  %v4135 = vunpack.c.l.b16 %v1175
  %v4136 = vunpack.c.l.b16 %v1176
  %v4137 = vunpack.c.l.b16 %v1177
  %v4138 = vunpack.c.l.b16 %v1178
  %v4139 = vunpack.c.l.b16 %v1179
  %v4140 = vunpack.c.l.b16 %v1180
  %v4141 = vunpack.c.l.b16 %v1181
  %v4142 = vunpack.c.l.b16 %v1182
  %v4143 = vunpack.c.l.b16 %v1183
  %v4144 = vunpack.c.l.b16 %v1184
  %v4145 = vunpack.c.l.b16 %v1185
  %v4146 = vunpack.c.l.b16 %v1186
  %v4147 = vunpack.c.l.b16 %v1187
  %v4148 = vunpack.c.l.b16 %v1188
  %v4149 = vunpack.c.l.b16 %v1189
  %v4150 = vunpack.c.l.b16 %v1190
  %v4151 = vunpack.c.l.b16 %v1191
  %v4152 = vunpack.c.l.b16 %v1192
  %v4153 = vunpack.c.l.b16 %v1193
  %v4154 = vunpack.c.l.b16 %v1194
  %v4155 = vunpack.c.l.b16 %v1195
  %v4156 = vunpack.c.l.b16 %v1196
  %v4157 = vunpack.c.l.b16 %v1197
  %v4158 = vunpack.c.l.b16 %v1198
  %v4159 = vunpack.c.l.b16 %v1199
  %v4160 = vunpack.c.l.b16 %v1200
  %v4161 = vunpack.c.l.b16 %v1201
  %v4162 = vunpack.c.l.b16 %v1202
  %v4163 = vunpack.c.l.b16 %v1203
  %v4164 = vunpack.c.l.b16 %v1204
  %v4165 = vunpack.c.l.b16 %v1205
  %v4166 = vunpack.c.l.b16 %v1206
  %v4167 = vunpack.c.l.b16 %v1207
  %v4168 = vunpack.c.l.b16 %v1208
  %v4169 = vunpack.c.l.b16 %v1209
  %v4170 = vunpack.c.l.b16 %v1210
  %v4171 = vunpack.c.l.b16 %v1211
  %v4172 = vunpack.c.l.b16 %v1212
  %v4173 = vunpack.c.l.b16 %v1213
  %v4174 = vunpack.c.l.b16 %v1214
  %v4175 = vunpack.c.l.b16 %v1215
  %v4176 = vunpack.c.l.b16 %v1216
  %v4177 = vunpack.c.l.b16 %v1217
  %v4178 = vunpack.c.l.b16 %v1218
  %v4179 = vunpack.c.l.b16 %v1219
  %v4180 = vunpack.c.l.b16 %v1220
  %v4181 = vunpack.c.l.b16 %v1221
  %v4182 = vunpack.c.l.b16 %v1222
  %v4183 = vunpack.c.l.b16 %v1223
  %v4184 = vunpack.c.l.b16 %v1224
  %v4185 = vunpack.c.l.b16 %v1225
  %v4186 = vunpack.c.l.b16 %v1226
  %v4187 = vunpack.c.l.b16 %v1227
  %v4188 = vunpack.c.l.b16 %v1228
  %v4189 = vunpack.c.l.b16 %v1229
  %v4190 = vunpack.c.l.b16 %v1230
  %v4191 = vunpack.c.l.b16 %v1231
  %v4192 = vunpack.c.l.b16 %v1232
  %v4193 = vunpack.c.l.b16 %v1233
  %v4194 = vunpack.c.l.b16 %v1234
  %v4195 = vunpack.c.l.b16 %v1235
  %v4196 = vunpack.c.l.b16 %v1236
  %v4197 = vunpack.c.l.b16 %v1237
  %v4198 = vunpack.c.l.b16 %v1238
  %v4199 = vunpack.c.l.b16 %v1239
  %v4200 = vunpack.c.l.b16 %v1240
  %v4201 = vunpack.c.l.b16 %v1241
  %v4202 = vunpack.c.l.b16 %v1242
  %v4203 = vunpack.c.l.b16 %v1243
  %v4204 = vunpack.c.l.b16 %v1244
  %v4205 = vunpack.c.l.b16 %v1245
  %v4206 = vunpack.c.l.b16 %v1246
  %v4207 = vunpack.c.l.b16 %v1247
  %v4208 = vunpack.c.l.b16 %v1248
  %v4209 = vunpack.c.l.b16 %v1249
  %v4210 = vunpack.c.l.b16 %v1250
  %v4211 = vunpack.c.l.b16 %v1251
  %v4212 = vunpack.c.l.b16 %v1252
  %v4213 = vunpack.c.l.b16 %v1253
  %v4214 = vunpack.c.l.b16 %v1254
  %v4215 = vunpack.c.l.b16 %v1255
  %v4216 = vunpack.c.l.b16 %v1256
  %v4217 = vunpack.c.l.b16 %v1257
  %v4218 = vunpack.c.l.b16 %v1258
  %v4219 = vunpack.c.l.b16 %v1259
  %v4220 = vunpack.c.l.b16 %v1260
  %v4221 = vunpack.c.l.b16 %v1261
  %v4222 = vunpack.c.l.b16 %v1262
  %v4223 = vunpack.c.l.b16 %v1263
  %v4224 = vunpack.c.l.b16 %v1264
  %v4225 = vunpack.c.l.b16 %v1265
  %v4226 = vunpack.c.l.b16 %v1266
  %v4227 = vunpack.c.l.b16 %v1267
  %v4228 = vunpack.c.l.b16 %v1268
  %v4229 = vunpack.c.l.b16 %v1269
  %v4230 = vunpack.c.l.b16 %v1270
  %v4231 = vunpack.c.l.b16 %v1271
  %v4232 = vunpack.c.l.b16 %v1272
  %v4233 = vunpack.c.l.b16 %v1273
  %v4234 = vunpack.c.l.b16 %v1274
  %v4235 = vunpack.c.l.b16 %v1275
  %v4236 = vunpack.c.l.b16 %v1276
  %v4237 = vunpack.c.l.b16 %v1277
  %v4238 = vunpack.c.l.b16 %v1278
  %v4239 = vunpack.c.l.b16 %v1279
  %v4240 = vunpack.c.l.b16 %v1280
  %v4241 = vunpack.c.l.b16 %v1281
  %v4242 = vunpack.c.l.b16 %v1282
  %v4243 = vunpack.c.l.b16 %v1283
  %v4244 = vunpack.c.l.b16 %v1284
  %v4245 = vunpack.c.l.b16 %v1285
  %v4246 = vunpack.c.l.b16 %v1286
  %v4247 = vunpack.c.l.b16 %v1287
  %v4248 = vunpack.c.l.b16 %v1288
  %v4249 = vunpack.c.l.b16 %v1289
  %v4250 = vunpack.c.l.b16 %v1290
  %v4251 = vunpack.c.l.b16 %v1291
  %v4252 = vunpack.c.l.b16 %v1292
  %v4253 = vunpack.c.l.b16 %v1293
  %v4254 = vunpack.c.l.b16 %v1294
  %v4255 = vunpack.c.l.b16 %v1295
  %v4256 = vunpack.c.l.b16 %v1296
  %v4257 = vunpack.c.l.b16 %v1297
  %v4258 = vunpack.c.l.b16 %v1298
  %v4259 = vunpack.c.l.b16 %v1299
  %v4260 = vunpack.c.l.b16 %v1300
  %v4261 = vunpack.c.l.b16 %v1301
  %v4262 = vunpack.c.l.b16 %v1302
  %v4263 = vunpack.c.l.b16 %v1303
  %v4264 = vunpack.c.l.b16 %v1304
  %v4265 = vunpack.c.l.b16 %v1305
  %v4266 = vunpack.c.l.b16 %v1306
  %v4267 = vunpack.c.l.b16 %v1307
  %v4268 = vunpack.c.l.b16 %v1308
  %v4269 = vunpack.c.l.b16 %v1309
  %v4270 = vunpack.c.l.b16 %v1310
  %v4271 = vunpack.c.l.b16 %v1311
  %v4272 = vunpack.c.l.b16 %v1312
  %v4273 = vunpack.c.l.b16 %v1313
  %v4274 = vunpack.c.l.b16 %v1314
  %v4275 = vunpack.c.l.b16 %v1315
  %v4276 = vunpack.c.l.b16 %v1316
  %v4277 = vunpack.c.l.b16 %v1317
  %v4278 = vunpack.c.l.b16 %v1318
  %v4279 = vunpack.c.l.b16 %v1319
  %v4280 = vunpack.c.l.b16 %v1320
  %v4281 = vunpack.c.l.b16 %v1321
  %v4282 = vunpack.c.l.b16 %v1322
  %v4283 = vunpack.c.l.b16 %v1323
  %v4284 = vunpack.c.l.b16 %v1324
  %v4285 = vunpack.c.l.b16 %v1325
  %v4286 = vunpack.c.l.b16 %v1326
  %v4287 = vunpack.c.l.b16 %v1327
  %v4288 = vunpack.c.l.b16 %v1328
  %v4289 = vunpack.c.l.b16 %v1329
  %v4290 = vunpack.c.l.b16 %v1330
  %v4291 = vunpack.c.l.b16 %v1331
  %v4292 = vunpack.c.l.b16 %v1332
  %v4293 = vunpack.c.l.b16 %v1333
  %v4294 = vunpack.c.l.b16 %v1334
  %v4295 = vunpack.c.l.b16 %v1335
  %v4296 = vunpack.c.l.b16 %v1336
  %v4297 = vunpack.c.l.b16 %v1337
  %v4298 = vunpack.c.l.b16 %v1338
  %v4299 = vunpack.c.l.b16 %v1339
  %v4300 = vunpack.c.l.b16 %v1340
  %v4301 = vunpack.c.l.b16 %v1341
  %v4302 = vunpack.c.l.b16 %v1342
  %v4303 = vunpack.c.l.b16 %v1343
  %v4304 = vunpack.c.l.b16 %v1344
  %v4305 = vunpack.c.l.b16 %v1345
  %v4306 = vunpack.c.l.b16 %v1346
  %v4307 = vunpack.c.l.b16 %v1347
  %v4308 = vunpack.c.l.b16 %v1348
  %v4309 = vunpack.c.l.b16 %v1349
  %v4310 = vunpack.c.l.b16 %v1350
  %v4311 = vunpack.c.l.b16 %v1351
  %v4312 = vunpack.c.l.b16 %v1352
  %v4313 = vunpack.c.l.b16 %v1353
  %v4314 = vunpack.c.l.b16 %v1354
  %v4315 = vunpack.c.l.b16 %v1355
  %v4316 = vunpack.c.l.b16 %v1356
  %v4317 = vunpack.c.l.b16 %v1357
  %v4318 = vunpack.c.l.b16 %v1358
  %v4319 = vunpack.c.l.b16 %v1359
  %v4320 = vunpack.c.l.b16 %v1360
  %v4321 = vunpack.c.l.b16 %v1361
  %v4322 = vunpack.c.l.b16 %v1362
  %v4323 = vunpack.c.l.b16 %v1363
  %v4324 = vunpack.c.l.b16 %v1364
  %v4325 = vunpack.c.l.b16 %v1365
  %v4326 = vunpack.c.l.b16 %v1366
  %v4327 = vunpack.c.l.b16 %v1367
  %v4328 = vunpack.c.l.b16 %v1368
  %v4329 = vunpack.c.l.b16 %v1369
  %v4330 = vunpack.c.l.b16 %v1370
  %v4331 = vunpack.c.l.b16 %v1371
  %v4332 = vunpack.c.l.b16 %v1372
  %v4333 = vunpack.c.l.b16 %v1373
  %v4334 = vunpack.c.l.b16 %v1374
  %v4335 = vunpack.c.l.b16 %v1375
  %v4336 = vunpack.c.l.b16 %v1376
  %v4337 = vunpack.c.l.b16 %v1377
  %v4338 = vpack.c.b16 %v3059, %v3058
  %v4339 = vpack.c.b16 %v3061, %v3060
  %v4340 = vpack.c.b16 %v3063, %v3062
  %v4341 = vpack.c.b16 %v3065, %v3064
  %v4342 = vpack.c.b16 %v3067, %v3066
  %v4343 = vpack.c.b16 %v3069, %v3068
  %v4344 = vpack.c.b16 %v3071, %v3070
  %v4345 = vpack.c.b16 %v3073, %v3072
  %v4346 = vpack.c.b16 %v3075, %v3074
  %v4347 = vpack.c.b16 %v3077, %v3076
  %v4348 = vpack.c.b16 %v3079, %v3078
  %v4349 = vpack.c.b16 %v3081, %v3080
  %v4350 = vpack.c.b16 %v3083, %v3082
  %v4351 = vpack.c.b16 %v3085, %v3084
  %v4352 = vpack.c.b16 %v3087, %v3086
  %v4353 = vpack.c.b16 %v3089, %v3088
  %v4354 = vpack.c.b16 %v3091, %v3090
  %v4355 = vpack.c.b16 %v3093, %v3092
  %v4356 = vpack.c.b16 %v3095, %v3094
  %v4357 = vpack.c.b16 %v3097, %v3096
  %v4358 = vpack.c.b16 %v3099, %v3098
  %v4359 = vpack.c.b16 %v3101, %v3100
  %v4360 = vpack.c.b16 %v3103, %v3102
  %v4361 = vpack.c.b16 %v3105, %v3104
  %v4362 = vpack.c.b16 %v3107, %v3106
  %v4363 = vpack.c.b16 %v3109, %v3108
  %v4364 = vpack.c.b16 %v3111, %v3110
  %v4365 = vpack.c.b16 %v3113, %v3112
  %v4366 = vpack.c.b16 %v3115, %v3114
  %v4367 = vpack.c.b16 %v3117, %v3116
  %v4368 = vpack.c.b16 %v3119, %v3118
  %v4369 = vpack.c.b16 %v3121, %v3120
  %v4370 = vpack.c.b16 %v3123, %v3122
  %v4371 = vpack.c.b16 %v3125, %v3124
  %v4372 = vpack.c.b16 %v3127, %v3126
  %v4373 = vpack.c.b16 %v3129, %v3128
  %v4374 = vpack.c.b16 %v3131, %v3130
  %v4375 = vpack.c.b16 %v3133, %v3132
  %v4376 = vpack.c.b16 %v3135, %v3134
  %v4377 = vpack.c.b16 %v3137, %v3136
  %v4378 = vpack.c.b16 %v3139, %v3138
  %v4379 = vpack.c.b16 %v3141, %v3140
  %v4380 = vpack.c.b16 %v3143, %v3142
  %v4381 = vpack.c.b16 %v3145, %v3144
  %v4382 = vpack.c.b16 %v3147, %v3146
  %v4383 = vpack.c.b16 %v3149, %v3148
  %v4384 = vpack.c.b16 %v3151, %v3150
  %v4385 = vpack.c.b16 %v3153, %v3152
  %v4386 = vpack.c.b16 %v3155, %v3154
  %v4387 = vpack.c.b16 %v3157, %v3156
  %v4388 = vpack.c.b16 %v3159, %v3158
  %v4389 = vpack.c.b16 %v3161, %v3160
  %v4390 = vpack.c.b16 %v3163, %v3162
  %v4391 = vpack.c.b16 %v3165, %v3164
  %v4392 = vpack.c.b16 %v3167, %v3166
  %v4393 = vpack.c.b16 %v3169, %v3168
  %v4394 = vpack.c.b16 %v3171, %v3170
  %v4395 = vpack.c.b16 %v3173, %v3172
  %v4396 = vpack.c.b16 %v3175, %v3174
  %v4397 = vpack.c.b16 %v3177, %v3176
  %v4398 = vpack.c.b16 %v3179, %v3178
  %v4399 = vpack.c.b16 %v3181, %v3180
  %v4400 = vpack.c.b16 %v3183, %v3182
  %v4401 = vpack.c.b16 %v3185, %v3184
  %v4402 = vpack.c.b16 %v3187, %v3186
  %v4403 = vpack.c.b16 %v3189, %v3188
  %v4404 = vpack.c.b16 %v3191, %v3190
  %v4405 = vpack.c.b16 %v3193, %v3192
  %v4406 = vpack.c.b16 %v3195, %v3194
  %v4407 = vpack.c.b16 %v3197, %v3196
  %v4408 = vpack.c.b16 %v3199, %v3198
  %v4409 = vpack.c.b16 %v3201, %v3200
  %v4410 = vpack.c.b16 %v3203, %v3202
  %v4411 = vpack.c.b16 %v3205, %v3204
  %v4412 = vpack.c.b16 %v3207, %v3206
  %v4413 = vpack.c.b16 %v3209, %v3208
  %v4414 = vpack.c.b16 %v3211, %v3210
  %v4415 = vpack.c.b16 %v3213, %v3212
  %v4416 = vpack.c.b16 %v3215, %v3214
  %v4417 = vpack.c.b16 %v3217, %v3216
  %v4418 = vpack.c.b16 %v3219, %v3218
  %v4419 = vpack.c.b16 %v3221, %v3220
  %v4420 = vpack.c.b16 %v3223, %v3222
  %v4421 = vpack.c.b16 %v3225, %v3224
  %v4422 = vpack.c.b16 %v3227, %v3226
  %v4423 = vpack.c.b16 %v3229, %v3228
  %v4424 = vpack.c.b16 %v3231, %v3230
  %v4425 = vpack.c.b16 %v3233, %v3232
  %v4426 = vpack.c.b16 %v3235, %v3234
  %v4427 = vpack.c.b16 %v3237, %v3236
  %v4428 = vpack.c.b16 %v3239, %v3238
  %v4429 = vpack.c.b16 %v3241, %v3240
  %v4430 = vpack.c.b16 %v3243, %v3242
  %v4431 = vpack.c.b16 %v3245, %v3244
  %v4432 = vpack.c.b16 %v3247, %v3246
  %v4433 = vpack.c.b16 %v3249, %v3248
  %v4434 = vpack.c.b16 %v3251, %v3250
  %v4435 = vpack.c.b16 %v3253, %v3252
  %v4436 = vpack.c.b16 %v3255, %v3254
  %v4437 = vpack.c.b16 %v3257, %v3256
  %v4438 = vpack.c.b16 %v3259, %v3258
  %v4439 = vpack.c.b16 %v3261, %v3260
  %v4440 = vpack.c.b16 %v3263, %v3262
  %v4441 = vpack.c.b16 %v3265, %v3264
  %v4442 = vpack.c.b16 %v3267, %v3266
  %v4443 = vpack.c.b16 %v3269, %v3268
  %v4444 = vpack.c.b16 %v3271, %v3270
  %v4445 = vpack.c.b16 %v3273, %v3272
  %v4446 = vpack.c.b16 %v3275, %v3274
  %v4447 = vpack.c.b16 %v3277, %v3276
  %v4448 = vpack.c.b16 %v3279, %v3278
  %v4449 = vpack.c.b16 %v3281, %v3280
  %v4450 = vpack.c.b16 %v3283, %v3282
  %v4451 = vpack.c.b16 %v3285, %v3284
  %v4452 = vpack.c.b16 %v3287, %v3286
  %v4453 = vpack.c.b16 %v3289, %v3288
  %v4454 = vpack.c.b16 %v3291, %v3290
  %v4455 = vpack.c.b16 %v3293, %v3292
  %v4456 = vpack.c.b16 %v3295, %v3294
  %v4457 = vpack.c.b16 %v3297, %v3296
  %v4458 = vpack.c.b16 %v3299, %v3298
  %v4459 = vpack.c.b16 %v3301, %v3300
  %v4460 = vpack.c.b16 %v3303, %v3302
  %v4461 = vpack.c.b16 %v3305, %v3304
  %v4462 = vpack.c.b16 %v3307, %v3306
  %v4463 = vpack.c.b16 %v3309, %v3308
  %v4464 = vpack.c.b16 %v3311, %v3310
  %v4465 = vpack.c.b16 %v3313, %v3312
  %v4466 = vpack.c.b16 %v3315, %v3314
  %v4467 = vpack.c.b16 %v3317, %v3316
  %v4468 = vpack.c.b16 %v3319, %v3318
  %v4469 = vpack.c.b16 %v3321, %v3320
  %v4470 = vpack.c.b16 %v3323, %v3322
  %v4471 = vpack.c.b16 %v3325, %v3324
  %v4472 = vpack.c.b16 %v3327, %v3326
  %v4473 = vpack.c.b16 %v3329, %v3328
  %v4474 = vpack.c.b16 %v3331, %v3330
  %v4475 = vpack.c.b16 %v3333, %v3332
  %v4476 = vpack.c.b16 %v3335, %v3334
  %v4477 = vpack.c.b16 %v3337, %v3336
  %v4478 = vpack.c.b16 %v3339, %v3338
  %v4479 = vpack.c.b16 %v3341, %v3340
  %v4480 = vpack.c.b16 %v3343, %v3342
  %v4481 = vpack.c.b16 %v3345, %v3344
  %v4482 = vpack.c.b16 %v3347, %v3346
  %v4483 = vpack.c.b16 %v3349, %v3348
  %v4484 = vpack.c.b16 %v3351, %v3350
  %v4485 = vpack.c.b16 %v3353, %v3352
  %v4486 = vpack.c.b16 %v3355, %v3354
  %v4487 = vpack.c.b16 %v3357, %v3356
  %v4488 = vpack.c.b16 %v3359, %v3358
  %v4489 = vpack.c.b16 %v3361, %v3360
  %v4490 = vpack.c.b16 %v3363, %v3362
  %v4491 = vpack.c.b16 %v3365, %v3364
  %v4492 = vpack.c.b16 %v3367, %v3366
  %v4493 = vpack.c.b16 %v3369, %v3368
  %v4494 = vpack.c.b16 %v3371, %v3370
  %v4495 = vpack.c.b16 %v3373, %v3372
  %v4496 = vpack.c.b16 %v3375, %v3374
  %v4497 = vpack.c.b16 %v3377, %v3376
  %v4498 = vpack.c.b16 %v3379, %v3378
  %v4499 = vpack.c.b16 %v3381, %v3380
  %v4500 = vpack.c.b16 %v3383, %v3382
  %v4501 = vpack.c.b16 %v3385, %v3384
  %v4502 = vpack.c.b16 %v3387, %v3386
  %v4503 = vpack.c.b16 %v3389, %v3388
  %v4504 = vpack.c.b16 %v3391, %v3390
  %v4505 = vpack.c.b16 %v3393, %v3392
  %v4506 = vpack.c.b16 %v3395, %v3394
  %v4507 = vpack.c.b16 %v3397, %v3396
  %v4508 = vpack.c.b16 %v3399, %v3398
  %v4509 = vpack.c.b16 %v3401, %v3400
  %v4510 = vpack.c.b16 %v3403, %v3402
  %v4511 = vpack.c.b16 %v3405, %v3404
  %v4512 = vpack.c.b16 %v3407, %v3406
  %v4513 = vpack.c.b16 %v3409, %v3408
  %v4514 = vpack.c.b16 %v3411, %v3410
  %v4515 = vpack.c.b16 %v3413, %v3412
  %v4516 = vpack.c.b16 %v3415, %v3414
  %v4517 = vpack.c.b16 %v3417, %v3416
  %v4518 = vpack.c.b16 %v3419, %v3418
  %v4519 = vpack.c.b16 %v3421, %v3420
  %v4520 = vpack.c.b16 %v3423, %v3422
  %v4521 = vpack.c.b16 %v3425, %v3424
  %v4522 = vpack.c.b16 %v3427, %v3426
  %v4523 = vpack.c.b16 %v3429, %v3428
  %v4524 = vpack.c.b16 %v3431, %v3430
  %v4525 = vpack.c.b16 %v3433, %v3432
  %v4526 = vpack.c.b16 %v3435, %v3434
  %v4527 = vpack.c.b16 %v3437, %v3436
  %v4528 = vpack.c.b16 %v3439, %v3438
  %v4529 = vpack.c.b16 %v3441, %v3440
  %v4530 = vpack.c.b16 %v3443, %v3442
  %v4531 = vpack.c.b16 %v3445, %v3444
  %v4532 = vpack.c.b16 %v3447, %v3446
  %v4533 = vpack.c.b16 %v3449, %v3448
  %v4534 = vpack.c.b16 %v3451, %v3450
  %v4535 = vpack.c.b16 %v3453, %v3452
  %v4536 = vpack.c.b16 %v3455, %v3454
  %v4537 = vpack.c.b16 %v3457, %v3456
  %v4538 = vpack.c.b16 %v3459, %v3458
  %v4539 = vpack.c.b16 %v3461, %v3460
  %v4540 = vpack.c.b16 %v3463, %v3462
  %v4541 = vpack.c.b16 %v3465, %v3464
  %v4542 = vpack.c.b16 %v3467, %v3466
  %v4543 = vpack.c.b16 %v3469, %v3468
  %v4544 = vpack.c.b16 %v3471, %v3470
  %v4545 = vpack.c.b16 %v3473, %v3472
  %v4546 = vpack.c.b16 %v3475, %v3474
  %v4547 = vpack.c.b16 %v3477, %v3476
  %v4548 = vpack.c.b16 %v3479, %v3478
  %v4549 = vpack.c.b16 %v3481, %v3480
  %v4550 = vpack.c.b16 %v3483, %v3482
  %v4551 = vpack.c.b16 %v3485, %v3484
  %v4552 = vpack.c.b16 %v3487, %v3486
  %v4553 = vpack.c.b16 %v3489, %v3488
  %v4554 = vpack.c.b16 %v3491, %v3490
  %v4555 = vpack.c.b16 %v3493, %v3492
  %v4556 = vpack.c.b16 %v3495, %v3494
  %v4557 = vpack.c.b16 %v3497, %v3496
  %v4558 = vpack.c.b16 %v3499, %v3498
  %v4559 = vpack.c.b16 %v3501, %v3500
  %v4560 = vpack.c.b16 %v3503, %v3502
  %v4561 = vpack.c.b16 %v3505, %v3504
  %v4562 = vpack.c.b16 %v3507, %v3506
  %v4563 = vpack.c.b16 %v3509, %v3508
  %v4564 = vpack.c.b16 %v3511, %v3510
  %v4565 = vpack.c.b16 %v3513, %v3512
  %v4566 = vpack.c.b16 %v3515, %v3514
  %v4567 = vpack.c.b16 %v3517, %v3516
  %v4568 = vpack.c.b16 %v3519, %v3518
  %v4569 = vpack.c.b16 %v3521, %v3520
  %v4570 = vpack.c.b16 %v3523, %v3522
  %v4571 = vpack.c.b16 %v3525, %v3524
  %v4572 = vpack.c.b16 %v3527, %v3526
  %v4573 = vpack.c.b16 %v3529, %v3528
  %v4574 = vpack.c.b16 %v3531, %v3530
  %v4575 = vpack.c.b16 %v3533, %v3532
  %v4576 = vpack.c.b16 %v3535, %v3534
  %v4577 = vpack.c.b16 %v3537, %v3536
  %v4578 = vpack.c.b16 %v3539, %v3538
  %v4579 = vpack.c.b16 %v3541, %v3540
  %v4580 = vpack.c.b16 %v3543, %v3542
  %v4581 = vpack.c.b16 %v3545, %v3544
  %v4582 = vpack.c.b16 %v3547, %v3546
  %v4583 = vpack.c.b16 %v3549, %v3548
  %v4584 = vpack.c.b16 %v3551, %v3550
  %v4585 = vpack.c.b16 %v3553, %v3552
  %v4586 = vpack.c.b16 %v3555, %v3554
  %v4587 = vpack.c.b16 %v3557, %v3556
  %v4588 = vpack.c.b16 %v3559, %v3558
  %v4589 = vpack.c.b16 %v3561, %v3560
  %v4590 = vpack.c.b16 %v3563, %v3562
  %v4591 = vpack.c.b16 %v3565, %v3564
  %v4592 = vpack.c.b16 %v3567, %v3566
  %v4593 = vpack.c.b16 %v3569, %v3568
  %v4594 = vpack.c.b16 %v3571, %v3570
  %v4595 = vpack.c.b16 %v3573, %v3572
  %v4596 = vpack.c.b16 %v3575, %v3574
  %v4597 = vpack.c.b16 %v3577, %v3576
  %v4598 = vpack.c.b16 %v3579, %v3578
  %v4599 = vpack.c.b16 %v3581, %v3580
  %v4600 = vpack.c.b16 %v3583, %v3582
  %v4601 = vpack.c.b16 %v3585, %v3584
  %v4602 = vpack.c.b16 %v3587, %v3586
  %v4603 = vpack.c.b16 %v3589, %v3588
  %v4604 = vpack.c.b16 %v3591, %v3590
  %v4605 = vpack.c.b16 %v3593, %v3592
  %v4606 = vpack.c.b16 %v3595, %v3594
  %v4607 = vpack.c.b16 %v3597, %v3596
  %v4608 = vpack.c.b16 %v3599, %v3598
  %v4609 = vpack.c.b16 %v3601, %v3600
  %v4610 = vpack.c.b16 %v3603, %v3602
  %v4611 = vpack.c.b16 %v3605, %v3604
  %v4612 = vpack.c.b16 %v3607, %v3606
  %v4613 = vpack.c.b16 %v3609, %v3608
  %v4614 = vpack.c.b16 %v3611, %v3610
  %v4615 = vpack.c.b16 %v3613, %v3612
  %v4616 = vpack.c.b16 %v3615, %v3614
  %v4617 = vpack.c.b16 %v3617, %v3616
  %v4618 = vpack.c.b16 %v3619, %v3618
  %v4619 = vpack.c.b16 %v3621, %v3620
  %v4620 = vpack.c.b16 %v3623, %v3622
  %v4621 = vpack.c.b16 %v3625, %v3624
  %v4622 = vpack.c.b16 %v3627, %v3626
  %v4623 = vpack.c.b16 %v3629, %v3628
  %v4624 = vpack.c.b16 %v3631, %v3630
  %v4625 = vpack.c.b16 %v3633, %v3632
  %v4626 = vpack.c.b16 %v3635, %v3634
  %v4627 = vpack.c.b16 %v3637, %v3636
  %v4628 = vpack.c.b16 %v3639, %v3638
  %v4629 = vpack.c.b16 %v3641, %v3640
  %v4630 = vpack.c.b16 %v3643, %v3642
  %v4631 = vpack.c.b16 %v3645, %v3644
  %v4632 = vpack.c.b16 %v3647, %v3646
  %v4633 = vpack.c.b16 %v3649, %v3648
  %v4634 = vpack.c.b16 %v3651, %v3650
  %v4635 = vpack.c.b16 %v3653, %v3652
  %v4636 = vpack.c.b16 %v3655, %v3654
  %v4637 = vpack.c.b16 %v3657, %v3656
  %v4638 = vpack.c.b16 %v3659, %v3658
  %v4639 = vpack.c.b16 %v3661, %v3660
  %v4640 = vpack.c.b16 %v3663, %v3662
  %v4641 = vpack.c.b16 %v3665, %v3664
  %v4642 = vpack.c.b16 %v3667, %v3666
  %v4643 = vpack.c.b16 %v3669, %v3668
  %v4644 = vpack.c.b16 %v3671, %v3670
  %v4645 = vpack.c.b16 %v3673, %v3672
  %v4646 = vpack.c.b16 %v3675, %v3674
  %v4647 = vpack.c.b16 %v3677, %v3676
  %v4648 = vpack.c.b16 %v3679, %v3678
  %v4649 = vpack.c.b16 %v3681, %v3680
  %v4650 = vpack.c.b16 %v3683, %v3682
  %v4651 = vpack.c.b16 %v3685, %v3684
  %v4652 = vpack.c.b16 %v3687, %v3686
  %v4653 = vpack.c.b16 %v3689, %v3688
  %v4654 = vpack.c.b16 %v3691, %v3690
  %v4655 = vpack.c.b16 %v3693, %v3692
  %v4656 = vpack.c.b16 %v3695, %v3694
  %v4657 = vpack.c.b16 %v3697, %v3696
  %v4658 = vpack.c.b16 %v3699, %v3698
  %v4659 = vpack.c.b16 %v3701, %v3700
  %v4660 = vpack.c.b16 %v3703, %v3702
  %v4661 = vpack.c.b16 %v3705, %v3704
  %v4662 = vpack.c.b16 %v3707, %v3706
  %v4663 = vpack.c.b16 %v3709, %v3708
  %v4664 = vpack.c.b16 %v3711, %v3710
  %v4665 = vpack.c.b16 %v3713, %v3712
  %v4666 = vpack.c.b16 %v3715, %v3714
  %v4667 = vpack.c.b16 %v3717, %v3716
  %v4668 = vpack.c.b16 %v3719, %v3718
  %v4669 = vpack.c.b16 %v3721, %v3720
  %v4670 = vpack.c.b16 %v3723, %v3722
  %v4671 = vpack.c.b16 %v3725, %v3724
  %v4672 = vpack.c.b16 %v3727, %v3726
  %v4673 = vpack.c.b16 %v3729, %v3728
  %v4674 = vpack.c.b16 %v3731, %v3730
  %v4675 = vpack.c.b16 %v3733, %v3732
  %v4676 = vpack.c.b16 %v3735, %v3734
  %v4677 = vpack.c.b16 %v3737, %v3736
  %v4678 = vpack.c.b16 %v3739, %v3738
  %v4679 = vpack.c.b16 %v3741, %v3740
  %v4680 = vpack.c.b16 %v3743, %v3742
  %v4681 = vpack.c.b16 %v3745, %v3744
  %v4682 = vpack.c.b16 %v3747, %v3746
  %v4683 = vpack.c.b16 %v3749, %v3748
  %v4684 = vpack.c.b16 %v3751, %v3750
  %v4685 = vpack.c.b16 %v3753, %v3752
  %v4686 = vpack.c.b16 %v3755, %v3754
  %v4687 = vpack.c.b16 %v3757, %v3756
  %v4688 = vpack.c.b16 %v3759, %v3758
  %v4689 = vpack.c.b16 %v3761, %v3760
  %v4690 = vpack.c.b16 %v3763, %v3762
  %v4691 = vpack.c.b16 %v3765, %v3764
  %v4692 = vpack.c.b16 %v3767, %v3766
  %v4693 = vpack.c.b16 %v3769, %v3768
  %v4694 = vpack.c.b16 %v3771, %v3770
  %v4695 = vpack.c.b16 %v3773, %v3772
  %v4696 = vpack.c.b16 %v3775, %v3774
  %v4697 = vpack.c.b16 %v3777, %v3776
  %v4698 = vpack.c.b16 %v3779, %v3778
  %v4699 = vpack.c.b16 %v3781, %v3780
  %v4700 = vpack.c.b16 %v3783, %v3782
  %v4701 = vpack.c.b16 %v3785, %v3784
  %v4702 = vpack.c.b16 %v3787, %v3786
  %v4703 = vpack.c.b16 %v3789, %v3788
  %v4704 = vpack.c.b16 %v3791, %v3790
  %v4705 = vpack.c.b16 %v3793, %v3792
  %v4706 = vpack.c.b16 %v3795, %v3794
  %v4707 = vpack.c.b16 %v3797, %v3796
  %v4708 = vpack.c.b16 %v3799, %v3798
  %v4709 = vpack.c.b16 %v3801, %v3800
  %v4710 = vpack.c.b16 %v3803, %v3802
  %v4711 = vpack.c.b16 %v3805, %v3804
  %v4712 = vpack.c.b16 %v3807, %v3806
  %v4713 = vpack.c.b16 %v3809, %v3808
  %v4714 = vpack.c.b16 %v3811, %v3810
  %v4715 = vpack.c.b16 %v3813, %v3812
  %v4716 = vpack.c.b16 %v3815, %v3814
  %v4717 = vpack.c.b16 %v3817, %v3816
  %v4718 = vpack.c.b16 %v3819, %v3818
  %v4719 = vpack.c.b16 %v3821, %v3820
  %v4720 = vpack.c.b16 %v3823, %v3822
  %v4721 = vpack.c.b16 %v3825, %v3824
  %v4722 = vpack.c.b16 %v3827, %v3826
  %v4723 = vpack.c.b16 %v3829, %v3828
  %v4724 = vpack.c.b16 %v3831, %v3830
  %v4725 = vpack.c.b16 %v3833, %v3832
  %v4726 = vpack.c.b16 %v3835, %v3834
  %v4727 = vpack.c.b16 %v3837, %v3836
  %v4728 = vpack.c.b16 %v3839, %v3838
  %v4729 = vpack.c.b16 %v3841, %v3840
  %v4730 = vpack.c.b16 %v3843, %v3842
  %v4731 = vpack.c.b16 %v3845, %v3844
  %v4732 = vpack.c.b16 %v3847, %v3846
  %v4733 = vpack.c.b16 %v3849, %v3848
  %v4734 = vpack.c.b16 %v3851, %v3850
  %v4735 = vpack.c.b16 %v3853, %v3852
  %v4736 = vpack.c.b16 %v3855, %v3854
  %v4737 = vpack.c.b16 %v3857, %v3856
  %v4738 = vpack.c.b16 %v3859, %v3858
  %v4739 = vpack.c.b16 %v3861, %v3860
  %v4740 = vpack.c.b16 %v3863, %v3862
  %v4741 = vpack.c.b16 %v3865, %v3864
  %v4742 = vpack.c.b16 %v3867, %v3866
  %v4743 = vpack.c.b16 %v3869, %v3868
  %v4744 = vpack.c.b16 %v3871, %v3870
  %v4745 = vpack.c.b16 %v3873, %v3872
  %v4746 = vpack.c.b16 %v3875, %v3874
  %v4747 = vpack.c.b16 %v3877, %v3876
  %v4748 = vpack.c.b16 %v3879, %v3878
  %v4749 = vpack.c.b16 %v3881, %v3880
  %v4750 = vpack.c.b16 %v3883, %v3882
  %v4751 = vpack.c.b16 %v3885, %v3884
  %v4752 = vpack.c.b16 %v3887, %v3886
  %v4753 = vpack.c.b16 %v3889, %v3888
  %v4754 = vpack.c.b16 %v3891, %v3890
  %v4755 = vpack.c.b16 %v3893, %v3892
  %v4756 = vpack.c.b16 %v3895, %v3894
  %v4757 = vpack.c.b16 %v3897, %v3896
  %v4758 = vpack.c.b16 %v3899, %v3898
  %v4759 = vpack.c.b16 %v3901, %v3900
  %v4760 = vpack.c.b16 %v3903, %v3902
  %v4761 = vpack.c.b16 %v3905, %v3904
  %v4762 = vpack.c.b16 %v3907, %v3906
  %v4763 = vpack.c.b16 %v3909, %v3908
  %v4764 = vpack.c.b16 %v3911, %v3910
  %v4765 = vpack.c.b16 %v3913, %v3912
  %v4766 = vpack.c.b16 %v3915, %v3914
  %v4767 = vpack.c.b16 %v3917, %v3916
  %v4768 = vpack.c.b16 %v3919, %v3918
  %v4769 = vpack.c.b16 %v3921, %v3920
  %v4770 = vpack.c.b16 %v3923, %v3922
  %v4771 = vpack.c.b16 %v3925, %v3924
  %v4772 = vpack.c.b16 %v3927, %v3926
  %v4773 = vpack.c.b16 %v3929, %v3928
  %v4774 = vpack.c.b16 %v3931, %v3930
  %v4775 = vpack.c.b16 %v3933, %v3932
  %v4776 = vpack.c.b16 %v3935, %v3934
  %v4777 = vpack.c.b16 %v3937, %v3936
  %v4778 = vpack.c.b16 %v3939, %v3938
  %v4779 = vpack.c.b16 %v3941, %v3940
  %v4780 = vpack.c.b16 %v3943, %v3942
  %v4781 = vpack.c.b16 %v3945, %v3944
  %v4782 = vpack.c.b16 %v3947, %v3946
  %v4783 = vpack.c.b16 %v3949, %v3948
  %v4784 = vpack.c.b16 %v3951, %v3950
  %v4785 = vpack.c.b16 %v3953, %v3952
  %v4786 = vpack.c.b16 %v3955, %v3954
  %v4787 = vpack.c.b16 %v3957, %v3956
  %v4788 = vpack.c.b16 %v3959, %v3958
  %v4789 = vpack.c.b16 %v3961, %v3960
  %v4790 = vpack.c.b16 %v3963, %v3962
  %v4791 = vpack.c.b16 %v3965, %v3964
  %v4792 = vpack.c.b16 %v3967, %v3966
  %v4793 = vpack.c.b16 %v3969, %v3968
  %v4794 = vpack.c.b16 %v3971, %v3970
  %v4795 = vpack.c.b16 %v3973, %v3972
  %v4796 = vpack.c.b16 %v3975, %v3974
  %v4797 = vpack.c.b16 %v3977, %v3976
  %v4798 = vpack.c.b16 %v3979, %v3978
  %v4799 = vpack.c.b16 %v3981, %v3980
  %v4800 = vpack.c.b16 %v3983, %v3982
  %v4801 = vpack.c.b16 %v3985, %v3984
  %v4802 = vpack.c.b16 %v3987, %v3986
  %v4803 = vpack.c.b16 %v3989, %v3988
  %v4804 = vpack.c.b16 %v3991, %v3990
  %v4805 = vpack.c.b16 %v3993, %v3992
  %v4806 = vpack.c.b16 %v3995, %v3994
  %v4807 = vpack.c.b16 %v3997, %v3996
  %v4808 = vpack.c.b16 %v3999, %v3998
  %v4809 = vpack.c.b16 %v4001, %v4000
  %v4810 = vpack.c.b16 %v4003, %v4002
  %v4811 = vpack.c.b16 %v4005, %v4004
  %v4812 = vpack.c.b16 %v4007, %v4006
  %v4813 = vpack.c.b16 %v4009, %v4008
  %v4814 = vpack.c.b16 %v4011, %v4010
  %v4815 = vpack.c.b16 %v4013, %v4012
  %v4816 = vpack.c.b16 %v4015, %v4014
  %v4817 = vpack.c.b16 %v4017, %v4016
  %v4818 = vpack.c.b16 %v4019, %v4018
  %v4819 = vpack.c.b16 %v4021, %v4020
  %v4820 = vpack.c.b16 %v4023, %v4022
  %v4821 = vpack.c.b16 %v4025, %v4024
  %v4822 = vpack.c.b16 %v4027, %v4026
  %v4823 = vpack.c.b16 %v4029, %v4028
  %v4824 = vpack.c.b16 %v4031, %v4030
  %v4825 = vpack.c.b16 %v4033, %v4032
  %v4826 = vpack.c.b16 %v4035, %v4034
  %v4827 = vpack.c.b16 %v4037, %v4036
  %v4828 = vpack.c.b16 %v4039, %v4038
  %v4829 = vpack.c.b16 %v4041, %v4040
  %v4830 = vpack.c.b16 %v4043, %v4042
  %v4831 = vpack.c.b16 %v4045, %v4044
  %v4832 = vpack.c.b16 %v4047, %v4046
  %v4833 = vpack.c.b16 %v4049, %v4048
  %v4834 = vpack.c.b16 %v4051, %v4050
  %v4835 = vpack.c.b16 %v4053, %v4052
  %v4836 = vpack.c.b16 %v4055, %v4054
  %v4837 = vpack.c.b16 %v4057, %v4056
  %v4838 = vpack.c.b16 %v4059, %v4058
  %v4839 = vpack.c.b16 %v4061, %v4060
  %v4840 = vpack.c.b16 %v4063, %v4062
  %v4841 = vpack.c.b16 %v4065, %v4064
  %v4842 = vpack.c.b16 %v4067, %v4066
  %v4843 = vpack.c.b16 %v4069, %v4068
  %v4844 = vpack.c.b16 %v4071, %v4070
  %v4845 = vpack.c.b16 %v4073, %v4072
  %v4846 = vpack.c.b16 %v4075, %v4074
  %v4847 = vpack.c.b16 %v4077, %v4076
  %v4848 = vpack.c.b16 %v4079, %v4078
  %v4849 = vpack.c.b16 %v4081, %v4080
  %v4850 = vpack.c.b16 %v4083, %v4082
  %v4851 = vpack.c.b16 %v4085, %v4084
  %v4852 = vpack.c.b16 %v4087, %v4086
  %v4853 = vpack.c.b16 %v4089, %v4088
  %v4854 = vpack.c.b16 %v4091, %v4090
  %v4855 = vpack.c.b16 %v4093, %v4092
  %v4856 = vpack.c.b16 %v4095, %v4094
  %v4857 = vpack.c.b16 %v4097, %v4096
  %v4858 = vpack.c.b16 %v4099, %v4098
  %v4859 = vpack.c.b16 %v4101, %v4100
  %v4860 = vpack.c.b16 %v4103, %v4102
  %v4861 = vpack.c.b16 %v4105, %v4104
  %v4862 = vpack.c.b16 %v4107, %v4106
  %v4863 = vpack.c.b16 %v4109, %v4108
  %v4864 = vpack.c.b16 %v4111, %v4110
  %v4865 = vpack.c.b16 %v4113, %v4112
  %v4866 = vpack.c.b16 %v4115, %v4114
  %v4867 = vpack.c.b16 %v4117, %v4116
  %v4868 = vpack.c.b16 %v4119, %v4118
  %v4869 = vpack.c.b16 %v4121, %v4120
  %v4870 = vpack.c.b16 %v4123, %v4122
  %v4871 = vpack.c.b16 %v4125, %v4124
  %v4872 = vpack.c.b16 %v4127, %v4126
  %v4873 = vpack.c.b16 %v4129, %v4128
  %v4874 = vpack.c.b16 %v4131, %v4130
  %v4875 = vpack.c.b16 %v4133, %v4132
  %v4876 = vpack.c.b16 %v4135, %v4134
  %v4877 = vpack.c.b16 %v4137, %v4136
  %v4878 = vpack.c.b16 %v4139, %v4138
  %v4879 = vpack.c.b16 %v4141, %v4140
  %v4880 = vpack.c.b16 %v4143, %v4142
  %v4881 = vpack.c.b16 %v4145, %v4144
  %v4882 = vpack.c.b16 %v4147, %v4146
  %v4883 = vpack.c.b16 %v4149, %v4148
  %v4884 = vpack.c.b16 %v4151, %v4150
  %v4885 = vpack.c.b16 %v4153, %v4152
  %v4886 = vpack.c.b16 %v4155, %v4154
  %v4887 = vpack.c.b16 %v4157, %v4156
  %v4888 = vpack.c.b16 %v4159, %v4158
  %v4889 = vpack.c.b16 %v4161, %v4160
  %v4890 = vpack.c.b16 %v4163, %v4162
  %v4891 = vpack.c.b16 %v4165, %v4164
  %v4892 = vpack.c.b16 %v4167, %v4166
  %v4893 = vpack.c.b16 %v4169, %v4168
  %v4894 = vpack.c.b16 %v4171, %v4170
  %v4895 = vpack.c.b16 %v4173, %v4172
  %v4896 = vpack.c.b16 %v4175, %v4174
  %v4897 = vpack.c.b16 %v4177, %v4176
  %v4898 = vpack.c.b16 %v4179, %v4178
  %v4899 = vpack.c.b16 %v4181, %v4180
  %v4900 = vpack.c.b16 %v4183, %v4182
  %v4901 = vpack.c.b16 %v4185, %v4184
  %v4902 = vpack.c.b16 %v4187, %v4186
  %v4903 = vpack.c.b16 %v4189, %v4188
  %v4904 = vpack.c.b16 %v4191, %v4190
  %v4905 = vpack.c.b16 %v4193, %v4192
  %v4906 = vpack.c.b16 %v4195, %v4194
  %v4907 = vpack.c.b16 %v4197, %v4196
  %v4908 = vpack.c.b16 %v4199, %v4198
  %v4909 = vpack.c.b16 %v4201, %v4200
  %v4910 = vpack.c.b16 %v4203, %v4202
  %v4911 = vpack.c.b16 %v4205, %v4204
  %v4912 = vpack.c.b16 %v4207, %v4206
  %v4913 = vpack.c.b16 %v4209, %v4208
  %v4914 = vpack.c.b16 %v4211, %v4210
  %v4915 = vpack.c.b16 %v4213, %v4212
  %v4916 = vpack.c.b16 %v4215, %v4214
  %v4917 = vpack.c.b16 %v4217, %v4216
  %v4918 = vpack.c.b16 %v4219, %v4218
  %v4919 = vpack.c.b16 %v4221, %v4220
  %v4920 = vpack.c.b16 %v4223, %v4222
  %v4921 = vpack.c.b16 %v4225, %v4224
  %v4922 = vpack.c.b16 %v4227, %v4226
  %v4923 = vpack.c.b16 %v4229, %v4228
  %v4924 = vpack.c.b16 %v4231, %v4230
  %v4925 = vpack.c.b16 %v4233, %v4232
  %v4926 = vpack.c.b16 %v4235, %v4234
  %v4927 = vpack.c.b16 %v4237, %v4236
  %v4928 = vpack.c.b16 %v4239, %v4238
  %v4929 = vpack.c.b16 %v4241, %v4240
  %v4930 = vpack.c.b16 %v4243, %v4242
  %v4931 = vpack.c.b16 %v4245, %v4244
  %v4932 = vpack.c.b16 %v4247, %v4246
  %v4933 = vpack.c.b16 %v4249, %v4248
  %v4934 = vpack.c.b16 %v4251, %v4250
  %v4935 = vpack.c.b16 %v4253, %v4252
  %v4936 = vpack.c.b16 %v4255, %v4254
  %v4937 = vpack.c.b16 %v4257, %v4256
  %v4938 = vpack.c.b16 %v4259, %v4258
  %v4939 = vpack.c.b16 %v4261, %v4260
  %v4940 = vpack.c.b16 %v4263, %v4262
  %v4941 = vpack.c.b16 %v4265, %v4264
  %v4942 = vpack.c.b16 %v4267, %v4266
  %v4943 = vpack.c.b16 %v4269, %v4268
  %v4944 = vpack.c.b16 %v4271, %v4270
  %v4945 = vpack.c.b16 %v4273, %v4272
  %v4946 = vpack.c.b16 %v4275, %v4274
  %v4947 = vpack.c.b16 %v4277, %v4276
  %v4948 = vpack.c.b16 %v4279, %v4278
  %v4949 = vpack.c.b16 %v4281, %v4280
  %v4950 = vpack.c.b16 %v4283, %v4282
  %v4951 = vpack.c.b16 %v4285, %v4284
  %v4952 = vpack.c.b16 %v4287, %v4286
  %v4953 = vpack.c.b16 %v4289, %v4288
  %v4954 = vpack.c.b16 %v4291, %v4290
  %v4955 = vpack.c.b16 %v4293, %v4292
  %v4956 = vpack.c.b16 %v4295, %v4294
  %v4957 = vpack.c.b16 %v4297, %v4296
  %v4958 = vpack.c.b16 %v4299, %v4298
  %v4959 = vpack.c.b16 %v4301, %v4300
  %v4960 = vpack.c.b16 %v4303, %v4302
  %v4961 = vpack.c.b16 %v4305, %v4304
  %v4962 = vpack.c.b16 %v4307, %v4306
  %v4963 = vpack.c.b16 %v4309, %v4308
  %v4964 = vpack.c.b16 %v4311, %v4310
  %v4965 = vpack.c.b16 %v4313, %v4312
  %v4966 = vpack.c.b16 %v4315, %v4314
  %v4967 = vpack.c.b16 %v4317, %v4316
  %v4968 = vpack.c.b16 %v4319, %v4318
  %v4969 = vpack.c.b16 %v4321, %v4320
  %v4970 = vpack.c.b16 %v4323, %v4322
  %v4971 = vpack.c.b16 %v4325, %v4324
  %v4972 = vpack.c.b16 %v4327, %v4326
  %v4973 = vpack.c.b16 %v4329, %v4328
  %v4974 = vpack.c.b16 %v4331, %v4330
  %v4975 = vpack.c.b16 %v4333, %v4332
  %v4976 = vpack.c.b16 %v4335, %v4334
  %v4977 = vpack.c.b16 %v4337, %v4336
  %5618 = vmatprep.subr.bf16.mxu0 0
  %5619 = vmatpush1.bf16.msra.mxu0 %v4338
  %5620 = vmatprep.subr.bf16.mxu0 0
  %5621 = vmatpush1.bf16.msra.mxu0 %v4339
  %5622 = vmatprep.subr.bf16.mxu0 0
  %5623 = vmatpush1.bf16.msra.mxu0 %v4340
  %5624 = vmatprep.subr.bf16.mxu0 0
  %5625 = vmatpush1.bf16.msra.mxu0 %v4341
  %5626 = vmatprep.subr.bf16.mxu0 0
  %5627 = vmatpush1.bf16.msra.mxu0 %v4342
  %5628 = vmatprep.subr.bf16.mxu0 0
  %5629 = vmatpush1.bf16.msra.mxu0 %v4343
  %5630 = vmatprep.subr.bf16.mxu0 0
  %5631 = vmatpush1.bf16.msra.mxu0 %v4344
  %5632 = vmatprep.subr.bf16.mxu0 0
  %5633 = vmatpush1.bf16.msra.mxu0 %v4345
  %5634 = vmatprep.subr.bf16.mxu0 0
  %5635 = vmatpush1.bf16.msra.mxu0 %v4346
  %5636 = vmatprep.subr.bf16.mxu0 0
  %5637 = vmatpush1.bf16.msra.mxu0 %v4347
  %5638 = vmatprep.subr.bf16.mxu0 0
  %5639 = vmatpush1.bf16.msra.mxu0 %v4348
  %5640 = vmatprep.subr.bf16.mxu0 0
  %5641 = vmatpush1.bf16.msra.mxu0 %v4349
  %5642 = vmatprep.subr.bf16.mxu0 0
  %5643 = vmatpush1.bf16.msra.mxu0 %v4350
  %5644 = vmatprep.subr.bf16.mxu0 0
  %5645 = vmatpush1.bf16.msra.mxu0 %v4351
  %5646 = vmatprep.subr.bf16.mxu0 0
  %5647 = vmatpush1.bf16.msra.mxu0 %v4352
  %5648 = vmatprep.subr.bf16.mxu0 0
  %5649 = vmatpush1.bf16.msra.mxu0 %v4353
  %5650 = vmatprep.mubr.bf16.mxu0 %v1619
  %5651 = vmatmul.mubr.bf16.gmra.mrb[0].mxu0 %v1618
  %v5652 = vpop.f32.mrb[0].mxu0
  %v5653 = vadd.f32 0.0, %v5652
  %v5654 = vpop.f32.mrb[0].mxu0
  %v5655 = vpop.f32.mrb[0].mxu0
  %v5656 = vadd.f32 0.0, %v5655
  %v5657 = vpop.f32.mrb[0].mxu0
  %5658 = vdwg.mxu0
  %5659 = vmatprep.subr.bf16.mxu0 0
  %5660 = vmatpush1.bf16.msra.mxu0 %v4354
  %5661 = vmatprep.subr.bf16.mxu0 0
  %5662 = vmatpush1.bf16.msra.mxu0 %v4355
  %5663 = vmatprep.subr.bf16.mxu0 0
  %5664 = vmatpush1.bf16.msra.mxu0 %v4356
  %5665 = vmatprep.subr.bf16.mxu0 0
  %5666 = vmatpush1.bf16.msra.mxu0 %v4357
  %5667 = vmatprep.subr.bf16.mxu0 0
  %5668 = vmatpush1.bf16.msra.mxu0 %v4358
  %5669 = vmatprep.subr.bf16.mxu0 0
  %5670 = vmatpush1.bf16.msra.mxu0 %v4359
  %5671 = vmatprep.subr.bf16.mxu0 0
  %5672 = vmatpush1.bf16.msra.mxu0 %v4360
  %5673 = vmatprep.subr.bf16.mxu0 0
  %5674 = vmatpush1.bf16.msra.mxu0 %v4361
  %5675 = vmatprep.subr.bf16.mxu0 0
  %5676 = vmatpush1.bf16.msra.mxu0 %v4362
  %5677 = vmatprep.subr.bf16.mxu0 0
  %5678 = vmatpush1.bf16.msra.mxu0 %v4363
  %5679 = vmatprep.subr.bf16.mxu0 0
  %5680 = vmatpush1.bf16.msra.mxu0 %v4364
  %5681 = vmatprep.subr.bf16.mxu0 0
  %5682 = vmatpush1.bf16.msra.mxu0 %v4365
  %5683 = vmatprep.subr.bf16.mxu0 0
  %5684 = vmatpush1.bf16.msra.mxu0 %v4366
  %5685 = vmatprep.subr.bf16.mxu0 0
  %5686 = vmatpush1.bf16.msra.mxu0 %v4367
  %5687 = vmatprep.subr.bf16.mxu0 0
  %5688 = vmatpush1.bf16.msra.mxu0 %v4368
  %5689 = vmatprep.subr.bf16.mxu0 0
  %5690 = vmatpush1.bf16.msra.mxu0 %v4369
  %5691 = vmatprep.mubr.bf16.mxu0 %v1621
  %5692 = vmatmul.mubr.bf16.gmra.mrb[0].mxu0 %v1620
  %v5693 = vpop.f32.mrb[0].mxu0
  %v5694 = vadd.f32 %v5653, %v5693
  %v5695 = vpop.f32.mrb[0].mxu0
  %v5696 = vpop.f32.mrb[0].mxu0
  %v5697 = vadd.f32 %v5656, %v5696
  %v5698 = vpop.f32.mrb[0].mxu0
  %5699 = vdwg.mxu0
  %5700 = vmatprep.subr.bf16.mxu0 0
  %5701 = vmatpush1.bf16.msra.mxu0 %v4370
  %5702 = vmatprep.subr.bf16.mxu0 0
  %5703 = vmatpush1.bf16.msra.mxu0 %v4371
  %5704 = vmatprep.subr.bf16.mxu0 0
  %5705 = vmatpush1.bf16.msra.mxu0 %v4372
  %5706 = vmatprep.subr.bf16.mxu0 0
  %5707 = vmatpush1.bf16.msra.mxu0 %v4373
  %5708 = vmatprep.subr.bf16.mxu0 0
  %5709 = vmatpush1.bf16.msra.mxu0 %v4374
  %5710 = vmatprep.subr.bf16.mxu0 0
  %5711 = vmatpush1.bf16.msra.mxu0 %v4375
  %5712 = vmatprep.subr.bf16.mxu0 0
  %5713 = vmatpush1.bf16.msra.mxu0 %v4376
  %5714 = vmatprep.subr.bf16.mxu0 0
  %5715 = vmatpush1.bf16.msra.mxu0 %v4377
  %5716 = vmatprep.subr.bf16.mxu0 0
  %5717 = vmatpush1.bf16.msra.mxu0 %v4378
  %5718 = vmatprep.subr.bf16.mxu0 0
  %5719 = vmatpush1.bf16.msra.mxu0 %v4379
  %5720 = vmatprep.subr.bf16.mxu0 0
  %5721 = vmatpush1.bf16.msra.mxu0 %v4380
  %5722 = vmatprep.subr.bf16.mxu0 0
  %5723 = vmatpush1.bf16.msra.mxu0 %v4381
  %5724 = vmatprep.subr.bf16.mxu0 0
  %5725 = vmatpush1.bf16.msra.mxu0 %v4382
  %5726 = vmatprep.subr.bf16.mxu0 0
  %5727 = vmatpush1.bf16.msra.mxu0 %v4383
  %5728 = vmatprep.subr.bf16.mxu0 0
  %5729 = vmatpush1.bf16.msra.mxu0 %v4384
  %5730 = vmatprep.subr.bf16.mxu0 0
  %5731 = vmatpush1.bf16.msra.mxu0 %v4385
  %5732 = vmatprep.mubr.bf16.mxu0 %v1623
  %5733 = vmatmul.mubr.bf16.gmra.mrb[0].mxu0 %v1622
  %v5734 = vpop.f32.mrb[0].mxu0
  %v5735 = vadd.f32 %v5694, %v5734
  %v5736 = vpop.f32.mrb[0].mxu0
  %v5737 = vpop.f32.mrb[0].mxu0
  %v5738 = vadd.f32 %v5697, %v5737
  %v5739 = vpop.f32.mrb[0].mxu0
  %5740 = vdwg.mxu0
  %5741 = vmatprep.subr.bf16.mxu0 0
  %5742 = vmatpush1.bf16.msra.mxu0 %v4386
  %5743 = vmatprep.subr.bf16.mxu0 0
  %5744 = vmatpush1.bf16.msra.mxu0 %v4387
  %5745 = vmatprep.subr.bf16.mxu0 0
  %5746 = vmatpush1.bf16.msra.mxu0 %v4388
  %5747 = vmatprep.subr.bf16.mxu0 0
  %5748 = vmatpush1.bf16.msra.mxu0 %v4389
  %5749 = vmatprep.subr.bf16.mxu0 0
  %5750 = vmatpush1.bf16.msra.mxu0 %v4390
  %5751 = vmatprep.subr.bf16.mxu0 0
  %5752 = vmatpush1.bf16.msra.mxu0 %v4391
  %5753 = vmatprep.subr.bf16.mxu0 0
  %5754 = vmatpush1.bf16.msra.mxu0 %v4392
  %5755 = vmatprep.subr.bf16.mxu0 0
  %5756 = vmatpush1.bf16.msra.mxu0 %v4393
  %5757 = vmatprep.subr.bf16.mxu0 0
  %5758 = vmatpush1.bf16.msra.mxu0 %v4394
  %5759 = vmatprep.subr.bf16.mxu0 0
  %5760 = vmatpush1.bf16.msra.mxu0 %v4395
  %5761 = vmatprep.subr.bf16.mxu0 0
  %5762 = vmatpush1.bf16.msra.mxu0 %v4396
  %5763 = vmatprep.subr.bf16.mxu0 0
  %5764 = vmatpush1.bf16.msra.mxu0 %v4397
  %5765 = vmatprep.subr.bf16.mxu0 0
  %5766 = vmatpush1.bf16.msra.mxu0 %v4398
  %5767 = vmatprep.subr.bf16.mxu0 0
  %5768 = vmatpush1.bf16.msra.mxu0 %v4399
  %5769 = vmatprep.subr.bf16.mxu0 0
  %5770 = vmatpush1.bf16.msra.mxu0 %v4400
  %5771 = vmatprep.subr.bf16.mxu0 0
  %5772 = vmatpush1.bf16.msra.mxu0 %v4401
  %5773 = vmatprep.mubr.bf16.mxu0 %v1625
  %5774 = vmatmul.mubr.bf16.gmra.mrb[0].mxu0 %v1624
  %v5775 = vpop.f32.mrb[0].mxu0
  %v5776 = vadd.f32 %v5735, %v5775
  %v5777 = vpop.f32.mrb[0].mxu0
  %v5778 = vpop.f32.mrb[0].mxu0
  %v5779 = vadd.f32 %v5738, %v5778
  %v5780 = vpop.f32.mrb[0].mxu0
  %5781 = vdwg.mxu0
  %5782 = vmatprep.subr.bf16.mxu0 0
  %5783 = vmatpush1.bf16.msra.mxu0 %v4402
  %5784 = vmatprep.subr.bf16.mxu0 0
  %5785 = vmatpush1.bf16.msra.mxu0 %v4403
  %5786 = vmatprep.subr.bf16.mxu0 0
  %5787 = vmatpush1.bf16.msra.mxu0 %v4404
  %5788 = vmatprep.subr.bf16.mxu0 0
  %5789 = vmatpush1.bf16.msra.mxu0 %v4405
  %5790 = vmatprep.subr.bf16.mxu0 0
  %5791 = vmatpush1.bf16.msra.mxu0 %v4406
  %5792 = vmatprep.subr.bf16.mxu0 0
  %5793 = vmatpush1.bf16.msra.mxu0 %v4407
  %5794 = vmatprep.subr.bf16.mxu0 0
  %5795 = vmatpush1.bf16.msra.mxu0 %v4408
  %5796 = vmatprep.subr.bf16.mxu0 0
  %5797 = vmatpush1.bf16.msra.mxu0 %v4409
  %5798 = vmatprep.subr.bf16.mxu0 0
  %5799 = vmatpush1.bf16.msra.mxu0 %v4410
  %5800 = vmatprep.subr.bf16.mxu0 0
  %5801 = vmatpush1.bf16.msra.mxu0 %v4411
  %5802 = vmatprep.subr.bf16.mxu0 0
  %5803 = vmatpush1.bf16.msra.mxu0 %v4412
  %5804 = vmatprep.subr.bf16.mxu0 0
  %5805 = vmatpush1.bf16.msra.mxu0 %v4413
  %5806 = vmatprep.subr.bf16.mxu0 0
  %5807 = vmatpush1.bf16.msra.mxu0 %v4414
  %5808 = vmatprep.subr.bf16.mxu0 0
  %5809 = vmatpush1.bf16.msra.mxu0 %v4415
  %5810 = vmatprep.subr.bf16.mxu0 0
  %5811 = vmatpush1.bf16.msra.mxu0 %v4416
  %5812 = vmatprep.subr.bf16.mxu0 0
  %5813 = vmatpush1.bf16.msra.mxu0 %v4417
  %5814 = vmatprep.mubr.bf16.mxu0 %v1627
  %5815 = vmatmul.mubr.bf16.gmra.mrb[0].mxu0 %v1626
  %v5816 = vpop.f32.mrb[0].mxu0
  %v5817 = vadd.f32 %v5776, %v5816
  %v5818 = vpop.f32.mrb[0].mxu0
  %v5819 = vpop.f32.mrb[0].mxu0
  %v5820 = vadd.f32 %v5779, %v5819
  %v5821 = vpop.f32.mrb[0].mxu0
  %5822 = vdwg.mxu0
  %5823 = vmatprep.subr.bf16.mxu0 0
  %5824 = vmatpush1.bf16.msra.mxu0 %v4418
  %5825 = vmatprep.subr.bf16.mxu0 0
  %5826 = vmatpush1.bf16.msra.mxu0 %v4419
  %5827 = vmatprep.subr.bf16.mxu0 0
  %5828 = vmatpush1.bf16.msra.mxu0 %v4420
  %5829 = vmatprep.subr.bf16.mxu0 0
  %5830 = vmatpush1.bf16.msra.mxu0 %v4421
  %5831 = vmatprep.subr.bf16.mxu0 0
  %5832 = vmatpush1.bf16.msra.mxu0 %v4422
  %5833 = vmatprep.subr.bf16.mxu0 0
  %5834 = vmatpush1.bf16.msra.mxu0 %v4423
  %5835 = vmatprep.subr.bf16.mxu0 0
  %5836 = vmatpush1.bf16.msra.mxu0 %v4424
  %5837 = vmatprep.subr.bf16.mxu0 0
  %5838 = vmatpush1.bf16.msra.mxu0 %v4425
  %5839 = vmatprep.subr.bf16.mxu0 0
  %5840 = vmatpush1.bf16.msra.mxu0 %v4426
  %5841 = vmatprep.subr.bf16.mxu0 0
  %5842 = vmatpush1.bf16.msra.mxu0 %v4427
  %5843 = vmatprep.subr.bf16.mxu0 0
  %5844 = vmatpush1.bf16.msra.mxu0 %v4428
  %5845 = vmatprep.subr.bf16.mxu0 0
  %5846 = vmatpush1.bf16.msra.mxu0 %v4429
  %5847 = vmatprep.subr.bf16.mxu0 0
  %5848 = vmatpush1.bf16.msra.mxu0 %v4430
  %5849 = vmatprep.subr.bf16.mxu0 0
  %5850 = vmatpush1.bf16.msra.mxu0 %v4431
  %5851 = vmatprep.subr.bf16.mxu0 0
  %5852 = vmatpush1.bf16.msra.mxu0 %v4432
  %5853 = vmatprep.subr.bf16.mxu0 0
  %5854 = vmatpush1.bf16.msra.mxu0 %v4433
  %5855 = vmatprep.mubr.bf16.mxu0 %v1629
  %5856 = vmatmul.mubr.bf16.gmra.mrb[0].mxu0 %v1628
  %v5857 = vpop.f32.mrb[0].mxu0
  %v5858 = vadd.f32 %v5817, %v5857
  %v5859 = vpop.f32.mrb[0].mxu0
  %v5860 = vpop.f32.mrb[0].mxu0
  %v5861 = vadd.f32 %v5820, %v5860
  %v5862 = vpop.f32.mrb[0].mxu0
  %5863 = vdwg.mxu0
  %5864 = vmatprep.subr.bf16.mxu0 0
  %5865 = vmatpush1.bf16.msra.mxu0 %v4434
  %5866 = vmatprep.subr.bf16.mxu0 0
  %5867 = vmatpush1.bf16.msra.mxu0 %v4435
  %5868 = vmatprep.subr.bf16.mxu0 0
  %5869 = vmatpush1.bf16.msra.mxu0 %v4436
  %5870 = vmatprep.subr.bf16.mxu0 0
  %5871 = vmatpush1.bf16.msra.mxu0 %v4437
  %5872 = vmatprep.subr.bf16.mxu0 0
  %5873 = vmatpush1.bf16.msra.mxu0 %v4438
  %5874 = vmatprep.subr.bf16.mxu0 0
  %5875 = vmatpush1.bf16.msra.mxu0 %v4439
  %5876 = vmatprep.subr.bf16.mxu0 0
  %5877 = vmatpush1.bf16.msra.mxu0 %v4440
  %5878 = vmatprep.subr.bf16.mxu0 0
  %5879 = vmatpush1.bf16.msra.mxu0 %v4441
  %5880 = vmatprep.subr.bf16.mxu0 0
  %5881 = vmatpush1.bf16.msra.mxu0 %v4442
  %5882 = vmatprep.subr.bf16.mxu0 0
  %5883 = vmatpush1.bf16.msra.mxu0 %v4443
  %5884 = vmatprep.subr.bf16.mxu0 0
  %5885 = vmatpush1.bf16.msra.mxu0 %v4444
  %5886 = vmatprep.subr.bf16.mxu0 0
  %5887 = vmatpush1.bf16.msra.mxu0 %v4445
  %5888 = vmatprep.subr.bf16.mxu0 0
  %5889 = vmatpush1.bf16.msra.mxu0 %v4446
  %5890 = vmatprep.subr.bf16.mxu0 0
  %5891 = vmatpush1.bf16.msra.mxu0 %v4447
  %5892 = vmatprep.subr.bf16.mxu0 0
  %5893 = vmatpush1.bf16.msra.mxu0 %v4448
  %5894 = vmatprep.subr.bf16.mxu0 0
  %5895 = vmatpush1.bf16.msra.mxu0 %v4449
  %5896 = vmatprep.mubr.bf16.mxu0 %v1631
  %5897 = vmatmul.mubr.bf16.gmra.mrb[0].mxu0 %v1630
  %v5898 = vpop.f32.mrb[0].mxu0
  %v5899 = vadd.f32 %v5858, %v5898
  %v5900 = vpop.f32.mrb[0].mxu0
  %v5901 = vpop.f32.mrb[0].mxu0
  %v5902 = vadd.f32 %v5861, %v5901
  %v5903 = vpop.f32.mrb[0].mxu0
  %5904 = vdwg.mxu0
  %5905 = vmatprep.subr.bf16.mxu0 0
  %5906 = vmatpush1.bf16.msra.mxu0 %v4450
  %5907 = vmatprep.subr.bf16.mxu0 0
  %5908 = vmatpush1.bf16.msra.mxu0 %v4451
  %5909 = vmatprep.subr.bf16.mxu0 0
  %5910 = vmatpush1.bf16.msra.mxu0 %v4452
  %5911 = vmatprep.subr.bf16.mxu0 0
  %5912 = vmatpush1.bf16.msra.mxu0 %v4453
  %5913 = vmatprep.subr.bf16.mxu0 0
  %5914 = vmatpush1.bf16.msra.mxu0 %v4454
  %5915 = vmatprep.subr.bf16.mxu0 0
  %5916 = vmatpush1.bf16.msra.mxu0 %v4455
  %5917 = vmatprep.subr.bf16.mxu0 0
  %5918 = vmatpush1.bf16.msra.mxu0 %v4456
  %5919 = vmatprep.subr.bf16.mxu0 0
  %5920 = vmatpush1.bf16.msra.mxu0 %v4457
  %5921 = vmatprep.subr.bf16.mxu0 0
  %5922 = vmatpush1.bf16.msra.mxu0 %v4458
  %5923 = vmatprep.subr.bf16.mxu0 0
  %5924 = vmatpush1.bf16.msra.mxu0 %v4459
  %5925 = vmatprep.subr.bf16.mxu0 0
  %5926 = vmatpush1.bf16.msra.mxu0 %v4460
  %5927 = vmatprep.subr.bf16.mxu0 0
  %5928 = vmatpush1.bf16.msra.mxu0 %v4461
  %5929 = vmatprep.subr.bf16.mxu0 0
  %5930 = vmatpush1.bf16.msra.mxu0 %v4462
  %5931 = vmatprep.subr.bf16.mxu0 0
  %5932 = vmatpush1.bf16.msra.mxu0 %v4463
  %5933 = vmatprep.subr.bf16.mxu0 0
  %5934 = vmatpush1.bf16.msra.mxu0 %v4464
  %5935 = vmatprep.subr.bf16.mxu0 0
  %5936 = vmatpush1.bf16.msra.mxu0 %v4465
  %5937 = vmatprep.mubr.bf16.mxu0 %v1633
  %5938 = vmatmul.mubr.bf16.gmra.mrb[0].mxu0 %v1632
  %v5939 = vpop.f32.mrb[0].mxu0
  %v5940 = vadd.f32 %v5899, %v5939
  %v5941 = vpop.f32.mrb[0].mxu0
  %v5942 = vpop.f32.mrb[0].mxu0
  %v5943 = vadd.f32 %v5902, %v5942
  %v5944 = vpop.f32.mrb[0].mxu0
  %5945 = vdwg.mxu0
  %5946 = vmatprep.subr.bf16.mxu0 0
  %5947 = vmatpush1.bf16.msra.mxu0 %v4466
  %5948 = vmatprep.subr.bf16.mxu0 0
  %5949 = vmatpush1.bf16.msra.mxu0 %v4467
  %5950 = vmatprep.subr.bf16.mxu0 0
  %5951 = vmatpush1.bf16.msra.mxu0 %v4468
  %5952 = vmatprep.subr.bf16.mxu0 0
  %5953 = vmatpush1.bf16.msra.mxu0 %v4469
  %5954 = vmatprep.subr.bf16.mxu0 0
  %5955 = vmatpush1.bf16.msra.mxu0 %v4470
  %5956 = vmatprep.subr.bf16.mxu0 0
  %5957 = vmatpush1.bf16.msra.mxu0 %v4471
  %5958 = vmatprep.subr.bf16.mxu0 0
  %5959 = vmatpush1.bf16.msra.mxu0 %v4472
  %5960 = vmatprep.subr.bf16.mxu0 0
  %5961 = vmatpush1.bf16.msra.mxu0 %v4473
  %5962 = vmatprep.subr.bf16.mxu0 0
  %5963 = vmatpush1.bf16.msra.mxu0 %v4474
  %5964 = vmatprep.subr.bf16.mxu0 0
  %5965 = vmatpush1.bf16.msra.mxu0 %v4475
  %5966 = vmatprep.subr.bf16.mxu0 0
  %5967 = vmatpush1.bf16.msra.mxu0 %v4476
  %5968 = vmatprep.subr.bf16.mxu0 0
  %5969 = vmatpush1.bf16.msra.mxu0 %v4477
  %5970 = vmatprep.subr.bf16.mxu0 0
  %5971 = vmatpush1.bf16.msra.mxu0 %v4478
  %5972 = vmatprep.subr.bf16.mxu0 0
  %5973 = vmatpush1.bf16.msra.mxu0 %v4479
  %5974 = vmatprep.subr.bf16.mxu0 0
  %5975 = vmatpush1.bf16.msra.mxu0 %v4480
  %5976 = vmatprep.subr.bf16.mxu0 0
  %5977 = vmatpush1.bf16.msra.mxu0 %v4481
  %5978 = vmatprep.mubr.bf16.mxu0 %v1635
  %5979 = vmatmul.mubr.bf16.gmra.mrb[0].mxu0 %v1634
  %v5980 = vpop.f32.mrb[0].mxu0
  %v5981 = vadd.f32 %v5940, %v5980
  %v5982 = vpop.f32.mrb[0].mxu0
  %v5983 = vpop.f32.mrb[0].mxu0
  %v5984 = vadd.f32 %v5943, %v5983
  %v5985 = vpop.f32.mrb[0].mxu0
  %5986 = vdwg.mxu0
  %5987 = vmatprep.subr.bf16.mxu0 0
  %5988 = vmatpush1.bf16.msra.mxu0 %v4482
  %5989 = vmatprep.subr.bf16.mxu0 0
  %5990 = vmatpush1.bf16.msra.mxu0 %v4483
  %5991 = vmatprep.subr.bf16.mxu0 0
  %5992 = vmatpush1.bf16.msra.mxu0 %v4484
  %5993 = vmatprep.subr.bf16.mxu0 0
  %5994 = vmatpush1.bf16.msra.mxu0 %v4485
  %5995 = vmatprep.subr.bf16.mxu0 0
  %5996 = vmatpush1.bf16.msra.mxu0 %v4486
  %5997 = vmatprep.subr.bf16.mxu0 0
  %5998 = vmatpush1.bf16.msra.mxu0 %v4487
  %5999 = vmatprep.subr.bf16.mxu0 0
  %6000 = vmatpush1.bf16.msra.mxu0 %v4488
  %6001 = vmatprep.subr.bf16.mxu0 0
  %6002 = vmatpush1.bf16.msra.mxu0 %v4489
  %6003 = vmatprep.subr.bf16.mxu0 0
  %6004 = vmatpush1.bf16.msra.mxu0 %v4490
  %6005 = vmatprep.subr.bf16.mxu0 0
  %6006 = vmatpush1.bf16.msra.mxu0 %v4491
  %6007 = vmatprep.subr.bf16.mxu0 0
  %6008 = vmatpush1.bf16.msra.mxu0 %v4492
  %6009 = vmatprep.subr.bf16.mxu0 0
  %6010 = vmatpush1.bf16.msra.mxu0 %v4493
  %6011 = vmatprep.subr.bf16.mxu0 0
  %6012 = vmatpush1.bf16.msra.mxu0 %v4494
  %6013 = vmatprep.subr.bf16.mxu0 0
  %6014 = vmatpush1.bf16.msra.mxu0 %v4495
  %6015 = vmatprep.subr.bf16.mxu0 0
  %6016 = vmatpush1.bf16.msra.mxu0 %v4496
  %6017 = vmatprep.subr.bf16.mxu0 0
  %6018 = vmatpush1.bf16.msra.mxu0 %v4497
  %6019 = vmatprep.mubr.bf16.mxu0 %v1637
  %6020 = vmatmul.mubr.bf16.gmra.mrb[0].mxu0 %v1636
  %v6021 = vpop.f32.mrb[0].mxu0
  %v6022 = vadd.f32 %v5981, %v6021
  %v6023 = vpop.f32.mrb[0].mxu0
  %v6024 = vpop.f32.mrb[0].mxu0
  %v6025 = vadd.f32 %v5984, %v6024
  %v6026 = vpop.f32.mrb[0].mxu0
  %6027 = vdwg.mxu0
  %6028 = vmatprep.subr.bf16.mxu0 0
  %6029 = vmatpush1.bf16.msra.mxu0 %v4498
  %6030 = vmatprep.subr.bf16.mxu0 0
  %6031 = vmatpush1.bf16.msra.mxu0 %v4499
  %6032 = vmatprep.subr.bf16.mxu0 0
  %6033 = vmatpush1.bf16.msra.mxu0 %v4500
  %6034 = vmatprep.subr.bf16.mxu0 0
  %6035 = vmatpush1.bf16.msra.mxu0 %v4501
  %6036 = vmatprep.subr.bf16.mxu0 0
  %6037 = vmatpush1.bf16.msra.mxu0 %v4502
  %6038 = vmatprep.subr.bf16.mxu0 0
  %6039 = vmatpush1.bf16.msra.mxu0 %v4503
  %6040 = vmatprep.subr.bf16.mxu0 0
  %6041 = vmatpush1.bf16.msra.mxu0 %v4504
  %6042 = vmatprep.subr.bf16.mxu0 0
  %6043 = vmatpush1.bf16.msra.mxu0 %v4505
  %6044 = vmatprep.subr.bf16.mxu0 0
  %6045 = vmatpush1.bf16.msra.mxu0 %v4506
  %6046 = vmatprep.subr.bf16.mxu0 0
  %6047 = vmatpush1.bf16.msra.mxu0 %v4507
  %6048 = vmatprep.subr.bf16.mxu0 0
  %6049 = vmatpush1.bf16.msra.mxu0 %v4508
  %6050 = vmatprep.subr.bf16.mxu0 0
  %6051 = vmatpush1.bf16.msra.mxu0 %v4509
  %6052 = vmatprep.subr.bf16.mxu0 0
  %6053 = vmatpush1.bf16.msra.mxu0 %v4510
  %6054 = vmatprep.subr.bf16.mxu0 0
  %6055 = vmatpush1.bf16.msra.mxu0 %v4511
  %6056 = vmatprep.subr.bf16.mxu0 0
  %6057 = vmatpush1.bf16.msra.mxu0 %v4512
  %6058 = vmatprep.subr.bf16.mxu0 0
  %6059 = vmatpush1.bf16.msra.mxu0 %v4513
  %6060 = vmatprep.mubr.bf16.mxu0 %v1639
  %6061 = vmatmul.mubr.bf16.gmra.mrb[0].mxu0 %v1638
  %v6062 = vpop.f32.mrb[0].mxu0
  %v6063 = vadd.f32 %v6022, %v6062
  %v6064 = vpop.f32.mrb[0].mxu0
  %v6065 = vpop.f32.mrb[0].mxu0
  %v6066 = vadd.f32 %v6025, %v6065
  %v6067 = vpop.f32.mrb[0].mxu0
  %6068 = vdwg.mxu0
  %6069 = vmatprep.subr.bf16.mxu0 0
  %6070 = vmatpush1.bf16.msra.mxu0 %v4514
  %6071 = vmatprep.subr.bf16.mxu0 0
  %6072 = vmatpush1.bf16.msra.mxu0 %v4515
  %6073 = vmatprep.subr.bf16.mxu0 0
  %6074 = vmatpush1.bf16.msra.mxu0 %v4516
  %6075 = vmatprep.subr.bf16.mxu0 0
  %6076 = vmatpush1.bf16.msra.mxu0 %v4517
  %6077 = vmatprep.subr.bf16.mxu0 0
  %6078 = vmatpush1.bf16.msra.mxu0 %v4518
  %6079 = vmatprep.subr.bf16.mxu0 0
  %6080 = vmatpush1.bf16.msra.mxu0 %v4519
  %6081 = vmatprep.subr.bf16.mxu0 0
  %6082 = vmatpush1.bf16.msra.mxu0 %v4520
  %6083 = vmatprep.subr.bf16.mxu0 0
  %6084 = vmatpush1.bf16.msra.mxu0 %v4521
  %6085 = vmatprep.subr.bf16.mxu0 0
  %6086 = vmatpush1.bf16.msra.mxu0 %v4522
  %6087 = vmatprep.subr.bf16.mxu0 0
  %6088 = vmatpush1.bf16.msra.mxu0 %v4523
  %6089 = vmatprep.subr.bf16.mxu0 0
  %6090 = vmatpush1.bf16.msra.mxu0 %v4524
  %6091 = vmatprep.subr.bf16.mxu0 0
  %6092 = vmatpush1.bf16.msra.mxu0 %v4525
  %6093 = vmatprep.subr.bf16.mxu0 0
  %6094 = vmatpush1.bf16.msra.mxu0 %v4526
  %6095 = vmatprep.subr.bf16.mxu0 0
  %6096 = vmatpush1.bf16.msra.mxu0 %v4527
  %6097 = vmatprep.subr.bf16.mxu0 0
  %6098 = vmatpush1.bf16.msra.mxu0 %v4528
  %6099 = vmatprep.subr.bf16.mxu0 0
  %6100 = vmatpush1.bf16.msra.mxu0 %v4529
  %6101 = vmatprep.mubr.bf16.mxu0 %v1641
  %6102 = vmatmul.mubr.bf16.gmra.mrb[0].mxu0 %v1640
  %v6103 = vpop.f32.mrb[0].mxu0
  %v6104 = vadd.f32 %v6063, %v6103
  %v6105 = vpop.f32.mrb[0].mxu0
  %v6106 = vpop.f32.mrb[0].mxu0
  %v6107 = vadd.f32 %v6066, %v6106
  %v6108 = vpop.f32.mrb[0].mxu0
  %6109 = vdwg.mxu0
  %6110 = vmatprep.subr.bf16.mxu0 0
  %6111 = vmatpush1.bf16.msra.mxu0 %v4530
  %6112 = vmatprep.subr.bf16.mxu0 0
  %6113 = vmatpush1.bf16.msra.mxu0 %v4531
  %6114 = vmatprep.subr.bf16.mxu0 0
  %6115 = vmatpush1.bf16.msra.mxu0 %v4532
  %6116 = vmatprep.subr.bf16.mxu0 0
  %6117 = vmatpush1.bf16.msra.mxu0 %v4533
  %6118 = vmatprep.subr.bf16.mxu0 0
  %6119 = vmatpush1.bf16.msra.mxu0 %v4534
  %6120 = vmatprep.subr.bf16.mxu0 0
  %6121 = vmatpush1.bf16.msra.mxu0 %v4535
  %6122 = vmatprep.subr.bf16.mxu0 0
  %6123 = vmatpush1.bf16.msra.mxu0 %v4536
  %6124 = vmatprep.subr.bf16.mxu0 0
  %6125 = vmatpush1.bf16.msra.mxu0 %v4537
  %6126 = vmatprep.subr.bf16.mxu0 0
  %6127 = vmatpush1.bf16.msra.mxu0 %v4538
  %6128 = vmatprep.subr.bf16.mxu0 0
  %6129 = vmatpush1.bf16.msra.mxu0 %v4539
  %6130 = vmatprep.subr.bf16.mxu0 0
  %6131 = vmatpush1.bf16.msra.mxu0 %v4540
  %6132 = vmatprep.subr.bf16.mxu0 0
  %6133 = vmatpush1.bf16.msra.mxu0 %v4541
  %6134 = vmatprep.subr.bf16.mxu0 0
  %6135 = vmatpush1.bf16.msra.mxu0 %v4542
  %6136 = vmatprep.subr.bf16.mxu0 0
  %6137 = vmatpush1.bf16.msra.mxu0 %v4543
  %6138 = vmatprep.subr.bf16.mxu0 0
  %6139 = vmatpush1.bf16.msra.mxu0 %v4544
  %6140 = vmatprep.subr.bf16.mxu0 0
  %6141 = vmatpush1.bf16.msra.mxu0 %v4545
  %6142 = vmatprep.mubr.bf16.mxu0 %v1643
  %6143 = vmatmul.mubr.bf16.gmra.mrb[0].mxu0 %v1642
  %v6144 = vpop.f32.mrb[0].mxu0
  %v6145 = vadd.f32 %v6104, %v6144
  %v6146 = vpop.f32.mrb[0].mxu0
  %v6147 = vpop.f32.mrb[0].mxu0
  %v6148 = vadd.f32 %v6107, %v6147
  %v6149 = vpop.f32.mrb[0].mxu0
  %6150 = vdwg.mxu0
  %6151 = vmatprep.subr.bf16.mxu0 0
  %6152 = vmatpush1.bf16.msra.mxu0 %v4546
  %6153 = vmatprep.subr.bf16.mxu0 0
  %6154 = vmatpush1.bf16.msra.mxu0 %v4547
  %6155 = vmatprep.subr.bf16.mxu0 0
  %6156 = vmatpush1.bf16.msra.mxu0 %v4548
  %6157 = vmatprep.subr.bf16.mxu0 0
  %6158 = vmatpush1.bf16.msra.mxu0 %v4549
  %6159 = vmatprep.subr.bf16.mxu0 0
  %6160 = vmatpush1.bf16.msra.mxu0 %v4550
  %6161 = vmatprep.subr.bf16.mxu0 0
  %6162 = vmatpush1.bf16.msra.mxu0 %v4551
  %6163 = vmatprep.subr.bf16.mxu0 0
  %6164 = vmatpush1.bf16.msra.mxu0 %v4552
  %6165 = vmatprep.subr.bf16.mxu0 0
  %6166 = vmatpush1.bf16.msra.mxu0 %v4553
  %6167 = vmatprep.subr.bf16.mxu0 0
  %6168 = vmatpush1.bf16.msra.mxu0 %v4554
  %6169 = vmatprep.subr.bf16.mxu0 0
  %6170 = vmatpush1.bf16.msra.mxu0 %v4555
  %6171 = vmatprep.subr.bf16.mxu0 0
  %6172 = vmatpush1.bf16.msra.mxu0 %v4556
  %6173 = vmatprep.subr.bf16.mxu0 0
  %6174 = vmatpush1.bf16.msra.mxu0 %v4557
  %6175 = vmatprep.subr.bf16.mxu0 0
  %6176 = vmatpush1.bf16.msra.mxu0 %v4558
  %6177 = vmatprep.subr.bf16.mxu0 0
  %6178 = vmatpush1.bf16.msra.mxu0 %v4559
  %6179 = vmatprep.subr.bf16.mxu0 0
  %6180 = vmatpush1.bf16.msra.mxu0 %v4560
  %6181 = vmatprep.subr.bf16.mxu0 0
  %6182 = vmatpush1.bf16.msra.mxu0 %v4561
  %6183 = vmatprep.mubr.bf16.mxu0 %v1645
  %6184 = vmatmul.mubr.bf16.gmra.mrb[0].mxu0 %v1644
  %v6185 = vpop.f32.mrb[0].mxu0
  %v6186 = vadd.f32 %v6145, %v6185
  %v6187 = vpop.f32.mrb[0].mxu0
  %v6188 = vpop.f32.mrb[0].mxu0
  %v6189 = vadd.f32 %v6148, %v6188
  %v6190 = vpop.f32.mrb[0].mxu0
  %6191 = vdwg.mxu0
  %6192 = vmatprep.subr.bf16.mxu0 0
  %6193 = vmatpush1.bf16.msra.mxu0 %v4562
  %6194 = vmatprep.subr.bf16.mxu0 0
  %6195 = vmatpush1.bf16.msra.mxu0 %v4563
  %6196 = vmatprep.subr.bf16.mxu0 0
  %6197 = vmatpush1.bf16.msra.mxu0 %v4564
  %6198 = vmatprep.subr.bf16.mxu0 0
  %6199 = vmatpush1.bf16.msra.mxu0 %v4565
  %6200 = vmatprep.subr.bf16.mxu0 0
  %6201 = vmatpush1.bf16.msra.mxu0 %v4566
  %6202 = vmatprep.subr.bf16.mxu0 0
  %6203 = vmatpush1.bf16.msra.mxu0 %v4567
  %6204 = vmatprep.subr.bf16.mxu0 0
  %6205 = vmatpush1.bf16.msra.mxu0 %v4568
  %6206 = vmatprep.subr.bf16.mxu0 0
  %6207 = vmatpush1.bf16.msra.mxu0 %v4569
  %6208 = vmatprep.subr.bf16.mxu0 0
  %6209 = vmatpush1.bf16.msra.mxu0 %v4570
  %6210 = vmatprep.subr.bf16.mxu0 0
  %6211 = vmatpush1.bf16.msra.mxu0 %v4571
  %6212 = vmatprep.subr.bf16.mxu0 0
  %6213 = vmatpush1.bf16.msra.mxu0 %v4572
  %6214 = vmatprep.subr.bf16.mxu0 0
  %6215 = vmatpush1.bf16.msra.mxu0 %v4573
  %6216 = vmatprep.subr.bf16.mxu0 0
  %6217 = vmatpush1.bf16.msra.mxu0 %v4574
  %6218 = vmatprep.subr.bf16.mxu0 0
  %6219 = vmatpush1.bf16.msra.mxu0 %v4575
  %6220 = vmatprep.subr.bf16.mxu0 0
  %6221 = vmatpush1.bf16.msra.mxu0 %v4576
  %6222 = vmatprep.subr.bf16.mxu0 0
  %6223 = vmatpush1.bf16.msra.mxu0 %v4577
  %6224 = vmatprep.mubr.bf16.mxu0 %v1647
  %6225 = vmatmul.mubr.bf16.gmra.mrb[0].mxu0 %v1646
  %v6226 = vpop.f32.mrb[0].mxu0
  %v6227 = vadd.f32 %v6186, %v6226
  %v6228 = vpop.f32.mrb[0].mxu0
  %v6229 = vpop.f32.mrb[0].mxu0
  %v6230 = vadd.f32 %v6189, %v6229
  %v6231 = vpop.f32.mrb[0].mxu0
  %6232 = vdwg.mxu0
  %6233 = vmatprep.subr.bf16.mxu0 0
  %6234 = vmatpush1.bf16.msra.mxu0 %v4578
  %6235 = vmatprep.subr.bf16.mxu0 0
  %6236 = vmatpush1.bf16.msra.mxu0 %v4579
  %6237 = vmatprep.subr.bf16.mxu0 0
  %6238 = vmatpush1.bf16.msra.mxu0 %v4580
  %6239 = vmatprep.subr.bf16.mxu0 0
  %6240 = vmatpush1.bf16.msra.mxu0 %v4581
  %6241 = vmatprep.subr.bf16.mxu0 0
  %6242 = vmatpush1.bf16.msra.mxu0 %v4582
  %6243 = vmatprep.subr.bf16.mxu0 0
  %6244 = vmatpush1.bf16.msra.mxu0 %v4583
  %6245 = vmatprep.subr.bf16.mxu0 0
  %6246 = vmatpush1.bf16.msra.mxu0 %v4584
  %6247 = vmatprep.subr.bf16.mxu0 0
  %6248 = vmatpush1.bf16.msra.mxu0 %v4585
  %6249 = vmatprep.subr.bf16.mxu0 0
  %6250 = vmatpush1.bf16.msra.mxu0 %v4586
  %6251 = vmatprep.subr.bf16.mxu0 0
  %6252 = vmatpush1.bf16.msra.mxu0 %v4587
  %6253 = vmatprep.subr.bf16.mxu0 0
  %6254 = vmatpush1.bf16.msra.mxu0 %v4588
  %6255 = vmatprep.subr.bf16.mxu0 0
  %6256 = vmatpush1.bf16.msra.mxu0 %v4589
  %6257 = vmatprep.subr.bf16.mxu0 0
  %6258 = vmatpush1.bf16.msra.mxu0 %v4590
  %6259 = vmatprep.subr.bf16.mxu0 0
  %6260 = vmatpush1.bf16.msra.mxu0 %v4591
  %6261 = vmatprep.subr.bf16.mxu0 0
  %6262 = vmatpush1.bf16.msra.mxu0 %v4592
  %6263 = vmatprep.subr.bf16.mxu0 0
  %6264 = vmatpush1.bf16.msra.mxu0 %v4593
  %6265 = vmatprep.mubr.bf16.mxu0 %v1649
  %6266 = vmatmul.mubr.bf16.gmra.mrb[0].mxu0 %v1648
  %v6267 = vpop.f32.mrb[0].mxu0
  %v6268 = vadd.f32 %v6227, %v6267
  %v6269 = vpop.f32.mrb[0].mxu0
  %v6270 = vpop.f32.mrb[0].mxu0
  %v6271 = vadd.f32 %v6230, %v6270
  %v6272 = vpop.f32.mrb[0].mxu0
  %6273 = vdwg.mxu0
  %6274 = vmatprep.subr.bf16.mxu0 0
  %6275 = vmatpush1.bf16.msra.mxu0 %v4594
  %6276 = vmatprep.subr.bf16.mxu0 0
  %6277 = vmatpush1.bf16.msra.mxu0 %v4595
  %6278 = vmatprep.subr.bf16.mxu0 0
  %6279 = vmatpush1.bf16.msra.mxu0 %v4596
  %6280 = vmatprep.subr.bf16.mxu0 0
  %6281 = vmatpush1.bf16.msra.mxu0 %v4597
  %6282 = vmatprep.subr.bf16.mxu0 0
  %6283 = vmatpush1.bf16.msra.mxu0 %v4598
  %6284 = vmatprep.subr.bf16.mxu0 0
  %6285 = vmatpush1.bf16.msra.mxu0 %v4599
  %6286 = vmatprep.subr.bf16.mxu0 0
  %6287 = vmatpush1.bf16.msra.mxu0 %v4600
  %6288 = vmatprep.subr.bf16.mxu0 0
  %6289 = vmatpush1.bf16.msra.mxu0 %v4601
  %6290 = vmatprep.subr.bf16.mxu0 0
  %6291 = vmatpush1.bf16.msra.mxu0 %v4602
  %6292 = vmatprep.subr.bf16.mxu0 0
  %6293 = vmatpush1.bf16.msra.mxu0 %v4603
  %6294 = vmatprep.subr.bf16.mxu0 0
  %6295 = vmatpush1.bf16.msra.mxu0 %v4604
  %6296 = vmatprep.subr.bf16.mxu0 0
  %6297 = vmatpush1.bf16.msra.mxu0 %v4605
  %6298 = vmatprep.subr.bf16.mxu0 0
  %6299 = vmatpush1.bf16.msra.mxu0 %v4606
  %6300 = vmatprep.subr.bf16.mxu0 0
  %6301 = vmatpush1.bf16.msra.mxu0 %v4607
  %6302 = vmatprep.subr.bf16.mxu0 0
  %6303 = vmatpush1.bf16.msra.mxu0 %v4608
  %6304 = vmatprep.subr.bf16.mxu0 0
  %6305 = vmatpush1.bf16.msra.mxu0 %v4609
  %6306 = vmatprep.mubr.bf16.mxu0 %v1651
  %6307 = vmatmul.mubr.bf16.gmra.mrb[0].mxu0 %v1650
  %v6308 = vpop.f32.mrb[0].mxu0
  %v6309 = vadd.f32 %v6268, %v6308
  %v6310 = vpop.f32.mrb[0].mxu0
  %v6311 = vpop.f32.mrb[0].mxu0
  %v6312 = vadd.f32 %v6271, %v6311
  %v6313 = vpop.f32.mrb[0].mxu0
  %6314 = vdwg.mxu0
  %6315 = vmatprep.subr.bf16.mxu0 0
  %6316 = vmatpush1.bf16.msra.mxu0 %v4610
  %6317 = vmatprep.subr.bf16.mxu0 0
  %6318 = vmatpush1.bf16.msra.mxu0 %v4611
  %6319 = vmatprep.subr.bf16.mxu0 0
  %6320 = vmatpush1.bf16.msra.mxu0 %v4612
  %6321 = vmatprep.subr.bf16.mxu0 0
  %6322 = vmatpush1.bf16.msra.mxu0 %v4613
  %6323 = vmatprep.subr.bf16.mxu0 0
  %6324 = vmatpush1.bf16.msra.mxu0 %v4614
  %6325 = vmatprep.subr.bf16.mxu0 0
  %6326 = vmatpush1.bf16.msra.mxu0 %v4615
  %6327 = vmatprep.subr.bf16.mxu0 0
  %6328 = vmatpush1.bf16.msra.mxu0 %v4616
  %6329 = vmatprep.subr.bf16.mxu0 0
  %6330 = vmatpush1.bf16.msra.mxu0 %v4617
  %6331 = vmatprep.subr.bf16.mxu0 0
  %6332 = vmatpush1.bf16.msra.mxu0 %v4618
  %6333 = vmatprep.subr.bf16.mxu0 0
  %6334 = vmatpush1.bf16.msra.mxu0 %v4619
  %6335 = vmatprep.subr.bf16.mxu0 0
  %6336 = vmatpush1.bf16.msra.mxu0 %v4620
  %6337 = vmatprep.subr.bf16.mxu0 0
  %6338 = vmatpush1.bf16.msra.mxu0 %v4621
  %6339 = vmatprep.subr.bf16.mxu0 0
  %6340 = vmatpush1.bf16.msra.mxu0 %v4622
  %6341 = vmatprep.subr.bf16.mxu0 0
  %6342 = vmatpush1.bf16.msra.mxu0 %v4623
  %6343 = vmatprep.subr.bf16.mxu0 0
  %6344 = vmatpush1.bf16.msra.mxu0 %v4624
  %6345 = vmatprep.subr.bf16.mxu0 0
  %6346 = vmatpush1.bf16.msra.mxu0 %v4625
  %6347 = vmatprep.mubr.bf16.mxu0 %v1653
  %6348 = vmatmul.mubr.bf16.gmra.mrb[0].mxu0 %v1652
  %v6349 = vpop.f32.mrb[0].mxu0
  %v6350 = vadd.f32 %v6309, %v6349
  %v6351 = vpop.f32.mrb[0].mxu0
  %v6352 = vpop.f32.mrb[0].mxu0
  %v6353 = vadd.f32 %v6312, %v6352
  %v6354 = vpop.f32.mrb[0].mxu0
  %6355 = vdwg.mxu0
  %6356 = vmatprep.subr.bf16.mxu0 0
  %6357 = vmatpush1.bf16.msra.mxu0 %v4626
  %6358 = vmatprep.subr.bf16.mxu0 0
  %6359 = vmatpush1.bf16.msra.mxu0 %v4627
  %6360 = vmatprep.subr.bf16.mxu0 0
  %6361 = vmatpush1.bf16.msra.mxu0 %v4628
  %6362 = vmatprep.subr.bf16.mxu0 0
  %6363 = vmatpush1.bf16.msra.mxu0 %v4629
  %6364 = vmatprep.subr.bf16.mxu0 0
  %6365 = vmatpush1.bf16.msra.mxu0 %v4630
  %6366 = vmatprep.subr.bf16.mxu0 0
  %6367 = vmatpush1.bf16.msra.mxu0 %v4631
  %6368 = vmatprep.subr.bf16.mxu0 0
  %6369 = vmatpush1.bf16.msra.mxu0 %v4632
  %6370 = vmatprep.subr.bf16.mxu0 0
  %6371 = vmatpush1.bf16.msra.mxu0 %v4633
  %6372 = vmatprep.subr.bf16.mxu0 0
  %6373 = vmatpush1.bf16.msra.mxu0 %v4634
  %6374 = vmatprep.subr.bf16.mxu0 0
  %6375 = vmatpush1.bf16.msra.mxu0 %v4635
  %6376 = vmatprep.subr.bf16.mxu0 0
  %6377 = vmatpush1.bf16.msra.mxu0 %v4636
  %6378 = vmatprep.subr.bf16.mxu0 0
  %6379 = vmatpush1.bf16.msra.mxu0 %v4637
  %6380 = vmatprep.subr.bf16.mxu0 0
  %6381 = vmatpush1.bf16.msra.mxu0 %v4638
  %6382 = vmatprep.subr.bf16.mxu0 0
  %6383 = vmatpush1.bf16.msra.mxu0 %v4639
  %6384 = vmatprep.subr.bf16.mxu0 0
  %6385 = vmatpush1.bf16.msra.mxu0 %v4640
  %6386 = vmatprep.subr.bf16.mxu0 0
  %6387 = vmatpush1.bf16.msra.mxu0 %v4641
  %6388 = vmatprep.mubr.bf16.mxu0 %v1655
  %6389 = vmatmul.mubr.bf16.gmra.mrb[0].mxu0 %v1654
  %v6390 = vpop.f32.mrb[0].mxu0
  %v6391 = vadd.f32 %v6350, %v6390
  %v6392 = vpop.f32.mrb[0].mxu0
  %v6393 = vpop.f32.mrb[0].mxu0
  %v6394 = vadd.f32 %v6353, %v6393
  %v6395 = vpop.f32.mrb[0].mxu0
  %6396 = vdwg.mxu0
  %6397 = vmatprep.subr.bf16.mxu0 0
  %6398 = vmatpush1.bf16.msra.mxu0 %v4642
  %6399 = vmatprep.subr.bf16.mxu0 0
  %6400 = vmatpush1.bf16.msra.mxu0 %v4643
  %6401 = vmatprep.subr.bf16.mxu0 0
  %6402 = vmatpush1.bf16.msra.mxu0 %v4644
  %6403 = vmatprep.subr.bf16.mxu0 0
  %6404 = vmatpush1.bf16.msra.mxu0 %v4645
  %6405 = vmatprep.subr.bf16.mxu0 0
  %6406 = vmatpush1.bf16.msra.mxu0 %v4646
  %6407 = vmatprep.subr.bf16.mxu0 0
  %6408 = vmatpush1.bf16.msra.mxu0 %v4647
  %6409 = vmatprep.subr.bf16.mxu0 0
  %6410 = vmatpush1.bf16.msra.mxu0 %v4648
  %6411 = vmatprep.subr.bf16.mxu0 0
  %6412 = vmatpush1.bf16.msra.mxu0 %v4649
  %6413 = vmatprep.subr.bf16.mxu0 0
  %6414 = vmatpush1.bf16.msra.mxu0 %v4650
  %6415 = vmatprep.subr.bf16.mxu0 0
  %6416 = vmatpush1.bf16.msra.mxu0 %v4651
  %6417 = vmatprep.subr.bf16.mxu0 0
  %6418 = vmatpush1.bf16.msra.mxu0 %v4652
  %6419 = vmatprep.subr.bf16.mxu0 0
  %6420 = vmatpush1.bf16.msra.mxu0 %v4653
  %6421 = vmatprep.subr.bf16.mxu0 0
  %6422 = vmatpush1.bf16.msra.mxu0 %v4654
  %6423 = vmatprep.subr.bf16.mxu0 0
  %6424 = vmatpush1.bf16.msra.mxu0 %v4655
  %6425 = vmatprep.subr.bf16.mxu0 0
  %6426 = vmatpush1.bf16.msra.mxu0 %v4656
  %6427 = vmatprep.subr.bf16.mxu0 0
  %6428 = vmatpush1.bf16.msra.mxu0 %v4657
  %6429 = vmatprep.mubr.bf16.mxu0 %v1657
  %6430 = vmatmul.mubr.bf16.gmra.mrb[0].mxu0 %v1656
  %v6431 = vpop.f32.mrb[0].mxu0
  %v6432 = vadd.f32 %v6391, %v6431
  %v6433 = vpop.f32.mrb[0].mxu0
  %v6434 = vpop.f32.mrb[0].mxu0
  %v6435 = vadd.f32 %v6394, %v6434
  %v6436 = vpop.f32.mrb[0].mxu0
  %6437 = vdwg.mxu0
  %6438 = vmatprep.subr.bf16.mxu0 0
  %6439 = vmatpush1.bf16.msra.mxu0 %v4658
  %6440 = vmatprep.subr.bf16.mxu0 0
  %6441 = vmatpush1.bf16.msra.mxu0 %v4659
  %6442 = vmatprep.subr.bf16.mxu0 0
  %6443 = vmatpush1.bf16.msra.mxu0 %v4660
  %6444 = vmatprep.subr.bf16.mxu0 0
  %6445 = vmatpush1.bf16.msra.mxu0 %v4661
  %6446 = vmatprep.subr.bf16.mxu0 0
  %6447 = vmatpush1.bf16.msra.mxu0 %v4662
  %6448 = vmatprep.subr.bf16.mxu0 0
  %6449 = vmatpush1.bf16.msra.mxu0 %v4663
  %6450 = vmatprep.subr.bf16.mxu0 0
  %6451 = vmatpush1.bf16.msra.mxu0 %v4664
  %6452 = vmatprep.subr.bf16.mxu0 0
  %6453 = vmatpush1.bf16.msra.mxu0 %v4665
  %6454 = vmatprep.subr.bf16.mxu0 0
  %6455 = vmatpush1.bf16.msra.mxu0 %v4666
  %6456 = vmatprep.subr.bf16.mxu0 0
  %6457 = vmatpush1.bf16.msra.mxu0 %v4667
  %6458 = vmatprep.subr.bf16.mxu0 0
  %6459 = vmatpush1.bf16.msra.mxu0 %v4668
  %6460 = vmatprep.subr.bf16.mxu0 0
  %6461 = vmatpush1.bf16.msra.mxu0 %v4669
  %6462 = vmatprep.subr.bf16.mxu0 0
  %6463 = vmatpush1.bf16.msra.mxu0 %v4670
  %6464 = vmatprep.subr.bf16.mxu0 0
  %6465 = vmatpush1.bf16.msra.mxu0 %v4671
  %6466 = vmatprep.subr.bf16.mxu0 0
  %6467 = vmatpush1.bf16.msra.mxu0 %v4672
  %6468 = vmatprep.subr.bf16.mxu0 0
  %6469 = vmatpush1.bf16.msra.mxu0 %v4673
  %6470 = vmatprep.mubr.bf16.mxu0 %v1659
  %6471 = vmatmul.mubr.bf16.gmra.mrb[0].mxu0 %v1658
  %v6472 = vpop.f32.mrb[0].mxu0
  %v6473 = vadd.f32 %v6432, %v6472
  %v6474 = vpop.f32.mrb[0].mxu0
  %v6475 = vpop.f32.mrb[0].mxu0
  %v6476 = vadd.f32 %v6435, %v6475
  %v6477 = vpop.f32.mrb[0].mxu0
  %6478 = vdwg.mxu0
  %6479 = vmatprep.subr.bf16.mxu0 0
  %6480 = vmatpush1.bf16.msra.mxu0 %v4674
  %6481 = vmatprep.subr.bf16.mxu0 0
  %6482 = vmatpush1.bf16.msra.mxu0 %v4675
  %6483 = vmatprep.subr.bf16.mxu0 0
  %6484 = vmatpush1.bf16.msra.mxu0 %v4676
  %6485 = vmatprep.subr.bf16.mxu0 0
  %6486 = vmatpush1.bf16.msra.mxu0 %v4677
  %6487 = vmatprep.subr.bf16.mxu0 0
  %6488 = vmatpush1.bf16.msra.mxu0 %v4678
  %6489 = vmatprep.subr.bf16.mxu0 0
  %6490 = vmatpush1.bf16.msra.mxu0 %v4679
  %6491 = vmatprep.subr.bf16.mxu0 0
  %6492 = vmatpush1.bf16.msra.mxu0 %v4680
  %6493 = vmatprep.subr.bf16.mxu0 0
  %6494 = vmatpush1.bf16.msra.mxu0 %v4681
  %6495 = vmatprep.subr.bf16.mxu0 0
  %6496 = vmatpush1.bf16.msra.mxu0 %v4682
  %6497 = vmatprep.subr.bf16.mxu0 0
  %6498 = vmatpush1.bf16.msra.mxu0 %v4683
  %6499 = vmatprep.subr.bf16.mxu0 0
  %6500 = vmatpush1.bf16.msra.mxu0 %v4684
  %6501 = vmatprep.subr.bf16.mxu0 0
  %6502 = vmatpush1.bf16.msra.mxu0 %v4685
  %6503 = vmatprep.subr.bf16.mxu0 0
  %6504 = vmatpush1.bf16.msra.mxu0 %v4686
  %6505 = vmatprep.subr.bf16.mxu0 0
  %6506 = vmatpush1.bf16.msra.mxu0 %v4687
  %6507 = vmatprep.subr.bf16.mxu0 0
  %6508 = vmatpush1.bf16.msra.mxu0 %v4688
  %6509 = vmatprep.subr.bf16.mxu0 0
  %6510 = vmatpush1.bf16.msra.mxu0 %v4689
  %6511 = vmatprep.mubr.bf16.mxu0 %v1661
  %6512 = vmatmul.mubr.bf16.gmra.mrb[0].mxu0 %v1660
  %v6513 = vpop.f32.mrb[0].mxu0
  %v6514 = vadd.f32 %v6473, %v6513
  %v6515 = vpop.f32.mrb[0].mxu0
  %v6516 = vpop.f32.mrb[0].mxu0
  %v6517 = vadd.f32 %v6476, %v6516
  %v6518 = vpop.f32.mrb[0].mxu0
  %6519 = vdwg.mxu0
  %6520 = vmatprep.subr.bf16.mxu0 0
  %6521 = vmatpush1.bf16.msra.mxu0 %v4690
  %6522 = vmatprep.subr.bf16.mxu0 0
  %6523 = vmatpush1.bf16.msra.mxu0 %v4691
  %6524 = vmatprep.subr.bf16.mxu0 0
  %6525 = vmatpush1.bf16.msra.mxu0 %v4692
  %6526 = vmatprep.subr.bf16.mxu0 0
  %6527 = vmatpush1.bf16.msra.mxu0 %v4693
  %6528 = vmatprep.subr.bf16.mxu0 0
  %6529 = vmatpush1.bf16.msra.mxu0 %v4694
  %6530 = vmatprep.subr.bf16.mxu0 0
  %6531 = vmatpush1.bf16.msra.mxu0 %v4695
  %6532 = vmatprep.subr.bf16.mxu0 0
  %6533 = vmatpush1.bf16.msra.mxu0 %v4696
  %6534 = vmatprep.subr.bf16.mxu0 0
  %6535 = vmatpush1.bf16.msra.mxu0 %v4697
  %6536 = vmatprep.subr.bf16.mxu0 0
  %6537 = vmatpush1.bf16.msra.mxu0 %v4698
  %6538 = vmatprep.subr.bf16.mxu0 0
  %6539 = vmatpush1.bf16.msra.mxu0 %v4699
  %6540 = vmatprep.subr.bf16.mxu0 0
  %6541 = vmatpush1.bf16.msra.mxu0 %v4700
  %6542 = vmatprep.subr.bf16.mxu0 0
  %6543 = vmatpush1.bf16.msra.mxu0 %v4701
  %6544 = vmatprep.subr.bf16.mxu0 0
  %6545 = vmatpush1.bf16.msra.mxu0 %v4702
  %6546 = vmatprep.subr.bf16.mxu0 0
  %6547 = vmatpush1.bf16.msra.mxu0 %v4703
  %6548 = vmatprep.subr.bf16.mxu0 0
  %6549 = vmatpush1.bf16.msra.mxu0 %v4704
  %6550 = vmatprep.subr.bf16.mxu0 0
  %6551 = vmatpush1.bf16.msra.mxu0 %v4705
  %6552 = vmatprep.mubr.bf16.mxu0 %v1663
  %6553 = vmatmul.mubr.bf16.gmra.mrb[0].mxu0 %v1662
  %v6554 = vpop.f32.mrb[0].mxu0
  %v6555 = vadd.f32 %v6514, %v6554
  %v6556 = vpop.f32.mrb[0].mxu0
  %v6557 = vpop.f32.mrb[0].mxu0
  %v6558 = vadd.f32 %v6517, %v6557
  %v6559 = vpop.f32.mrb[0].mxu0
  %6560 = vdwg.mxu0
  %6561 = vmatprep.subr.bf16.mxu0 0
  %6562 = vmatpush1.bf16.msra.mxu0 %v4706
  %6563 = vmatprep.subr.bf16.mxu0 0
  %6564 = vmatpush1.bf16.msra.mxu0 %v4707
  %6565 = vmatprep.subr.bf16.mxu0 0
  %6566 = vmatpush1.bf16.msra.mxu0 %v4708
  %6567 = vmatprep.subr.bf16.mxu0 0
  %6568 = vmatpush1.bf16.msra.mxu0 %v4709
  %6569 = vmatprep.subr.bf16.mxu0 0
  %6570 = vmatpush1.bf16.msra.mxu0 %v4710
  %6571 = vmatprep.subr.bf16.mxu0 0
  %6572 = vmatpush1.bf16.msra.mxu0 %v4711
  %6573 = vmatprep.subr.bf16.mxu0 0
  %6574 = vmatpush1.bf16.msra.mxu0 %v4712
  %6575 = vmatprep.subr.bf16.mxu0 0
  %6576 = vmatpush1.bf16.msra.mxu0 %v4713
  %6577 = vmatprep.subr.bf16.mxu0 0
  %6578 = vmatpush1.bf16.msra.mxu0 %v4714
  %6579 = vmatprep.subr.bf16.mxu0 0
  %6580 = vmatpush1.bf16.msra.mxu0 %v4715
  %6581 = vmatprep.subr.bf16.mxu0 0
  %6582 = vmatpush1.bf16.msra.mxu0 %v4716
  %6583 = vmatprep.subr.bf16.mxu0 0
  %6584 = vmatpush1.bf16.msra.mxu0 %v4717
  %6585 = vmatprep.subr.bf16.mxu0 0
  %6586 = vmatpush1.bf16.msra.mxu0 %v4718
  %6587 = vmatprep.subr.bf16.mxu0 0
  %6588 = vmatpush1.bf16.msra.mxu0 %v4719
  %6589 = vmatprep.subr.bf16.mxu0 0
  %6590 = vmatpush1.bf16.msra.mxu0 %v4720
  %6591 = vmatprep.subr.bf16.mxu0 0
  %6592 = vmatpush1.bf16.msra.mxu0 %v4721
  %6593 = vmatprep.mubr.bf16.mxu0 %v1665
  %6594 = vmatmul.mubr.bf16.gmra.mrb[0].mxu0 %v1664
  %v6595 = vpop.f32.mrb[0].mxu0
  %v6596 = vadd.f32 %v6555, %v6595
  %v6597 = vpop.f32.mrb[0].mxu0
  %v6598 = vpop.f32.mrb[0].mxu0
  %v6599 = vadd.f32 %v6558, %v6598
  %v6600 = vpop.f32.mrb[0].mxu0
  %6601 = vdwg.mxu0
  %6602 = vmatprep.subr.bf16.mxu0 0
  %6603 = vmatpush1.bf16.msra.mxu0 %v4722
  %6604 = vmatprep.subr.bf16.mxu0 0
  %6605 = vmatpush1.bf16.msra.mxu0 %v4723
  %6606 = vmatprep.subr.bf16.mxu0 0
  %6607 = vmatpush1.bf16.msra.mxu0 %v4724
  %6608 = vmatprep.subr.bf16.mxu0 0
  %6609 = vmatpush1.bf16.msra.mxu0 %v4725
  %6610 = vmatprep.subr.bf16.mxu0 0
  %6611 = vmatpush1.bf16.msra.mxu0 %v4726
  %6612 = vmatprep.subr.bf16.mxu0 0
  %6613 = vmatpush1.bf16.msra.mxu0 %v4727
  %6614 = vmatprep.subr.bf16.mxu0 0
  %6615 = vmatpush1.bf16.msra.mxu0 %v4728
  %6616 = vmatprep.subr.bf16.mxu0 0
  %6617 = vmatpush1.bf16.msra.mxu0 %v4729
  %6618 = vmatprep.subr.bf16.mxu0 0
  %6619 = vmatpush1.bf16.msra.mxu0 %v4730
  %6620 = vmatprep.subr.bf16.mxu0 0
  %6621 = vmatpush1.bf16.msra.mxu0 %v4731
  %6622 = vmatprep.subr.bf16.mxu0 0
  %6623 = vmatpush1.bf16.msra.mxu0 %v4732
  %6624 = vmatprep.subr.bf16.mxu0 0
  %6625 = vmatpush1.bf16.msra.mxu0 %v4733
  %6626 = vmatprep.subr.bf16.mxu0 0
  %6627 = vmatpush1.bf16.msra.mxu0 %v4734
  %6628 = vmatprep.subr.bf16.mxu0 0
  %6629 = vmatpush1.bf16.msra.mxu0 %v4735
  %6630 = vmatprep.subr.bf16.mxu0 0
  %6631 = vmatpush1.bf16.msra.mxu0 %v4736
  %6632 = vmatprep.subr.bf16.mxu0 0
  %6633 = vmatpush1.bf16.msra.mxu0 %v4737
  %6634 = vmatprep.mubr.bf16.mxu0 %v1667
  %6635 = vmatmul.mubr.bf16.gmra.mrb[0].mxu0 %v1666
  %v6636 = vpop.f32.mrb[0].mxu0
  %v6637 = vadd.f32 %v6596, %v6636
  %v6638 = vpop.f32.mrb[0].mxu0
  %v6639 = vpop.f32.mrb[0].mxu0
  %v6640 = vadd.f32 %v6599, %v6639
  %v6641 = vpop.f32.mrb[0].mxu0
  %6642 = vdwg.mxu0
  %6643 = vmatprep.subr.bf16.mxu0 0
  %6644 = vmatpush1.bf16.msra.mxu0 %v4738
  %6645 = vmatprep.subr.bf16.mxu0 0
  %6646 = vmatpush1.bf16.msra.mxu0 %v4739
  %6647 = vmatprep.subr.bf16.mxu0 0
  %6648 = vmatpush1.bf16.msra.mxu0 %v4740
  %6649 = vmatprep.subr.bf16.mxu0 0
  %6650 = vmatpush1.bf16.msra.mxu0 %v4741
  %6651 = vmatprep.subr.bf16.mxu0 0
  %6652 = vmatpush1.bf16.msra.mxu0 %v4742
  %6653 = vmatprep.subr.bf16.mxu0 0
  %6654 = vmatpush1.bf16.msra.mxu0 %v4743
  %6655 = vmatprep.subr.bf16.mxu0 0
  %6656 = vmatpush1.bf16.msra.mxu0 %v4744
  %6657 = vmatprep.subr.bf16.mxu0 0
  %6658 = vmatpush1.bf16.msra.mxu0 %v4745
  %6659 = vmatprep.subr.bf16.mxu0 0
  %6660 = vmatpush1.bf16.msra.mxu0 %v4746
  %6661 = vmatprep.subr.bf16.mxu0 0
  %6662 = vmatpush1.bf16.msra.mxu0 %v4747
  %6663 = vmatprep.subr.bf16.mxu0 0
  %6664 = vmatpush1.bf16.msra.mxu0 %v4748
  %6665 = vmatprep.subr.bf16.mxu0 0
  %6666 = vmatpush1.bf16.msra.mxu0 %v4749
  %6667 = vmatprep.subr.bf16.mxu0 0
  %6668 = vmatpush1.bf16.msra.mxu0 %v4750
  %6669 = vmatprep.subr.bf16.mxu0 0
  %6670 = vmatpush1.bf16.msra.mxu0 %v4751
  %6671 = vmatprep.subr.bf16.mxu0 0
  %6672 = vmatpush1.bf16.msra.mxu0 %v4752
  %6673 = vmatprep.subr.bf16.mxu0 0
  %6674 = vmatpush1.bf16.msra.mxu0 %v4753
  %6675 = vmatprep.mubr.bf16.mxu0 %v1669
  %6676 = vmatmul.mubr.bf16.gmra.mrb[0].mxu0 %v1668
  %v6677 = vpop.f32.mrb[0].mxu0
  %v6678 = vadd.f32 %v6637, %v6677
  %v6679 = vpop.f32.mrb[0].mxu0
  %v6680 = vpop.f32.mrb[0].mxu0
  %v6681 = vadd.f32 %v6640, %v6680
  %v6682 = vpop.f32.mrb[0].mxu0
  %6683 = vdwg.mxu0
  %6684 = vmatprep.subr.bf16.mxu0 0
  %6685 = vmatpush1.bf16.msra.mxu0 %v4754
  %6686 = vmatprep.subr.bf16.mxu0 0
  %6687 = vmatpush1.bf16.msra.mxu0 %v4755
  %6688 = vmatprep.subr.bf16.mxu0 0
  %6689 = vmatpush1.bf16.msra.mxu0 %v4756
  %6690 = vmatprep.subr.bf16.mxu0 0
  %6691 = vmatpush1.bf16.msra.mxu0 %v4757
  %6692 = vmatprep.subr.bf16.mxu0 0
  %6693 = vmatpush1.bf16.msra.mxu0 %v4758
  %6694 = vmatprep.subr.bf16.mxu0 0
  %6695 = vmatpush1.bf16.msra.mxu0 %v4759
  %6696 = vmatprep.subr.bf16.mxu0 0
  %6697 = vmatpush1.bf16.msra.mxu0 %v4760
  %6698 = vmatprep.subr.bf16.mxu0 0
  %6699 = vmatpush1.bf16.msra.mxu0 %v4761
  %6700 = vmatprep.subr.bf16.mxu0 0
  %6701 = vmatpush1.bf16.msra.mxu0 %v4762
  %6702 = vmatprep.subr.bf16.mxu0 0
  %6703 = vmatpush1.bf16.msra.mxu0 %v4763
  %6704 = vmatprep.subr.bf16.mxu0 0
  %6705 = vmatpush1.bf16.msra.mxu0 %v4764
  %6706 = vmatprep.subr.bf16.mxu0 0
  %6707 = vmatpush1.bf16.msra.mxu0 %v4765
  %6708 = vmatprep.subr.bf16.mxu0 0
  %6709 = vmatpush1.bf16.msra.mxu0 %v4766
  %6710 = vmatprep.subr.bf16.mxu0 0
  %6711 = vmatpush1.bf16.msra.mxu0 %v4767
  %6712 = vmatprep.subr.bf16.mxu0 0
  %6713 = vmatpush1.bf16.msra.mxu0 %v4768
  %6714 = vmatprep.subr.bf16.mxu0 0
  %6715 = vmatpush1.bf16.msra.mxu0 %v4769
  %6716 = vmatprep.mubr.bf16.mxu0 %v1671
  %6717 = vmatmul.mubr.bf16.gmra.mrb[0].mxu0 %v1670
  %v6718 = vpop.f32.mrb[0].mxu0
  %v6719 = vadd.f32 %v6678, %v6718
  %v6720 = vpop.f32.mrb[0].mxu0
  %v6721 = vpop.f32.mrb[0].mxu0
  %v6722 = vadd.f32 %v6681, %v6721
  %v6723 = vpop.f32.mrb[0].mxu0
  %6724 = vdwg.mxu0
  %6725 = vmatprep.subr.bf16.mxu0 0
  %6726 = vmatpush1.bf16.msra.mxu0 %v4770
  %6727 = vmatprep.subr.bf16.mxu0 0
  %6728 = vmatpush1.bf16.msra.mxu0 %v4771
  %6729 = vmatprep.subr.bf16.mxu0 0
  %6730 = vmatpush1.bf16.msra.mxu0 %v4772
  %6731 = vmatprep.subr.bf16.mxu0 0
  %6732 = vmatpush1.bf16.msra.mxu0 %v4773
  %6733 = vmatprep.subr.bf16.mxu0 0
  %6734 = vmatpush1.bf16.msra.mxu0 %v4774
  %6735 = vmatprep.subr.bf16.mxu0 0
  %6736 = vmatpush1.bf16.msra.mxu0 %v4775
  %6737 = vmatprep.subr.bf16.mxu0 0
  %6738 = vmatpush1.bf16.msra.mxu0 %v4776
  %6739 = vmatprep.subr.bf16.mxu0 0
  %6740 = vmatpush1.bf16.msra.mxu0 %v4777
  %6741 = vmatprep.subr.bf16.mxu0 0
  %6742 = vmatpush1.bf16.msra.mxu0 %v4778
  %6743 = vmatprep.subr.bf16.mxu0 0
  %6744 = vmatpush1.bf16.msra.mxu0 %v4779
  %6745 = vmatprep.subr.bf16.mxu0 0
  %6746 = vmatpush1.bf16.msra.mxu0 %v4780
  %6747 = vmatprep.subr.bf16.mxu0 0
  %6748 = vmatpush1.bf16.msra.mxu0 %v4781
  %6749 = vmatprep.subr.bf16.mxu0 0
  %6750 = vmatpush1.bf16.msra.mxu0 %v4782
  %6751 = vmatprep.subr.bf16.mxu0 0
  %6752 = vmatpush1.bf16.msra.mxu0 %v4783
  %6753 = vmatprep.subr.bf16.mxu0 0
  %6754 = vmatpush1.bf16.msra.mxu0 %v4784
  %6755 = vmatprep.subr.bf16.mxu0 0
  %6756 = vmatpush1.bf16.msra.mxu0 %v4785
  %6757 = vmatprep.mubr.bf16.mxu0 %v1673
  %6758 = vmatmul.mubr.bf16.gmra.mrb[0].mxu0 %v1672
  %v6759 = vpop.f32.mrb[0].mxu0
  %v6760 = vadd.f32 %v6719, %v6759
  %v6761 = vpop.f32.mrb[0].mxu0
  %v6762 = vpop.f32.mrb[0].mxu0
  %v6763 = vadd.f32 %v6722, %v6762
  %v6764 = vpop.f32.mrb[0].mxu0
  %6765 = vdwg.mxu0
  %6766 = vmatprep.subr.bf16.mxu0 0
  %6767 = vmatpush1.bf16.msra.mxu0 %v4786
  %6768 = vmatprep.subr.bf16.mxu0 0
  %6769 = vmatpush1.bf16.msra.mxu0 %v4787
  %6770 = vmatprep.subr.bf16.mxu0 0
  %6771 = vmatpush1.bf16.msra.mxu0 %v4788
  %6772 = vmatprep.subr.bf16.mxu0 0
  %6773 = vmatpush1.bf16.msra.mxu0 %v4789
  %6774 = vmatprep.subr.bf16.mxu0 0
  %6775 = vmatpush1.bf16.msra.mxu0 %v4790
  %6776 = vmatprep.subr.bf16.mxu0 0
  %6777 = vmatpush1.bf16.msra.mxu0 %v4791
  %6778 = vmatprep.subr.bf16.mxu0 0
  %6779 = vmatpush1.bf16.msra.mxu0 %v4792
  %6780 = vmatprep.subr.bf16.mxu0 0
  %6781 = vmatpush1.bf16.msra.mxu0 %v4793
  %6782 = vmatprep.subr.bf16.mxu0 0
  %6783 = vmatpush1.bf16.msra.mxu0 %v4794
  %6784 = vmatprep.subr.bf16.mxu0 0
  %6785 = vmatpush1.bf16.msra.mxu0 %v4795
  %6786 = vmatprep.subr.bf16.mxu0 0
  %6787 = vmatpush1.bf16.msra.mxu0 %v4796
  %6788 = vmatprep.subr.bf16.mxu0 0
  %6789 = vmatpush1.bf16.msra.mxu0 %v4797
  %6790 = vmatprep.subr.bf16.mxu0 0
  %6791 = vmatpush1.bf16.msra.mxu0 %v4798
  %6792 = vmatprep.subr.bf16.mxu0 0
  %6793 = vmatpush1.bf16.msra.mxu0 %v4799
  %6794 = vmatprep.subr.bf16.mxu0 0
  %6795 = vmatpush1.bf16.msra.mxu0 %v4800
  %6796 = vmatprep.subr.bf16.mxu0 0
  %6797 = vmatpush1.bf16.msra.mxu0 %v4801
  %6798 = vmatprep.mubr.bf16.mxu0 %v1675
  %6799 = vmatmul.mubr.bf16.gmra.mrb[0].mxu0 %v1674
  %v6800 = vpop.f32.mrb[0].mxu0
  %v6801 = vadd.f32 %v6760, %v6800
  %v6802 = vpop.f32.mrb[0].mxu0
  %v6803 = vpop.f32.mrb[0].mxu0
  %v6804 = vadd.f32 %v6763, %v6803
  %v6805 = vpop.f32.mrb[0].mxu0
  %6806 = vdwg.mxu0
  %6807 = vmatprep.subr.bf16.mxu0 0
  %6808 = vmatpush1.bf16.msra.mxu0 %v4802
  %6809 = vmatprep.subr.bf16.mxu0 0
  %6810 = vmatpush1.bf16.msra.mxu0 %v4803
  %6811 = vmatprep.subr.bf16.mxu0 0
  %6812 = vmatpush1.bf16.msra.mxu0 %v4804
  %6813 = vmatprep.subr.bf16.mxu0 0
  %6814 = vmatpush1.bf16.msra.mxu0 %v4805
  %6815 = vmatprep.subr.bf16.mxu0 0
  %6816 = vmatpush1.bf16.msra.mxu0 %v4806
  %6817 = vmatprep.subr.bf16.mxu0 0
  %6818 = vmatpush1.bf16.msra.mxu0 %v4807
  %6819 = vmatprep.subr.bf16.mxu0 0
  %6820 = vmatpush1.bf16.msra.mxu0 %v4808
  %6821 = vmatprep.subr.bf16.mxu0 0
  %6822 = vmatpush1.bf16.msra.mxu0 %v4809
  %6823 = vmatprep.subr.bf16.mxu0 0
  %6824 = vmatpush1.bf16.msra.mxu0 %v4810
  %6825 = vmatprep.subr.bf16.mxu0 0
  %6826 = vmatpush1.bf16.msra.mxu0 %v4811
  %6827 = vmatprep.subr.bf16.mxu0 0
  %6828 = vmatpush1.bf16.msra.mxu0 %v4812
  %6829 = vmatprep.subr.bf16.mxu0 0
  %6830 = vmatpush1.bf16.msra.mxu0 %v4813
  %6831 = vmatprep.subr.bf16.mxu0 0
  %6832 = vmatpush1.bf16.msra.mxu0 %v4814
  %6833 = vmatprep.subr.bf16.mxu0 0
  %6834 = vmatpush1.bf16.msra.mxu0 %v4815
  %6835 = vmatprep.subr.bf16.mxu0 0
  %6836 = vmatpush1.bf16.msra.mxu0 %v4816
  %6837 = vmatprep.subr.bf16.mxu0 0
  %6838 = vmatpush1.bf16.msra.mxu0 %v4817
  %6839 = vmatprep.mubr.bf16.mxu0 %v1677
  %6840 = vmatmul.mubr.bf16.gmra.mrb[0].mxu0 %v1676
  %v6841 = vpop.f32.mrb[0].mxu0
  %v6842 = vadd.f32 %v6801, %v6841
  %v6843 = vpop.f32.mrb[0].mxu0
  %v6844 = vpop.f32.mrb[0].mxu0
  %v6845 = vadd.f32 %v6804, %v6844
  %v6846 = vpop.f32.mrb[0].mxu0
  %6847 = vdwg.mxu0
  %6848 = vmatprep.subr.bf16.mxu0 0
  %6849 = vmatpush1.bf16.msra.mxu0 %v4818
  %6850 = vmatprep.subr.bf16.mxu0 0
  %6851 = vmatpush1.bf16.msra.mxu0 %v4819
  %6852 = vmatprep.subr.bf16.mxu0 0
  %6853 = vmatpush1.bf16.msra.mxu0 %v4820
  %6854 = vmatprep.subr.bf16.mxu0 0
  %6855 = vmatpush1.bf16.msra.mxu0 %v4821
  %6856 = vmatprep.subr.bf16.mxu0 0
  %6857 = vmatpush1.bf16.msra.mxu0 %v4822
  %6858 = vmatprep.subr.bf16.mxu0 0
  %6859 = vmatpush1.bf16.msra.mxu0 %v4823
  %6860 = vmatprep.subr.bf16.mxu0 0
  %6861 = vmatpush1.bf16.msra.mxu0 %v4824
  %6862 = vmatprep.subr.bf16.mxu0 0
  %6863 = vmatpush1.bf16.msra.mxu0 %v4825
  %6864 = vmatprep.subr.bf16.mxu0 0
  %6865 = vmatpush1.bf16.msra.mxu0 %v4826
  %6866 = vmatprep.subr.bf16.mxu0 0
  %6867 = vmatpush1.bf16.msra.mxu0 %v4827
  %6868 = vmatprep.subr.bf16.mxu0 0
  %6869 = vmatpush1.bf16.msra.mxu0 %v4828
  %6870 = vmatprep.subr.bf16.mxu0 0
  %6871 = vmatpush1.bf16.msra.mxu0 %v4829
  %6872 = vmatprep.subr.bf16.mxu0 0
  %6873 = vmatpush1.bf16.msra.mxu0 %v4830
  %6874 = vmatprep.subr.bf16.mxu0 0
  %6875 = vmatpush1.bf16.msra.mxu0 %v4831
  %6876 = vmatprep.subr.bf16.mxu0 0
  %6877 = vmatpush1.bf16.msra.mxu0 %v4832
  %6878 = vmatprep.subr.bf16.mxu0 0
  %6879 = vmatpush1.bf16.msra.mxu0 %v4833
  %6880 = vmatprep.mubr.bf16.mxu0 %v1679
  %6881 = vmatmul.mubr.bf16.gmra.mrb[0].mxu0 %v1678
  %v6882 = vpop.f32.mrb[0].mxu0
  %v6883 = vadd.f32 %v6842, %v6882
  %v6884 = vpop.f32.mrb[0].mxu0
  %v6885 = vpop.f32.mrb[0].mxu0
  %v6886 = vadd.f32 %v6845, %v6885
  %v6887 = vpop.f32.mrb[0].mxu0
  %6888 = vdwg.mxu0
  %6889 = vmatprep.subr.bf16.mxu0 0
  %6890 = vmatpush1.bf16.msra.mxu0 %v4834
  %6891 = vmatprep.subr.bf16.mxu0 0
  %6892 = vmatpush1.bf16.msra.mxu0 %v4835
  %6893 = vmatprep.subr.bf16.mxu0 0
  %6894 = vmatpush1.bf16.msra.mxu0 %v4836
  %6895 = vmatprep.subr.bf16.mxu0 0
  %6896 = vmatpush1.bf16.msra.mxu0 %v4837
  %6897 = vmatprep.subr.bf16.mxu0 0
  %6898 = vmatpush1.bf16.msra.mxu0 %v4838
  %6899 = vmatprep.subr.bf16.mxu0 0
  %6900 = vmatpush1.bf16.msra.mxu0 %v4839
  %6901 = vmatprep.subr.bf16.mxu0 0
  %6902 = vmatpush1.bf16.msra.mxu0 %v4840
  %6903 = vmatprep.subr.bf16.mxu0 0
  %6904 = vmatpush1.bf16.msra.mxu0 %v4841
  %6905 = vmatprep.subr.bf16.mxu0 0
  %6906 = vmatpush1.bf16.msra.mxu0 %v4842
  %6907 = vmatprep.subr.bf16.mxu0 0
  %6908 = vmatpush1.bf16.msra.mxu0 %v4843
  %6909 = vmatprep.subr.bf16.mxu0 0
  %6910 = vmatpush1.bf16.msra.mxu0 %v4844
  %6911 = vmatprep.subr.bf16.mxu0 0
  %6912 = vmatpush1.bf16.msra.mxu0 %v4845
  %6913 = vmatprep.subr.bf16.mxu0 0
  %6914 = vmatpush1.bf16.msra.mxu0 %v4846
  %6915 = vmatprep.subr.bf16.mxu0 0
  %6916 = vmatpush1.bf16.msra.mxu0 %v4847
  %6917 = vmatprep.subr.bf16.mxu0 0
  %6918 = vmatpush1.bf16.msra.mxu0 %v4848
  %6919 = vmatprep.subr.bf16.mxu0 0
  %6920 = vmatpush1.bf16.msra.mxu0 %v4849
  %6921 = vmatprep.mubr.bf16.mxu0 %v1681
  %6922 = vmatmul.mubr.bf16.gmra.mrb[0].mxu0 %v1680
  %v6923 = vpop.f32.mrb[0].mxu0
  %v6924 = vadd.f32 %v6883, %v6923
  %v6925 = vpop.f32.mrb[0].mxu0
  %v6926 = vpop.f32.mrb[0].mxu0
  %v6927 = vadd.f32 %v6886, %v6926
  %v6928 = vpop.f32.mrb[0].mxu0
  %6929 = vdwg.mxu0
  %6930 = vmatprep.subr.bf16.mxu0 0
  %6931 = vmatpush1.bf16.msra.mxu0 %v4850
  %6932 = vmatprep.subr.bf16.mxu0 0
  %6933 = vmatpush1.bf16.msra.mxu0 %v4851
  %6934 = vmatprep.subr.bf16.mxu0 0
  %6935 = vmatpush1.bf16.msra.mxu0 %v4852
  %6936 = vmatprep.subr.bf16.mxu0 0
  %6937 = vmatpush1.bf16.msra.mxu0 %v4853
  %6938 = vmatprep.subr.bf16.mxu0 0
  %6939 = vmatpush1.bf16.msra.mxu0 %v4854
  %6940 = vmatprep.subr.bf16.mxu0 0
  %6941 = vmatpush1.bf16.msra.mxu0 %v4855
  %6942 = vmatprep.subr.bf16.mxu0 0
  %6943 = vmatpush1.bf16.msra.mxu0 %v4856
  %6944 = vmatprep.subr.bf16.mxu0 0
  %6945 = vmatpush1.bf16.msra.mxu0 %v4857
  %6946 = vmatprep.subr.bf16.mxu0 0
  %6947 = vmatpush1.bf16.msra.mxu0 %v4858
  %6948 = vmatprep.subr.bf16.mxu0 0
  %6949 = vmatpush1.bf16.msra.mxu0 %v4859
  %6950 = vmatprep.subr.bf16.mxu0 0
  %6951 = vmatpush1.bf16.msra.mxu0 %v4860
  %6952 = vmatprep.subr.bf16.mxu0 0
  %6953 = vmatpush1.bf16.msra.mxu0 %v4861
  %6954 = vmatprep.subr.bf16.mxu0 0
  %6955 = vmatpush1.bf16.msra.mxu0 %v4862
  %6956 = vmatprep.subr.bf16.mxu0 0
  %6957 = vmatpush1.bf16.msra.mxu0 %v4863
  %6958 = vmatprep.subr.bf16.mxu0 0
  %6959 = vmatpush1.bf16.msra.mxu0 %v4864
  %6960 = vmatprep.subr.bf16.mxu0 0
  %6961 = vmatpush1.bf16.msra.mxu0 %v4865
  %6962 = vmatprep.mubr.bf16.mxu0 %v1683
  %6963 = vmatmul.mubr.bf16.gmra.mrb[0].mxu0 %v1682
  %v6964 = vpop.f32.mrb[0].mxu0
  %v6965 = vadd.f32 %v6924, %v6964
  %v6966 = vpop.f32.mrb[0].mxu0
  %v6967 = vpop.f32.mrb[0].mxu0
  %v6968 = vadd.f32 %v6927, %v6967
  %v6969 = vpop.f32.mrb[0].mxu0
  %6970 = vdwg.mxu0
  %6971 = vmatprep.subr.bf16.mxu0 0
  %6972 = vmatpush1.bf16.msra.mxu0 %v4866
  %6973 = vmatprep.subr.bf16.mxu0 0
  %6974 = vmatpush1.bf16.msra.mxu0 %v4867
  %6975 = vmatprep.subr.bf16.mxu0 0
  %6976 = vmatpush1.bf16.msra.mxu0 %v4868
  %6977 = vmatprep.subr.bf16.mxu0 0
  %6978 = vmatpush1.bf16.msra.mxu0 %v4869
  %6979 = vmatprep.subr.bf16.mxu0 0
  %6980 = vmatpush1.bf16.msra.mxu0 %v4870
  %6981 = vmatprep.subr.bf16.mxu0 0
  %6982 = vmatpush1.bf16.msra.mxu0 %v4871
  %6983 = vmatprep.subr.bf16.mxu0 0
  %6984 = vmatpush1.bf16.msra.mxu0 %v4872
  %6985 = vmatprep.subr.bf16.mxu0 0
  %6986 = vmatpush1.bf16.msra.mxu0 %v4873
  %6987 = vmatprep.subr.bf16.mxu0 0
  %6988 = vmatpush1.bf16.msra.mxu0 %v4874
  %6989 = vmatprep.subr.bf16.mxu0 0
  %6990 = vmatpush1.bf16.msra.mxu0 %v4875
  %6991 = vmatprep.subr.bf16.mxu0 0
  %6992 = vmatpush1.bf16.msra.mxu0 %v4876
  %6993 = vmatprep.subr.bf16.mxu0 0
  %6994 = vmatpush1.bf16.msra.mxu0 %v4877
  %6995 = vmatprep.subr.bf16.mxu0 0
  %6996 = vmatpush1.bf16.msra.mxu0 %v4878
  %6997 = vmatprep.subr.bf16.mxu0 0
  %6998 = vmatpush1.bf16.msra.mxu0 %v4879
  %6999 = vmatprep.subr.bf16.mxu0 0
  %7000 = vmatpush1.bf16.msra.mxu0 %v4880
  %7001 = vmatprep.subr.bf16.mxu0 0
  %7002 = vmatpush1.bf16.msra.mxu0 %v4881
  %7003 = vmatprep.mubr.bf16.mxu0 %v1685
  %7004 = vmatmul.mubr.bf16.gmra.mrb[0].mxu0 %v1684
  %v7005 = vpop.f32.mrb[0].mxu0
  %v7006 = vadd.f32 %v6965, %v7005
  %v7007 = vpop.f32.mrb[0].mxu0
  %v7008 = vpop.f32.mrb[0].mxu0
  %v7009 = vadd.f32 %v6968, %v7008
  %v7010 = vpop.f32.mrb[0].mxu0
  %7011 = vdwg.mxu0
  %7012 = vmatprep.subr.bf16.mxu0 0
  %7013 = vmatpush1.bf16.msra.mxu0 %v4882
  %7014 = vmatprep.subr.bf16.mxu0 0
  %7015 = vmatpush1.bf16.msra.mxu0 %v4883
  %7016 = vmatprep.subr.bf16.mxu0 0
  %7017 = vmatpush1.bf16.msra.mxu0 %v4884
  %7018 = vmatprep.subr.bf16.mxu0 0
  %7019 = vmatpush1.bf16.msra.mxu0 %v4885
  %7020 = vmatprep.subr.bf16.mxu0 0
  %7021 = vmatpush1.bf16.msra.mxu0 %v4886
  %7022 = vmatprep.subr.bf16.mxu0 0
  %7023 = vmatpush1.bf16.msra.mxu0 %v4887
  %7024 = vmatprep.subr.bf16.mxu0 0
  %7025 = vmatpush1.bf16.msra.mxu0 %v4888
  %7026 = vmatprep.subr.bf16.mxu0 0
  %7027 = vmatpush1.bf16.msra.mxu0 %v4889
  %7028 = vmatprep.subr.bf16.mxu0 0
  %7029 = vmatpush1.bf16.msra.mxu0 %v4890
  %7030 = vmatprep.subr.bf16.mxu0 0
  %7031 = vmatpush1.bf16.msra.mxu0 %v4891
  %7032 = vmatprep.subr.bf16.mxu0 0
  %7033 = vmatpush1.bf16.msra.mxu0 %v4892
  %7034 = vmatprep.subr.bf16.mxu0 0
  %7035 = vmatpush1.bf16.msra.mxu0 %v4893
  %7036 = vmatprep.subr.bf16.mxu0 0
  %7037 = vmatpush1.bf16.msra.mxu0 %v4894
  %7038 = vmatprep.subr.bf16.mxu0 0
  %7039 = vmatpush1.bf16.msra.mxu0 %v4895
  %7040 = vmatprep.subr.bf16.mxu0 0
  %7041 = vmatpush1.bf16.msra.mxu0 %v4896
  %7042 = vmatprep.subr.bf16.mxu0 0
  %7043 = vmatpush1.bf16.msra.mxu0 %v4897
  %7044 = vmatprep.mubr.bf16.mxu0 %v1687
  %7045 = vmatmul.mubr.bf16.gmra.mrb[0].mxu0 %v1686
  %v7046 = vpop.f32.mrb[0].mxu0
  %v7047 = vadd.f32 %v7006, %v7046
  %v7048 = vpop.f32.mrb[0].mxu0
  %v7049 = vpop.f32.mrb[0].mxu0
  %v7050 = vadd.f32 %v7009, %v7049
  %v7051 = vpop.f32.mrb[0].mxu0
  %7052 = vdwg.mxu0
  %7053 = vmatprep.subr.bf16.mxu0 0
  %7054 = vmatpush1.bf16.msra.mxu0 %v4898
  %7055 = vmatprep.subr.bf16.mxu0 0
  %7056 = vmatpush1.bf16.msra.mxu0 %v4899
  %7057 = vmatprep.subr.bf16.mxu0 0
  %7058 = vmatpush1.bf16.msra.mxu0 %v4900
  %7059 = vmatprep.subr.bf16.mxu0 0
  %7060 = vmatpush1.bf16.msra.mxu0 %v4901
  %7061 = vmatprep.subr.bf16.mxu0 0
  %7062 = vmatpush1.bf16.msra.mxu0 %v4902
  %7063 = vmatprep.subr.bf16.mxu0 0
  %7064 = vmatpush1.bf16.msra.mxu0 %v4903
  %7065 = vmatprep.subr.bf16.mxu0 0
  %7066 = vmatpush1.bf16.msra.mxu0 %v4904
  %7067 = vmatprep.subr.bf16.mxu0 0
  %7068 = vmatpush1.bf16.msra.mxu0 %v4905
  %7069 = vmatprep.subr.bf16.mxu0 0
  %7070 = vmatpush1.bf16.msra.mxu0 %v4906
  %7071 = vmatprep.subr.bf16.mxu0 0
  %7072 = vmatpush1.bf16.msra.mxu0 %v4907
  %7073 = vmatprep.subr.bf16.mxu0 0
  %7074 = vmatpush1.bf16.msra.mxu0 %v4908
  %7075 = vmatprep.subr.bf16.mxu0 0
  %7076 = vmatpush1.bf16.msra.mxu0 %v4909
  %7077 = vmatprep.subr.bf16.mxu0 0
  %7078 = vmatpush1.bf16.msra.mxu0 %v4910
  %7079 = vmatprep.subr.bf16.mxu0 0
  %7080 = vmatpush1.bf16.msra.mxu0 %v4911
  %7081 = vmatprep.subr.bf16.mxu0 0
  %7082 = vmatpush1.bf16.msra.mxu0 %v4912
  %7083 = vmatprep.subr.bf16.mxu0 0
  %7084 = vmatpush1.bf16.msra.mxu0 %v4913
  %7085 = vmatprep.mubr.bf16.mxu0 %v1689
  %7086 = vmatmul.mubr.bf16.gmra.mrb[0].mxu0 %v1688
  %v7087 = vpop.f32.mrb[0].mxu0
  %v7088 = vadd.f32 %v7047, %v7087
  %v7089 = vpop.f32.mrb[0].mxu0
  %v7090 = vpop.f32.mrb[0].mxu0
  %v7091 = vadd.f32 %v7050, %v7090
  %v7092 = vpop.f32.mrb[0].mxu0
  %7093 = vdwg.mxu0
  %7094 = vmatprep.subr.bf16.mxu0 0
  %7095 = vmatpush1.bf16.msra.mxu0 %v4914
  %7096 = vmatprep.subr.bf16.mxu0 0
  %7097 = vmatpush1.bf16.msra.mxu0 %v4915
  %7098 = vmatprep.subr.bf16.mxu0 0
  %7099 = vmatpush1.bf16.msra.mxu0 %v4916
  %7100 = vmatprep.subr.bf16.mxu0 0
  %7101 = vmatpush1.bf16.msra.mxu0 %v4917
  %7102 = vmatprep.subr.bf16.mxu0 0
  %7103 = vmatpush1.bf16.msra.mxu0 %v4918
  %7104 = vmatprep.subr.bf16.mxu0 0
  %7105 = vmatpush1.bf16.msra.mxu0 %v4919
  %7106 = vmatprep.subr.bf16.mxu0 0
  %7107 = vmatpush1.bf16.msra.mxu0 %v4920
  %7108 = vmatprep.subr.bf16.mxu0 0
  %7109 = vmatpush1.bf16.msra.mxu0 %v4921
  %7110 = vmatprep.subr.bf16.mxu0 0
  %7111 = vmatpush1.bf16.msra.mxu0 %v4922
  %7112 = vmatprep.subr.bf16.mxu0 0
  %7113 = vmatpush1.bf16.msra.mxu0 %v4923
  %7114 = vmatprep.subr.bf16.mxu0 0
  %7115 = vmatpush1.bf16.msra.mxu0 %v4924
  %7116 = vmatprep.subr.bf16.mxu0 0
  %7117 = vmatpush1.bf16.msra.mxu0 %v4925
  %7118 = vmatprep.subr.bf16.mxu0 0
  %7119 = vmatpush1.bf16.msra.mxu0 %v4926
  %7120 = vmatprep.subr.bf16.mxu0 0
  %7121 = vmatpush1.bf16.msra.mxu0 %v4927
  %7122 = vmatprep.subr.bf16.mxu0 0
  %7123 = vmatpush1.bf16.msra.mxu0 %v4928
  %7124 = vmatprep.subr.bf16.mxu0 0
  %7125 = vmatpush1.bf16.msra.mxu0 %v4929
  %7126 = vmatprep.mubr.bf16.mxu0 %v1691
  %7127 = vmatmul.mubr.bf16.gmra.mrb[0].mxu0 %v1690
  %v7128 = vpop.f32.mrb[0].mxu0
  %v7129 = vadd.f32 %v7088, %v7128
  %v7130 = vpop.f32.mrb[0].mxu0
  %v7131 = vpop.f32.mrb[0].mxu0
  %v7132 = vadd.f32 %v7091, %v7131
  %v7133 = vpop.f32.mrb[0].mxu0
  %7134 = vdwg.mxu0
  %7135 = vmatprep.subr.bf16.mxu0 0
  %7136 = vmatpush1.bf16.msra.mxu0 %v4930
  %7137 = vmatprep.subr.bf16.mxu0 0
  %7138 = vmatpush1.bf16.msra.mxu0 %v4931
  %7139 = vmatprep.subr.bf16.mxu0 0
  %7140 = vmatpush1.bf16.msra.mxu0 %v4932
  %7141 = vmatprep.subr.bf16.mxu0 0
  %7142 = vmatpush1.bf16.msra.mxu0 %v4933
  %7143 = vmatprep.subr.bf16.mxu0 0
  %7144 = vmatpush1.bf16.msra.mxu0 %v4934
  %7145 = vmatprep.subr.bf16.mxu0 0
  %7146 = vmatpush1.bf16.msra.mxu0 %v4935
  %7147 = vmatprep.subr.bf16.mxu0 0
  %7148 = vmatpush1.bf16.msra.mxu0 %v4936
  %7149 = vmatprep.subr.bf16.mxu0 0
  %7150 = vmatpush1.bf16.msra.mxu0 %v4937
  %7151 = vmatprep.subr.bf16.mxu0 0
  %7152 = vmatpush1.bf16.msra.mxu0 %v4938
  %7153 = vmatprep.subr.bf16.mxu0 0
  %7154 = vmatpush1.bf16.msra.mxu0 %v4939
  %7155 = vmatprep.subr.bf16.mxu0 0
  %7156 = vmatpush1.bf16.msra.mxu0 %v4940
  %7157 = vmatprep.subr.bf16.mxu0 0
  %7158 = vmatpush1.bf16.msra.mxu0 %v4941
  %7159 = vmatprep.subr.bf16.mxu0 0
  %7160 = vmatpush1.bf16.msra.mxu0 %v4942
  %7161 = vmatprep.subr.bf16.mxu0 0
  %7162 = vmatpush1.bf16.msra.mxu0 %v4943
  %7163 = vmatprep.subr.bf16.mxu0 0
  %7164 = vmatpush1.bf16.msra.mxu0 %v4944
  %7165 = vmatprep.subr.bf16.mxu0 0
  %7166 = vmatpush1.bf16.msra.mxu0 %v4945
  %7167 = vmatprep.mubr.bf16.mxu0 %v1693
  %7168 = vmatmul.mubr.bf16.gmra.mrb[0].mxu0 %v1692
  %v7169 = vpop.f32.mrb[0].mxu0
  %v7170 = vadd.f32 %v7129, %v7169
  %v7171 = vpop.f32.mrb[0].mxu0
  %v7172 = vpop.f32.mrb[0].mxu0
  %v7173 = vadd.f32 %v7132, %v7172
  %v7174 = vpop.f32.mrb[0].mxu0
  %7175 = vdwg.mxu0
  %7176 = vmatprep.subr.bf16.mxu0 0
  %7177 = vmatpush1.bf16.msra.mxu0 %v4946
  %7178 = vmatprep.subr.bf16.mxu0 0
  %7179 = vmatpush1.bf16.msra.mxu0 %v4947
  %7180 = vmatprep.subr.bf16.mxu0 0
  %7181 = vmatpush1.bf16.msra.mxu0 %v4948
  %7182 = vmatprep.subr.bf16.mxu0 0
  %7183 = vmatpush1.bf16.msra.mxu0 %v4949
  %7184 = vmatprep.subr.bf16.mxu0 0
  %7185 = vmatpush1.bf16.msra.mxu0 %v4950
  %7186 = vmatprep.subr.bf16.mxu0 0
  %7187 = vmatpush1.bf16.msra.mxu0 %v4951
  %7188 = vmatprep.subr.bf16.mxu0 0
  %7189 = vmatpush1.bf16.msra.mxu0 %v4952
  %7190 = vmatprep.subr.bf16.mxu0 0
  %7191 = vmatpush1.bf16.msra.mxu0 %v4953
  %7192 = vmatprep.subr.bf16.mxu0 0
  %7193 = vmatpush1.bf16.msra.mxu0 %v4954
  %7194 = vmatprep.subr.bf16.mxu0 0
  %7195 = vmatpush1.bf16.msra.mxu0 %v4955
  %7196 = vmatprep.subr.bf16.mxu0 0
  %7197 = vmatpush1.bf16.msra.mxu0 %v4956
  %7198 = vmatprep.subr.bf16.mxu0 0
  %7199 = vmatpush1.bf16.msra.mxu0 %v4957
  %7200 = vmatprep.subr.bf16.mxu0 0
  %7201 = vmatpush1.bf16.msra.mxu0 %v4958
  %7202 = vmatprep.subr.bf16.mxu0 0
  %7203 = vmatpush1.bf16.msra.mxu0 %v4959
  %7204 = vmatprep.subr.bf16.mxu0 0
  %7205 = vmatpush1.bf16.msra.mxu0 %v4960
  %7206 = vmatprep.subr.bf16.mxu0 0
  %7207 = vmatpush1.bf16.msra.mxu0 %v4961
  %7208 = vmatprep.mubr.bf16.mxu0 %v1695
  %7209 = vmatmul.mubr.bf16.gmra.mrb[0].mxu0 %v1694
  %v7210 = vpop.f32.mrb[0].mxu0
  %v7211 = vadd.f32 %v7170, %v7210
  %v7212 = vpop.f32.mrb[0].mxu0
  %v7213 = vpop.f32.mrb[0].mxu0
  %v7214 = vadd.f32 %v7173, %v7213
  %v7215 = vpop.f32.mrb[0].mxu0
  %7216 = vdwg.mxu0
  %7217 = vmatprep.subr.bf16.mxu0 0
  %7218 = vmatpush1.bf16.msra.mxu0 %v4962
  %7219 = vmatprep.subr.bf16.mxu0 0
  %7220 = vmatpush1.bf16.msra.mxu0 %v4963
  %7221 = vmatprep.subr.bf16.mxu0 0
  %7222 = vmatpush1.bf16.msra.mxu0 %v4964
  %7223 = vmatprep.subr.bf16.mxu0 0
  %7224 = vmatpush1.bf16.msra.mxu0 %v4965
  %7225 = vmatprep.subr.bf16.mxu0 0
  %7226 = vmatpush1.bf16.msra.mxu0 %v4966
  %7227 = vmatprep.subr.bf16.mxu0 0
  %7228 = vmatpush1.bf16.msra.mxu0 %v4967
  %7229 = vmatprep.subr.bf16.mxu0 0
  %7230 = vmatpush1.bf16.msra.mxu0 %v4968
  %7231 = vmatprep.subr.bf16.mxu0 0
  %7232 = vmatpush1.bf16.msra.mxu0 %v4969
  %7233 = vmatprep.subr.bf16.mxu0 0
  %7234 = vmatpush1.bf16.msra.mxu0 %v4970
  %7235 = vmatprep.subr.bf16.mxu0 0
  %7236 = vmatpush1.bf16.msra.mxu0 %v4971
  %7237 = vmatprep.subr.bf16.mxu0 0
  %7238 = vmatpush1.bf16.msra.mxu0 %v4972
  %7239 = vmatprep.subr.bf16.mxu0 0
  %7240 = vmatpush1.bf16.msra.mxu0 %v4973
  %7241 = vmatprep.subr.bf16.mxu0 0
  %7242 = vmatpush1.bf16.msra.mxu0 %v4974
  %7243 = vmatprep.subr.bf16.mxu0 0
  %7244 = vmatpush1.bf16.msra.mxu0 %v4975
  %7245 = vmatprep.subr.bf16.mxu0 0
  %7246 = vmatpush1.bf16.msra.mxu0 %v4976
  %7247 = vmatprep.subr.bf16.mxu0 0
  %7248 = vmatpush1.bf16.msra.mxu0 %v4977
  %7249 = vmatprep.mubr.bf16.mxu0 %v1697
  %7250 = vmatmul.mubr.bf16.gmra.mrb[0].mxu0 %v1696
  %v7251 = vpop.f32.mrb[0].mxu0
  %v7252 = vadd.f32 %v7211, %v7251
  %v7253 = vpop.f32.mrb[0].mxu0
  %v7254 = vpop.f32.mrb[0].mxu0
  %v7255 = vadd.f32 %v7214, %v7254
  %v7256 = vpop.f32.mrb[0].mxu0
  %7257 = vdwg.mxu0
  %v7258 = vld [vmem:[%s2] sm:$0x1]
  %v7260 = vlaneseq
  %v7261 = vshrl.u32 %v7260, 7
  %v7262 = vsub.s32 0, %v7261
  %v7263 = vrot.slane %v7258, %v7262
  %v7265 = vmul.f32 %v7252, %v7263
  %v7266 = vmul.f32 %v7255, %v7263
  %v7267 = vld [vmem:[%s3] sm:$0x1]
  %v7269 = vlaneseq
  %v7270 = vshrl.u32 %v7269, 7
  %v7271 = vsub.s32 0, %v7270
  %v7272 = vrot.slane %v7267, %v7271
  %v7274 = vadd.f32 %v7265, %v7272
  %v7275 = vadd.f32 %v7266, %v7272
  %7276 = vst [vmem:[%s4] sm:$0xff] %v7274
  %7277 = vst [vmem:[%s4 + $0x8] sm:$0xff] %v7275
  // Predicated region
  $region18: #{forward.21} parent=0 // pred_check
    _
  $region19: #{forward.21} parent=0 // pred_check_branch
    %7279 = sbr.rel (0) target = $region21
  $region20: #{forward.21} parent=0 // pred_region
    _
  $region21: #{forward.21} parent=0 // pred_fallthru
    _
  // Predicated region
  $region22: #{forward.21} parent=0 // pred_check
    _
  $region23: #{forward.21} parent=0 // pred_check_branch
    %7281 = sbr.rel (0) target = $region25
  $region24: #{forward.21} parent=0 // pred_region
    _
  $region25: #{forward.21} parent=0 // pred_fallthru
    _

</llo_original>
